<compile_context>
chip_gen: v7x
topology: tpu7x:2x2x1
jax: 0.10.0
libtpu: 0.0.40
codegen_flags: <defaults>
</compile_context>

<pallas_src>
import functools
import math

import jax
import jax.numpy as jnp
from jax.experimental import pallas as pl
from jax.experimental.pallas import tpu as pltpu

NUM_HEADS = 4
LN_EPS = 1e-5
# Packed per-channel vector columns: [b_qkv, ln1_g, ln1_b, bo, ln2_g, ln2_b, b1, b2]
_NVEC = 8


def _layer_norm_cm(v, gamma, beta):
    """LayerNorm over channels for a channel-major (C, S) tile."""
    mu = jnp.mean(v, axis=0, keepdims=True)
    var = jnp.mean((v - mu) ** 2, axis=0, keepdims=True)
    return (v - mu) * jax.lax.rsqrt(var + LN_EPS) * gamma + beta


def self_attention_kernel(
    x_ref,        # (Bblk, C, S)  channel-major (native NCHW) tile
    vec_ref,      # (3C, _NVEC)   packed per-channel vectors (single DMA)
    w_qkv_ref,    # (3C, C)       fused in-proj, Q rows pre-scaled by 1/sqrt(d)
    wo_ref,       # (C, C)
    w1_ref,       # (C, C)
    w2_ref,       # (C, C)
    o_ref,        # (Bblk, C, S)
    *,
    approx_gelu=False,
):
    Bblk, C, S = x_ref.shape
    NH = NUM_HEADS
    d = C // NH

    mdt = w_qkv_ref.dtype               # matmul-operand dtype (f32 or bf16)
    cast = lambda a: a.astype(mdt)      # accumulation stays f32 via preferred_element_type

    # ---- unpack per-channel vectors once (hoisted out of the batch loop) ----
    vec = vec_ref[...].astype(jnp.float32)
    b_qkv = vec[:, 0:1]                 # (3C, 1) — Q section already scale-folded
    ln1_g = vec[0:C, 1:2]
    ln1_b = vec[0:C, 2:3]
    bo    = vec[0:C, 3:4]
    ln2_g = vec[0:C, 4:5]
    ln2_b = vec[0:C, 5:6]
    b1    = vec[0:C, 6:7]
    b2    = vec[0:C, 7:8]

    w_qkv = w_qkv_ref[...]
    wo = wo_ref[...]
    w1 = w1_ref[...]
    w2 = w2_ref[...]

    # Static unroll over the (small) per-block batch: each iteration works on a
    # full-width channel-major (C, S) slab — no lane-masked slices and no
    # cross-batch lane concatenates; only a leading-axis store per element.
    for b in range(Bblk):
        x = x_ref[b]                                            # (C, S)

        # LayerNorm over channels (sublane axis); result stays channel-major.
        x_ln = _layer_norm_cm(x, ln1_g, ln1_b)

        # Fused QKV projection: one (3C, C) @ (C, S) MXU matmul.  The softmax
        # 1/sqrt(d) scale was folded into the Q rows of w_qkv / b_qkv.
        qkv = jnp.dot(w_qkv, cast(x_ln),
                      preferred_element_type=jnp.float32) + b_qkv   # (3C, S)

        # Head split is a pure sublane reshape (d = 8 aligns with sublane
        # tiles): q/k/v stay (NH, d, S) with S on lanes — no transposes.
        qkv = qkv.reshape(3, NH, d, S)
        q, k, v = cast(qkv[0]), cast(qkv[1]), cast(qkv[2])          # (NH, d, S)

        # Scores contract directly over the sublane d axis (transposed-LHS MXU
        # feed); no lane-sparse (S, d) intermediates anywhere.
        s = jnp.einsum("hdq,hdk->hqk", q, k,
                       preferred_element_type=jnp.float32)          # (NH, S, S)
        s = s - jnp.max(s, axis=-1, keepdims=True)
        p = jnp.exp(s)
        # Exact reciprocal keeps the 1e-4 fp32 tolerance; it scales only the
        # small (NH, 1, S) / (NH, d, S) tensors, never the (NH, S, S) probs.
        inv = pl.reciprocal(jnp.sum(p, axis=-1, keepdims=True), approx=False)
        inv = jnp.transpose(inv, (0, 2, 1))                          # (NH, 1, S)

        # PV lands directly in the merge-friendly (NH, d, S) layout.
        heads = jnp.einsum("hdk,hqk->hdq", v, cast(p),
                           preferred_element_type=jnp.float32)       # (NH, d, S)
        heads = heads * inv

        # Merge heads = trivial sublane reshape; out-projection is a standard
        # (C, C) @ (C, S) GEMM, residual uses the original channel-major input.
        attn_cm = cast(heads.reshape(C, S))
        attn = jnp.dot(wo, attn_cm, preferred_element_type=jnp.float32) + bo
        h1 = attn + x

        # Feed-forward: LN -> Linear -> GELU -> Linear, + residual.
        f = _layer_norm_cm(h1, ln2_g, ln2_b)
        f = jnp.dot(w1, cast(f), preferred_element_type=jnp.float32) + b1
        if approx_gelu:
            f = jax.nn.gelu(f, approximate=True)     # tanh -> EUP (free slot)
        else:
            f = 0.5 * f * (1.0 + jax.lax.erf(f * (1.0 / math.sqrt(2.0))))
        f = jnp.dot(w2, cast(f), preferred_element_type=jnp.float32) + b2

        # Already channel-major: store with no output transpose.
        o_ref[b] = (h1 + f).astype(o_ref.dtype)


def self_attention_forward(x_nchw, params, *, grid_blocks=1, use_bf16=False,
                           approx_gelu=False):
    """SelfAttention forward on a (B, C, H, W) float32 input.

    grid_blocks=1 (default): whole batch in one grid step — one pipeline-
      overhead hit and the largest per-step matmuls (v5e/v6e single-TC).
    grid_blocks=2: two parallel grid steps of Bblk = B//2 each, one per v7x
      TensorCore (remainder-safe fallback to 1 if B is not divisible).
    use_bf16: bf16 matmul operands with f32 accumulation (bf16-native MXU on
      v6e/v7x).  Exceeds the 1e-4 fp32 tolerance, so off by default.
    approx_gelu: tanh-GELU on the EUP instead of exact erf (off by default).

    VMEM note: per block this materializes NH*S*S*4 bytes of scores per batch
    element plus the (3C, S)/(C, S) activations and double-buffered I/O; keep
    that under the explicit vmem limit below (budgeted for v7x's 64 MiB).
    # TODO(synk): add a flash-style online-softmax KV-tile grid axis (and >=3-4
    # grid steps for DMA/compute overlap) before scaling S well past ~1024.
    """
    B, C, H, W = x_nchw.shape
    S = H * W
    NH = NUM_HEADS
    d = C // NH
    assert C % NH == 0, "channels must be divisible by the number of heads"

    if grid_blocks < 1 or B % grid_blocks != 0:
        grid_blocks = 1                       # remainder-safe fallback
    Bblk = B // grid_blocks

    x_ncs = x_nchw.reshape(B, C, S)           # free reshape; no HBM transpose

    # ---- weight prep (torch layout (out, in) == channel-major layout) ----
    scale = 1.0 / math.sqrt(d)
    w_qkv = params["w_qkv"]                   # (3C, C)
    b_qkv = params["b_qkv"]                   # (3C,)
    # Fold the softmax scale into the Q rows: applied inside the MXU matmul
    # for free instead of a VPU multiply over the (NH, S, S) scores.
    w_qkv = jnp.concatenate([w_qkv[:C] * scale, w_qkv[C:]], axis=0)
    b_qkv = jnp.concatenate([b_qkv[:C] * scale, b_qkv[C:]], axis=0)

    # Pack all per-channel vectors into one (3C, _NVEC) array: one BlockSpec /
    # DMA descriptor instead of eight tiny sub-(8,128) arguments.
    def col(v):
        return jnp.pad(v, (0, 3 * C - v.shape[0]))
    vec_pack = jnp.stack(
        [b_qkv, col(params["ln1_g"]), col(params["ln1_b"]), col(params["bo"]),
         col(params["ln2_g"]), col(params["ln2_b"]), col(params["b1"]),
         col(params["b2"])], axis=1).astype(jnp.float32)          # (3C, _NVEC)

    mdt = jnp.bfloat16 if use_bf16 else jnp.float32
    mats = [w_qkv.astype(mdt), params["wo"].astype(mdt),
            params["w1"].astype(mdt), params["w2"].astype(mdt)]

    in_specs = [pl.BlockSpec((Bblk, C, S), lambda b: (b, 0, 0)),
                pl.BlockSpec(vec_pack.shape, lambda b: (0, 0))]
    in_specs += [pl.BlockSpec(m.shape, lambda b: (0, 0)) for m in mats]

    kernel = functools.partial(self_attention_kernel, approx_gelu=approx_gelu)

    out = pl.pallas_call(
        kernel,
        out_shape=jax.ShapeDtypeStruct((B, C, S), jnp.float32),
        grid_spec=pltpu.PrefetchScalarGridSpec(
            num_scalar_prefetch=0,
            grid=(grid_blocks,),
            in_specs=in_specs,
            out_specs=pl.BlockSpec((Bblk, C, S), lambda b: (b, 0, 0)),
        ),
        compiler_params=pltpu.CompilerParams(
            dimension_semantics=("parallel",),
            # Raise v5e's 16 MiB scoped default while leaving headroom on
            # v7x's 64 MiB physical VMEM.
            vmem_limit_bytes=48 * 1024 * 1024,
        ),
    )(x_ncs, vec_pack, *mats)

    return out.reshape(B, C, H, W)


def make_params(key, channels):
    """Deterministic synthetic parameters in PyTorch layout: Linear / MHA
    weights are (out_features, in_features), which is exactly the channel-major
    layout the kernel consumes (y = W @ x_cm + b) — no wrapper transposes."""
    C = channels
    ks = jax.random.split(key, 8)
    s = 0.05
    return {
        "ln1_g": jnp.ones((C,), jnp.float32),
        "ln1_b": jnp.zeros((C,), jnp.float32),
        "w_qkv": s * jax.random.normal(ks[0], (3 * C, C), jnp.float32),
        "b_qkv": s * jax.random.normal(ks[1], (3 * C,), jnp.float32),
        "wo": s * jax.random.normal(ks[2], (C, C), jnp.float32),
        "bo": s * jax.random.normal(ks[3], (C,), jnp.float32),
        "ln2_g": jnp.ones((C,), jnp.float32),
        "ln2_b": jnp.zeros((C,), jnp.float32),
        "w1": s * jax.random.normal(ks[4], (C, C), jnp.float32),
        "b1": s * jax.random.normal(ks[5], (C,), jnp.float32),
        "w2": s * jax.random.normal(ks[6], (C, C), jnp.float32),
        "b2": s * jax.random.normal(ks[7], (C,), jnp.float32),
    }


def reference_forward(x_nchw, params):
    """Pure-JAX token-major reference mirroring the PyTorch module semantics."""
    B, C, H, W = x_nchw.shape
    S = H * W
    NH = NUM_HEADS
    d = C // NH
    x = jnp.transpose(x_nchw.reshape(B, C, S), (0, 2, 1))      # (B, S, C)

    def ln(v, g, b):
        mu = jnp.mean(v, axis=-1, keepdims=True)
        var = jnp.mean((v - mu) ** 2, axis=-1, keepdims=True)
        return (v - mu) / jnp.sqrt(var + LN_EPS) * g + b

    x_ln = ln(x, params["ln1_g"], params["ln1_b"])
    qkv = x_ln @ params["w_qkv"].T + params["b_qkv"]           # (B, S, 3C)
    q, k, v = qkv[..., :C], qkv[..., C:2 * C], qkv[..., 2 * C:]
    q = q.reshape(B, S, NH, d).transpose(0, 2, 1, 3)
    k = k.reshape(B, S, NH, d).transpose(0, 2, 1, 3)
    v = v.reshape(B, S, NH, d).transpose(0, 2, 1, 3)
    s = jnp.einsum("bhqd,bhkd->bhqk", q, k) / math.sqrt(d)
    p = jax.nn.softmax(s, axis=-1)
    o = jnp.einsum("bhqk,bhkd->bhqd", p, v).transpose(0, 2, 1, 3).reshape(B, S, C)
    attn = o @ params["wo"].T + params["bo"]
    h1 = attn + x
    f = ln(h1, params["ln2_g"], params["ln2_b"])
    f = f @ params["w1"].T + params["b1"]
    f = 0.5 * f * (1.0 + jax.lax.erf(f / math.sqrt(2.0)))
    f = f @ params["w2"].T + params["b2"]
    out = h1 + f
    return jnp.transpose(out, (0, 2, 1)).reshape(B, C, H, W)


if __name__ == "__main__":
    # batch=2, channels=32 (4 heads x 8), image_size=16 -> S=256 tokens.
    # S is a multiple of 128, so the (Bblk, C, S) I/O blocks are lane-dense.
    B, C, IMG = 2, 32, 16
    key = jax.random.PRNGKey(0)
    kx, kp = jax.random.split(key)
    x = jax.random.normal(kx, (B, C, IMG, IMG), jnp.float32)
    params = make_params(kp, C)

    ref = reference_forward(x, params)

    # Default: whole batch collapsed into one grid step (v5e/v6e single-TC).
    out = jax.block_until_ready(self_attention_forward(x, params))
    # v7x-friendly: two parallel grid steps, one per TensorCore.
    out_2tc = jax.block_until_ready(self_attention_forward(x, params, grid_blocks=2))
    # bf16-MXU + tanh-GELU path (v6e/v7x); naturally looser tolerance.
    out_fast = jax.block_until_ready(
        self_attention_forward(x, params, use_bf16=True, approx_gelu=True))

    assert out.shape == (B, C, IMG, IMG)
    assert jnp.allclose(out, ref, atol=1e-4, rtol=1e-4), "mismatch (collapsed-batch path)"
    assert jnp.allclose(out_2tc, ref, atol=1e-4, rtol=1e-4), "mismatch (2-step grid path)"
    assert jnp.allclose(out_fast, ref, atol=5e-2, rtol=5e-2), "mismatch (bf16/tanh path)"
    print("KERNEL_OK")
</pallas_src>

<mosaic_0001>
module attributes {stable_mosaic.version = 11 : i64} {
  func.func @self_attention_kernel(%arg0: i32, %arg1: memref<2x32x256xf32, #tpu.memory_space<vmem>>, %arg2: memref<96x8xf32, #tpu.memory_space<vmem>>, %arg3: memref<96x32xf32, #tpu.memory_space<vmem>>, %arg4: memref<32x32xf32, #tpu.memory_space<vmem>>, %arg5: memref<32x32xf32, #tpu.memory_space<vmem>>, %arg6: memref<32x32xf32, #tpu.memory_space<vmem>>, %arg7: memref<2x32x256xf32, #tpu.memory_space<vmem>>) attributes {dimension_semantics = [#tpu.dimension_semantics<parallel>], iteration_bounds = array<i64: 1>, scalar_prefetch = 0 : i64, scratch_operands = 0 : i64, tpu.core_type = #tpu.core_type<tc>, window_params = [{transform_indices = @transform_0, window_bounds = array<i64: 2, 32, 256>}, {pipeline_mode = #tpu.pipeline_mode<synchronous>, transform_indices = @transform_1, window_bounds = array<i64: 96, 8>}, {pipeline_mode = #tpu.pipeline_mode<synchronous>, transform_indices = @transform_2, window_bounds = array<i64: 96, 32>}, {pipeline_mode = #tpu.pipeline_mode<synchronous>, transform_indices = @transform_3, window_bounds = array<i64: 32, 32>}, {pipeline_mode = #tpu.pipeline_mode<synchronous>, transform_indices = @transform_4, window_bounds = array<i64: 32, 32>}, {pipeline_mode = #tpu.pipeline_mode<synchronous>, transform_indices = @transform_5, window_bounds = array<i64: 32, 32>}, {transform_indices = @transform_6, window_bounds = array<i64: 2, 32, 256>}]} {
    %c0 = arith.constant 0 : index
    %c0_0 = arith.constant 0 : index
    %0 = vector.load %arg2[%c0, %c0_0] : memref<96x8xf32, #tpu.memory_space<vmem>>, vector<96x8xf32>
    %1 = vector.extract_strided_slice %0 {offsets = [0, 0], sizes = [96, 1], strides = [1, 1]} : vector<96x8xf32> to vector<96x1xf32>
    %2 = vector.extract_strided_slice %0 {offsets = [0, 1], sizes = [32, 1], strides = [1, 1]} : vector<96x8xf32> to vector<32x1xf32>
    %3 = vector.extract_strided_slice %0 {offsets = [0, 2], sizes = [32, 1], strides = [1, 1]} : vector<96x8xf32> to vector<32x1xf32>
    %4 = vector.extract_strided_slice %0 {offsets = [0, 3], sizes = [32, 1], strides = [1, 1]} : vector<96x8xf32> to vector<32x1xf32>
    %5 = vector.extract_strided_slice %0 {offsets = [0, 4], sizes = [32, 1], strides = [1, 1]} : vector<96x8xf32> to vector<32x1xf32>
    %6 = vector.extract_strided_slice %0 {offsets = [0, 5], sizes = [32, 1], strides = [1, 1]} : vector<96x8xf32> to vector<32x1xf32>
    %7 = vector.extract_strided_slice %0 {offsets = [0, 6], sizes = [32, 1], strides = [1, 1]} : vector<96x8xf32> to vector<32x1xf32>
    %8 = vector.extract_strided_slice %0 {offsets = [0, 7], sizes = [32, 1], strides = [1, 1]} : vector<96x8xf32> to vector<32x1xf32>
    %c0_1 = arith.constant 0 : index
    %c0_2 = arith.constant 0 : index
    %9 = vector.load %arg3[%c0_1, %c0_2] : memref<96x32xf32, #tpu.memory_space<vmem>>, vector<96x32xf32>
    %c0_3 = arith.constant 0 : index
    %c0_4 = arith.constant 0 : index
    %10 = vector.load %arg4[%c0_3, %c0_4] : memref<32x32xf32, #tpu.memory_space<vmem>>, vector<32x32xf32>
    %c0_5 = arith.constant 0 : index
    %c0_6 = arith.constant 0 : index
    %11 = vector.load %arg5[%c0_5, %c0_6] : memref<32x32xf32, #tpu.memory_space<vmem>>, vector<32x32xf32>
    %c0_7 = arith.constant 0 : index
    %c0_8 = arith.constant 0 : index
    %12 = vector.load %arg6[%c0_7, %c0_8] : memref<32x32xf32, #tpu.memory_space<vmem>>, vector<32x32xf32>
    %c0_9 = arith.constant 0 : index
    %c0_10 = arith.constant 0 : index
    %c0_11 = arith.constant 0 : index
    %13 = vector.load %arg1[%c0_9, %c0_10, %c0_11] : memref<2x32x256xf32, #tpu.memory_space<vmem>>, vector<1x32x256xf32>
    %14 = vector.shape_cast %13 : vector<1x32x256xf32> to vector<32x256xf32>
    %cst = arith.constant dense<0.000000e+00> : vector<256xf32>
    %15 = vector.multi_reduction <add>, %14, %cst [0] : vector<32x256xf32> to vector<256xf32>
    %16 = vector.shape_cast %15 : vector<256xf32> to vector<1x256xf32>
    %cst_12 = arith.constant 3.200000e+01 : f32
    %17 = vector.broadcast %cst_12 : f32 to vector<1x256xf32>
    %18 = arith.divf %16, %17 : vector<1x256xf32>
    %19 = vector.broadcast %18 : vector<1x256xf32> to vector<32x256xf32>
    %20 = arith.subf %14, %19 : vector<32x256xf32>
    %21 = arith.mulf %20, %20 : vector<32x256xf32>
    %cst_13 = arith.constant dense<0.000000e+00> : vector<256xf32>
    %22 = vector.multi_reduction <add>, %21, %cst_13 [0] : vector<32x256xf32> to vector<256xf32>
    %23 = vector.shape_cast %22 : vector<256xf32> to vector<1x256xf32>
    %cst_14 = arith.constant 3.200000e+01 : f32
    %24 = vector.broadcast %cst_14 : f32 to vector<1x256xf32>
    %25 = arith.divf %23, %24 : vector<1x256xf32>
    %26 = vector.broadcast %18 : vector<1x256xf32> to vector<32x256xf32>
    %27 = arith.subf %14, %26 : vector<32x256xf32>
    %cst_15 = arith.constant 9.99999974E-6 : f32
    %28 = vector.broadcast %cst_15 : f32 to vector<1x256xf32>
    %29 = arith.addf %25, %28 : vector<1x256xf32>
    %30 = math.rsqrt %29 : vector<1x256xf32>
    %31 = vector.broadcast %30 : vector<1x256xf32> to vector<32x256xf32>
    %32 = arith.mulf %27, %31 : vector<32x256xf32>
    %33 = vector.broadcast %2 : vector<32x1xf32> to vector<32x256xf32>
    %34 = arith.mulf %32, %33 : vector<32x256xf32>
    %35 = vector.broadcast %3 : vector<32x1xf32> to vector<32x256xf32>
    %36 = arith.addf %34, %35 : vector<32x256xf32>
    %cst_16 = arith.constant dense<0.000000e+00> : vector<96x256xf32>
    %37 = tpu.matmul %9, %36, %cst_16 {dimension_numbers = #tpu.dot_dimension_numbers<[1], [0], [0], [1], [0, 0, 1, 1], [], []>} : vector<96x32xf32>, vector<32x256xf32>, vector<96x256xf32> -> vector<96x256xf32>
    %38 = vector.broadcast %1 : vector<96x1xf32> to vector<96x256xf32>
    %39 = arith.addf %37, %38 : vector<96x256xf32>
    %40 = vector.shape_cast %39 : vector<96x256xf32> to vector<3x4x8x256xf32>
    %41 = vector.extract_strided_slice %40 {offsets = [0, 0, 0, 0], sizes = [1, 4, 8, 256], strides = [1, 1, 1, 1]} : vector<3x4x8x256xf32> to vector<1x4x8x256xf32>
    %42 = vector.shape_cast %41 : vector<1x4x8x256xf32> to vector<4x8x256xf32>
    %43 = vector.extract_strided_slice %40 {offsets = [1, 0, 0, 0], sizes = [1, 4, 8, 256], strides = [1, 1, 1, 1]} : vector<3x4x8x256xf32> to vector<1x4x8x256xf32>
    %44 = vector.shape_cast %43 : vector<1x4x8x256xf32> to vector<4x8x256xf32>
    %45 = vector.extract_strided_slice %40 {offsets = [2, 0, 0, 0], sizes = [1, 4, 8, 256], strides = [1, 1, 1, 1]} : vector<3x4x8x256xf32> to vector<1x4x8x256xf32>
    %46 = vector.shape_cast %45 : vector<1x4x8x256xf32> to vector<4x8x256xf32>
    "tpu.trace_start"() <{level = 10 : i32, message = "hdq,hdk->hqk"}> : () -> ()
    %cst_17 = arith.constant dense<0.000000e+00> : vector<4x256x256xf32>
    %47 = tpu.matmul %42, %44, %cst_17 {dimension_numbers = #tpu.dot_dimension_numbers<[1], [1], [2], [2], [0, 0, 0, 2, 1, 2], [0], [0]>} : vector<4x8x256xf32>, vector<4x8x256xf32>, vector<4x256x256xf32> -> vector<4x256x256xf32>
    "tpu.trace_stop"() : () -> ()
    %cst_18 = arith.constant dense<0xFF800000> : vector<4x256xf32>
    %48 = vector.multi_reduction <maximumf>, %47, %cst_18 [2] : vector<4x256x256xf32> to vector<4x256xf32>
    %49 = vector.shape_cast %48 : vector<4x256xf32> to vector<4x256x1xf32>
    %50 = vector.broadcast %49 : vector<4x256x1xf32> to vector<4x256x256xf32>
    %51 = arith.subf %47, %50 : vector<4x256x256xf32>
    %52 = math.exp %51 : vector<4x256x256xf32>
    %cst_19 = arith.constant dense<0.000000e+00> : vector<4x256xf32>
    %53 = vector.multi_reduction <add>, %52, %cst_19 [2] : vector<4x256x256xf32> to vector<4x256xf32>
    %54 = vector.shape_cast %53 : vector<4x256xf32> to vector<4x256x1xf32>
    %55 = tpu.reciprocal %54 : vector<4x256x1xf32> -> vector<4x256x1xf32>
    %56 = tpu.transpose %55, [0, 2, 1] : vector<4x256x1xf32> -> vector<4x1x256xf32>
    "tpu.trace_start"() <{level = 10 : i32, message = "hdk,hqk->hdq"}> : () -> ()
    %cst_20 = arith.constant dense<0.000000e+00> : vector<4x8x256xf32>
    %57 = tpu.matmul %46, %52, %cst_20 {dimension_numbers = #tpu.dot_dimension_numbers<[2], [2], [1], [1], [0, 0, 0, 1, 1, 1], [0], [0]>} : vector<4x8x256xf32>, vector<4x256x256xf32>, vector<4x8x256xf32> -> vector<4x8x256xf32>
    "tpu.trace_stop"() : () -> ()
    %58 = vector.broadcast %56 : vector<4x1x256xf32> to vector<4x8x256xf32>
    %59 = arith.mulf %57, %58 : vector<4x8x256xf32>
    %60 = vector.shape_cast %59 : vector<4x8x256xf32> to vector<32x256xf32>
    %cst_21 = arith.constant dense<0.000000e+00> : vector<32x256xf32>
    %61 = tpu.matmul %10, %60, %cst_21 {dimension_numbers = #tpu.dot_dimension_numbers<[1], [0], [0], [1], [0, 0, 1, 1], [], []>} : vector<32x32xf32>, vector<32x256xf32>, vector<32x256xf32> -> vector<32x256xf32>
    %62 = vector.broadcast %4 : vector<32x1xf32> to vector<32x256xf32>
    %63 = arith.addf %61, %62 : vector<32x256xf32>
    %64 = arith.addf %63, %14 : vector<32x256xf32>
    %cst_22 = arith.constant dense<0.000000e+00> : vector<256xf32>
    %65 = vector.multi_reduction <add>, %64, %cst_22 [0] : vector<32x256xf32> to vector<256xf32>
    %66 = vector.shape_cast %65 : vector<256xf32> to vector<1x256xf32>
    %cst_23 = arith.constant 3.200000e+01 : f32
    %67 = vector.broadcast %cst_23 : f32 to vector<1x256xf32>
    %68 = arith.divf %66, %67 : vector<1x256xf32>
    %69 = vector.broadcast %68 : vector<1x256xf32> to vector<32x256xf32>
    %70 = arith.subf %64, %69 : vector<32x256xf32>
    %71 = arith.mulf %70, %70 : vector<32x256xf32>
    %cst_24 = arith.constant dense<0.000000e+00> : vector<256xf32>
    %72 = vector.multi_reduction <add>, %71, %cst_24 [0] : vector<32x256xf32> to vector<256xf32>
    %73 = vector.shape_cast %72 : vector<256xf32> to vector<1x256xf32>
    %cst_25 = arith.constant 3.200000e+01 : f32
    %74 = vector.broadcast %cst_25 : f32 to vector<1x256xf32>
    %75 = arith.divf %73, %74 : vector<1x256xf32>
    %76 = vector.broadcast %68 : vector<1x256xf32> to vector<32x256xf32>
    %77 = arith.subf %64, %76 : vector<32x256xf32>
    %cst_26 = arith.constant 9.99999974E-6 : f32
    %78 = vector.broadcast %cst_26 : f32 to vector<1x256xf32>
    %79 = arith.addf %75, %78 : vector<1x256xf32>
    %80 = math.rsqrt %79 : vector<1x256xf32>
    %81 = vector.broadcast %80 : vector<1x256xf32> to vector<32x256xf32>
    %82 = arith.mulf %77, %81 : vector<32x256xf32>
    %83 = vector.broadcast %5 : vector<32x1xf32> to vector<32x256xf32>
    %84 = arith.mulf %82, %83 : vector<32x256xf32>
    %85 = vector.broadcast %6 : vector<32x1xf32> to vector<32x256xf32>
    %86 = arith.addf %84, %85 : vector<32x256xf32>
    %cst_27 = arith.constant dense<0.000000e+00> : vector<32x256xf32>
    %87 = tpu.matmul %11, %86, %cst_27 {dimension_numbers = #tpu.dot_dimension_numbers<[1], [0], [0], [1], [0, 0, 1, 1], [], []>} : vector<32x32xf32>, vector<32x256xf32>, vector<32x256xf32> -> vector<32x256xf32>
    %88 = vector.broadcast %7 : vector<32x1xf32> to vector<32x256xf32>
    %89 = arith.addf %87, %88 : vector<32x256xf32>
    %cst_28 = arith.constant 5.000000e-01 : f32
    %90 = vector.broadcast %cst_28 : f32 to vector<32x256xf32>
    %91 = arith.mulf %90, %89 : vector<32x256xf32>
    %cst_29 = arith.constant 0.707106769 : f32
    %92 = vector.broadcast %cst_29 : f32 to vector<32x256xf32>
    %93 = arith.mulf %89, %92 : vector<32x256xf32>
    %94 = math.erf %93 : vector<32x256xf32>
    %cst_30 = arith.constant 1.000000e+00 : f32
    %95 = vector.broadcast %cst_30 : f32 to vector<32x256xf32>
    %96 = arith.addf %95, %94 : vector<32x256xf32>
    %97 = arith.mulf %91, %96 : vector<32x256xf32>
    %cst_31 = arith.constant dense<0.000000e+00> : vector<32x256xf32>
    %98 = tpu.matmul %12, %97, %cst_31 {dimension_numbers = #tpu.dot_dimension_numbers<[1], [0], [0], [1], [0, 0, 1, 1], [], []>} : vector<32x32xf32>, vector<32x256xf32>, vector<32x256xf32> -> vector<32x256xf32>
    %99 = vector.broadcast %8 : vector<32x1xf32> to vector<32x256xf32>
    %100 = arith.addf %98, %99 : vector<32x256xf32>
    %101 = arith.addf %64, %100 : vector<32x256xf32>
    %c0_32 = arith.constant 0 : index
    %c0_33 = arith.constant 0 : index
    %c0_34 = arith.constant 0 : index
    %102 = vector.load %arg7[%c0_32, %c0_33, %c0_34] : memref<2x32x256xf32, #tpu.memory_space<vmem>>, vector<1x32x256xf32>
    %103 = vector.shape_cast %102 : vector<1x32x256xf32> to vector<32x256xf32>
    %104 = vector.shape_cast %101 : vector<32x256xf32> to vector<1x32x256xf32>
    tpu.vector_store %arg7[%c0_32, %c0_33, %c0_34], %104 {strides = array<i32>} : memref<2x32x256xf32, #tpu.memory_space<vmem>>, vector<1x32x256xf32>,
    %c1 = arith.constant 1 : index
    %c0_35 = arith.constant 0 : index
    %c0_36 = arith.constant 0 : index
    %105 = vector.load %arg1[%c1, %c0_35, %c0_36] : memref<2x32x256xf32, #tpu.memory_space<vmem>>, vector<1x32x256xf32>
    %106 = vector.shape_cast %105 : vector<1x32x256xf32> to vector<32x256xf32>
    %cst_37 = arith.constant dense<0.000000e+00> : vector<256xf32>
    %107 = vector.multi_reduction <add>, %106, %cst_37 [0] : vector<32x256xf32> to vector<256xf32>
    %108 = vector.shape_cast %107 : vector<256xf32> to vector<1x256xf32>
    %cst_38 = arith.constant 3.200000e+01 : f32
    %109 = vector.broadcast %cst_38 : f32 to vector<1x256xf32>
    %110 = arith.divf %108, %109 : vector<1x256xf32>
    %111 = vector.broadcast %110 : vector<1x256xf32> to vector<32x256xf32>
    %112 = arith.subf %106, %111 : vector<32x256xf32>
    %113 = arith.mulf %112, %112 : vector<32x256xf32>
    %cst_39 = arith.constant dense<0.000000e+00> : vector<256xf32>
    %114 = vector.multi_reduction <add>, %113, %cst_39 [0] : vector<32x256xf32> to vector<256xf32>
    %115 = vector.shape_cast %114 : vector<256xf32> to vector<1x256xf32>
    %cst_40 = arith.constant 3.200000e+01 : f32
    %116 = vector.broadcast %cst_40 : f32 to vector<1x256xf32>
    %117 = arith.divf %115, %116 : vector<1x256xf32>
    %118 = vector.broadcast %110 : vector<1x256xf32> to vector<32x256xf32>
    %119 = arith.subf %106, %118 : vector<32x256xf32>
    %cst_41 = arith.constant 9.99999974E-6 : f32
    %120 = vector.broadcast %cst_41 : f32 to vector<1x256xf32>
    %121 = arith.addf %117, %120 : vector<1x256xf32>
    %122 = math.rsqrt %121 : vector<1x256xf32>
    %123 = vector.broadcast %122 : vector<1x256xf32> to vector<32x256xf32>
    %124 = arith.mulf %119, %123 : vector<32x256xf32>
    %125 = vector.broadcast %2 : vector<32x1xf32> to vector<32x256xf32>
    %126 = arith.mulf %124, %125 : vector<32x256xf32>
    %127 = vector.broadcast %3 : vector<32x1xf32> to vector<32x256xf32>
    %128 = arith.addf %126, %127 : vector<32x256xf32>
    %cst_42 = arith.constant dense<0.000000e+00> : vector<96x256xf32>
    %129 = tpu.matmul %9, %128, %cst_42 {dimension_numbers = #tpu.dot_dimension_numbers<[1], [0], [0], [1], [0, 0, 1, 1], [], []>} : vector<96x32xf32>, vector<32x256xf32>, vector<96x256xf32> -> vector<96x256xf32>
    %130 = vector.broadcast %1 : vector<96x1xf32> to vector<96x256xf32>
    %131 = arith.addf %129, %130 : vector<96x256xf32>
    %132 = vector.shape_cast %131 : vector<96x256xf32> to vector<3x4x8x256xf32>
    %133 = vector.extract_strided_slice %132 {offsets = [0, 0, 0, 0], sizes = [1, 4, 8, 256], strides = [1, 1, 1, 1]} : vector<3x4x8x256xf32> to vector<1x4x8x256xf32>
    %134 = vector.shape_cast %133 : vector<1x4x8x256xf32> to vector<4x8x256xf32>
    %135 = vector.extract_strided_slice %132 {offsets = [1, 0, 0, 0], sizes = [1, 4, 8, 256], strides = [1, 1, 1, 1]} : vector<3x4x8x256xf32> to vector<1x4x8x256xf32>
    %136 = vector.shape_cast %135 : vector<1x4x8x256xf32> to vector<4x8x256xf32>
    %137 = vector.extract_strided_slice %132 {offsets = [2, 0, 0, 0], sizes = [1, 4, 8, 256], strides = [1, 1, 1, 1]} : vector<3x4x8x256xf32> to vector<1x4x8x256xf32>
    %138 = vector.shape_cast %137 : vector<1x4x8x256xf32> to vector<4x8x256xf32>
    "tpu.trace_start"() <{level = 10 : i32, message = "hdq,hdk->hqk"}> : () -> ()
    %cst_43 = arith.constant dense<0.000000e+00> : vector<4x256x256xf32>
    %139 = tpu.matmul %134, %136, %cst_43 {dimension_numbers = #tpu.dot_dimension_numbers<[1], [1], [2], [2], [0, 0, 0, 2, 1, 2], [0], [0]>} : vector<4x8x256xf32>, vector<4x8x256xf32>, vector<4x256x256xf32> -> vector<4x256x256xf32>
    "tpu.trace_stop"() : () -> ()
    %cst_44 = arith.constant dense<0xFF800000> : vector<4x256xf32>
    %140 = vector.multi_reduction <maximumf>, %139, %cst_44 [2] : vector<4x256x256xf32> to vector<4x256xf32>
    %141 = vector.shape_cast %140 : vector<4x256xf32> to vector<4x256x1xf32>
    %142 = vector.broadcast %141 : vector<4x256x1xf32> to vector<4x256x256xf32>
    %143 = arith.subf %139, %142 : vector<4x256x256xf32>
    %144 = math.exp %143 : vector<4x256x256xf32>
    %cst_45 = arith.constant dense<0.000000e+00> : vector<4x256xf32>
    %145 = vector.multi_reduction <add>, %144, %cst_45 [2] : vector<4x256x256xf32> to vector<4x256xf32>
    %146 = vector.shape_cast %145 : vector<4x256xf32> to vector<4x256x1xf32>
    %147 = tpu.reciprocal %146 : vector<4x256x1xf32> -> vector<4x256x1xf32>
    %148 = tpu.transpose %147, [0, 2, 1] : vector<4x256x1xf32> -> vector<4x1x256xf32>
    "tpu.trace_start"() <{level = 10 : i32, message = "hdk,hqk->hdq"}> : () -> ()
    %cst_46 = arith.constant dense<0.000000e+00> : vector<4x8x256xf32>
    %149 = tpu.matmul %138, %144, %cst_46 {dimension_numbers = #tpu.dot_dimension_numbers<[2], [2], [1], [1], [0, 0, 0, 1, 1, 1], [0], [0]>} : vector<4x8x256xf32>, vector<4x256x256xf32>, vector<4x8x256xf32> -> vector<4x8x256xf32>
    "tpu.trace_stop"() : () -> ()
    %150 = vector.broadcast %148 : vector<4x1x256xf32> to vector<4x8x256xf32>
    %151 = arith.mulf %149, %150 : vector<4x8x256xf32>
    %152 = vector.shape_cast %151 : vector<4x8x256xf32> to vector<32x256xf32>
    %cst_47 = arith.constant dense<0.000000e+00> : vector<32x256xf32>
    %153 = tpu.matmul %10, %152, %cst_47 {dimension_numbers = #tpu.dot_dimension_numbers<[1], [0], [0], [1], [0, 0, 1, 1], [], []>} : vector<32x32xf32>, vector<32x256xf32>, vector<32x256xf32> -> vector<32x256xf32>
    %154 = vector.broadcast %4 : vector<32x1xf32> to vector<32x256xf32>
    %155 = arith.addf %153, %154 : vector<32x256xf32>
    %156 = arith.addf %155, %106 : vector<32x256xf32>
    %cst_48 = arith.constant dense<0.000000e+00> : vector<256xf32>
    %157 = vector.multi_reduction <add>, %156, %cst_48 [0] : vector<32x256xf32> to vector<256xf32>
    %158 = vector.shape_cast %157 : vector<256xf32> to vector<1x256xf32>
    %cst_49 = arith.constant 3.200000e+01 : f32
    %159 = vector.broadcast %cst_49 : f32 to vector<1x256xf32>
    %160 = arith.divf %158, %159 : vector<1x256xf32>
    %161 = vector.broadcast %160 : vector<1x256xf32> to vector<32x256xf32>
    %162 = arith.subf %156, %161 : vector<32x256xf32>
    %163 = arith.mulf %162, %162 : vector<32x256xf32>
    %cst_50 = arith.constant dense<0.000000e+00> : vector<256xf32>
    %164 = vector.multi_reduction <add>, %163, %cst_50 [0] : vector<32x256xf32> to vector<256xf32>
    %165 = vector.shape_cast %164 : vector<256xf32> to vector<1x256xf32>
    %cst_51 = arith.constant 3.200000e+01 : f32
    %166 = vector.broadcast %cst_51 : f32 to vector<1x256xf32>
    %167 = arith.divf %165, %166 : vector<1x256xf32>
    %168 = vector.broadcast %160 : vector<1x256xf32> to vector<32x256xf32>
    %169 = arith.subf %156, %168 : vector<32x256xf32>
    %cst_52 = arith.constant 9.99999974E-6 : f32
    %170 = vector.broadcast %cst_52 : f32 to vector<1x256xf32>
    %171 = arith.addf %167, %170 : vector<1x256xf32>
    %172 = math.rsqrt %171 : vector<1x256xf32>
    %173 = vector.broadcast %172 : vector<1x256xf32> to vector<32x256xf32>
    %174 = arith.mulf %169, %173 : vector<32x256xf32>
    %175 = vector.broadcast %5 : vector<32x1xf32> to vector<32x256xf32>
    %176 = arith.mulf %174, %175 : vector<32x256xf32>
    %177 = vector.broadcast %6 : vector<32x1xf32> to vector<32x256xf32>
    %178 = arith.addf %176, %177 : vector<32x256xf32>
    %cst_53 = arith.constant dense<0.000000e+00> : vector<32x256xf32>
    %179 = tpu.matmul %11, %178, %cst_53 {dimension_numbers = #tpu.dot_dimension_numbers<[1], [0], [0], [1], [0, 0, 1, 1], [], []>} : vector<32x32xf32>, vector<32x256xf32>, vector<32x256xf32> -> vector<32x256xf32>
    %180 = vector.broadcast %7 : vector<32x1xf32> to vector<32x256xf32>
    %181 = arith.addf %179, %180 : vector<32x256xf32>
    %cst_54 = arith.constant 5.000000e-01 : f32
    %182 = vector.broadcast %cst_54 : f32 to vector<32x256xf32>
    %183 = arith.mulf %182, %181 : vector<32x256xf32>
    %cst_55 = arith.constant 0.707106769 : f32
    %184 = vector.broadcast %cst_55 : f32 to vector<32x256xf32>
    %185 = arith.mulf %181, %184 : vector<32x256xf32>
    %186 = math.erf %185 : vector<32x256xf32>
    %cst_56 = arith.constant 1.000000e+00 : f32
    %187 = vector.broadcast %cst_56 : f32 to vector<32x256xf32>
    %188 = arith.addf %187, %186 : vector<32x256xf32>
    %189 = arith.mulf %183, %188 : vector<32x256xf32>
    %cst_57 = arith.constant dense<0.000000e+00> : vector<32x256xf32>
    %190 = tpu.matmul %12, %189, %cst_57 {dimension_numbers = #tpu.dot_dimension_numbers<[1], [0], [0], [1], [0, 0, 1, 1], [], []>} : vector<32x32xf32>, vector<32x256xf32>, vector<32x256xf32> -> vector<32x256xf32>
    %191 = vector.broadcast %8 : vector<32x1xf32> to vector<32x256xf32>
    %192 = arith.addf %190, %191 : vector<32x256xf32>
    %193 = arith.addf %156, %192 : vector<32x256xf32>
    %c1_58 = arith.constant 1 : index
    %c0_59 = arith.constant 0 : index
    %c0_60 = arith.constant 0 : index
    %194 = vector.load %arg7[%c1_58, %c0_59, %c0_60] : memref<2x32x256xf32, #tpu.memory_space<vmem>>, vector<1x32x256xf32>
    %195 = vector.shape_cast %194 : vector<1x32x256xf32> to vector<32x256xf32>
    %196 = vector.shape_cast %193 : vector<32x256xf32> to vector<1x32x256xf32>
    tpu.vector_store %arg7[%c1_58, %c0_59, %c0_60], %196 {strides = array<i32>} : memref<2x32x256xf32, #tpu.memory_space<vmem>>, vector<1x32x256xf32>,
    return
  }
  func.func @transform_0(%arg0: i32) -> (i32, i32, i32) {
    %c0_i32 = arith.constant 0 : i32
    %c0_i32_0 = arith.constant 0 : i32
    %c0_i32_1 = arith.constant 0 : i32
    return %arg0, %c0_i32, %c0_i32_0 : i32, i32, i32
  }
  func.func @transform_1(%arg0: i32) -> (i32, i32) {
    %c0_i32 = arith.constant 0 : i32
    %c0_i32_0 = arith.constant 0 : i32
    %c0_i32_1 = arith.constant 0 : i32
    return %c0_i32, %c0_i32_0 : i32, i32
  }
  func.func @transform_2(%arg0: i32) -> (i32, i32) {
    %c0_i32 = arith.constant 0 : i32
    %c0_i32_0 = arith.constant 0 : i32
    %c0_i32_1 = arith.constant 0 : i32
    return %c0_i32, %c0_i32_0 : i32, i32
  }
  func.func @transform_3(%arg0: i32) -> (i32, i32) {
    %c0_i32 = arith.constant 0 : i32
    %c0_i32_0 = arith.constant 0 : i32
    %c0_i32_1 = arith.constant 0 : i32
    return %c0_i32, %c0_i32_0 : i32, i32
  }
  func.func @transform_4(%arg0: i32) -> (i32, i32) {
    %c0_i32 = arith.constant 0 : i32
    %c0_i32_0 = arith.constant 0 : i32
    %c0_i32_1 = arith.constant 0 : i32
    return %c0_i32, %c0_i32_0 : i32, i32
  }
  func.func @transform_5(%arg0: i32) -> (i32, i32) {
    %c0_i32 = arith.constant 0 : i32
    %c0_i32_0 = arith.constant 0 : i32
    %c0_i32_1 = arith.constant 0 : i32
    return %c0_i32, %c0_i32_0 : i32, i32
  }
  func.func @transform_6(%arg0: i32) -> (i32, i32, i32) {
    %c0_i32 = arith.constant 0 : i32
    %c0_i32_0 = arith.constant 0 : i32
    %c0_i32_1 = arith.constant 0 : i32
    return %arg0, %c0_i32, %c0_i32_0 : i32, i32, i32
  }
}

</mosaic_0001>

<llo_original>
// kernel: tpu_custom_call.1
$region0: #{tpu_custom_call.1}
  #allocation0 [shape = 'u32[]', space=smem, size = 0x4, offset = 0x4, fixed_abs, tag = 'smem constant byte address 0x4 - core index']
  #allocation1 [shape = 'u32[144,128]{1,0:T(1,128)}', space=vmem, size = 0x12000, scoped, tag = 'internal scratch']
  %s0 = inlined_call_operand.vmem [shape: f32[2,32,256], index: 0, kind: input, shape index: {}]
  %s1 = inlined_call_operand.vmem [shape: f32[96,8], index: 1, kind: input, shape index: {}]
  %s2 = inlined_call_operand.vmem [shape: f32[96,32], index: 2, kind: input, shape index: {}]
  %s3 = inlined_call_operand.vmem [shape: f32[32,32], index: 3, kind: input, shape index: {}]
  %s4 = inlined_call_operand.vmem [shape: f32[32,32], index: 4, kind: input, shape index: {}]
  %s5 = inlined_call_operand.vmem [shape: f32[32,32], index: 5, kind: input, shape index: {}]
  %s6 = inlined_call_operand.hbm [shape: f32[2,32,256], index: 6, kind: output, shape index: {}]
  %s7 = sld [smem:[#allocation0]]
  $region34: #{tpu_custom_call.1} parent=0
    _
  %s9 = ssub.s32 1, %s7
  %s10 = scalar_select 0, %s9, %s7
  $region1: #{tpu_custom_call.1} parent=0
    #allocation2 [shape = 'u8[65536]{0}', space=vmem, size = 0x10000, scoped, tag = 'output window, operand 0, single buffered']
    #allocation3 [shape = 's32[1]{0}', space=sflag, size = 0x4, scoped, tag = 'scoped memory for tpu_custom_call.1']
    %11 = vsyncpa [#allocation3], 0
    // Predicated region
    $region2: #{tpu_custom_call.1} parent=1 // pred_check
      _
    $region3: #{tpu_custom_call.1} parent=1 // pred_check_branch
      %13 = sbr.rel (0) target = $region5
    $region4: #{tpu_custom_call.1} parent=1 // pred_region
      _
    $region5: #{tpu_custom_call.1} parent=1 // pred_fallthru
      _
    // Predicated region
    $region6: #{tpu_custom_call.1} parent=1 // pred_check
      _
    $region7: #{tpu_custom_call.1} parent=1 // pred_check_branch
      %15 = sbr.rel (0) target = $region9
    $region8: #{tpu_custom_call.1} parent=1 // pred_region
      _
    $region9: #{tpu_custom_call.1} parent=1 // pred_fallthru
      _
    // Predicated region
    $region10: #{tpu_custom_call.1} parent=1 // pred_check
      _
    $region11: #{tpu_custom_call.1} parent=1 // pred_check_branch
      %17 = sbr.rel (0) target = $region13
    $region12: #{tpu_custom_call.1} parent=1 // pred_region
      _
    $region13: #{tpu_custom_call.1} parent=1 // pred_fallthru
      _
    // Predicated region
    $region14: #{tpu_custom_call.1} parent=1 // pred_check
      _
    $region15: #{tpu_custom_call.1} parent=1 // pred_check_branch
      %19 = sbr.rel (0) target = $region17
    $region16: #{tpu_custom_call.1} parent=1 // pred_region
      _
    $region17: #{tpu_custom_call.1} parent=1 // pred_fallthru
      _
    // Predicated region
    $region18: #{tpu_custom_call.1} parent=1 // pred_check
      _
    $region19: #{tpu_custom_call.1} parent=1 // pred_check_branch
      %21 = sbr.rel (0) target = $region21
    $region20: #{tpu_custom_call.1} parent=1 // pred_region
      _
    $region21: #{tpu_custom_call.1} parent=1 // pred_fallthru
      _
    // Predicated region
    $region22: #{tpu_custom_call.1} parent=1 // pred_check
      _
    $region23: #{tpu_custom_call.1} parent=1 // pred_check_branch
      %23 = sbr.rel (0) target = $region25
    $region24: #{tpu_custom_call.1} parent=1 // pred_region
      _
    $region25: #{tpu_custom_call.1} parent=1 // pred_fallthru
      _
    %v24 = vld [vmem:[%s1] sm:$0xff]
    %v25 = vld [vmem:[%s1 + $0x8] sm:$0xff]
    %v26 = vld [vmem:[%s1 + $0x10] sm:$0xff]
    %v27 = vld [vmem:[%s1 + $0x18] sm:$0xff]
    %v28 = vld [vmem:[%s1 + $0x20] sm:$0xff]
    %v29 = vld [vmem:[%s1 + $0x28] sm:$0xff]
    %v30 = vld [vmem:[%s1 + $0x30] sm:$0xff]
    %v31 = vld [vmem:[%s1 + $0x38] sm:$0xff]
    %v32 = vld [vmem:[%s1 + $0x40] sm:$0xff]
    %v33 = vld [vmem:[%s1 + $0x48] sm:$0xff]
    %v34 = vld [vmem:[%s1 + $0x50] sm:$0xff]
    %v35 = vld [vmem:[%s1 + $0x58] sm:$0xff]
    %v36 = vld [vmem:[%s2] sm:$0xff]
    %v37 = vld [vmem:[%s2 + $0x8] sm:$0xff]
    %v38 = vld [vmem:[%s2 + $0x10] sm:$0xff]
    %v39 = vld [vmem:[%s2 + $0x18] sm:$0xff]
    %v40 = vld [vmem:[%s2 + $0x20] sm:$0xff]
    %v41 = vld [vmem:[%s2 + $0x28] sm:$0xff]
    %v42 = vld [vmem:[%s2 + $0x30] sm:$0xff]
    %v43 = vld [vmem:[%s2 + $0x38] sm:$0xff]
    %v44 = vld [vmem:[%s2 + $0x40] sm:$0xff]
    %v45 = vld [vmem:[%s2 + $0x48] sm:$0xff]
    %v46 = vld [vmem:[%s2 + $0x50] sm:$0xff]
    %v47 = vld [vmem:[%s2 + $0x58] sm:$0xff]
    %v48 = vld [vmem:[%s3] sm:$0xff]
    %v49 = vld [vmem:[%s3 + $0x8] sm:$0xff]
    %v50 = vld [vmem:[%s3 + $0x10] sm:$0xff]
    %v51 = vld [vmem:[%s3 + $0x18] sm:$0xff]
    %v52 = vld [vmem:[%s4] sm:$0xff]
    %v53 = vld [vmem:[%s4 + $0x8] sm:$0xff]
    %v54 = vld [vmem:[%s4 + $0x10] sm:$0xff]
    %v55 = vld [vmem:[%s4 + $0x18] sm:$0xff]
    %v56 = vld [vmem:[%s5] sm:$0xff]
    %v57 = vld [vmem:[%s5 + $0x8] sm:$0xff]
    %v58 = vld [vmem:[%s5 + $0x10] sm:$0xff]
    %v59 = vld [vmem:[%s5 + $0x18] sm:$0xff]
    %v60 = vld [vmem:[%s0] sm:$0xff]
    %v61 = vld [vmem:[%s0 + $0x8] sm:$0xff]
    %v62 = vld [vmem:[%s0 + $0x10] sm:$0xff]
    %v63 = vld [vmem:[%s0 + $0x18] sm:$0xff]
    %v64 = vld [vmem:[%s0 + $0x20] sm:$0xff]
    %v65 = vld [vmem:[%s0 + $0x28] sm:$0xff]
    %v66 = vld [vmem:[%s0 + $0x30] sm:$0xff]
    %v67 = vld [vmem:[%s0 + $0x38] sm:$0xff]
    %v68 = vadd.f32 %v60, %v62
    %v69 = vadd.f32 %v68, %v64
    %v70 = vadd.f32 %v69, %v66
    %v71 = vrot.slane %v70, 4
    %v72 = vadd.f32 %v70, %v71
    %v73 = vrot.slane %v72, 2
    %v74 = vadd.f32 %v72, %v73
    %v75 = vrot.slane %v74, 1
    %v76 = vadd.f32 %v74, %v75
    %v77 = vadd.f32 %v61, %v63
    %v78 = vadd.f32 %v77, %v65
    %v79 = vadd.f32 %v78, %v67
    %v80 = vrot.slane %v79, 4
    %v81 = vadd.f32 %v79, %v80
    %v82 = vrot.slane %v81, 2
    %v83 = vadd.f32 %v81, %v82
    %v84 = vrot.slane %v83, 1
    %v85 = vadd.f32 %v83, %v84
    %v86 = vrcp.pop 32.0
    %v87 = vmul.f32 %v76, %v86
    %v88 = vmul.f32 %v85, %v86
    %v89 = vsub.f32 %v60, %v87
    %v90 = vsub.f32 %v61, %v88
    %v91 = vsub.f32 %v62, %v87
    %v92 = vsub.f32 %v63, %v88
    %v93 = vsub.f32 %v64, %v87
    %v94 = vsub.f32 %v65, %v88
    %v95 = vsub.f32 %v66, %v87
    %v96 = vsub.f32 %v67, %v88
    %v97 = vmul.f32 %v89, %v89
    %v98 = vmul.f32 %v90, %v90
    %v99 = vmul.f32 %v91, %v91
    %v100 = vmul.f32 %v92, %v92
    %v101 = vmul.f32 %v93, %v93
    %v102 = vmul.f32 %v94, %v94
    %v103 = vmul.f32 %v95, %v95
    %v104 = vmul.f32 %v96, %v96
    %v105 = vadd.f32 %v97, %v99
    %v106 = vadd.f32 %v105, %v101
    %v107 = vadd.f32 %v106, %v103
    %v108 = vrot.slane %v107, 4
    %v109 = vadd.f32 %v107, %v108
    %v110 = vrot.slane %v109, 2
    %v111 = vadd.f32 %v109, %v110
    %v112 = vrot.slane %v111, 1
    %v113 = vadd.f32 %v111, %v112
    %v114 = vadd.f32 %v98, %v100
    %v115 = vadd.f32 %v114, %v102
    %v116 = vadd.f32 %v115, %v104
    %v117 = vrot.slane %v116, 4
    %v118 = vadd.f32 %v116, %v117
    %v119 = vrot.slane %v118, 2
    %v120 = vadd.f32 %v118, %v119
    %v121 = vrot.slane %v120, 1
    %v122 = vadd.f32 %v120, %v121
    %v123 = vmul.f32 %v113, %v86
    %v124 = vmul.f32 %v122, %v86
    %v125 = vadd.f32 %v123, 1e-05
    %v126 = vadd.f32 %v124, 1e-05
    %v127 = vrsqrt.pop %v125
    %v128 = vrsqrt.pop %v126
    %v129 = vmul.f32 %v89, %v127
    %v130 = vmul.f32 %v90, %v128
    %v131 = vmul.f32 %v91, %v127
    %v132 = vmul.f32 %v92, %v128
    %v133 = vmul.f32 %v93, %v127
    %v134 = vmul.f32 %v94, %v128
    %v135 = vmul.f32 %v95, %v127
    %v136 = vmul.f32 %v96, %v128
    %138 = vset.pattern.permute.xlu0 1
    %139 = vperm.xlu0 %138, %v24
    %v140 = vpop.permute.xlu0 %139
    %143 = vset.pattern.permute.xlu0 1
    %144 = vperm.xlu0 %143, %v25
    %v145 = vpop.permute.xlu0 %144
    %148 = vset.pattern.permute.xlu0 1
    %149 = vperm.xlu0 %148, %v26
    %v150 = vpop.permute.xlu0 %149
    %153 = vset.pattern.permute.xlu0 1
    %154 = vperm.xlu0 %153, %v27
    %v155 = vpop.permute.xlu0 %154
    %v157 = vmul.f32 %v129, %v140
    %v158 = vmul.f32 %v130, %v140
    %v159 = vmul.f32 %v131, %v145
    %v160 = vmul.f32 %v132, %v145
    %v161 = vmul.f32 %v133, %v150
    %v162 = vmul.f32 %v134, %v150
    %v163 = vmul.f32 %v135, %v155
    %v164 = vmul.f32 %v136, %v155
    %165 = vset.pattern.permute.xlu0 2
    %166 = vperm.xlu0 %165, %v24
    %v167 = vpop.permute.xlu0 %166
    %169 = vset.pattern.permute.xlu0 2
    %170 = vperm.xlu0 %169, %v25
    %v171 = vpop.permute.xlu0 %170
    %173 = vset.pattern.permute.xlu0 2
    %174 = vperm.xlu0 %173, %v26
    %v175 = vpop.permute.xlu0 %174
    %177 = vset.pattern.permute.xlu0 2
    %178 = vperm.xlu0 %177, %v27
    %v179 = vpop.permute.xlu0 %178
    %v181 = vadd.f32 %v157, %v167
    %v182 = vadd.f32 %v158, %v167
    %v183 = vadd.f32 %v159, %v171
    %v184 = vadd.f32 %v160, %v171
    %v185 = vadd.f32 %v161, %v175
    %v186 = vadd.f32 %v162, %v175
    %v187 = vadd.f32 %v163, %v179
    %v188 = vadd.f32 %v164, %v179
    %189 = vset.pattern.permute.xlu0 0
    %190 = vperm.xlu0 %189, %v24
    %v191 = vpop.permute.xlu0 %190
    %193 = vset.pattern.permute.xlu0 0
    %194 = vperm.xlu0 %193, %v25
    %v195 = vpop.permute.xlu0 %194
    %197 = vset.pattern.permute.xlu0 0
    %198 = vperm.xlu0 %197, %v26
    %v199 = vpop.permute.xlu0 %198
    %201 = vset.pattern.permute.xlu0 0
    %202 = vperm.xlu0 %201, %v27
    %v203 = vpop.permute.xlu0 %202
    %206 = vset.pattern.permute.xlu0 0
    %207 = vperm.xlu0 %206, %v28
    %v208 = vpop.permute.xlu0 %207
    %211 = vset.pattern.permute.xlu0 0
    %212 = vperm.xlu0 %211, %v29
    %v213 = vpop.permute.xlu0 %212
    %216 = vset.pattern.permute.xlu0 0
    %217 = vperm.xlu0 %216, %v30
    %v218 = vpop.permute.xlu0 %217
    %221 = vset.pattern.permute.xlu0 0
    %222 = vperm.xlu0 %221, %v31
    %v223 = vpop.permute.xlu0 %222
    %226 = vset.pattern.permute.xlu0 0
    %227 = vperm.xlu0 %226, %v32
    %v228 = vpop.permute.xlu0 %227
    %231 = vset.pattern.permute.xlu0 0
    %232 = vperm.xlu0 %231, %v33
    %v233 = vpop.permute.xlu0 %232
    %236 = vset.pattern.permute.xlu0 0
    %237 = vperm.xlu0 %236, %v34
    %v238 = vpop.permute.xlu0 %237
    %241 = vset.pattern.permute.xlu0 0
    %242 = vperm.xlu0 %241, %v35
    %v243 = vpop.permute.xlu0 %242
    %vm245 = vcmask 261120
    %v247 = vsel %vm245, %v36, 0
    %v250 = vsel %vm245, %v37, 0
    %v253 = vsel %vm245, %v38, 0
    %v256 = vsel %vm245, %v39, 0
    %v259 = vsel %vm245, %v40, 0
    %v262 = vsel %vm245, %v41, 0
    %v265 = vsel %vm245, %v42, 0
    %v268 = vsel %vm245, %v43, 0
    %v271 = vsel %vm245, %v44, 0
    %v274 = vsel %vm245, %v45, 0
    %v277 = vsel %vm245, %v46, 0
    %v280 = vsel %vm245, %v47, 0
    %282 = vmatprep.subr.mxu0 %v182
    %283 = vmatpush1.msra.mxu0 %v181
    %284 = vmatprep.subr.mxu0 %v184
    %285 = vmatpush1.msra.mxu0 %v183
    %286 = vmatprep.subr.mxu0 %v186
    %287 = vmatpush1.msra.mxu0 %v185
    %288 = vmatprep.subr.mxu0 %v188
    %289 = vmatpush1.msra.mxu0 %v187
    %290 = vmatprep.subr.mxu0 0.0
    %291 = vmatpush1.msra.mxu0 0.0
    %292 = vmatprep.subr.mxu0 0.0
    %293 = vmatpush1.msra.mxu0 0.0
    %294 = vmatprep.subr.mxu0 0.0
    %295 = vmatpush1.msra.mxu0 0.0
    %296 = vmatprep.subr.mxu0 0.0
    %297 = vmatpush1.msra.mxu0 0.0
    %298 = vmatprep.subr.mxu0 0.0
    %299 = vmatpush1.msra.mxu0 0.0
    %300 = vmatprep.subr.mxu0 0.0
    %301 = vmatpush1.msra.mxu0 0.0
    %302 = vmatprep.subr.mxu0 0.0
    %303 = vmatpush1.msra.mxu0 0.0
    %304 = vmatprep.subr.mxu0 0.0
    %305 = vmatpush1.msra.mxu0 0.0
    %306 = vmatprep.subr.mxu0 0.0
    %307 = vmatpush1.msra.mxu0 0.0
    %308 = vmatprep.subr.mxu0 0.0
    %309 = vmatpush1.msra.mxu0 0.0
    %310 = vmatprep.subr.mxu0 0.0
    %311 = vmatpush1.msra.mxu0 0.0
    %312 = vmatprep.subr.mxu0 0.0
    %313 = vmatpush1.msra.mxu0 0.0
    %314 = vmatprep.subr.mxu0 0.0
    %315 = vmatpush1.msra.mxu0 0.0
    %316 = vmatprep.subr.mxu0 0.0
    %317 = vmatpush1.msra.mxu0 0.0
    %318 = vmatprep.subr.mxu0 0.0
    %319 = vmatpush1.msra.mxu0 0.0
    %320 = vmatprep.subr.mxu0 0.0
    %321 = vmatpush1.msra.mxu0 0.0
    %322 = vmatprep.subr.mxu0 0.0
    %323 = vmatpush1.msra.mxu0 0.0
    %324 = vmatprep.subr.mxu0 0.0
    %325 = vmatpush1.msra.mxu0 0.0
    %326 = vmatprep.subr.mxu0 0.0
    %327 = vmatpush1.msra.mxu0 0.0
    %328 = vmatprep.subr.mxu0 0.0
    %329 = vmatpush1.msra.mxu0 0.0
    %330 = vmatprep.subr.mxu0 0.0
    %331 = vmatpush1.msra.mxu0 0.0
    %332 = vmatprep.subr.mxu0 0.0
    %333 = vmatpush1.msra.mxu0 0.0
    %334 = vmatprep.subr.mxu0 0.0
    %335 = vmatpush1.msra.mxu0 0.0
    %336 = vmatprep.subr.mxu0 0.0
    %337 = vmatpush1.msra.mxu0 0.0
    %338 = vmatprep.subr.mxu0 0.0
    %339 = vmatpush1.msra.mxu0 0.0
    %340 = vmatprep.subr.mxu0 0.0
    %341 = vmatpush1.msra.mxu0 0.0
    %342 = vmatprep.subr.mxu0 0.0
    %343 = vmatpush1.msra.mxu0 0.0
    %344 = vmatprep.subr.mxu0 0.0
    %345 = vmatpush1.msra.mxu0 0.0
    %346 = vmatprep.mubr.f32.mxu0 0.0
    %347 = vmatmul.mubr.f32.gmra.mrb[0].mxu0 %v247
    %v348 = vpop.f32.mrb[0].mxu0
    %v349 = vadd.f32 %v191, %v348
    %v350 = vpop.f32.mrb[0].mxu0
    %v351 = vadd.f32 %v191, %v350
    %352 = vmatprep.mubr.f32.mxu0 0.0
    %353 = vmatmul.mubr.f32.gmra.mrb[0].mxu0 %v250
    %v354 = vpop.f32.mrb[0].mxu0
    %v355 = vadd.f32 %v195, %v354
    %v356 = vpop.f32.mrb[0].mxu0
    %v357 = vadd.f32 %v195, %v356
    %358 = vmatprep.mubr.f32.mxu0 0.0
    %359 = vmatmul.mubr.f32.gmra.mrb[0].mxu0 %v253
    %v360 = vpop.f32.mrb[0].mxu0
    %v361 = vadd.f32 %v199, %v360
    %v362 = vpop.f32.mrb[0].mxu0
    %v363 = vadd.f32 %v199, %v362
    %364 = vmatprep.mubr.f32.mxu0 0.0
    %365 = vmatmul.mubr.f32.gmra.mrb[0].mxu0 %v256
    %v366 = vpop.f32.mrb[0].mxu0
    %v367 = vadd.f32 %v203, %v366
    %v368 = vpop.f32.mrb[0].mxu0
    %v369 = vadd.f32 %v203, %v368
    %370 = vmatprep.mubr.f32.mxu0 0.0
    %371 = vmatmul.mubr.f32.gmra.mrb[0].mxu0 %v259
    %v372 = vpop.f32.mrb[0].mxu0
    %v373 = vadd.f32 %v208, %v372
    %v374 = vpop.f32.mrb[0].mxu0
    %v375 = vadd.f32 %v208, %v374
    %376 = vmatprep.mubr.f32.mxu0 0.0
    %377 = vmatmul.mubr.f32.gmra.mrb[0].mxu0 %v262
    %v378 = vpop.f32.mrb[0].mxu0
    %v379 = vadd.f32 %v213, %v378
    %v380 = vpop.f32.mrb[0].mxu0
    %v381 = vadd.f32 %v213, %v380
    %382 = vmatprep.mubr.f32.mxu0 0.0
    %383 = vmatmul.mubr.f32.gmra.mrb[0].mxu0 %v265
    %v384 = vpop.f32.mrb[0].mxu0
    %v385 = vadd.f32 %v218, %v384
    %v386 = vpop.f32.mrb[0].mxu0
    %v387 = vadd.f32 %v218, %v386
    %388 = vmatprep.mubr.f32.mxu0 0.0
    %389 = vmatmul.mubr.f32.gmra.mrb[0].mxu0 %v268
    %v390 = vpop.f32.mrb[0].mxu0
    %v391 = vadd.f32 %v223, %v390
    %v392 = vpop.f32.mrb[0].mxu0
    %v393 = vadd.f32 %v223, %v392
    %394 = vmatprep.mubr.f32.mxu0 0.0
    %395 = vmatmul.mubr.f32.gmra.mrb[0].mxu0 %v271
    %v396 = vpop.f32.mrb[0].mxu0
    %v397 = vadd.f32 %v228, %v396
    %v398 = vpop.f32.mrb[0].mxu0
    %v399 = vadd.f32 %v228, %v398
    %400 = vmatprep.mubr.f32.mxu0 0.0
    %401 = vmatmul.mubr.f32.gmra.mrb[0].mxu0 %v274
    %v402 = vpop.f32.mrb[0].mxu0
    %v403 = vadd.f32 %v233, %v402
    %v404 = vpop.f32.mrb[0].mxu0
    %v405 = vadd.f32 %v233, %v404
    %406 = vmatprep.mubr.f32.mxu0 0.0
    %407 = vmatmul.mubr.f32.gmra.mrb[0].mxu0 %v277
    %v408 = vpop.f32.mrb[0].mxu0
    %v409 = vadd.f32 %v238, %v408
    %v410 = vpop.f32.mrb[0].mxu0
    %v411 = vadd.f32 %v238, %v410
    %412 = vmatprep.mubr.f32.mxu0 0.0
    %413 = vmatmul.mubr.f32.gmra.mrb[0].mxu0 %v280
    %v414 = vpop.f32.mrb[0].mxu0
    %v415 = vadd.f32 %v243, %v414
    %v416 = vpop.f32.mrb[0].mxu0
    %v417 = vadd.f32 %v243, %v416
    %418 = vdwg.mxu0
    %419 = vxpose.xlu0.b32.start [1/16] %v349, 128
    %420 = vxpose.xlu0.b32.cont [2/16] 0.0, 128
    %421 = vxpose.xlu0.b32.cont [3/16] 0.0, 128
    %422 = vxpose.xlu0.b32.cont [4/16] 0.0, 128
    %423 = vxpose.xlu0.b32.cont [5/16] 0.0, 128
    %424 = vxpose.xlu0.b32.cont [6/16] 0.0, 128
    %425 = vxpose.xlu0.b32.cont [7/16] 0.0, 128
    %426 = vxpose.xlu0.b32.cont [8/16] 0.0, 128
    %427 = vxpose.xlu0.b32.cont [9/16] 0.0, 128
    %428 = vxpose.xlu0.b32.cont [10/16] 0.0, 128
    %429 = vxpose.xlu0.b32.cont [11/16] 0.0, 128
    %430 = vxpose.xlu0.b32.cont [12/16] 0.0, 128
    %431 = vxpose.xlu0.b32.cont [13/16] 0.0, 128
    %432 = vxpose.xlu0.b32.cont [14/16] 0.0, 128
    %433 = vxpose.xlu0.b32.cont [15/16] 0.0, 128
    %434 = vxpose.xlu0.b32.end [16/16] 0.0, 128
    %v435 = vpop.trf.xlu0
    %v436 = vpop.trf.xlu0
    %v437 = vpop.trf.xlu0
    %v438 = vpop.trf.xlu0
    %v439 = vpop.trf.xlu0
    %v440 = vpop.trf.xlu0
    %v441 = vpop.trf.xlu0
    %v442 = vpop.trf.xlu0
    %v443 = vpop.trf.xlu0
    %v444 = vpop.trf.xlu0
    %v445 = vpop.trf.xlu0
    %v446 = vpop.trf.xlu0
    %v447 = vpop.trf.xlu0
    %v448 = vpop.trf.xlu0
    %v449 = vpop.trf.xlu0
    %v450 = vpop.trf.xlu0
    %451 = vxpose.xlu0.b32.start [1/16] %v351, 128
    %452 = vxpose.xlu0.b32.cont [2/16] 0.0, 128
    %453 = vxpose.xlu0.b32.cont [3/16] 0.0, 128
    %454 = vxpose.xlu0.b32.cont [4/16] 0.0, 128
    %455 = vxpose.xlu0.b32.cont [5/16] 0.0, 128
    %456 = vxpose.xlu0.b32.cont [6/16] 0.0, 128
    %457 = vxpose.xlu0.b32.cont [7/16] 0.0, 128
    %458 = vxpose.xlu0.b32.cont [8/16] 0.0, 128
    %459 = vxpose.xlu0.b32.cont [9/16] 0.0, 128
    %460 = vxpose.xlu0.b32.cont [10/16] 0.0, 128
    %461 = vxpose.xlu0.b32.cont [11/16] 0.0, 128
    %462 = vxpose.xlu0.b32.cont [12/16] 0.0, 128
    %463 = vxpose.xlu0.b32.cont [13/16] 0.0, 128
    %464 = vxpose.xlu0.b32.cont [14/16] 0.0, 128
    %465 = vxpose.xlu0.b32.cont [15/16] 0.0, 128
    %466 = vxpose.xlu0.b32.end [16/16] 0.0, 128
    %v467 = vpop.trf.xlu0
    %v468 = vpop.trf.xlu0
    %v469 = vpop.trf.xlu0
    %v470 = vpop.trf.xlu0
    %v471 = vpop.trf.xlu0
    %v472 = vpop.trf.xlu0
    %v473 = vpop.trf.xlu0
    %v474 = vpop.trf.xlu0
    %v475 = vpop.trf.xlu0
    %v476 = vpop.trf.xlu0
    %v477 = vpop.trf.xlu0
    %v478 = vpop.trf.xlu0
    %v479 = vpop.trf.xlu0
    %v480 = vpop.trf.xlu0
    %v481 = vpop.trf.xlu0
    %v482 = vpop.trf.xlu0
    %vm483 = vcmask 64512
    %v485 = vsel %vm483, %v435, 0
    %v488 = vsel %vm483, %v436, 0
    %v491 = vsel %vm483, %v437, 0
    %v494 = vsel %vm483, %v438, 0
    %v497 = vsel %vm483, %v439, 0
    %v500 = vsel %vm483, %v440, 0
    %v503 = vsel %vm483, %v441, 0
    %v506 = vsel %vm483, %v442, 0
    %v509 = vsel %vm483, %v443, 0
    %v512 = vsel %vm483, %v444, 0
    %v515 = vsel %vm483, %v445, 0
    %v518 = vsel %vm483, %v446, 0
    %v521 = vsel %vm483, %v447, 0
    %v524 = vsel %vm483, %v448, 0
    %v527 = vsel %vm483, %v449, 0
    %v530 = vsel %vm483, %v450, 0
    %v533 = vsel %vm483, %v467, 0
    %v536 = vsel %vm483, %v468, 0
    %v539 = vsel %vm483, %v469, 0
    %v542 = vsel %vm483, %v470, 0
    %v545 = vsel %vm483, %v471, 0
    %v548 = vsel %vm483, %v472, 0
    %v551 = vsel %vm483, %v473, 0
    %v554 = vsel %vm483, %v474, 0
    %v557 = vsel %vm483, %v475, 0
    %v560 = vsel %vm483, %v476, 0
    %v563 = vsel %vm483, %v477, 0
    %v566 = vsel %vm483, %v478, 0
    %v569 = vsel %vm483, %v479, 0
    %v572 = vsel %vm483, %v480, 0
    %v575 = vsel %vm483, %v481, 0
    %v578 = vsel %vm483, %v482, 0
    %580 = vmatprep.subr.mxu0 %v375
    %581 = vmatpush1.msra.mxu0 %v373
    %582 = vmatprep.subr.mxu0 0.0
    %583 = vmatpush1.msra.mxu0 0.0
    %584 = vmatprep.subr.mxu0 0.0
    %585 = vmatpush1.msra.mxu0 0.0
    %586 = vmatprep.subr.mxu0 0.0
    %587 = vmatpush1.msra.mxu0 0.0
    %588 = vmatprep.subr.mxu0 0.0
    %589 = vmatpush1.msra.mxu0 0.0
    %590 = vmatprep.subr.mxu0 0.0
    %591 = vmatpush1.msra.mxu0 0.0
    %592 = vmatprep.subr.mxu0 0.0
    %593 = vmatpush1.msra.mxu0 0.0
    %594 = vmatprep.subr.mxu0 0.0
    %595 = vmatpush1.msra.mxu0 0.0
    %596 = vmatprep.subr.mxu0 0.0
    %597 = vmatpush1.msra.mxu0 0.0
    %598 = vmatprep.subr.mxu0 0.0
    %599 = vmatpush1.msra.mxu0 0.0
    %600 = vmatprep.subr.mxu0 0.0
    %601 = vmatpush1.msra.mxu0 0.0
    %602 = vmatprep.subr.mxu0 0.0
    %603 = vmatpush1.msra.mxu0 0.0
    %604 = vmatprep.subr.mxu0 0.0
    %605 = vmatpush1.msra.mxu0 0.0
    %606 = vmatprep.subr.mxu0 0.0
    %607 = vmatpush1.msra.mxu0 0.0
    %608 = vmatprep.subr.mxu0 0.0
    %609 = vmatpush1.msra.mxu0 0.0
    %610 = vmatprep.subr.mxu0 0.0
    %611 = vmatpush1.msra.mxu0 0.0
    %612 = vmatprep.subr.mxu0 0.0
    %613 = vmatpush1.msra.mxu0 0.0
    %614 = vmatprep.subr.mxu0 0.0
    %615 = vmatpush1.msra.mxu0 0.0
    %616 = vmatprep.subr.mxu0 0.0
    %617 = vmatpush1.msra.mxu0 0.0
    %618 = vmatprep.subr.mxu0 0.0
    %619 = vmatpush1.msra.mxu0 0.0
    %620 = vmatprep.subr.mxu0 0.0
    %621 = vmatpush1.msra.mxu0 0.0
    %622 = vmatprep.subr.mxu0 0.0
    %623 = vmatpush1.msra.mxu0 0.0
    %624 = vmatprep.subr.mxu0 0.0
    %625 = vmatpush1.msra.mxu0 0.0
    %626 = vmatprep.subr.mxu0 0.0
    %627 = vmatpush1.msra.mxu0 0.0
    %628 = vmatprep.subr.mxu0 0.0
    %629 = vmatpush1.msra.mxu0 0.0
    %630 = vmatprep.subr.mxu0 0.0
    %631 = vmatpush1.msra.mxu0 0.0
    %632 = vmatprep.subr.mxu0 0.0
    %633 = vmatpush1.msra.mxu0 0.0
    %634 = vmatprep.subr.mxu0 0.0
    %635 = vmatpush1.msra.mxu0 0.0
    %636 = vmatprep.subr.mxu0 0.0
    %637 = vmatpush1.msra.mxu0 0.0
    %638 = vmatprep.subr.mxu0 0.0
    %639 = vmatpush1.msra.mxu0 0.0
    %640 = vmatprep.subr.mxu0 0.0
    %641 = vmatpush1.msra.mxu0 0.0
    %642 = vmatprep.subr.mxu0 0.0
    %643 = vmatpush1.msra.mxu0 0.0
    %644 = vmatprep.mubr.f32.mxu0 0.0
    %645 = vmatmul.mubr.f32.gmra.mrb[0].mxu0 %v485
    %v646 = vpop.f32.mrb[0].mxu0
    %v647 = vadd.f32 0.0, %v646
    %v648 = vpop.f32.mrb[0].mxu0
    %v649 = vadd.f32 0.0, %v648
    %650 = vmatprep.mubr.f32.mxu0 0.0
    %651 = vmatmul.mubr.f32.gmra.mrb[0].mxu0 %v488
    %v652 = vpop.f32.mrb[0].mxu0
    %v653 = vadd.f32 0.0, %v652
    %v654 = vpop.f32.mrb[0].mxu0
    %v655 = vadd.f32 0.0, %v654
    %656 = vmatprep.mubr.f32.mxu0 0.0
    %657 = vmatmul.mubr.f32.gmra.mrb[0].mxu0 %v491
    %v658 = vpop.f32.mrb[0].mxu0
    %v659 = vadd.f32 0.0, %v658
    %v660 = vpop.f32.mrb[0].mxu0
    %v661 = vadd.f32 0.0, %v660
    %662 = vmatprep.mubr.f32.mxu0 0.0
    %663 = vmatmul.mubr.f32.gmra.mrb[0].mxu0 %v494
    %v664 = vpop.f32.mrb[0].mxu0
    %v665 = vadd.f32 0.0, %v664
    %v666 = vpop.f32.mrb[0].mxu0
    %v667 = vadd.f32 0.0, %v666
    %668 = vmatprep.mubr.f32.mxu0 0.0
    %669 = vmatmul.mubr.f32.gmra.mrb[0].mxu0 %v497
    %v670 = vpop.f32.mrb[0].mxu0
    %v671 = vadd.f32 0.0, %v670
    %v672 = vpop.f32.mrb[0].mxu0
    %v673 = vadd.f32 0.0, %v672
    %674 = vmatprep.mubr.f32.mxu0 0.0
    %675 = vmatmul.mubr.f32.gmra.mrb[0].mxu0 %v500
    %v676 = vpop.f32.mrb[0].mxu0
    %v677 = vadd.f32 0.0, %v676
    %v678 = vpop.f32.mrb[0].mxu0
    %v679 = vadd.f32 0.0, %v678
    %680 = vmatprep.mubr.f32.mxu0 0.0
    %681 = vmatmul.mubr.f32.gmra.mrb[0].mxu0 %v503
    %v682 = vpop.f32.mrb[0].mxu0
    %v683 = vadd.f32 0.0, %v682
    %v684 = vpop.f32.mrb[0].mxu0
    %v685 = vadd.f32 0.0, %v684
    %686 = vmatprep.mubr.f32.mxu0 0.0
    %687 = vmatmul.mubr.f32.gmra.mrb[0].mxu0 %v506
    %v688 = vpop.f32.mrb[0].mxu0
    %v689 = vadd.f32 0.0, %v688
    %v690 = vpop.f32.mrb[0].mxu0
    %v691 = vadd.f32 0.0, %v690
    %692 = vmatprep.mubr.f32.mxu0 0.0
    %693 = vmatmul.mubr.f32.gmra.mrb[0].mxu0 %v509
    %v694 = vpop.f32.mrb[0].mxu0
    %v695 = vadd.f32 0.0, %v694
    %v696 = vpop.f32.mrb[0].mxu0
    %v697 = vadd.f32 0.0, %v696
    %698 = vmatprep.mubr.f32.mxu0 0.0
    %699 = vmatmul.mubr.f32.gmra.mrb[0].mxu0 %v512
    %v700 = vpop.f32.mrb[0].mxu0
    %v701 = vadd.f32 0.0, %v700
    %v702 = vpop.f32.mrb[0].mxu0
    %v703 = vadd.f32 0.0, %v702
    %704 = vmatprep.mubr.f32.mxu0 0.0
    %705 = vmatmul.mubr.f32.gmra.mrb[0].mxu0 %v515
    %v706 = vpop.f32.mrb[0].mxu0
    %v707 = vadd.f32 0.0, %v706
    %v708 = vpop.f32.mrb[0].mxu0
    %v709 = vadd.f32 0.0, %v708
    %710 = vmatprep.mubr.f32.mxu0 0.0
    %711 = vmatmul.mubr.f32.gmra.mrb[0].mxu0 %v518
    %v712 = vpop.f32.mrb[0].mxu0
    %v713 = vadd.f32 0.0, %v712
    %v714 = vpop.f32.mrb[0].mxu0
    %v715 = vadd.f32 0.0, %v714
    %716 = vmatprep.mubr.f32.mxu0 0.0
    %717 = vmatmul.mubr.f32.gmra.mrb[0].mxu0 %v521
    %v718 = vpop.f32.mrb[0].mxu0
    %v719 = vadd.f32 0.0, %v718
    %v720 = vpop.f32.mrb[0].mxu0
    %v721 = vadd.f32 0.0, %v720
    %722 = vmatprep.mubr.f32.mxu0 0.0
    %723 = vmatmul.mubr.f32.gmra.mrb[0].mxu0 %v524
    %v724 = vpop.f32.mrb[0].mxu0
    %v725 = vadd.f32 0.0, %v724
    %v726 = vpop.f32.mrb[0].mxu0
    %v727 = vadd.f32 0.0, %v726
    %728 = vmatprep.mubr.f32.mxu0 0.0
    %729 = vmatmul.mubr.f32.gmra.mrb[0].mxu0 %v527
    %v730 = vpop.f32.mrb[0].mxu0
    %v731 = vadd.f32 0.0, %v730
    %v732 = vpop.f32.mrb[0].mxu0
    %v733 = vadd.f32 0.0, %v732
    %734 = vmatprep.mubr.f32.mxu0 0.0
    %735 = vmatmul.mubr.f32.gmra.mrb[0].mxu0 %v530
    %v736 = vpop.f32.mrb[0].mxu0
    %v737 = vadd.f32 0.0, %v736
    %v738 = vpop.f32.mrb[0].mxu0
    %v739 = vadd.f32 0.0, %v738
    %740 = vmatprep.mubr.f32.mxu0 0.0
    %741 = vmatmul.mubr.f32.gmra.mrb[0].mxu0 %v533
    %v742 = vpop.f32.mrb[0].mxu0
    %v743 = vadd.f32 0.0, %v742
    %v744 = vpop.f32.mrb[0].mxu0
    %v745 = vadd.f32 0.0, %v744
    %746 = vmatprep.mubr.f32.mxu0 0.0
    %747 = vmatmul.mubr.f32.gmra.mrb[0].mxu0 %v536
    %v748 = vpop.f32.mrb[0].mxu0
    %v749 = vadd.f32 0.0, %v748
    %v750 = vpop.f32.mrb[0].mxu0
    %v751 = vadd.f32 0.0, %v750
    %752 = vmatprep.mubr.f32.mxu0 0.0
    %753 = vmatmul.mubr.f32.gmra.mrb[0].mxu0 %v539
    %v754 = vpop.f32.mrb[0].mxu0
    %v755 = vadd.f32 0.0, %v754
    %v756 = vpop.f32.mrb[0].mxu0
    %v757 = vadd.f32 0.0, %v756
    %758 = vmatprep.mubr.f32.mxu0 0.0
    %759 = vmatmul.mubr.f32.gmra.mrb[0].mxu0 %v542
    %v760 = vpop.f32.mrb[0].mxu0
    %v761 = vadd.f32 0.0, %v760
    %v762 = vpop.f32.mrb[0].mxu0
    %v763 = vadd.f32 0.0, %v762
    %764 = vmatprep.mubr.f32.mxu0 0.0
    %765 = vmatmul.mubr.f32.gmra.mrb[0].mxu0 %v545
    %v766 = vpop.f32.mrb[0].mxu0
    %v767 = vadd.f32 0.0, %v766
    %v768 = vpop.f32.mrb[0].mxu0
    %v769 = vadd.f32 0.0, %v768
    %770 = vmatprep.mubr.f32.mxu0 0.0
    %771 = vmatmul.mubr.f32.gmra.mrb[0].mxu0 %v548
    %v772 = vpop.f32.mrb[0].mxu0
    %v773 = vadd.f32 0.0, %v772
    %v774 = vpop.f32.mrb[0].mxu0
    %v775 = vadd.f32 0.0, %v774
    %776 = vmatprep.mubr.f32.mxu0 0.0
    %777 = vmatmul.mubr.f32.gmra.mrb[0].mxu0 %v551
    %v778 = vpop.f32.mrb[0].mxu0
    %v779 = vadd.f32 0.0, %v778
    %v780 = vpop.f32.mrb[0].mxu0
    %v781 = vadd.f32 0.0, %v780
    %782 = vmatprep.mubr.f32.mxu0 0.0
    %783 = vmatmul.mubr.f32.gmra.mrb[0].mxu0 %v554
    %v784 = vpop.f32.mrb[0].mxu0
    %v785 = vadd.f32 0.0, %v784
    %v786 = vpop.f32.mrb[0].mxu0
    %v787 = vadd.f32 0.0, %v786
    %788 = vmatprep.mubr.f32.mxu0 0.0
    %789 = vmatmul.mubr.f32.gmra.mrb[0].mxu0 %v557
    %v790 = vpop.f32.mrb[0].mxu0
    %v791 = vadd.f32 0.0, %v790
    %v792 = vpop.f32.mrb[0].mxu0
    %v793 = vadd.f32 0.0, %v792
    %794 = vmatprep.mubr.f32.mxu0 0.0
    %795 = vmatmul.mubr.f32.gmra.mrb[0].mxu0 %v560
    %v796 = vpop.f32.mrb[0].mxu0
    %v797 = vadd.f32 0.0, %v796
    %v798 = vpop.f32.mrb[0].mxu0
    %v799 = vadd.f32 0.0, %v798
    %800 = vmatprep.mubr.f32.mxu0 0.0
    %801 = vmatmul.mubr.f32.gmra.mrb[0].mxu0 %v563
    %v802 = vpop.f32.mrb[0].mxu0
    %v803 = vadd.f32 0.0, %v802
    %v804 = vpop.f32.mrb[0].mxu0
    %v805 = vadd.f32 0.0, %v804
    %806 = vmatprep.mubr.f32.mxu0 0.0
    %807 = vmatmul.mubr.f32.gmra.mrb[0].mxu0 %v566
    %v808 = vpop.f32.mrb[0].mxu0
    %v809 = vadd.f32 0.0, %v808
    %v810 = vpop.f32.mrb[0].mxu0
    %v811 = vadd.f32 0.0, %v810
    %812 = vmatprep.mubr.f32.mxu0 0.0
    %813 = vmatmul.mubr.f32.gmra.mrb[0].mxu0 %v569
    %v814 = vpop.f32.mrb[0].mxu0
    %v815 = vadd.f32 0.0, %v814
    %v816 = vpop.f32.mrb[0].mxu0
    %v817 = vadd.f32 0.0, %v816
    %818 = vmatprep.mubr.f32.mxu0 0.0
    %819 = vmatmul.mubr.f32.gmra.mrb[0].mxu0 %v572
    %v820 = vpop.f32.mrb[0].mxu0
    %v821 = vadd.f32 0.0, %v820
    %v822 = vpop.f32.mrb[0].mxu0
    %v823 = vadd.f32 0.0, %v822
    %824 = vmatprep.mubr.f32.mxu0 0.0
    %825 = vmatmul.mubr.f32.gmra.mrb[0].mxu0 %v575
    %v826 = vpop.f32.mrb[0].mxu0
    %v827 = vadd.f32 0.0, %v826
    %v828 = vpop.f32.mrb[0].mxu0
    %v829 = vadd.f32 0.0, %v828
    %830 = vmatprep.mubr.f32.mxu0 0.0
    %831 = vmatmul.mubr.f32.gmra.mrb[0].mxu0 %v578
    %v832 = vpop.f32.mrb[0].mxu0
    %v833 = vadd.f32 0.0, %v832
    %v834 = vpop.f32.mrb[0].mxu0
    %v835 = vadd.f32 0.0, %v834
    %836 = vdwg.mxu0
    %837 = vxpose.xlu0.b32.start [1/16] %v355, 128
    %838 = vxpose.xlu0.b32.cont [2/16] 0.0, 128
    %839 = vxpose.xlu0.b32.cont [3/16] 0.0, 128
    %840 = vxpose.xlu0.b32.cont [4/16] 0.0, 128
    %841 = vxpose.xlu0.b32.cont [5/16] 0.0, 128
    %842 = vxpose.xlu0.b32.cont [6/16] 0.0, 128
    %843 = vxpose.xlu0.b32.cont [7/16] 0.0, 128
    %844 = vxpose.xlu0.b32.cont [8/16] 0.0, 128
    %845 = vxpose.xlu0.b32.cont [9/16] 0.0, 128
    %846 = vxpose.xlu0.b32.cont [10/16] 0.0, 128
    %847 = vxpose.xlu0.b32.cont [11/16] 0.0, 128
    %848 = vxpose.xlu0.b32.cont [12/16] 0.0, 128
    %849 = vxpose.xlu0.b32.cont [13/16] 0.0, 128
    %850 = vxpose.xlu0.b32.cont [14/16] 0.0, 128
    %851 = vxpose.xlu0.b32.cont [15/16] 0.0, 128
    %852 = vxpose.xlu0.b32.end [16/16] 0.0, 128
    %v853 = vpop.trf.xlu0
    %v854 = vpop.trf.xlu0
    %v855 = vpop.trf.xlu0
    %v856 = vpop.trf.xlu0
    %v857 = vpop.trf.xlu0
    %v858 = vpop.trf.xlu0
    %v859 = vpop.trf.xlu0
    %v860 = vpop.trf.xlu0
    %v861 = vpop.trf.xlu0
    %v862 = vpop.trf.xlu0
    %v863 = vpop.trf.xlu0
    %v864 = vpop.trf.xlu0
    %v865 = vpop.trf.xlu0
    %v866 = vpop.trf.xlu0
    %v867 = vpop.trf.xlu0
    %v868 = vpop.trf.xlu0
    %869 = vxpose.xlu0.b32.start [1/16] %v357, 128
    %870 = vxpose.xlu0.b32.cont [2/16] 0.0, 128
    %871 = vxpose.xlu0.b32.cont [3/16] 0.0, 128
    %872 = vxpose.xlu0.b32.cont [4/16] 0.0, 128
    %873 = vxpose.xlu0.b32.cont [5/16] 0.0, 128
    %874 = vxpose.xlu0.b32.cont [6/16] 0.0, 128
    %875 = vxpose.xlu0.b32.cont [7/16] 0.0, 128
    %876 = vxpose.xlu0.b32.cont [8/16] 0.0, 128
    %877 = vxpose.xlu0.b32.cont [9/16] 0.0, 128
    %878 = vxpose.xlu0.b32.cont [10/16] 0.0, 128
    %879 = vxpose.xlu0.b32.cont [11/16] 0.0, 128
    %880 = vxpose.xlu0.b32.cont [12/16] 0.0, 128
    %881 = vxpose.xlu0.b32.cont [13/16] 0.0, 128
    %882 = vxpose.xlu0.b32.cont [14/16] 0.0, 128
    %883 = vxpose.xlu0.b32.cont [15/16] 0.0, 128
    %884 = vxpose.xlu0.b32.end [16/16] 0.0, 128
    %v885 = vpop.trf.xlu0
    %v886 = vpop.trf.xlu0
    %v887 = vpop.trf.xlu0
    %v888 = vpop.trf.xlu0
    %v889 = vpop.trf.xlu0
    %v890 = vpop.trf.xlu0
    %v891 = vpop.trf.xlu0
    %v892 = vpop.trf.xlu0
    %v893 = vpop.trf.xlu0
    %v894 = vpop.trf.xlu0
    %v895 = vpop.trf.xlu0
    %v896 = vpop.trf.xlu0
    %v897 = vpop.trf.xlu0
    %v898 = vpop.trf.xlu0
    %v899 = vpop.trf.xlu0
    %v900 = vpop.trf.xlu0
    %v902 = vsel %vm483, %v853, 0
    %v905 = vsel %vm483, %v854, 0
    %v908 = vsel %vm483, %v855, 0
    %v911 = vsel %vm483, %v856, 0
    %v914 = vsel %vm483, %v857, 0
    %v917 = vsel %vm483, %v858, 0
    %v920 = vsel %vm483, %v859, 0
    %v923 = vsel %vm483, %v860, 0
    %v926 = vsel %vm483, %v861, 0
    %v929 = vsel %vm483, %v862, 0
    %v932 = vsel %vm483, %v863, 0
    %v935 = vsel %vm483, %v864, 0
    %v938 = vsel %vm483, %v865, 0
    %v941 = vsel %vm483, %v866, 0
    %v944 = vsel %vm483, %v867, 0
    %v947 = vsel %vm483, %v868, 0
    %v950 = vsel %vm483, %v885, 0
    %v953 = vsel %vm483, %v886, 0
    %v956 = vsel %vm483, %v887, 0
    %v959 = vsel %vm483, %v888, 0
    %v962 = vsel %vm483, %v889, 0
    %v965 = vsel %vm483, %v890, 0
    %v968 = vsel %vm483, %v891, 0
    %v971 = vsel %vm483, %v892, 0
    %v974 = vsel %vm483, %v893, 0
    %v977 = vsel %vm483, %v894, 0
    %v980 = vsel %vm483, %v895, 0
    %v983 = vsel %vm483, %v896, 0
    %v986 = vsel %vm483, %v897, 0
    %v989 = vsel %vm483, %v898, 0
    %v992 = vsel %vm483, %v899, 0
    %v995 = vsel %vm483, %v900, 0
    %997 = vmatprep.subr.mxu0 %v381
    %998 = vmatpush1.msra.mxu0 %v379
    %999 = vmatprep.subr.mxu0 0.0
    %1000 = vmatpush1.msra.mxu0 0.0
    %1001 = vmatprep.subr.mxu0 0.0
    %1002 = vmatpush1.msra.mxu0 0.0
    %1003 = vmatprep.subr.mxu0 0.0
    %1004 = vmatpush1.msra.mxu0 0.0
    %1005 = vmatprep.subr.mxu0 0.0
    %1006 = vmatpush1.msra.mxu0 0.0
    %1007 = vmatprep.subr.mxu0 0.0
    %1008 = vmatpush1.msra.mxu0 0.0
    %1009 = vmatprep.subr.mxu0 0.0
    %1010 = vmatpush1.msra.mxu0 0.0
    %1011 = vmatprep.subr.mxu0 0.0
    %1012 = vmatpush1.msra.mxu0 0.0
    %1013 = vmatprep.subr.mxu0 0.0
    %1014 = vmatpush1.msra.mxu0 0.0
    %1015 = vmatprep.subr.mxu0 0.0
    %1016 = vmatpush1.msra.mxu0 0.0
    %1017 = vmatprep.subr.mxu0 0.0
    %1018 = vmatpush1.msra.mxu0 0.0
    %1019 = vmatprep.subr.mxu0 0.0
    %1020 = vmatpush1.msra.mxu0 0.0
    %1021 = vmatprep.subr.mxu0 0.0
    %1022 = vmatpush1.msra.mxu0 0.0
    %1023 = vmatprep.subr.mxu0 0.0
    %1024 = vmatpush1.msra.mxu0 0.0
    %1025 = vmatprep.subr.mxu0 0.0
    %1026 = vmatpush1.msra.mxu0 0.0
    %1027 = vmatprep.subr.mxu0 0.0
    %1028 = vmatpush1.msra.mxu0 0.0
    %1029 = vmatprep.subr.mxu0 0.0
    %1030 = vmatpush1.msra.mxu0 0.0
    %1031 = vmatprep.subr.mxu0 0.0
    %1032 = vmatpush1.msra.mxu0 0.0
    %1033 = vmatprep.subr.mxu0 0.0
    %1034 = vmatpush1.msra.mxu0 0.0
    %1035 = vmatprep.subr.mxu0 0.0
    %1036 = vmatpush1.msra.mxu0 0.0
    %1037 = vmatprep.subr.mxu0 0.0
    %1038 = vmatpush1.msra.mxu0 0.0
    %1039 = vmatprep.subr.mxu0 0.0
    %1040 = vmatpush1.msra.mxu0 0.0
    %1041 = vmatprep.subr.mxu0 0.0
    %1042 = vmatpush1.msra.mxu0 0.0
    %1043 = vmatprep.subr.mxu0 0.0
    %1044 = vmatpush1.msra.mxu0 0.0
    %1045 = vmatprep.subr.mxu0 0.0
    %1046 = vmatpush1.msra.mxu0 0.0
    %1047 = vmatprep.subr.mxu0 0.0
    %1048 = vmatpush1.msra.mxu0 0.0
    %1049 = vmatprep.subr.mxu0 0.0
    %1050 = vmatpush1.msra.mxu0 0.0
    %1051 = vmatprep.subr.mxu0 0.0
    %1052 = vmatpush1.msra.mxu0 0.0
    %1053 = vmatprep.subr.mxu0 0.0
    %1054 = vmatpush1.msra.mxu0 0.0
    %1055 = vmatprep.subr.mxu0 0.0
    %1056 = vmatpush1.msra.mxu0 0.0
    %1057 = vmatprep.subr.mxu0 0.0
    %1058 = vmatpush1.msra.mxu0 0.0
    %1059 = vmatprep.subr.mxu0 0.0
    %1060 = vmatpush1.msra.mxu0 0.0
    %1061 = vmatprep.mubr.f32.mxu0 0.0
    %1062 = vmatmul.mubr.f32.gmra.mrb[0].mxu0 %v902
    %v1063 = vpop.f32.mrb[0].mxu0
    %v1064 = vadd.f32 0.0, %v1063
    %v1065 = vpop.f32.mrb[0].mxu0
    %v1066 = vadd.f32 0.0, %v1065
    %1067 = vmatprep.mubr.f32.mxu0 0.0
    %1068 = vmatmul.mubr.f32.gmra.mrb[0].mxu0 %v905
    %v1069 = vpop.f32.mrb[0].mxu0
    %v1070 = vadd.f32 0.0, %v1069
    %v1071 = vpop.f32.mrb[0].mxu0
    %v1072 = vadd.f32 0.0, %v1071
    %1073 = vmatprep.mubr.f32.mxu0 0.0
    %1074 = vmatmul.mubr.f32.gmra.mrb[0].mxu0 %v908
    %v1075 = vpop.f32.mrb[0].mxu0
    %v1076 = vadd.f32 0.0, %v1075
    %v1077 = vpop.f32.mrb[0].mxu0
    %v1078 = vadd.f32 0.0, %v1077
    %1079 = vmatprep.mubr.f32.mxu0 0.0
    %1080 = vmatmul.mubr.f32.gmra.mrb[0].mxu0 %v911
    %v1081 = vpop.f32.mrb[0].mxu0
    %v1082 = vadd.f32 0.0, %v1081
    %v1083 = vpop.f32.mrb[0].mxu0
    %v1084 = vadd.f32 0.0, %v1083
    %1085 = vmatprep.mubr.f32.mxu0 0.0
    %1086 = vmatmul.mubr.f32.gmra.mrb[0].mxu0 %v914
    %v1087 = vpop.f32.mrb[0].mxu0
    %v1088 = vadd.f32 0.0, %v1087
    %v1089 = vpop.f32.mrb[0].mxu0
    %v1090 = vadd.f32 0.0, %v1089
    %1091 = vmatprep.mubr.f32.mxu0 0.0
    %1092 = vmatmul.mubr.f32.gmra.mrb[0].mxu0 %v917
    %v1093 = vpop.f32.mrb[0].mxu0
    %v1094 = vadd.f32 0.0, %v1093
    %v1095 = vpop.f32.mrb[0].mxu0
    %v1096 = vadd.f32 0.0, %v1095
    %1097 = vmatprep.mubr.f32.mxu0 0.0
    %1098 = vmatmul.mubr.f32.gmra.mrb[0].mxu0 %v920
    %v1099 = vpop.f32.mrb[0].mxu0
    %v1100 = vadd.f32 0.0, %v1099
    %v1101 = vpop.f32.mrb[0].mxu0
    %v1102 = vadd.f32 0.0, %v1101
    %1103 = vmatprep.mubr.f32.mxu0 0.0
    %1104 = vmatmul.mubr.f32.gmra.mrb[0].mxu0 %v923
    %v1105 = vpop.f32.mrb[0].mxu0
    %v1106 = vadd.f32 0.0, %v1105
    %v1107 = vpop.f32.mrb[0].mxu0
    %v1108 = vadd.f32 0.0, %v1107
    %1109 = vmatprep.mubr.f32.mxu0 0.0
    %1110 = vmatmul.mubr.f32.gmra.mrb[0].mxu0 %v926
    %v1111 = vpop.f32.mrb[0].mxu0
    %v1112 = vadd.f32 0.0, %v1111
    %v1113 = vpop.f32.mrb[0].mxu0
    %v1114 = vadd.f32 0.0, %v1113
    %1115 = vmatprep.mubr.f32.mxu0 0.0
    %1116 = vmatmul.mubr.f32.gmra.mrb[0].mxu0 %v929
    %v1117 = vpop.f32.mrb[0].mxu0
    %v1118 = vadd.f32 0.0, %v1117
    %v1119 = vpop.f32.mrb[0].mxu0
    %v1120 = vadd.f32 0.0, %v1119
    %1121 = vmatprep.mubr.f32.mxu0 0.0
    %1122 = vmatmul.mubr.f32.gmra.mrb[0].mxu0 %v932
    %v1123 = vpop.f32.mrb[0].mxu0
    %v1124 = vadd.f32 0.0, %v1123
    %v1125 = vpop.f32.mrb[0].mxu0
    %v1126 = vadd.f32 0.0, %v1125
    %1127 = vmatprep.mubr.f32.mxu0 0.0
    %1128 = vmatmul.mubr.f32.gmra.mrb[0].mxu0 %v935
    %v1129 = vpop.f32.mrb[0].mxu0
    %v1130 = vadd.f32 0.0, %v1129
    %v1131 = vpop.f32.mrb[0].mxu0
    %v1132 = vadd.f32 0.0, %v1131
    %1133 = vmatprep.mubr.f32.mxu0 0.0
    %1134 = vmatmul.mubr.f32.gmra.mrb[0].mxu0 %v938
    %v1135 = vpop.f32.mrb[0].mxu0
    %v1136 = vadd.f32 0.0, %v1135
    %v1137 = vpop.f32.mrb[0].mxu0
    %v1138 = vadd.f32 0.0, %v1137
    %1139 = vmatprep.mubr.f32.mxu0 0.0
    %1140 = vmatmul.mubr.f32.gmra.mrb[0].mxu0 %v941
    %v1141 = vpop.f32.mrb[0].mxu0
    %v1142 = vadd.f32 0.0, %v1141
    %v1143 = vpop.f32.mrb[0].mxu0
    %v1144 = vadd.f32 0.0, %v1143
    %1145 = vmatprep.mubr.f32.mxu0 0.0
    %1146 = vmatmul.mubr.f32.gmra.mrb[0].mxu0 %v944
    %v1147 = vpop.f32.mrb[0].mxu0
    %v1148 = vadd.f32 0.0, %v1147
    %v1149 = vpop.f32.mrb[0].mxu0
    %v1150 = vadd.f32 0.0, %v1149
    %1151 = vmatprep.mubr.f32.mxu0 0.0
    %1152 = vmatmul.mubr.f32.gmra.mrb[0].mxu0 %v947
    %v1153 = vpop.f32.mrb[0].mxu0
    %v1154 = vadd.f32 0.0, %v1153
    %v1155 = vpop.f32.mrb[0].mxu0
    %v1156 = vadd.f32 0.0, %v1155
    %1157 = vmatprep.mubr.f32.mxu0 0.0
    %1158 = vmatmul.mubr.f32.gmra.mrb[0].mxu0 %v950
    %v1159 = vpop.f32.mrb[0].mxu0
    %v1160 = vadd.f32 0.0, %v1159
    %v1161 = vpop.f32.mrb[0].mxu0
    %v1162 = vadd.f32 0.0, %v1161
    %1163 = vmatprep.mubr.f32.mxu0 0.0
    %1164 = vmatmul.mubr.f32.gmra.mrb[0].mxu0 %v953
    %v1165 = vpop.f32.mrb[0].mxu0
    %v1166 = vadd.f32 0.0, %v1165
    %v1167 = vpop.f32.mrb[0].mxu0
    %v1168 = vadd.f32 0.0, %v1167
    %1169 = vmatprep.mubr.f32.mxu0 0.0
    %1170 = vmatmul.mubr.f32.gmra.mrb[0].mxu0 %v956
    %v1171 = vpop.f32.mrb[0].mxu0
    %v1172 = vadd.f32 0.0, %v1171
    %v1173 = vpop.f32.mrb[0].mxu0
    %v1174 = vadd.f32 0.0, %v1173
    %1175 = vmatprep.mubr.f32.mxu0 0.0
    %1176 = vmatmul.mubr.f32.gmra.mrb[0].mxu0 %v959
    %v1177 = vpop.f32.mrb[0].mxu0
    %v1178 = vadd.f32 0.0, %v1177
    %v1179 = vpop.f32.mrb[0].mxu0
    %v1180 = vadd.f32 0.0, %v1179
    %1181 = vmatprep.mubr.f32.mxu0 0.0
    %1182 = vmatmul.mubr.f32.gmra.mrb[0].mxu0 %v962
    %v1183 = vpop.f32.mrb[0].mxu0
    %v1184 = vadd.f32 0.0, %v1183
    %v1185 = vpop.f32.mrb[0].mxu0
    %v1186 = vadd.f32 0.0, %v1185
    %1187 = vmatprep.mubr.f32.mxu0 0.0
    %1188 = vmatmul.mubr.f32.gmra.mrb[0].mxu0 %v965
    %v1189 = vpop.f32.mrb[0].mxu0
    %v1190 = vadd.f32 0.0, %v1189
    %v1191 = vpop.f32.mrb[0].mxu0
    %v1192 = vadd.f32 0.0, %v1191
    %1193 = vmatprep.mubr.f32.mxu0 0.0
    %1194 = vmatmul.mubr.f32.gmra.mrb[0].mxu0 %v968
    %v1195 = vpop.f32.mrb[0].mxu0
    %v1196 = vadd.f32 0.0, %v1195
    %v1197 = vpop.f32.mrb[0].mxu0
    %v1198 = vadd.f32 0.0, %v1197
    %1199 = vmatprep.mubr.f32.mxu0 0.0
    %1200 = vmatmul.mubr.f32.gmra.mrb[0].mxu0 %v971
    %v1201 = vpop.f32.mrb[0].mxu0
    %v1202 = vadd.f32 0.0, %v1201
    %v1203 = vpop.f32.mrb[0].mxu0
    %v1204 = vadd.f32 0.0, %v1203
    %1205 = vmatprep.mubr.f32.mxu0 0.0
    %1206 = vmatmul.mubr.f32.gmra.mrb[0].mxu0 %v974
    %v1207 = vpop.f32.mrb[0].mxu0
    %v1208 = vadd.f32 0.0, %v1207
    %v1209 = vpop.f32.mrb[0].mxu0
    %v1210 = vadd.f32 0.0, %v1209
    %1211 = vmatprep.mubr.f32.mxu0 0.0
    %1212 = vmatmul.mubr.f32.gmra.mrb[0].mxu0 %v977
    %v1213 = vpop.f32.mrb[0].mxu0
    %v1214 = vadd.f32 0.0, %v1213
    %v1215 = vpop.f32.mrb[0].mxu0
    %v1216 = vadd.f32 0.0, %v1215
    %1217 = vmatprep.mubr.f32.mxu0 0.0
    %1218 = vmatmul.mubr.f32.gmra.mrb[0].mxu0 %v980
    %v1219 = vpop.f32.mrb[0].mxu0
    %v1220 = vadd.f32 0.0, %v1219
    %v1221 = vpop.f32.mrb[0].mxu0
    %v1222 = vadd.f32 0.0, %v1221
    %1223 = vmatprep.mubr.f32.mxu0 0.0
    %1224 = vmatmul.mubr.f32.gmra.mrb[0].mxu0 %v983
    %v1225 = vpop.f32.mrb[0].mxu0
    %v1226 = vadd.f32 0.0, %v1225
    %v1227 = vpop.f32.mrb[0].mxu0
    %v1228 = vadd.f32 0.0, %v1227
    %1229 = vmatprep.mubr.f32.mxu0 0.0
    %1230 = vmatmul.mubr.f32.gmra.mrb[0].mxu0 %v986
    %v1231 = vpop.f32.mrb[0].mxu0
    %v1232 = vadd.f32 0.0, %v1231
    %v1233 = vpop.f32.mrb[0].mxu0
    %v1234 = vadd.f32 0.0, %v1233
    %1235 = vmatprep.mubr.f32.mxu0 0.0
    %1236 = vmatmul.mubr.f32.gmra.mrb[0].mxu0 %v989
    %v1237 = vpop.f32.mrb[0].mxu0
    %v1238 = vadd.f32 0.0, %v1237
    %v1239 = vpop.f32.mrb[0].mxu0
    %v1240 = vadd.f32 0.0, %v1239
    %1241 = vmatprep.mubr.f32.mxu0 0.0
    %1242 = vmatmul.mubr.f32.gmra.mrb[0].mxu0 %v992
    %v1243 = vpop.f32.mrb[0].mxu0
    %v1244 = vadd.f32 0.0, %v1243
    %v1245 = vpop.f32.mrb[0].mxu0
    %v1246 = vadd.f32 0.0, %v1245
    %1247 = vmatprep.mubr.f32.mxu0 0.0
    %1248 = vmatmul.mubr.f32.gmra.mrb[0].mxu0 %v995
    %v1249 = vpop.f32.mrb[0].mxu0
    %v1250 = vadd.f32 0.0, %v1249
    %v1251 = vpop.f32.mrb[0].mxu0
    %v1252 = vadd.f32 0.0, %v1251
    %1253 = vdwg.mxu0
    %1254 = vxpose.xlu0.b32.start [1/16] %v361, 128
    %1255 = vxpose.xlu0.b32.cont [2/16] 0.0, 128
    %1256 = vxpose.xlu0.b32.cont [3/16] 0.0, 128
    %1257 = vxpose.xlu0.b32.cont [4/16] 0.0, 128
    %1258 = vxpose.xlu0.b32.cont [5/16] 0.0, 128
    %1259 = vxpose.xlu0.b32.cont [6/16] 0.0, 128
    %1260 = vxpose.xlu0.b32.cont [7/16] 0.0, 128
    %1261 = vxpose.xlu0.b32.cont [8/16] 0.0, 128
    %1262 = vxpose.xlu0.b32.cont [9/16] 0.0, 128
    %1263 = vxpose.xlu0.b32.cont [10/16] 0.0, 128
    %1264 = vxpose.xlu0.b32.cont [11/16] 0.0, 128
    %1265 = vxpose.xlu0.b32.cont [12/16] 0.0, 128
    %1266 = vxpose.xlu0.b32.cont [13/16] 0.0, 128
    %1267 = vxpose.xlu0.b32.cont [14/16] 0.0, 128
    %1268 = vxpose.xlu0.b32.cont [15/16] 0.0, 128
    %1269 = vxpose.xlu0.b32.end [16/16] 0.0, 128
    %v1270 = vpop.trf.xlu0
    %v1271 = vpop.trf.xlu0
    %v1272 = vpop.trf.xlu0
    %v1273 = vpop.trf.xlu0
    %v1274 = vpop.trf.xlu0
    %v1275 = vpop.trf.xlu0
    %v1276 = vpop.trf.xlu0
    %v1277 = vpop.trf.xlu0
    %v1278 = vpop.trf.xlu0
    %v1279 = vpop.trf.xlu0
    %v1280 = vpop.trf.xlu0
    %v1281 = vpop.trf.xlu0
    %v1282 = vpop.trf.xlu0
    %v1283 = vpop.trf.xlu0
    %v1284 = vpop.trf.xlu0
    %v1285 = vpop.trf.xlu0
    %1286 = vxpose.xlu0.b32.start [1/16] %v363, 128
    %1287 = vxpose.xlu0.b32.cont [2/16] 0.0, 128
    %1288 = vxpose.xlu0.b32.cont [3/16] 0.0, 128
    %1289 = vxpose.xlu0.b32.cont [4/16] 0.0, 128
    %1290 = vxpose.xlu0.b32.cont [5/16] 0.0, 128
    %1291 = vxpose.xlu0.b32.cont [6/16] 0.0, 128
    %1292 = vxpose.xlu0.b32.cont [7/16] 0.0, 128
    %1293 = vxpose.xlu0.b32.cont [8/16] 0.0, 128
    %1294 = vxpose.xlu0.b32.cont [9/16] 0.0, 128
    %1295 = vxpose.xlu0.b32.cont [10/16] 0.0, 128
    %1296 = vxpose.xlu0.b32.cont [11/16] 0.0, 128
    %1297 = vxpose.xlu0.b32.cont [12/16] 0.0, 128
    %1298 = vxpose.xlu0.b32.cont [13/16] 0.0, 128
    %1299 = vxpose.xlu0.b32.cont [14/16] 0.0, 128
    %1300 = vxpose.xlu0.b32.cont [15/16] 0.0, 128
    %1301 = vxpose.xlu0.b32.end [16/16] 0.0, 128
    %v1302 = vpop.trf.xlu0
    %v1303 = vpop.trf.xlu0
    %v1304 = vpop.trf.xlu0
    %v1305 = vpop.trf.xlu0
    %v1306 = vpop.trf.xlu0
    %v1307 = vpop.trf.xlu0
    %v1308 = vpop.trf.xlu0
    %v1309 = vpop.trf.xlu0
    %v1310 = vpop.trf.xlu0
    %v1311 = vpop.trf.xlu0
    %v1312 = vpop.trf.xlu0
    %v1313 = vpop.trf.xlu0
    %v1314 = vpop.trf.xlu0
    %v1315 = vpop.trf.xlu0
    %v1316 = vpop.trf.xlu0
    %v1317 = vpop.trf.xlu0
    %v1319 = vsel %vm483, %v1270, 0
    %v1322 = vsel %vm483, %v1271, 0
    %v1325 = vsel %vm483, %v1272, 0
    %v1328 = vsel %vm483, %v1273, 0
    %v1331 = vsel %vm483, %v1274, 0
    %v1334 = vsel %vm483, %v1275, 0
    %v1337 = vsel %vm483, %v1276, 0
    %v1340 = vsel %vm483, %v1277, 0
    %v1343 = vsel %vm483, %v1278, 0
    %v1346 = vsel %vm483, %v1279, 0
    %v1349 = vsel %vm483, %v1280, 0
    %v1352 = vsel %vm483, %v1281, 0
    %v1355 = vsel %vm483, %v1282, 0
    %v1358 = vsel %vm483, %v1283, 0
    %v1361 = vsel %vm483, %v1284, 0
    %v1364 = vsel %vm483, %v1285, 0
    %v1367 = vsel %vm483, %v1302, 0
    %v1370 = vsel %vm483, %v1303, 0
    %v1373 = vsel %vm483, %v1304, 0
    %v1376 = vsel %vm483, %v1305, 0
    %v1379 = vsel %vm483, %v1306, 0
    %v1382 = vsel %vm483, %v1307, 0
    %v1385 = vsel %vm483, %v1308, 0
    %v1388 = vsel %vm483, %v1309, 0
    %v1391 = vsel %vm483, %v1310, 0
    %v1394 = vsel %vm483, %v1311, 0
    %v1397 = vsel %vm483, %v1312, 0
    %v1400 = vsel %vm483, %v1313, 0
    %v1403 = vsel %vm483, %v1314, 0
    %v1406 = vsel %vm483, %v1315, 0
    %v1409 = vsel %vm483, %v1316, 0
    %v1412 = vsel %vm483, %v1317, 0
    %1414 = vmatprep.subr.mxu0 %v387
    %1415 = vmatpush1.msra.mxu0 %v385
    %1416 = vmatprep.subr.mxu0 0.0
    %1417 = vmatpush1.msra.mxu0 0.0
    %1418 = vmatprep.subr.mxu0 0.0
    %1419 = vmatpush1.msra.mxu0 0.0
    %1420 = vmatprep.subr.mxu0 0.0
    %1421 = vmatpush1.msra.mxu0 0.0
    %1422 = vmatprep.subr.mxu0 0.0
    %1423 = vmatpush1.msra.mxu0 0.0
    %1424 = vmatprep.subr.mxu0 0.0
    %1425 = vmatpush1.msra.mxu0 0.0
    %1426 = vmatprep.subr.mxu0 0.0
    %1427 = vmatpush1.msra.mxu0 0.0
    %1428 = vmatprep.subr.mxu0 0.0
    %1429 = vmatpush1.msra.mxu0 0.0
    %1430 = vmatprep.subr.mxu0 0.0
    %1431 = vmatpush1.msra.mxu0 0.0
    %1432 = vmatprep.subr.mxu0 0.0
    %1433 = vmatpush1.msra.mxu0 0.0
    %1434 = vmatprep.subr.mxu0 0.0
    %1435 = vmatpush1.msra.mxu0 0.0
    %1436 = vmatprep.subr.mxu0 0.0
    %1437 = vmatpush1.msra.mxu0 0.0
    %1438 = vmatprep.subr.mxu0 0.0
    %1439 = vmatpush1.msra.mxu0 0.0
    %1440 = vmatprep.subr.mxu0 0.0
    %1441 = vmatpush1.msra.mxu0 0.0
    %1442 = vmatprep.subr.mxu0 0.0
    %1443 = vmatpush1.msra.mxu0 0.0
    %1444 = vmatprep.subr.mxu0 0.0
    %1445 = vmatpush1.msra.mxu0 0.0
    %1446 = vmatprep.subr.mxu0 0.0
    %1447 = vmatpush1.msra.mxu0 0.0
    %1448 = vmatprep.subr.mxu0 0.0
    %1449 = vmatpush1.msra.mxu0 0.0
    %1450 = vmatprep.subr.mxu0 0.0
    %1451 = vmatpush1.msra.mxu0 0.0
    %1452 = vmatprep.subr.mxu0 0.0
    %1453 = vmatpush1.msra.mxu0 0.0
    %1454 = vmatprep.subr.mxu0 0.0
    %1455 = vmatpush1.msra.mxu0 0.0
    %1456 = vmatprep.subr.mxu0 0.0
    %1457 = vmatpush1.msra.mxu0 0.0
    %1458 = vmatprep.subr.mxu0 0.0
    %1459 = vmatpush1.msra.mxu0 0.0
    %1460 = vmatprep.subr.mxu0 0.0
    %1461 = vmatpush1.msra.mxu0 0.0
    %1462 = vmatprep.subr.mxu0 0.0
    %1463 = vmatpush1.msra.mxu0 0.0
    %1464 = vmatprep.subr.mxu0 0.0
    %1465 = vmatpush1.msra.mxu0 0.0
    %1466 = vmatprep.subr.mxu0 0.0
    %1467 = vmatpush1.msra.mxu0 0.0
    %1468 = vmatprep.subr.mxu0 0.0
    %1469 = vmatpush1.msra.mxu0 0.0
    %1470 = vmatprep.subr.mxu0 0.0
    %1471 = vmatpush1.msra.mxu0 0.0
    %1472 = vmatprep.subr.mxu0 0.0
    %1473 = vmatpush1.msra.mxu0 0.0
    %1474 = vmatprep.subr.mxu0 0.0
    %1475 = vmatpush1.msra.mxu0 0.0
    %1476 = vmatprep.subr.mxu0 0.0
    %1477 = vmatpush1.msra.mxu0 0.0
    %1478 = vmatprep.mubr.f32.mxu0 0.0
    %1479 = vmatmul.mubr.f32.gmra.mrb[0].mxu0 %v1319
    %v1480 = vpop.f32.mrb[0].mxu0
    %v1481 = vadd.f32 0.0, %v1480
    %v1482 = vpop.f32.mrb[0].mxu0
    %v1483 = vadd.f32 0.0, %v1482
    %1484 = vmatprep.mubr.f32.mxu0 0.0
    %1485 = vmatmul.mubr.f32.gmra.mrb[0].mxu0 %v1322
    %v1486 = vpop.f32.mrb[0].mxu0
    %v1487 = vadd.f32 0.0, %v1486
    %v1488 = vpop.f32.mrb[0].mxu0
    %v1489 = vadd.f32 0.0, %v1488
    %1490 = vmatprep.mubr.f32.mxu0 0.0
    %1491 = vmatmul.mubr.f32.gmra.mrb[0].mxu0 %v1325
    %v1492 = vpop.f32.mrb[0].mxu0
    %v1493 = vadd.f32 0.0, %v1492
    %v1494 = vpop.f32.mrb[0].mxu0
    %v1495 = vadd.f32 0.0, %v1494
    %1496 = vmatprep.mubr.f32.mxu0 0.0
    %1497 = vmatmul.mubr.f32.gmra.mrb[0].mxu0 %v1328
    %v1498 = vpop.f32.mrb[0].mxu0
    %v1499 = vadd.f32 0.0, %v1498
    %v1500 = vpop.f32.mrb[0].mxu0
    %v1501 = vadd.f32 0.0, %v1500
    %1502 = vmatprep.mubr.f32.mxu0 0.0
    %1503 = vmatmul.mubr.f32.gmra.mrb[0].mxu0 %v1331
    %v1504 = vpop.f32.mrb[0].mxu0
    %v1505 = vadd.f32 0.0, %v1504
    %v1506 = vpop.f32.mrb[0].mxu0
    %v1507 = vadd.f32 0.0, %v1506
    %1508 = vmatprep.mubr.f32.mxu0 0.0
    %1509 = vmatmul.mubr.f32.gmra.mrb[0].mxu0 %v1334
    %v1510 = vpop.f32.mrb[0].mxu0
    %v1511 = vadd.f32 0.0, %v1510
    %v1512 = vpop.f32.mrb[0].mxu0
    %v1513 = vadd.f32 0.0, %v1512
    %1514 = vmatprep.mubr.f32.mxu0 0.0
    %1515 = vmatmul.mubr.f32.gmra.mrb[0].mxu0 %v1337
    %v1516 = vpop.f32.mrb[0].mxu0
    %v1517 = vadd.f32 0.0, %v1516
    %v1518 = vpop.f32.mrb[0].mxu0
    %v1519 = vadd.f32 0.0, %v1518
    %1520 = vmatprep.mubr.f32.mxu0 0.0
    %1521 = vmatmul.mubr.f32.gmra.mrb[0].mxu0 %v1340
    %v1522 = vpop.f32.mrb[0].mxu0
    %v1523 = vadd.f32 0.0, %v1522
    %v1524 = vpop.f32.mrb[0].mxu0
    %v1525 = vadd.f32 0.0, %v1524
    %1526 = vmatprep.mubr.f32.mxu0 0.0
    %1527 = vmatmul.mubr.f32.gmra.mrb[0].mxu0 %v1343
    %v1528 = vpop.f32.mrb[0].mxu0
    %v1529 = vadd.f32 0.0, %v1528
    %v1530 = vpop.f32.mrb[0].mxu0
    %v1531 = vadd.f32 0.0, %v1530
    %1532 = vmatprep.mubr.f32.mxu0 0.0
    %1533 = vmatmul.mubr.f32.gmra.mrb[0].mxu0 %v1346
    %v1534 = vpop.f32.mrb[0].mxu0
    %v1535 = vadd.f32 0.0, %v1534
    %v1536 = vpop.f32.mrb[0].mxu0
    %v1537 = vadd.f32 0.0, %v1536
    %1538 = vmatprep.mubr.f32.mxu0 0.0
    %1539 = vmatmul.mubr.f32.gmra.mrb[0].mxu0 %v1349
    %v1540 = vpop.f32.mrb[0].mxu0
    %v1541 = vadd.f32 0.0, %v1540
    %v1542 = vpop.f32.mrb[0].mxu0
    %v1543 = vadd.f32 0.0, %v1542
    %1544 = vmatprep.mubr.f32.mxu0 0.0
    %1545 = vmatmul.mubr.f32.gmra.mrb[0].mxu0 %v1352
    %v1546 = vpop.f32.mrb[0].mxu0
    %v1547 = vadd.f32 0.0, %v1546
    %v1548 = vpop.f32.mrb[0].mxu0
    %v1549 = vadd.f32 0.0, %v1548
    %1550 = vmatprep.mubr.f32.mxu0 0.0
    %1551 = vmatmul.mubr.f32.gmra.mrb[0].mxu0 %v1355
    %v1552 = vpop.f32.mrb[0].mxu0
    %v1553 = vadd.f32 0.0, %v1552
    %v1554 = vpop.f32.mrb[0].mxu0
    %v1555 = vadd.f32 0.0, %v1554
    %1556 = vmatprep.mubr.f32.mxu0 0.0
    %1557 = vmatmul.mubr.f32.gmra.mrb[0].mxu0 %v1358
    %v1558 = vpop.f32.mrb[0].mxu0
    %v1559 = vadd.f32 0.0, %v1558
    %v1560 = vpop.f32.mrb[0].mxu0
    %v1561 = vadd.f32 0.0, %v1560
    %1562 = vmatprep.mubr.f32.mxu0 0.0
    %1563 = vmatmul.mubr.f32.gmra.mrb[0].mxu0 %v1361
    %v1564 = vpop.f32.mrb[0].mxu0
    %v1565 = vadd.f32 0.0, %v1564
    %v1566 = vpop.f32.mrb[0].mxu0
    %v1567 = vadd.f32 0.0, %v1566
    %1568 = vmatprep.mubr.f32.mxu0 0.0
    %1569 = vmatmul.mubr.f32.gmra.mrb[0].mxu0 %v1364
    %v1570 = vpop.f32.mrb[0].mxu0
    %v1571 = vadd.f32 0.0, %v1570
    %v1572 = vpop.f32.mrb[0].mxu0
    %v1573 = vadd.f32 0.0, %v1572
    %1574 = vmatprep.mubr.f32.mxu0 0.0
    %1575 = vmatmul.mubr.f32.gmra.mrb[0].mxu0 %v1367
    %v1576 = vpop.f32.mrb[0].mxu0
    %v1577 = vadd.f32 0.0, %v1576
    %v1578 = vpop.f32.mrb[0].mxu0
    %v1579 = vadd.f32 0.0, %v1578
    %1580 = vmatprep.mubr.f32.mxu0 0.0
    %1581 = vmatmul.mubr.f32.gmra.mrb[0].mxu0 %v1370
    %v1582 = vpop.f32.mrb[0].mxu0
    %v1583 = vadd.f32 0.0, %v1582
    %v1584 = vpop.f32.mrb[0].mxu0
    %v1585 = vadd.f32 0.0, %v1584
    %1586 = vmatprep.mubr.f32.mxu0 0.0
    %1587 = vmatmul.mubr.f32.gmra.mrb[0].mxu0 %v1373
    %v1588 = vpop.f32.mrb[0].mxu0
    %v1589 = vadd.f32 0.0, %v1588
    %v1590 = vpop.f32.mrb[0].mxu0
    %v1591 = vadd.f32 0.0, %v1590
    %1592 = vmatprep.mubr.f32.mxu0 0.0
    %1593 = vmatmul.mubr.f32.gmra.mrb[0].mxu0 %v1376
    %v1594 = vpop.f32.mrb[0].mxu0
    %v1595 = vadd.f32 0.0, %v1594
    %v1596 = vpop.f32.mrb[0].mxu0
    %v1597 = vadd.f32 0.0, %v1596
    %1598 = vmatprep.mubr.f32.mxu0 0.0
    %1599 = vmatmul.mubr.f32.gmra.mrb[0].mxu0 %v1379
    %v1600 = vpop.f32.mrb[0].mxu0
    %v1601 = vadd.f32 0.0, %v1600
    %v1602 = vpop.f32.mrb[0].mxu0
    %v1603 = vadd.f32 0.0, %v1602
    %1604 = vmatprep.mubr.f32.mxu0 0.0
    %1605 = vmatmul.mubr.f32.gmra.mrb[0].mxu0 %v1382
    %v1606 = vpop.f32.mrb[0].mxu0
    %v1607 = vadd.f32 0.0, %v1606
    %v1608 = vpop.f32.mrb[0].mxu0
    %v1609 = vadd.f32 0.0, %v1608
    %1610 = vmatprep.mubr.f32.mxu0 0.0
    %1611 = vmatmul.mubr.f32.gmra.mrb[0].mxu0 %v1385
    %v1612 = vpop.f32.mrb[0].mxu0
    %v1613 = vadd.f32 0.0, %v1612
    %v1614 = vpop.f32.mrb[0].mxu0
    %v1615 = vadd.f32 0.0, %v1614
    %1616 = vmatprep.mubr.f32.mxu0 0.0
    %1617 = vmatmul.mubr.f32.gmra.mrb[0].mxu0 %v1388
    %v1618 = vpop.f32.mrb[0].mxu0
    %v1619 = vadd.f32 0.0, %v1618
    %v1620 = vpop.f32.mrb[0].mxu0
    %v1621 = vadd.f32 0.0, %v1620
    %1622 = vmatprep.mubr.f32.mxu0 0.0
    %1623 = vmatmul.mubr.f32.gmra.mrb[0].mxu0 %v1391
    %v1624 = vpop.f32.mrb[0].mxu0
    %v1625 = vadd.f32 0.0, %v1624
    %v1626 = vpop.f32.mrb[0].mxu0
    %v1627 = vadd.f32 0.0, %v1626
    %1628 = vmatprep.mubr.f32.mxu0 0.0
    %1629 = vmatmul.mubr.f32.gmra.mrb[0].mxu0 %v1394
    %v1630 = vpop.f32.mrb[0].mxu0
    %v1631 = vadd.f32 0.0, %v1630
    %v1632 = vpop.f32.mrb[0].mxu0
    %v1633 = vadd.f32 0.0, %v1632
    %1634 = vmatprep.mubr.f32.mxu0 0.0
    %1635 = vmatmul.mubr.f32.gmra.mrb[0].mxu0 %v1397
    %v1636 = vpop.f32.mrb[0].mxu0
    %v1637 = vadd.f32 0.0, %v1636
    %v1638 = vpop.f32.mrb[0].mxu0
    %v1639 = vadd.f32 0.0, %v1638
    %1640 = vmatprep.mubr.f32.mxu0 0.0
    %1641 = vmatmul.mubr.f32.gmra.mrb[0].mxu0 %v1400
    %v1642 = vpop.f32.mrb[0].mxu0
    %v1643 = vadd.f32 0.0, %v1642
    %v1644 = vpop.f32.mrb[0].mxu0
    %v1645 = vadd.f32 0.0, %v1644
    %1646 = vmatprep.mubr.f32.mxu0 0.0
    %1647 = vmatmul.mubr.f32.gmra.mrb[0].mxu0 %v1403
    %v1648 = vpop.f32.mrb[0].mxu0
    %v1649 = vadd.f32 0.0, %v1648
    %v1650 = vpop.f32.mrb[0].mxu0
    %v1651 = vadd.f32 0.0, %v1650
    %1652 = vmatprep.mubr.f32.mxu0 0.0
    %1653 = vmatmul.mubr.f32.gmra.mrb[0].mxu0 %v1406
    %v1654 = vpop.f32.mrb[0].mxu0
    %v1655 = vadd.f32 0.0, %v1654
    %v1656 = vpop.f32.mrb[0].mxu0
    %v1657 = vadd.f32 0.0, %v1656
    %1658 = vmatprep.mubr.f32.mxu0 0.0
    %1659 = vmatmul.mubr.f32.gmra.mrb[0].mxu0 %v1409
    %v1660 = vpop.f32.mrb[0].mxu0
    %v1661 = vadd.f32 0.0, %v1660
    %v1662 = vpop.f32.mrb[0].mxu0
    %v1663 = vadd.f32 0.0, %v1662
    %1664 = vmatprep.mubr.f32.mxu0 0.0
    %1665 = vmatmul.mubr.f32.gmra.mrb[0].mxu0 %v1412
    %v1666 = vpop.f32.mrb[0].mxu0
    %v1667 = vadd.f32 0.0, %v1666
    %v1668 = vpop.f32.mrb[0].mxu0
    %v1669 = vadd.f32 0.0, %v1668
    %1670 = vdwg.mxu0
    %1671 = vxpose.xlu0.b32.start [1/16] %v367, 128
    %1672 = vxpose.xlu0.b32.cont [2/16] 0.0, 128
    %1673 = vxpose.xlu0.b32.cont [3/16] 0.0, 128
    %1674 = vxpose.xlu0.b32.cont [4/16] 0.0, 128
    %1675 = vxpose.xlu0.b32.cont [5/16] 0.0, 128
    %1676 = vxpose.xlu0.b32.cont [6/16] 0.0, 128
    %1677 = vxpose.xlu0.b32.cont [7/16] 0.0, 128
    %1678 = vxpose.xlu0.b32.cont [8/16] 0.0, 128
    %1679 = vxpose.xlu0.b32.cont [9/16] 0.0, 128
    %1680 = vxpose.xlu0.b32.cont [10/16] 0.0, 128
    %1681 = vxpose.xlu0.b32.cont [11/16] 0.0, 128
    %1682 = vxpose.xlu0.b32.cont [12/16] 0.0, 128
    %1683 = vxpose.xlu0.b32.cont [13/16] 0.0, 128
    %1684 = vxpose.xlu0.b32.cont [14/16] 0.0, 128
    %1685 = vxpose.xlu0.b32.cont [15/16] 0.0, 128
    %1686 = vxpose.xlu0.b32.end [16/16] 0.0, 128
    %v1687 = vpop.trf.xlu0
    %v1688 = vpop.trf.xlu0
    %v1689 = vpop.trf.xlu0
    %v1690 = vpop.trf.xlu0
    %v1691 = vpop.trf.xlu0
    %v1692 = vpop.trf.xlu0
    %v1693 = vpop.trf.xlu0
    %v1694 = vpop.trf.xlu0
    %v1695 = vpop.trf.xlu0
    %v1696 = vpop.trf.xlu0
    %v1697 = vpop.trf.xlu0
    %v1698 = vpop.trf.xlu0
    %v1699 = vpop.trf.xlu0
    %v1700 = vpop.trf.xlu0
    %v1701 = vpop.trf.xlu0
    %v1702 = vpop.trf.xlu0
    %1703 = vxpose.xlu0.b32.start [1/16] %v369, 128
    %1704 = vxpose.xlu0.b32.cont [2/16] 0.0, 128
    %1705 = vxpose.xlu0.b32.cont [3/16] 0.0, 128
    %1706 = vxpose.xlu0.b32.cont [4/16] 0.0, 128
    %1707 = vxpose.xlu0.b32.cont [5/16] 0.0, 128
    %1708 = vxpose.xlu0.b32.cont [6/16] 0.0, 128
    %1709 = vxpose.xlu0.b32.cont [7/16] 0.0, 128
    %1710 = vxpose.xlu0.b32.cont [8/16] 0.0, 128
    %1711 = vxpose.xlu0.b32.cont [9/16] 0.0, 128
    %1712 = vxpose.xlu0.b32.cont [10/16] 0.0, 128
    %1713 = vxpose.xlu0.b32.cont [11/16] 0.0, 128
    %1714 = vxpose.xlu0.b32.cont [12/16] 0.0, 128
    %1715 = vxpose.xlu0.b32.cont [13/16] 0.0, 128
    %1716 = vxpose.xlu0.b32.cont [14/16] 0.0, 128
    %1717 = vxpose.xlu0.b32.cont [15/16] 0.0, 128
    %1718 = vxpose.xlu0.b32.end [16/16] 0.0, 128
    %v1719 = vpop.trf.xlu0
    %v1720 = vpop.trf.xlu0
    %v1721 = vpop.trf.xlu0
    %v1722 = vpop.trf.xlu0
    %v1723 = vpop.trf.xlu0
    %v1724 = vpop.trf.xlu0
    %v1725 = vpop.trf.xlu0
    %v1726 = vpop.trf.xlu0
    %v1727 = vpop.trf.xlu0
    %v1728 = vpop.trf.xlu0
    %v1729 = vpop.trf.xlu0
    %v1730 = vpop.trf.xlu0
    %v1731 = vpop.trf.xlu0
    %v1732 = vpop.trf.xlu0
    %v1733 = vpop.trf.xlu0
    %v1734 = vpop.trf.xlu0
    %v1736 = vsel %vm483, %v1687, 0
    %v1739 = vsel %vm483, %v1688, 0
    %v1742 = vsel %vm483, %v1689, 0
    %v1745 = vsel %vm483, %v1690, 0
    %v1748 = vsel %vm483, %v1691, 0
    %v1751 = vsel %vm483, %v1692, 0
    %v1754 = vsel %vm483, %v1693, 0
    %v1757 = vsel %vm483, %v1694, 0
    %v1760 = vsel %vm483, %v1695, 0
    %v1763 = vsel %vm483, %v1696, 0
    %v1766 = vsel %vm483, %v1697, 0
    %v1769 = vsel %vm483, %v1698, 0
    %v1772 = vsel %vm483, %v1699, 0
    %v1775 = vsel %vm483, %v1700, 0
    %v1778 = vsel %vm483, %v1701, 0
    %v1781 = vsel %vm483, %v1702, 0
    %v1784 = vsel %vm483, %v1719, 0
    %v1787 = vsel %vm483, %v1720, 0
    %v1790 = vsel %vm483, %v1721, 0
    %v1793 = vsel %vm483, %v1722, 0
    %v1796 = vsel %vm483, %v1723, 0
    %v1799 = vsel %vm483, %v1724, 0
    %v1802 = vsel %vm483, %v1725, 0
    %v1805 = vsel %vm483, %v1726, 0
    %v1808 = vsel %vm483, %v1727, 0
    %v1811 = vsel %vm483, %v1728, 0
    %v1814 = vsel %vm483, %v1729, 0
    %v1817 = vsel %vm483, %v1730, 0
    %v1820 = vsel %vm483, %v1731, 0
    %v1823 = vsel %vm483, %v1732, 0
    %v1826 = vsel %vm483, %v1733, 0
    %v1829 = vsel %vm483, %v1734, 0
    %1831 = vmatprep.subr.mxu0 %v393
    %1832 = vmatpush1.msra.mxu0 %v391
    %1833 = vmatprep.subr.mxu0 0.0
    %1834 = vmatpush1.msra.mxu0 0.0
    %1835 = vmatprep.subr.mxu0 0.0
    %1836 = vmatpush1.msra.mxu0 0.0
    %1837 = vmatprep.subr.mxu0 0.0
    %1838 = vmatpush1.msra.mxu0 0.0
    %1839 = vmatprep.subr.mxu0 0.0
    %1840 = vmatpush1.msra.mxu0 0.0
    %1841 = vmatprep.subr.mxu0 0.0
    %1842 = vmatpush1.msra.mxu0 0.0
    %1843 = vmatprep.subr.mxu0 0.0
    %1844 = vmatpush1.msra.mxu0 0.0
    %1845 = vmatprep.subr.mxu0 0.0
    %1846 = vmatpush1.msra.mxu0 0.0
    %1847 = vmatprep.subr.mxu0 0.0
    %1848 = vmatpush1.msra.mxu0 0.0
    %1849 = vmatprep.subr.mxu0 0.0
    %1850 = vmatpush1.msra.mxu0 0.0
    %1851 = vmatprep.subr.mxu0 0.0
    %1852 = vmatpush1.msra.mxu0 0.0
    %1853 = vmatprep.subr.mxu0 0.0
    %1854 = vmatpush1.msra.mxu0 0.0
    %1855 = vmatprep.subr.mxu0 0.0
    %1856 = vmatpush1.msra.mxu0 0.0
    %1857 = vmatprep.subr.mxu0 0.0
    %1858 = vmatpush1.msra.mxu0 0.0
    %1859 = vmatprep.subr.mxu0 0.0
    %1860 = vmatpush1.msra.mxu0 0.0
    %1861 = vmatprep.subr.mxu0 0.0
    %1862 = vmatpush1.msra.mxu0 0.0
    %1863 = vmatprep.subr.mxu0 0.0
    %1864 = vmatpush1.msra.mxu0 0.0
    %1865 = vmatprep.subr.mxu0 0.0
    %1866 = vmatpush1.msra.mxu0 0.0
    %1867 = vmatprep.subr.mxu0 0.0
    %1868 = vmatpush1.msra.mxu0 0.0
    %1869 = vmatprep.subr.mxu0 0.0
    %1870 = vmatpush1.msra.mxu0 0.0
    %1871 = vmatprep.subr.mxu0 0.0
    %1872 = vmatpush1.msra.mxu0 0.0
    %1873 = vmatprep.subr.mxu0 0.0
    %1874 = vmatpush1.msra.mxu0 0.0
    %1875 = vmatprep.subr.mxu0 0.0
    %1876 = vmatpush1.msra.mxu0 0.0
    %1877 = vmatprep.subr.mxu0 0.0
    %1878 = vmatpush1.msra.mxu0 0.0
    %1879 = vmatprep.subr.mxu0 0.0
    %1880 = vmatpush1.msra.mxu0 0.0
    %1881 = vmatprep.subr.mxu0 0.0
    %1882 = vmatpush1.msra.mxu0 0.0
    %1883 = vmatprep.subr.mxu0 0.0
    %1884 = vmatpush1.msra.mxu0 0.0
    %1885 = vmatprep.subr.mxu0 0.0
    %1886 = vmatpush1.msra.mxu0 0.0
    %1887 = vmatprep.subr.mxu0 0.0
    %1888 = vmatpush1.msra.mxu0 0.0
    %1889 = vmatprep.subr.mxu0 0.0
    %1890 = vmatpush1.msra.mxu0 0.0
    %1891 = vmatprep.subr.mxu0 0.0
    %1892 = vmatpush1.msra.mxu0 0.0
    %1893 = vmatprep.subr.mxu0 0.0
    %1894 = vmatpush1.msra.mxu0 0.0
    %1895 = vmatprep.mubr.f32.mxu0 0.0
    %1896 = vmatmul.mubr.f32.gmra.mrb[0].mxu0 %v1736
    %v1897 = vpop.f32.mrb[0].mxu0
    %v1898 = vadd.f32 0.0, %v1897
    %v1899 = vpop.f32.mrb[0].mxu0
    %v1900 = vadd.f32 0.0, %v1899
    %1901 = vmatprep.mubr.f32.mxu0 0.0
    %1902 = vmatmul.mubr.f32.gmra.mrb[0].mxu0 %v1739
    %v1903 = vpop.f32.mrb[0].mxu0
    %v1904 = vadd.f32 0.0, %v1903
    %v1905 = vpop.f32.mrb[0].mxu0
    %v1906 = vadd.f32 0.0, %v1905
    %1907 = vmatprep.mubr.f32.mxu0 0.0
    %1908 = vmatmul.mubr.f32.gmra.mrb[0].mxu0 %v1742
    %v1909 = vpop.f32.mrb[0].mxu0
    %v1910 = vadd.f32 0.0, %v1909
    %v1911 = vpop.f32.mrb[0].mxu0
    %v1912 = vadd.f32 0.0, %v1911
    %1913 = vmatprep.mubr.f32.mxu0 0.0
    %1914 = vmatmul.mubr.f32.gmra.mrb[0].mxu0 %v1745
    %v1915 = vpop.f32.mrb[0].mxu0
    %v1916 = vadd.f32 0.0, %v1915
    %v1917 = vpop.f32.mrb[0].mxu0
    %v1918 = vadd.f32 0.0, %v1917
    %1919 = vmatprep.mubr.f32.mxu0 0.0
    %1920 = vmatmul.mubr.f32.gmra.mrb[0].mxu0 %v1748
    %v1921 = vpop.f32.mrb[0].mxu0
    %v1922 = vadd.f32 0.0, %v1921
    %v1923 = vpop.f32.mrb[0].mxu0
    %v1924 = vadd.f32 0.0, %v1923
    %1925 = vmatprep.mubr.f32.mxu0 0.0
    %1926 = vmatmul.mubr.f32.gmra.mrb[0].mxu0 %v1751
    %v1927 = vpop.f32.mrb[0].mxu0
    %v1928 = vadd.f32 0.0, %v1927
    %v1929 = vpop.f32.mrb[0].mxu0
    %v1930 = vadd.f32 0.0, %v1929
    %1931 = vmatprep.mubr.f32.mxu0 0.0
    %1932 = vmatmul.mubr.f32.gmra.mrb[0].mxu0 %v1754
    %v1933 = vpop.f32.mrb[0].mxu0
    %v1934 = vadd.f32 0.0, %v1933
    %v1935 = vpop.f32.mrb[0].mxu0
    %v1936 = vadd.f32 0.0, %v1935
    %1937 = vmatprep.mubr.f32.mxu0 0.0
    %1938 = vmatmul.mubr.f32.gmra.mrb[0].mxu0 %v1757
    %v1939 = vpop.f32.mrb[0].mxu0
    %v1940 = vadd.f32 0.0, %v1939
    %v1941 = vpop.f32.mrb[0].mxu0
    %v1942 = vadd.f32 0.0, %v1941
    %1943 = vmatprep.mubr.f32.mxu0 0.0
    %1944 = vmatmul.mubr.f32.gmra.mrb[0].mxu0 %v1760
    %v1945 = vpop.f32.mrb[0].mxu0
    %v1946 = vadd.f32 0.0, %v1945
    %v1947 = vpop.f32.mrb[0].mxu0
    %v1948 = vadd.f32 0.0, %v1947
    %1949 = vmatprep.mubr.f32.mxu0 0.0
    %1950 = vmatmul.mubr.f32.gmra.mrb[0].mxu0 %v1763
    %v1951 = vpop.f32.mrb[0].mxu0
    %v1952 = vadd.f32 0.0, %v1951
    %v1953 = vpop.f32.mrb[0].mxu0
    %v1954 = vadd.f32 0.0, %v1953
    %1955 = vmatprep.mubr.f32.mxu0 0.0
    %1956 = vmatmul.mubr.f32.gmra.mrb[0].mxu0 %v1766
    %v1957 = vpop.f32.mrb[0].mxu0
    %v1958 = vadd.f32 0.0, %v1957
    %v1959 = vpop.f32.mrb[0].mxu0
    %v1960 = vadd.f32 0.0, %v1959
    %1961 = vmatprep.mubr.f32.mxu0 0.0
    %1962 = vmatmul.mubr.f32.gmra.mrb[0].mxu0 %v1769
    %v1963 = vpop.f32.mrb[0].mxu0
    %v1964 = vadd.f32 0.0, %v1963
    %v1965 = vpop.f32.mrb[0].mxu0
    %v1966 = vadd.f32 0.0, %v1965
    %1967 = vmatprep.mubr.f32.mxu0 0.0
    %1968 = vmatmul.mubr.f32.gmra.mrb[0].mxu0 %v1772
    %v1969 = vpop.f32.mrb[0].mxu0
    %v1970 = vadd.f32 0.0, %v1969
    %v1971 = vpop.f32.mrb[0].mxu0
    %v1972 = vadd.f32 0.0, %v1971
    %1973 = vmatprep.mubr.f32.mxu0 0.0
    %1974 = vmatmul.mubr.f32.gmra.mrb[0].mxu0 %v1775
    %v1975 = vpop.f32.mrb[0].mxu0
    %v1976 = vadd.f32 0.0, %v1975
    %v1977 = vpop.f32.mrb[0].mxu0
    %v1978 = vadd.f32 0.0, %v1977
    %1979 = vmatprep.mubr.f32.mxu0 0.0
    %1980 = vmatmul.mubr.f32.gmra.mrb[0].mxu0 %v1778
    %v1981 = vpop.f32.mrb[0].mxu0
    %v1982 = vadd.f32 0.0, %v1981
    %v1983 = vpop.f32.mrb[0].mxu0
    %v1984 = vadd.f32 0.0, %v1983
    %1985 = vmatprep.mubr.f32.mxu0 0.0
    %1986 = vmatmul.mubr.f32.gmra.mrb[0].mxu0 %v1781
    %v1987 = vpop.f32.mrb[0].mxu0
    %v1988 = vadd.f32 0.0, %v1987
    %v1989 = vpop.f32.mrb[0].mxu0
    %v1990 = vadd.f32 0.0, %v1989
    %1991 = vmatprep.mubr.f32.mxu0 0.0
    %1992 = vmatmul.mubr.f32.gmra.mrb[0].mxu0 %v1784
    %v1993 = vpop.f32.mrb[0].mxu0
    %v1994 = vadd.f32 0.0, %v1993
    %v1995 = vpop.f32.mrb[0].mxu0
    %v1996 = vadd.f32 0.0, %v1995
    %1997 = vmatprep.mubr.f32.mxu0 0.0
    %1998 = vmatmul.mubr.f32.gmra.mrb[0].mxu0 %v1787
    %v1999 = vpop.f32.mrb[0].mxu0
    %v2000 = vadd.f32 0.0, %v1999
    %v2001 = vpop.f32.mrb[0].mxu0
    %v2002 = vadd.f32 0.0, %v2001
    %2003 = vmatprep.mubr.f32.mxu0 0.0
    %2004 = vmatmul.mubr.f32.gmra.mrb[0].mxu0 %v1790
    %v2005 = vpop.f32.mrb[0].mxu0
    %v2006 = vadd.f32 0.0, %v2005
    %v2007 = vpop.f32.mrb[0].mxu0
    %v2008 = vadd.f32 0.0, %v2007
    %2009 = vmatprep.mubr.f32.mxu0 0.0
    %2010 = vmatmul.mubr.f32.gmra.mrb[0].mxu0 %v1793
    %v2011 = vpop.f32.mrb[0].mxu0
    %v2012 = vadd.f32 0.0, %v2011
    %v2013 = vpop.f32.mrb[0].mxu0
    %v2014 = vadd.f32 0.0, %v2013
    %2015 = vmatprep.mubr.f32.mxu0 0.0
    %2016 = vmatmul.mubr.f32.gmra.mrb[0].mxu0 %v1796
    %v2017 = vpop.f32.mrb[0].mxu0
    %v2018 = vadd.f32 0.0, %v2017
    %v2019 = vpop.f32.mrb[0].mxu0
    %v2020 = vadd.f32 0.0, %v2019
    %2021 = vmatprep.mubr.f32.mxu0 0.0
    %2022 = vmatmul.mubr.f32.gmra.mrb[0].mxu0 %v1799
    %v2023 = vpop.f32.mrb[0].mxu0
    %v2024 = vadd.f32 0.0, %v2023
    %v2025 = vpop.f32.mrb[0].mxu0
    %v2026 = vadd.f32 0.0, %v2025
    %2027 = vmatprep.mubr.f32.mxu0 0.0
    %2028 = vmatmul.mubr.f32.gmra.mrb[0].mxu0 %v1802
    %v2029 = vpop.f32.mrb[0].mxu0
    %v2030 = vadd.f32 0.0, %v2029
    %v2031 = vpop.f32.mrb[0].mxu0
    %v2032 = vadd.f32 0.0, %v2031
    %2033 = vmatprep.mubr.f32.mxu0 0.0
    %2034 = vmatmul.mubr.f32.gmra.mrb[0].mxu0 %v1805
    %v2035 = vpop.f32.mrb[0].mxu0
    %v2036 = vadd.f32 0.0, %v2035
    %v2037 = vpop.f32.mrb[0].mxu0
    %v2038 = vadd.f32 0.0, %v2037
    %2039 = vmatprep.mubr.f32.mxu0 0.0
    %2040 = vmatmul.mubr.f32.gmra.mrb[0].mxu0 %v1808
    %v2041 = vpop.f32.mrb[0].mxu0
    %v2042 = vadd.f32 0.0, %v2041
    %v2043 = vpop.f32.mrb[0].mxu0
    %v2044 = vadd.f32 0.0, %v2043
    %2045 = vmatprep.mubr.f32.mxu0 0.0
    %2046 = vmatmul.mubr.f32.gmra.mrb[0].mxu0 %v1811
    %v2047 = vpop.f32.mrb[0].mxu0
    %v2048 = vadd.f32 0.0, %v2047
    %v2049 = vpop.f32.mrb[0].mxu0
    %v2050 = vadd.f32 0.0, %v2049
    %2051 = vmatprep.mubr.f32.mxu0 0.0
    %2052 = vmatmul.mubr.f32.gmra.mrb[0].mxu0 %v1814
    %v2053 = vpop.f32.mrb[0].mxu0
    %v2054 = vadd.f32 0.0, %v2053
    %v2055 = vpop.f32.mrb[0].mxu0
    %v2056 = vadd.f32 0.0, %v2055
    %2057 = vmatprep.mubr.f32.mxu0 0.0
    %2058 = vmatmul.mubr.f32.gmra.mrb[0].mxu0 %v1817
    %v2059 = vpop.f32.mrb[0].mxu0
    %v2060 = vadd.f32 0.0, %v2059
    %v2061 = vpop.f32.mrb[0].mxu0
    %v2062 = vadd.f32 0.0, %v2061
    %2063 = vmatprep.mubr.f32.mxu0 0.0
    %2064 = vmatmul.mubr.f32.gmra.mrb[0].mxu0 %v1820
    %v2065 = vpop.f32.mrb[0].mxu0
    %v2066 = vadd.f32 0.0, %v2065
    %v2067 = vpop.f32.mrb[0].mxu0
    %v2068 = vadd.f32 0.0, %v2067
    %2069 = vmatprep.mubr.f32.mxu0 0.0
    %2070 = vmatmul.mubr.f32.gmra.mrb[0].mxu0 %v1823
    %v2071 = vpop.f32.mrb[0].mxu0
    %v2072 = vadd.f32 0.0, %v2071
    %v2073 = vpop.f32.mrb[0].mxu0
    %v2074 = vadd.f32 0.0, %v2073
    %2075 = vmatprep.mubr.f32.mxu0 0.0
    %2076 = vmatmul.mubr.f32.gmra.mrb[0].mxu0 %v1826
    %v2077 = vpop.f32.mrb[0].mxu0
    %v2078 = vadd.f32 0.0, %v2077
    %v2079 = vpop.f32.mrb[0].mxu0
    %v2080 = vadd.f32 0.0, %v2079
    %2081 = vmatprep.mubr.f32.mxu0 0.0
    %2082 = vmatmul.mubr.f32.gmra.mrb[0].mxu0 %v1829
    %v2083 = vpop.f32.mrb[0].mxu0
    %v2084 = vadd.f32 0.0, %v2083
    %v2085 = vpop.f32.mrb[0].mxu0
    %v2086 = vadd.f32 0.0, %v2085
    %2087 = vdwg.mxu0
    %v2088 = vmax.f32 %v647, %v649
    %2089 = vmax.xlane.f32.xlu0 %v2088
    %v2090 = vpop.xlane.xlu0 %2089
    %v2091 = vmax.f32 %v653, %v655
    %2092 = vmax.xlane.f32.xlu0 %v2091
    %v2093 = vpop.xlane.xlu0 %2092
    %v2094 = vmax.f32 %v659, %v661
    %2095 = vmax.xlane.f32.xlu0 %v2094
    %v2096 = vpop.xlane.xlu0 %2095
    %v2097 = vmax.f32 %v665, %v667
    %2098 = vmax.xlane.f32.xlu0 %v2097
    %v2099 = vpop.xlane.xlu0 %2098
    %v2100 = vmax.f32 %v671, %v673
    %2101 = vmax.xlane.f32.xlu0 %v2100
    %v2102 = vpop.xlane.xlu0 %2101
    %v2103 = vmax.f32 %v677, %v679
    %2104 = vmax.xlane.f32.xlu0 %v2103
    %v2105 = vpop.xlane.xlu0 %2104
    %v2106 = vmax.f32 %v683, %v685
    %2107 = vmax.xlane.f32.xlu0 %v2106
    %v2108 = vpop.xlane.xlu0 %2107
    %v2109 = vmax.f32 %v689, %v691
    %2110 = vmax.xlane.f32.xlu0 %v2109
    %v2111 = vpop.xlane.xlu0 %2110
    %v2112 = vmax.f32 %v695, %v697
    %2113 = vmax.xlane.f32.xlu0 %v2112
    %v2114 = vpop.xlane.xlu0 %2113
    %v2115 = vmax.f32 %v701, %v703
    %2116 = vmax.xlane.f32.xlu0 %v2115
    %v2117 = vpop.xlane.xlu0 %2116
    %v2118 = vmax.f32 %v707, %v709
    %2119 = vmax.xlane.f32.xlu0 %v2118
    %v2120 = vpop.xlane.xlu0 %2119
    %v2121 = vmax.f32 %v713, %v715
    %2122 = vmax.xlane.f32.xlu0 %v2121
    %v2123 = vpop.xlane.xlu0 %2122
    %v2124 = vmax.f32 %v719, %v721
    %2125 = vmax.xlane.f32.xlu0 %v2124
    %v2126 = vpop.xlane.xlu0 %2125
    %v2127 = vmax.f32 %v725, %v727
    %2128 = vmax.xlane.f32.xlu0 %v2127
    %v2129 = vpop.xlane.xlu0 %2128
    %v2130 = vmax.f32 %v731, %v733
    %2131 = vmax.xlane.f32.xlu0 %v2130
    %v2132 = vpop.xlane.xlu0 %2131
    %v2133 = vmax.f32 %v737, %v739
    %2134 = vmax.xlane.f32.xlu0 %v2133
    %v2135 = vpop.xlane.xlu0 %2134
    %v2136 = vmax.f32 %v743, %v745
    %2137 = vmax.xlane.f32.xlu0 %v2136
    %v2138 = vpop.xlane.xlu0 %2137
    %v2139 = vmax.f32 %v749, %v751
    %2140 = vmax.xlane.f32.xlu0 %v2139
    %v2141 = vpop.xlane.xlu0 %2140
    %v2142 = vmax.f32 %v755, %v757
    %2143 = vmax.xlane.f32.xlu0 %v2142
    %v2144 = vpop.xlane.xlu0 %2143
    %v2145 = vmax.f32 %v761, %v763
    %2146 = vmax.xlane.f32.xlu0 %v2145
    %v2147 = vpop.xlane.xlu0 %2146
    %v2148 = vmax.f32 %v767, %v769
    %2149 = vmax.xlane.f32.xlu0 %v2148
    %v2150 = vpop.xlane.xlu0 %2149
    %v2151 = vmax.f32 %v773, %v775
    %2152 = vmax.xlane.f32.xlu0 %v2151
    %v2153 = vpop.xlane.xlu0 %2152
    %v2154 = vmax.f32 %v779, %v781
    %2155 = vmax.xlane.f32.xlu0 %v2154
    %v2156 = vpop.xlane.xlu0 %2155
    %v2157 = vmax.f32 %v785, %v787
    %2158 = vmax.xlane.f32.xlu0 %v2157
    %v2159 = vpop.xlane.xlu0 %2158
    %v2160 = vmax.f32 %v791, %v793
    %2161 = vmax.xlane.f32.xlu0 %v2160
    %v2162 = vpop.xlane.xlu0 %2161
    %v2163 = vmax.f32 %v797, %v799
    %2164 = vmax.xlane.f32.xlu0 %v2163
    %v2165 = vpop.xlane.xlu0 %2164
    %v2166 = vmax.f32 %v803, %v805
    %2167 = vmax.xlane.f32.xlu0 %v2166
    %v2168 = vpop.xlane.xlu0 %2167
    %v2169 = vmax.f32 %v809, %v811
    %2170 = vmax.xlane.f32.xlu0 %v2169
    %v2171 = vpop.xlane.xlu0 %2170
    %v2172 = vmax.f32 %v815, %v817
    %2173 = vmax.xlane.f32.xlu0 %v2172
    %v2174 = vpop.xlane.xlu0 %2173
    %v2175 = vmax.f32 %v821, %v823
    %2176 = vmax.xlane.f32.xlu0 %v2175
    %v2177 = vpop.xlane.xlu0 %2176
    %v2178 = vmax.f32 %v827, %v829
    %2179 = vmax.xlane.f32.xlu0 %v2178
    %v2180 = vpop.xlane.xlu0 %2179
    %v2181 = vmax.f32 %v833, %v835
    %2182 = vmax.xlane.f32.xlu0 %v2181
    %v2183 = vpop.xlane.xlu0 %2182
    %v2184 = vmax.f32 %v1064, %v1066
    %2185 = vmax.xlane.f32.xlu0 %v2184
    %v2186 = vpop.xlane.xlu0 %2185
    %v2187 = vmax.f32 %v1070, %v1072
    %2188 = vmax.xlane.f32.xlu0 %v2187
    %v2189 = vpop.xlane.xlu0 %2188
    %v2190 = vmax.f32 %v1076, %v1078
    %2191 = vmax.xlane.f32.xlu0 %v2190
    %v2192 = vpop.xlane.xlu0 %2191
    %v2193 = vmax.f32 %v1082, %v1084
    %2194 = vmax.xlane.f32.xlu0 %v2193
    %v2195 = vpop.xlane.xlu0 %2194
    %v2196 = vmax.f32 %v1088, %v1090
    %2197 = vmax.xlane.f32.xlu0 %v2196
    %v2198 = vpop.xlane.xlu0 %2197
    %v2199 = vmax.f32 %v1094, %v1096
    %2200 = vmax.xlane.f32.xlu0 %v2199
    %v2201 = vpop.xlane.xlu0 %2200
    %v2202 = vmax.f32 %v1100, %v1102
    %2203 = vmax.xlane.f32.xlu0 %v2202
    %v2204 = vpop.xlane.xlu0 %2203
    %v2205 = vmax.f32 %v1106, %v1108
    %2206 = vmax.xlane.f32.xlu0 %v2205
    %v2207 = vpop.xlane.xlu0 %2206
    %v2208 = vmax.f32 %v1112, %v1114
    %2209 = vmax.xlane.f32.xlu0 %v2208
    %v2210 = vpop.xlane.xlu0 %2209
    %v2211 = vmax.f32 %v1118, %v1120
    %2212 = vmax.xlane.f32.xlu0 %v2211
    %v2213 = vpop.xlane.xlu0 %2212
    %v2214 = vmax.f32 %v1124, %v1126
    %2215 = vmax.xlane.f32.xlu0 %v2214
    %v2216 = vpop.xlane.xlu0 %2215
    %v2217 = vmax.f32 %v1130, %v1132
    %2218 = vmax.xlane.f32.xlu0 %v2217
    %v2219 = vpop.xlane.xlu0 %2218
    %v2220 = vmax.f32 %v1136, %v1138
    %2221 = vmax.xlane.f32.xlu0 %v2220
    %v2222 = vpop.xlane.xlu0 %2221
    %v2223 = vmax.f32 %v1142, %v1144
    %2224 = vmax.xlane.f32.xlu0 %v2223
    %v2225 = vpop.xlane.xlu0 %2224
    %v2226 = vmax.f32 %v1148, %v1150
    %2227 = vmax.xlane.f32.xlu0 %v2226
    %v2228 = vpop.xlane.xlu0 %2227
    %v2229 = vmax.f32 %v1154, %v1156
    %2230 = vmax.xlane.f32.xlu0 %v2229
    %v2231 = vpop.xlane.xlu0 %2230
    %v2232 = vmax.f32 %v1160, %v1162
    %2233 = vmax.xlane.f32.xlu0 %v2232
    %v2234 = vpop.xlane.xlu0 %2233
    %v2235 = vmax.f32 %v1166, %v1168
    %2236 = vmax.xlane.f32.xlu0 %v2235
    %v2237 = vpop.xlane.xlu0 %2236
    %v2238 = vmax.f32 %v1172, %v1174
    %2239 = vmax.xlane.f32.xlu0 %v2238
    %v2240 = vpop.xlane.xlu0 %2239
    %v2241 = vmax.f32 %v1178, %v1180
    %2242 = vmax.xlane.f32.xlu0 %v2241
    %v2243 = vpop.xlane.xlu0 %2242
    %v2244 = vmax.f32 %v1184, %v1186
    %2245 = vmax.xlane.f32.xlu0 %v2244
    %v2246 = vpop.xlane.xlu0 %2245
    %v2247 = vmax.f32 %v1190, %v1192
    %2248 = vmax.xlane.f32.xlu0 %v2247
    %v2249 = vpop.xlane.xlu0 %2248
    %v2250 = vmax.f32 %v1196, %v1198
    %2251 = vmax.xlane.f32.xlu0 %v2250
    %v2252 = vpop.xlane.xlu0 %2251
    %v2253 = vmax.f32 %v1202, %v1204
    %2254 = vmax.xlane.f32.xlu0 %v2253
    %v2255 = vpop.xlane.xlu0 %2254
    %v2256 = vmax.f32 %v1208, %v1210
    %2257 = vmax.xlane.f32.xlu0 %v2256
    %v2258 = vpop.xlane.xlu0 %2257
    %v2259 = vmax.f32 %v1214, %v1216
    %2260 = vmax.xlane.f32.xlu0 %v2259
    %v2261 = vpop.xlane.xlu0 %2260
    %v2262 = vmax.f32 %v1220, %v1222
    %2263 = vmax.xlane.f32.xlu0 %v2262
    %v2264 = vpop.xlane.xlu0 %2263
    %v2265 = vmax.f32 %v1226, %v1228
    %2266 = vmax.xlane.f32.xlu0 %v2265
    %v2267 = vpop.xlane.xlu0 %2266
    %v2268 = vmax.f32 %v1232, %v1234
    %2269 = vmax.xlane.f32.xlu0 %v2268
    %v2270 = vpop.xlane.xlu0 %2269
    %v2271 = vmax.f32 %v1238, %v1240
    %2272 = vmax.xlane.f32.xlu0 %v2271
    %v2273 = vpop.xlane.xlu0 %2272
    %v2274 = vmax.f32 %v1244, %v1246
    %2275 = vmax.xlane.f32.xlu0 %v2274
    %v2276 = vpop.xlane.xlu0 %2275
    %v2277 = vmax.f32 %v1250, %v1252
    %2278 = vmax.xlane.f32.xlu0 %v2277
    %v2279 = vpop.xlane.xlu0 %2278
    %v2280 = vmax.f32 %v1481, %v1483
    %2281 = vmax.xlane.f32.xlu0 %v2280
    %v2282 = vpop.xlane.xlu0 %2281
    %v2283 = vmax.f32 %v1487, %v1489
    %2284 = vmax.xlane.f32.xlu0 %v2283
    %v2285 = vpop.xlane.xlu0 %2284
    %v2286 = vmax.f32 %v1493, %v1495
    %2287 = vmax.xlane.f32.xlu0 %v2286
    %v2288 = vpop.xlane.xlu0 %2287
    %v2289 = vmax.f32 %v1499, %v1501
    %2290 = vmax.xlane.f32.xlu0 %v2289
    %v2291 = vpop.xlane.xlu0 %2290
    %v2292 = vmax.f32 %v1505, %v1507
    %2293 = vmax.xlane.f32.xlu0 %v2292
    %v2294 = vpop.xlane.xlu0 %2293
    %v2295 = vmax.f32 %v1511, %v1513
    %2296 = vmax.xlane.f32.xlu0 %v2295
    %v2297 = vpop.xlane.xlu0 %2296
    %v2298 = vmax.f32 %v1517, %v1519
    %2299 = vmax.xlane.f32.xlu0 %v2298
    %v2300 = vpop.xlane.xlu0 %2299
    %v2301 = vmax.f32 %v1523, %v1525
    %2302 = vmax.xlane.f32.xlu0 %v2301
    %v2303 = vpop.xlane.xlu0 %2302
    %v2304 = vmax.f32 %v1529, %v1531
    %2305 = vmax.xlane.f32.xlu0 %v2304
    %v2306 = vpop.xlane.xlu0 %2305
    %v2307 = vmax.f32 %v1535, %v1537
    %2308 = vmax.xlane.f32.xlu0 %v2307
    %v2309 = vpop.xlane.xlu0 %2308
    %v2310 = vmax.f32 %v1541, %v1543
    %2311 = vmax.xlane.f32.xlu0 %v2310
    %v2312 = vpop.xlane.xlu0 %2311
    %v2313 = vmax.f32 %v1547, %v1549
    %2314 = vmax.xlane.f32.xlu0 %v2313
    %v2315 = vpop.xlane.xlu0 %2314
    %v2316 = vmax.f32 %v1553, %v1555
    %2317 = vmax.xlane.f32.xlu0 %v2316
    %v2318 = vpop.xlane.xlu0 %2317
    %v2319 = vmax.f32 %v1559, %v1561
    %2320 = vmax.xlane.f32.xlu0 %v2319
    %v2321 = vpop.xlane.xlu0 %2320
    %v2322 = vmax.f32 %v1565, %v1567
    %2323 = vmax.xlane.f32.xlu0 %v2322
    %v2324 = vpop.xlane.xlu0 %2323
    %v2325 = vmax.f32 %v1571, %v1573
    %2326 = vmax.xlane.f32.xlu0 %v2325
    %v2327 = vpop.xlane.xlu0 %2326
    %v2328 = vmax.f32 %v1577, %v1579
    %2329 = vmax.xlane.f32.xlu0 %v2328
    %v2330 = vpop.xlane.xlu0 %2329
    %v2331 = vmax.f32 %v1583, %v1585
    %2332 = vmax.xlane.f32.xlu0 %v2331
    %v2333 = vpop.xlane.xlu0 %2332
    %v2334 = vmax.f32 %v1589, %v1591
    %2335 = vmax.xlane.f32.xlu0 %v2334
    %v2336 = vpop.xlane.xlu0 %2335
    %v2337 = vmax.f32 %v1595, %v1597
    %2338 = vmax.xlane.f32.xlu0 %v2337
    %v2339 = vpop.xlane.xlu0 %2338
    %v2340 = vmax.f32 %v1601, %v1603
    %2341 = vmax.xlane.f32.xlu0 %v2340
    %v2342 = vpop.xlane.xlu0 %2341
    %v2343 = vmax.f32 %v1607, %v1609
    %2344 = vmax.xlane.f32.xlu0 %v2343
    %v2345 = vpop.xlane.xlu0 %2344
    %v2346 = vmax.f32 %v1613, %v1615
    %2347 = vmax.xlane.f32.xlu0 %v2346
    %v2348 = vpop.xlane.xlu0 %2347
    %v2349 = vmax.f32 %v1619, %v1621
    %2350 = vmax.xlane.f32.xlu0 %v2349
    %v2351 = vpop.xlane.xlu0 %2350
    %v2352 = vmax.f32 %v1625, %v1627
    %2353 = vmax.xlane.f32.xlu0 %v2352
    %v2354 = vpop.xlane.xlu0 %2353
    %v2355 = vmax.f32 %v1631, %v1633
    %2356 = vmax.xlane.f32.xlu0 %v2355
    %v2357 = vpop.xlane.xlu0 %2356
    %v2358 = vmax.f32 %v1637, %v1639
    %2359 = vmax.xlane.f32.xlu0 %v2358
    %v2360 = vpop.xlane.xlu0 %2359
    %v2361 = vmax.f32 %v1643, %v1645
    %2362 = vmax.xlane.f32.xlu0 %v2361
    %v2363 = vpop.xlane.xlu0 %2362
    %v2364 = vmax.f32 %v1649, %v1651
    %2365 = vmax.xlane.f32.xlu0 %v2364
    %v2366 = vpop.xlane.xlu0 %2365
    %v2367 = vmax.f32 %v1655, %v1657
    %2368 = vmax.xlane.f32.xlu0 %v2367
    %v2369 = vpop.xlane.xlu0 %2368
    %v2370 = vmax.f32 %v1661, %v1663
    %2371 = vmax.xlane.f32.xlu0 %v2370
    %v2372 = vpop.xlane.xlu0 %2371
    %v2373 = vmax.f32 %v1667, %v1669
    %2374 = vmax.xlane.f32.xlu0 %v2373
    %v2375 = vpop.xlane.xlu0 %2374
    %v2376 = vmax.f32 %v1898, %v1900
    %2377 = vmax.xlane.f32.xlu0 %v2376
    %v2378 = vpop.xlane.xlu0 %2377
    %v2379 = vmax.f32 %v1904, %v1906
    %2380 = vmax.xlane.f32.xlu0 %v2379
    %v2381 = vpop.xlane.xlu0 %2380
    %v2382 = vmax.f32 %v1910, %v1912
    %2383 = vmax.xlane.f32.xlu0 %v2382
    %v2384 = vpop.xlane.xlu0 %2383
    %v2385 = vmax.f32 %v1916, %v1918
    %2386 = vmax.xlane.f32.xlu0 %v2385
    %v2387 = vpop.xlane.xlu0 %2386
    %v2388 = vmax.f32 %v1922, %v1924
    %2389 = vmax.xlane.f32.xlu0 %v2388
    %v2390 = vpop.xlane.xlu0 %2389
    %v2391 = vmax.f32 %v1928, %v1930
    %2392 = vmax.xlane.f32.xlu0 %v2391
    %v2393 = vpop.xlane.xlu0 %2392
    %v2394 = vmax.f32 %v1934, %v1936
    %2395 = vmax.xlane.f32.xlu0 %v2394
    %v2396 = vpop.xlane.xlu0 %2395
    %v2397 = vmax.f32 %v1940, %v1942
    %2398 = vmax.xlane.f32.xlu0 %v2397
    %v2399 = vpop.xlane.xlu0 %2398
    %v2400 = vmax.f32 %v1946, %v1948
    %2401 = vmax.xlane.f32.xlu0 %v2400
    %v2402 = vpop.xlane.xlu0 %2401
    %v2403 = vmax.f32 %v1952, %v1954
    %2404 = vmax.xlane.f32.xlu0 %v2403
    %v2405 = vpop.xlane.xlu0 %2404
    %v2406 = vmax.f32 %v1958, %v1960
    %2407 = vmax.xlane.f32.xlu0 %v2406
    %v2408 = vpop.xlane.xlu0 %2407
    %v2409 = vmax.f32 %v1964, %v1966
    %2410 = vmax.xlane.f32.xlu0 %v2409
    %v2411 = vpop.xlane.xlu0 %2410
    %v2412 = vmax.f32 %v1970, %v1972
    %2413 = vmax.xlane.f32.xlu0 %v2412
    %v2414 = vpop.xlane.xlu0 %2413
    %v2415 = vmax.f32 %v1976, %v1978
    %2416 = vmax.xlane.f32.xlu0 %v2415
    %v2417 = vpop.xlane.xlu0 %2416
    %v2418 = vmax.f32 %v1982, %v1984
    %2419 = vmax.xlane.f32.xlu0 %v2418
    %v2420 = vpop.xlane.xlu0 %2419
    %v2421 = vmax.f32 %v1988, %v1990
    %2422 = vmax.xlane.f32.xlu0 %v2421
    %v2423 = vpop.xlane.xlu0 %2422
    %v2424 = vmax.f32 %v1994, %v1996
    %2425 = vmax.xlane.f32.xlu0 %v2424
    %v2426 = vpop.xlane.xlu0 %2425
    %v2427 = vmax.f32 %v2000, %v2002
    %2428 = vmax.xlane.f32.xlu0 %v2427
    %v2429 = vpop.xlane.xlu0 %2428
    %v2430 = vmax.f32 %v2006, %v2008
    %2431 = vmax.xlane.f32.xlu0 %v2430
    %v2432 = vpop.xlane.xlu0 %2431
    %v2433 = vmax.f32 %v2012, %v2014
    %2434 = vmax.xlane.f32.xlu0 %v2433
    %v2435 = vpop.xlane.xlu0 %2434
    %v2436 = vmax.f32 %v2018, %v2020
    %2437 = vmax.xlane.f32.xlu0 %v2436
    %v2438 = vpop.xlane.xlu0 %2437
    %v2439 = vmax.f32 %v2024, %v2026
    %2440 = vmax.xlane.f32.xlu0 %v2439
    %v2441 = vpop.xlane.xlu0 %2440
    %v2442 = vmax.f32 %v2030, %v2032
    %2443 = vmax.xlane.f32.xlu0 %v2442
    %v2444 = vpop.xlane.xlu0 %2443
    %v2445 = vmax.f32 %v2036, %v2038
    %2446 = vmax.xlane.f32.xlu0 %v2445
    %v2447 = vpop.xlane.xlu0 %2446
    %v2448 = vmax.f32 %v2042, %v2044
    %2449 = vmax.xlane.f32.xlu0 %v2448
    %v2450 = vpop.xlane.xlu0 %2449
    %v2451 = vmax.f32 %v2048, %v2050
    %2452 = vmax.xlane.f32.xlu0 %v2451
    %v2453 = vpop.xlane.xlu0 %2452
    %v2454 = vmax.f32 %v2054, %v2056
    %2455 = vmax.xlane.f32.xlu0 %v2454
    %v2456 = vpop.xlane.xlu0 %2455
    %v2457 = vmax.f32 %v2060, %v2062
    %2458 = vmax.xlane.f32.xlu0 %v2457
    %v2459 = vpop.xlane.xlu0 %2458
    %v2460 = vmax.f32 %v2066, %v2068
    %2461 = vmax.xlane.f32.xlu0 %v2460
    %v2462 = vpop.xlane.xlu0 %2461
    %v2463 = vmax.f32 %v2072, %v2074
    %2464 = vmax.xlane.f32.xlu0 %v2463
    %v2465 = vpop.xlane.xlu0 %2464
    %v2466 = vmax.f32 %v2078, %v2080
    %2467 = vmax.xlane.f32.xlu0 %v2466
    %v2468 = vpop.xlane.xlu0 %2467
    %v2469 = vmax.f32 %v2084, %v2086
    %2470 = vmax.xlane.f32.xlu0 %v2469
    %v2471 = vpop.xlane.xlu0 %2470
    %v2472 = vsub.f32 %v647, %v2090
    %v2473 = vsub.f32 %v649, %v2090
    %v2474 = vsub.f32 %v653, %v2093
    %v2475 = vsub.f32 %v655, %v2093
    %v2476 = vsub.f32 %v659, %v2096
    %v2477 = vsub.f32 %v661, %v2096
    %v2478 = vsub.f32 %v665, %v2099
    %v2479 = vsub.f32 %v667, %v2099
    %v2480 = vsub.f32 %v671, %v2102
    %v2481 = vsub.f32 %v673, %v2102
    %v2482 = vsub.f32 %v677, %v2105
    %v2483 = vsub.f32 %v679, %v2105
    %v2484 = vsub.f32 %v683, %v2108
    %v2485 = vsub.f32 %v685, %v2108
    %v2486 = vsub.f32 %v689, %v2111
    %v2487 = vsub.f32 %v691, %v2111
    %v2488 = vsub.f32 %v695, %v2114
    %v2489 = vsub.f32 %v697, %v2114
    %v2490 = vsub.f32 %v701, %v2117
    %v2491 = vsub.f32 %v703, %v2117
    %v2492 = vsub.f32 %v707, %v2120
    %v2493 = vsub.f32 %v709, %v2120
    %v2494 = vsub.f32 %v713, %v2123
    %v2495 = vsub.f32 %v715, %v2123
    %v2496 = vsub.f32 %v719, %v2126
    %v2497 = vsub.f32 %v721, %v2126
    %v2498 = vsub.f32 %v725, %v2129
    %v2499 = vsub.f32 %v727, %v2129
    %v2500 = vsub.f32 %v731, %v2132
    %v2501 = vsub.f32 %v733, %v2132
    %v2502 = vsub.f32 %v737, %v2135
    %v2503 = vsub.f32 %v739, %v2135
    %v2504 = vsub.f32 %v743, %v2138
    %v2505 = vsub.f32 %v745, %v2138
    %v2506 = vsub.f32 %v749, %v2141
    %v2507 = vsub.f32 %v751, %v2141
    %v2508 = vsub.f32 %v755, %v2144
    %v2509 = vsub.f32 %v757, %v2144
    %v2510 = vsub.f32 %v761, %v2147
    %v2511 = vsub.f32 %v763, %v2147
    %v2512 = vsub.f32 %v767, %v2150
    %v2513 = vsub.f32 %v769, %v2150
    %v2514 = vsub.f32 %v773, %v2153
    %v2515 = vsub.f32 %v775, %v2153
    %v2516 = vsub.f32 %v779, %v2156
    %v2517 = vsub.f32 %v781, %v2156
    %v2518 = vsub.f32 %v785, %v2159
    %v2519 = vsub.f32 %v787, %v2159
    %v2520 = vsub.f32 %v791, %v2162
    %v2521 = vsub.f32 %v793, %v2162
    %v2522 = vsub.f32 %v797, %v2165
    %v2523 = vsub.f32 %v799, %v2165
    %v2524 = vsub.f32 %v803, %v2168
    %v2525 = vsub.f32 %v805, %v2168
    %v2526 = vsub.f32 %v809, %v2171
    %v2527 = vsub.f32 %v811, %v2171
    %v2528 = vsub.f32 %v815, %v2174
    %v2529 = vsub.f32 %v817, %v2174
    %v2530 = vsub.f32 %v821, %v2177
    %v2531 = vsub.f32 %v823, %v2177
    %v2532 = vsub.f32 %v827, %v2180
    %v2533 = vsub.f32 %v829, %v2180
    %v2534 = vsub.f32 %v833, %v2183
    %v2535 = vsub.f32 %v835, %v2183
    %v2536 = vsub.f32 %v1064, %v2186
    %v2537 = vsub.f32 %v1066, %v2186
    %v2538 = vsub.f32 %v1070, %v2189
    %v2539 = vsub.f32 %v1072, %v2189
    %v2540 = vsub.f32 %v1076, %v2192
    %v2541 = vsub.f32 %v1078, %v2192
    %v2542 = vsub.f32 %v1082, %v2195
    %v2543 = vsub.f32 %v1084, %v2195
    %v2544 = vsub.f32 %v1088, %v2198
    %v2545 = vsub.f32 %v1090, %v2198
    %v2546 = vsub.f32 %v1094, %v2201
    %v2547 = vsub.f32 %v1096, %v2201
    %v2548 = vsub.f32 %v1100, %v2204
    %v2549 = vsub.f32 %v1102, %v2204
    %v2550 = vsub.f32 %v1106, %v2207
    %v2551 = vsub.f32 %v1108, %v2207
    %v2552 = vsub.f32 %v1112, %v2210
    %v2553 = vsub.f32 %v1114, %v2210
    %v2554 = vsub.f32 %v1118, %v2213
    %v2555 = vsub.f32 %v1120, %v2213
    %v2556 = vsub.f32 %v1124, %v2216
    %v2557 = vsub.f32 %v1126, %v2216
    %v2558 = vsub.f32 %v1130, %v2219
    %v2559 = vsub.f32 %v1132, %v2219
    %v2560 = vsub.f32 %v1136, %v2222
    %v2561 = vsub.f32 %v1138, %v2222
    %v2562 = vsub.f32 %v1142, %v2225
    %v2563 = vsub.f32 %v1144, %v2225
    %v2564 = vsub.f32 %v1148, %v2228
    %v2565 = vsub.f32 %v1150, %v2228
    %v2566 = vsub.f32 %v1154, %v2231
    %v2567 = vsub.f32 %v1156, %v2231
    %v2568 = vsub.f32 %v1160, %v2234
    %v2569 = vsub.f32 %v1162, %v2234
    %v2570 = vsub.f32 %v1166, %v2237
    %v2571 = vsub.f32 %v1168, %v2237
    %v2572 = vsub.f32 %v1172, %v2240
    %v2573 = vsub.f32 %v1174, %v2240
    %v2574 = vsub.f32 %v1178, %v2243
    %v2575 = vsub.f32 %v1180, %v2243
    %v2576 = vsub.f32 %v1184, %v2246
    %v2577 = vsub.f32 %v1186, %v2246
    %v2578 = vsub.f32 %v1190, %v2249
    %v2579 = vsub.f32 %v1192, %v2249
    %v2580 = vsub.f32 %v1196, %v2252
    %v2581 = vsub.f32 %v1198, %v2252
    %v2582 = vsub.f32 %v1202, %v2255
    %v2583 = vsub.f32 %v1204, %v2255
    %v2584 = vsub.f32 %v1208, %v2258
    %v2585 = vsub.f32 %v1210, %v2258
    %v2586 = vsub.f32 %v1214, %v2261
    %v2587 = vsub.f32 %v1216, %v2261
    %v2588 = vsub.f32 %v1220, %v2264
    %v2589 = vsub.f32 %v1222, %v2264
    %v2590 = vsub.f32 %v1226, %v2267
    %v2591 = vsub.f32 %v1228, %v2267
    %v2592 = vsub.f32 %v1232, %v2270
    %v2593 = vsub.f32 %v1234, %v2270
    %v2594 = vsub.f32 %v1238, %v2273
    %v2595 = vsub.f32 %v1240, %v2273
    %v2596 = vsub.f32 %v1244, %v2276
    %v2597 = vsub.f32 %v1246, %v2276
    %v2598 = vsub.f32 %v1250, %v2279
    %v2599 = vsub.f32 %v1252, %v2279
    %v2600 = vsub.f32 %v1481, %v2282
    %v2601 = vsub.f32 %v1483, %v2282
    %v2602 = vsub.f32 %v1487, %v2285
    %v2603 = vsub.f32 %v1489, %v2285
    %v2604 = vsub.f32 %v1493, %v2288
    %v2605 = vsub.f32 %v1495, %v2288
    %v2606 = vsub.f32 %v1499, %v2291
    %v2607 = vsub.f32 %v1501, %v2291
    %v2608 = vsub.f32 %v1505, %v2294
    %v2609 = vsub.f32 %v1507, %v2294
    %v2610 = vsub.f32 %v1511, %v2297
    %v2611 = vsub.f32 %v1513, %v2297
    %v2612 = vsub.f32 %v1517, %v2300
    %v2613 = vsub.f32 %v1519, %v2300
    %v2614 = vsub.f32 %v1523, %v2303
    %v2615 = vsub.f32 %v1525, %v2303
    %v2616 = vsub.f32 %v1529, %v2306
    %v2617 = vsub.f32 %v1531, %v2306
    %v2618 = vsub.f32 %v1535, %v2309
    %v2619 = vsub.f32 %v1537, %v2309
    %v2620 = vsub.f32 %v1541, %v2312
    %v2621 = vsub.f32 %v1543, %v2312
    %v2622 = vsub.f32 %v1547, %v2315
    %v2623 = vsub.f32 %v1549, %v2315
    %v2624 = vsub.f32 %v1553, %v2318
    %v2625 = vsub.f32 %v1555, %v2318
    %v2626 = vsub.f32 %v1559, %v2321
    %v2627 = vsub.f32 %v1561, %v2321
    %v2628 = vsub.f32 %v1565, %v2324
    %v2629 = vsub.f32 %v1567, %v2324
    %v2630 = vsub.f32 %v1571, %v2327
    %v2631 = vsub.f32 %v1573, %v2327
    %v2632 = vsub.f32 %v1577, %v2330
    %v2633 = vsub.f32 %v1579, %v2330
    %v2634 = vsub.f32 %v1583, %v2333
    %v2635 = vsub.f32 %v1585, %v2333
    %v2636 = vsub.f32 %v1589, %v2336
    %v2637 = vsub.f32 %v1591, %v2336
    %v2638 = vsub.f32 %v1595, %v2339
    %v2639 = vsub.f32 %v1597, %v2339
    %v2640 = vsub.f32 %v1601, %v2342
    %v2641 = vsub.f32 %v1603, %v2342
    %v2642 = vsub.f32 %v1607, %v2345
    %v2643 = vsub.f32 %v1609, %v2345
    %v2644 = vsub.f32 %v1613, %v2348
    %v2645 = vsub.f32 %v1615, %v2348
    %v2646 = vsub.f32 %v1619, %v2351
    %v2647 = vsub.f32 %v1621, %v2351
    %v2648 = vsub.f32 %v1625, %v2354
    %v2649 = vsub.f32 %v1627, %v2354
    %v2650 = vsub.f32 %v1631, %v2357
    %v2651 = vsub.f32 %v1633, %v2357
    %v2652 = vsub.f32 %v1637, %v2360
    %v2653 = vsub.f32 %v1639, %v2360
    %v2654 = vsub.f32 %v1643, %v2363
    %v2655 = vsub.f32 %v1645, %v2363
    %v2656 = vsub.f32 %v1649, %v2366
    %v2657 = vsub.f32 %v1651, %v2366
    %v2658 = vsub.f32 %v1655, %v2369
    %v2659 = vsub.f32 %v1657, %v2369
    %v2660 = vsub.f32 %v1661, %v2372
    %v2661 = vsub.f32 %v1663, %v2372
    %v2662 = vsub.f32 %v1667, %v2375
    %v2663 = vsub.f32 %v1669, %v2375
    %v2664 = vsub.f32 %v1898, %v2378
    %v2665 = vsub.f32 %v1900, %v2378
    %v2666 = vsub.f32 %v1904, %v2381
    %v2667 = vsub.f32 %v1906, %v2381
    %v2668 = vsub.f32 %v1910, %v2384
    %v2669 = vsub.f32 %v1912, %v2384
    %v2670 = vsub.f32 %v1916, %v2387
    %v2671 = vsub.f32 %v1918, %v2387
    %v2672 = vsub.f32 %v1922, %v2390
    %v2673 = vsub.f32 %v1924, %v2390
    %v2674 = vsub.f32 %v1928, %v2393
    %v2675 = vsub.f32 %v1930, %v2393
    %v2676 = vsub.f32 %v1934, %v2396
    %v2677 = vsub.f32 %v1936, %v2396
    %v2678 = vsub.f32 %v1940, %v2399
    %v2679 = vsub.f32 %v1942, %v2399
    %v2680 = vsub.f32 %v1946, %v2402
    %v2681 = vsub.f32 %v1948, %v2402
    %v2682 = vsub.f32 %v1952, %v2405
    %v2683 = vsub.f32 %v1954, %v2405
    %v2684 = vsub.f32 %v1958, %v2408
    %v2685 = vsub.f32 %v1960, %v2408
    %v2686 = vsub.f32 %v1964, %v2411
    %v2687 = vsub.f32 %v1966, %v2411
    %v2688 = vsub.f32 %v1970, %v2414
    %v2689 = vsub.f32 %v1972, %v2414
    %v2690 = vsub.f32 %v1976, %v2417
    %v2691 = vsub.f32 %v1978, %v2417
    %v2692 = vsub.f32 %v1982, %v2420
    %v2693 = vsub.f32 %v1984, %v2420
    %v2694 = vsub.f32 %v1988, %v2423
    %v2695 = vsub.f32 %v1990, %v2423
    %v2696 = vsub.f32 %v1994, %v2426
    %v2697 = vsub.f32 %v1996, %v2426
    %v2698 = vsub.f32 %v2000, %v2429
    %v2699 = vsub.f32 %v2002, %v2429
    %v2700 = vsub.f32 %v2006, %v2432
    %v2701 = vsub.f32 %v2008, %v2432
    %v2702 = vsub.f32 %v2012, %v2435
    %v2703 = vsub.f32 %v2014, %v2435
    %v2704 = vsub.f32 %v2018, %v2438
    %v2705 = vsub.f32 %v2020, %v2438
    %v2706 = vsub.f32 %v2024, %v2441
    %v2707 = vsub.f32 %v2026, %v2441
    %v2708 = vsub.f32 %v2030, %v2444
    %v2709 = vsub.f32 %v2032, %v2444
    %v2710 = vsub.f32 %v2036, %v2447
    %v2711 = vsub.f32 %v2038, %v2447
    %v2712 = vsub.f32 %v2042, %v2450
    %v2713 = vsub.f32 %v2044, %v2450
    %v2714 = vsub.f32 %v2048, %v2453
    %v2715 = vsub.f32 %v2050, %v2453
    %v2716 = vsub.f32 %v2054, %v2456
    %v2717 = vsub.f32 %v2056, %v2456
    %v2718 = vsub.f32 %v2060, %v2459
    %v2719 = vsub.f32 %v2062, %v2459
    %v2720 = vsub.f32 %v2066, %v2462
    %v2721 = vsub.f32 %v2068, %v2462
    %v2722 = vsub.f32 %v2072, %v2465
    %v2723 = vsub.f32 %v2074, %v2465
    %v2724 = vsub.f32 %v2078, %v2468
    %v2725 = vsub.f32 %v2080, %v2468
    %v2726 = vsub.f32 %v2084, %v2471
    %v2727 = vsub.f32 %v2086, %v2471
    %v2728 = vmul.f32 %v2472, 1.442695
    %v2729 = vpow.pop %v2728
    %v2730 = vmul.f32 %v2473, 1.442695
    %v2731 = vpow.pop %v2730
    %v2732 = vmul.f32 %v2474, 1.442695
    %v2733 = vpow.pop %v2732
    %v2734 = vmul.f32 %v2475, 1.442695
    %v2735 = vpow.pop %v2734
    %v2736 = vmul.f32 %v2476, 1.442695
    %v2737 = vpow.pop %v2736
    %v2738 = vmul.f32 %v2477, 1.442695
    %v2739 = vpow.pop %v2738
    %v2740 = vmul.f32 %v2478, 1.442695
    %v2741 = vpow.pop %v2740
    %v2742 = vmul.f32 %v2479, 1.442695
    %v2743 = vpow.pop %v2742
    %v2744 = vmul.f32 %v2480, 1.442695
    %v2745 = vpow.pop %v2744
    %v2746 = vmul.f32 %v2481, 1.442695
    %v2747 = vpow.pop %v2746
    %v2748 = vmul.f32 %v2482, 1.442695
    %v2749 = vpow.pop %v2748
    %v2750 = vmul.f32 %v2483, 1.442695
    %v2751 = vpow.pop %v2750
    %v2752 = vmul.f32 %v2484, 1.442695
    %v2753 = vpow.pop %v2752
    %v2754 = vmul.f32 %v2485, 1.442695
    %v2755 = vpow.pop %v2754
    %v2756 = vmul.f32 %v2486, 1.442695
    %v2757 = vpow.pop %v2756
    %v2758 = vmul.f32 %v2487, 1.442695
    %v2759 = vpow.pop %v2758
    %v2760 = vmul.f32 %v2488, 1.442695
    %v2761 = vpow.pop %v2760
    %v2762 = vmul.f32 %v2489, 1.442695
    %v2763 = vpow.pop %v2762
    %v2764 = vmul.f32 %v2490, 1.442695
    %v2765 = vpow.pop %v2764
    %v2766 = vmul.f32 %v2491, 1.442695
    %v2767 = vpow.pop %v2766
    %v2768 = vmul.f32 %v2492, 1.442695
    %v2769 = vpow.pop %v2768
    %v2770 = vmul.f32 %v2493, 1.442695
    %v2771 = vpow.pop %v2770
    %v2772 = vmul.f32 %v2494, 1.442695
    %v2773 = vpow.pop %v2772
    %v2774 = vmul.f32 %v2495, 1.442695
    %v2775 = vpow.pop %v2774
    %v2776 = vmul.f32 %v2496, 1.442695
    %v2777 = vpow.pop %v2776
    %v2778 = vmul.f32 %v2497, 1.442695
    %v2779 = vpow.pop %v2778
    %v2780 = vmul.f32 %v2498, 1.442695
    %v2781 = vpow.pop %v2780
    %v2782 = vmul.f32 %v2499, 1.442695
    %v2783 = vpow.pop %v2782
    %v2784 = vmul.f32 %v2500, 1.442695
    %v2785 = vpow.pop %v2784
    %v2786 = vmul.f32 %v2501, 1.442695
    %v2787 = vpow.pop %v2786
    %v2788 = vmul.f32 %v2502, 1.442695
    %v2789 = vpow.pop %v2788
    %v2790 = vmul.f32 %v2503, 1.442695
    %v2791 = vpow.pop %v2790
    %v2792 = vmul.f32 %v2504, 1.442695
    %v2793 = vpow.pop %v2792
    %v2794 = vmul.f32 %v2505, 1.442695
    %v2795 = vpow.pop %v2794
    %v2796 = vmul.f32 %v2506, 1.442695
    %v2797 = vpow.pop %v2796
    %v2798 = vmul.f32 %v2507, 1.442695
    %v2799 = vpow.pop %v2798
    %v2800 = vmul.f32 %v2508, 1.442695
    %v2801 = vpow.pop %v2800
    %v2802 = vmul.f32 %v2509, 1.442695
    %v2803 = vpow.pop %v2802
    %v2804 = vmul.f32 %v2510, 1.442695
    %v2805 = vpow.pop %v2804
    %v2806 = vmul.f32 %v2511, 1.442695
    %v2807 = vpow.pop %v2806
    %v2808 = vmul.f32 %v2512, 1.442695
    %v2809 = vpow.pop %v2808
    %v2810 = vmul.f32 %v2513, 1.442695
    %v2811 = vpow.pop %v2810
    %v2812 = vmul.f32 %v2514, 1.442695
    %v2813 = vpow.pop %v2812
    %v2814 = vmul.f32 %v2515, 1.442695
    %v2815 = vpow.pop %v2814
    %v2816 = vmul.f32 %v2516, 1.442695
    %v2817 = vpow.pop %v2816
    %v2818 = vmul.f32 %v2517, 1.442695
    %v2819 = vpow.pop %v2818
    %v2820 = vmul.f32 %v2518, 1.442695
    %v2821 = vpow.pop %v2820
    %v2822 = vmul.f32 %v2519, 1.442695
    %v2823 = vpow.pop %v2822
    %v2824 = vmul.f32 %v2520, 1.442695
    %v2825 = vpow.pop %v2824
    %v2826 = vmul.f32 %v2521, 1.442695
    %v2827 = vpow.pop %v2826
    %v2828 = vmul.f32 %v2522, 1.442695
    %v2829 = vpow.pop %v2828
    %v2830 = vmul.f32 %v2523, 1.442695
    %v2831 = vpow.pop %v2830
    %v2832 = vmul.f32 %v2524, 1.442695
    %v2833 = vpow.pop %v2832
    %v2834 = vmul.f32 %v2525, 1.442695
    %v2835 = vpow.pop %v2834
    %v2836 = vmul.f32 %v2526, 1.442695
    %v2837 = vpow.pop %v2836
    %v2838 = vmul.f32 %v2527, 1.442695
    %v2839 = vpow.pop %v2838
    %v2840 = vmul.f32 %v2528, 1.442695
    %v2841 = vpow.pop %v2840
    %v2842 = vmul.f32 %v2529, 1.442695
    %v2843 = vpow.pop %v2842
    %v2844 = vmul.f32 %v2530, 1.442695
    %v2845 = vpow.pop %v2844
    %v2846 = vmul.f32 %v2531, 1.442695
    %v2847 = vpow.pop %v2846
    %v2848 = vmul.f32 %v2532, 1.442695
    %v2849 = vpow.pop %v2848
    %v2850 = vmul.f32 %v2533, 1.442695
    %v2851 = vpow.pop %v2850
    %v2852 = vmul.f32 %v2534, 1.442695
    %v2853 = vpow.pop %v2852
    %v2854 = vmul.f32 %v2535, 1.442695
    %v2855 = vpow.pop %v2854
    %v2856 = vmul.f32 %v2536, 1.442695
    %v2857 = vpow.pop %v2856
    %v2858 = vmul.f32 %v2537, 1.442695
    %v2859 = vpow.pop %v2858
    %v2860 = vmul.f32 %v2538, 1.442695
    %v2861 = vpow.pop %v2860
    %v2862 = vmul.f32 %v2539, 1.442695
    %v2863 = vpow.pop %v2862
    %v2864 = vmul.f32 %v2540, 1.442695
    %v2865 = vpow.pop %v2864
    %v2866 = vmul.f32 %v2541, 1.442695
    %v2867 = vpow.pop %v2866
    %v2868 = vmul.f32 %v2542, 1.442695
    %v2869 = vpow.pop %v2868
    %v2870 = vmul.f32 %v2543, 1.442695
    %v2871 = vpow.pop %v2870
    %v2872 = vmul.f32 %v2544, 1.442695
    %v2873 = vpow.pop %v2872
    %v2874 = vmul.f32 %v2545, 1.442695
    %v2875 = vpow.pop %v2874
    %v2876 = vmul.f32 %v2546, 1.442695
    %v2877 = vpow.pop %v2876
    %v2878 = vmul.f32 %v2547, 1.442695
    %v2879 = vpow.pop %v2878
    %v2880 = vmul.f32 %v2548, 1.442695
    %v2881 = vpow.pop %v2880
    %v2882 = vmul.f32 %v2549, 1.442695
    %v2883 = vpow.pop %v2882
    %v2884 = vmul.f32 %v2550, 1.442695
    %v2885 = vpow.pop %v2884
    %v2886 = vmul.f32 %v2551, 1.442695
    %v2887 = vpow.pop %v2886
    %v2888 = vmul.f32 %v2552, 1.442695
    %v2889 = vpow.pop %v2888
    %v2890 = vmul.f32 %v2553, 1.442695
    %v2891 = vpow.pop %v2890
    %v2892 = vmul.f32 %v2554, 1.442695
    %v2893 = vpow.pop %v2892
    %v2894 = vmul.f32 %v2555, 1.442695
    %v2895 = vpow.pop %v2894
    %v2896 = vmul.f32 %v2556, 1.442695
    %v2897 = vpow.pop %v2896
    %v2898 = vmul.f32 %v2557, 1.442695
    %v2899 = vpow.pop %v2898
    %v2900 = vmul.f32 %v2558, 1.442695
    %v2901 = vpow.pop %v2900
    %v2902 = vmul.f32 %v2559, 1.442695
    %v2903 = vpow.pop %v2902
    %v2904 = vmul.f32 %v2560, 1.442695
    %v2905 = vpow.pop %v2904
    %v2906 = vmul.f32 %v2561, 1.442695
    %v2907 = vpow.pop %v2906
    %v2908 = vmul.f32 %v2562, 1.442695
    %v2909 = vpow.pop %v2908
    %v2910 = vmul.f32 %v2563, 1.442695
    %v2911 = vpow.pop %v2910
    %v2912 = vmul.f32 %v2564, 1.442695
    %v2913 = vpow.pop %v2912
    %v2914 = vmul.f32 %v2565, 1.442695
    %v2915 = vpow.pop %v2914
    %v2916 = vmul.f32 %v2566, 1.442695
    %v2917 = vpow.pop %v2916
    %v2918 = vmul.f32 %v2567, 1.442695
    %v2919 = vpow.pop %v2918
    %v2920 = vmul.f32 %v2568, 1.442695
    %v2921 = vpow.pop %v2920
    %v2922 = vmul.f32 %v2569, 1.442695
    %v2923 = vpow.pop %v2922
    %v2924 = vmul.f32 %v2570, 1.442695
    %v2925 = vpow.pop %v2924
    %v2926 = vmul.f32 %v2571, 1.442695
    %v2927 = vpow.pop %v2926
    %v2928 = vmul.f32 %v2572, 1.442695
    %v2929 = vpow.pop %v2928
    %v2930 = vmul.f32 %v2573, 1.442695
    %v2931 = vpow.pop %v2930
    %v2932 = vmul.f32 %v2574, 1.442695
    %v2933 = vpow.pop %v2932
    %v2934 = vmul.f32 %v2575, 1.442695
    %v2935 = vpow.pop %v2934
    %v2936 = vmul.f32 %v2576, 1.442695
    %v2937 = vpow.pop %v2936
    %v2938 = vmul.f32 %v2577, 1.442695
    %v2939 = vpow.pop %v2938
    %v2940 = vmul.f32 %v2578, 1.442695
    %v2941 = vpow.pop %v2940
    %v2942 = vmul.f32 %v2579, 1.442695
    %v2943 = vpow.pop %v2942
    %v2944 = vmul.f32 %v2580, 1.442695
    %v2945 = vpow.pop %v2944
    %v2946 = vmul.f32 %v2581, 1.442695
    %v2947 = vpow.pop %v2946
    %v2948 = vmul.f32 %v2582, 1.442695
    %v2949 = vpow.pop %v2948
    %v2950 = vmul.f32 %v2583, 1.442695
    %v2951 = vpow.pop %v2950
    %v2952 = vmul.f32 %v2584, 1.442695
    %v2953 = vpow.pop %v2952
    %v2954 = vmul.f32 %v2585, 1.442695
    %v2955 = vpow.pop %v2954
    %v2956 = vmul.f32 %v2586, 1.442695
    %v2957 = vpow.pop %v2956
    %v2958 = vmul.f32 %v2587, 1.442695
    %v2959 = vpow.pop %v2958
    %v2960 = vmul.f32 %v2588, 1.442695
    %v2961 = vpow.pop %v2960
    %v2962 = vmul.f32 %v2589, 1.442695
    %v2963 = vpow.pop %v2962
    %v2964 = vmul.f32 %v2590, 1.442695
    %v2965 = vpow.pop %v2964
    %v2966 = vmul.f32 %v2591, 1.442695
    %v2967 = vpow.pop %v2966
    %v2968 = vmul.f32 %v2592, 1.442695
    %v2969 = vpow.pop %v2968
    %v2970 = vmul.f32 %v2593, 1.442695
    %v2971 = vpow.pop %v2970
    %v2972 = vmul.f32 %v2594, 1.442695
    %v2973 = vpow.pop %v2972
    %v2974 = vmul.f32 %v2595, 1.442695
    %v2975 = vpow.pop %v2974
    %v2976 = vmul.f32 %v2596, 1.442695
    %v2977 = vpow.pop %v2976
    %v2978 = vmul.f32 %v2597, 1.442695
    %v2979 = vpow.pop %v2978
    %v2980 = vmul.f32 %v2598, 1.442695
    %v2981 = vpow.pop %v2980
    %v2982 = vmul.f32 %v2599, 1.442695
    %v2983 = vpow.pop %v2982
    %v2984 = vmul.f32 %v2600, 1.442695
    %v2985 = vpow.pop %v2984
    %v2986 = vmul.f32 %v2601, 1.442695
    %v2987 = vpow.pop %v2986
    %v2988 = vmul.f32 %v2602, 1.442695
    %v2989 = vpow.pop %v2988
    %v2990 = vmul.f32 %v2603, 1.442695
    %v2991 = vpow.pop %v2990
    %v2992 = vmul.f32 %v2604, 1.442695
    %v2993 = vpow.pop %v2992
    %v2994 = vmul.f32 %v2605, 1.442695
    %v2995 = vpow.pop %v2994
    %v2996 = vmul.f32 %v2606, 1.442695
    %v2997 = vpow.pop %v2996
    %v2998 = vmul.f32 %v2607, 1.442695
    %v2999 = vpow.pop %v2998
    %v3000 = vmul.f32 %v2608, 1.442695
    %v3001 = vpow.pop %v3000
    %v3002 = vmul.f32 %v2609, 1.442695
    %v3003 = vpow.pop %v3002
    %v3004 = vmul.f32 %v2610, 1.442695
    %v3005 = vpow.pop %v3004
    %v3006 = vmul.f32 %v2611, 1.442695
    %v3007 = vpow.pop %v3006
    %v3008 = vmul.f32 %v2612, 1.442695
    %v3009 = vpow.pop %v3008
    %v3010 = vmul.f32 %v2613, 1.442695
    %v3011 = vpow.pop %v3010
    %v3012 = vmul.f32 %v2614, 1.442695
    %v3013 = vpow.pop %v3012
    %v3014 = vmul.f32 %v2615, 1.442695
    %v3015 = vpow.pop %v3014
    %v3016 = vmul.f32 %v2616, 1.442695
    %v3017 = vpow.pop %v3016
    %v3018 = vmul.f32 %v2617, 1.442695
    %v3019 = vpow.pop %v3018
    %v3020 = vmul.f32 %v2618, 1.442695
    %v3021 = vpow.pop %v3020
    %v3022 = vmul.f32 %v2619, 1.442695
    %v3023 = vpow.pop %v3022
    %v3024 = vmul.f32 %v2620, 1.442695
    %v3025 = vpow.pop %v3024
    %v3026 = vmul.f32 %v2621, 1.442695
    %v3027 = vpow.pop %v3026
    %v3028 = vmul.f32 %v2622, 1.442695
    %v3029 = vpow.pop %v3028
    %v3030 = vmul.f32 %v2623, 1.442695
    %v3031 = vpow.pop %v3030
    %v3032 = vmul.f32 %v2624, 1.442695
    %v3033 = vpow.pop %v3032
    %v3034 = vmul.f32 %v2625, 1.442695
    %v3035 = vpow.pop %v3034
    %v3036 = vmul.f32 %v2626, 1.442695
    %v3037 = vpow.pop %v3036
    %v3038 = vmul.f32 %v2627, 1.442695
    %v3039 = vpow.pop %v3038
    %v3040 = vmul.f32 %v2628, 1.442695
    %v3041 = vpow.pop %v3040
    %v3042 = vmul.f32 %v2629, 1.442695
    %v3043 = vpow.pop %v3042
    %v3044 = vmul.f32 %v2630, 1.442695
    %v3045 = vpow.pop %v3044
    %v3046 = vmul.f32 %v2631, 1.442695
    %v3047 = vpow.pop %v3046
    %v3048 = vmul.f32 %v2632, 1.442695
    %v3049 = vpow.pop %v3048
    %v3050 = vmul.f32 %v2633, 1.442695
    %v3051 = vpow.pop %v3050
    %v3052 = vmul.f32 %v2634, 1.442695
    %v3053 = vpow.pop %v3052
    %v3054 = vmul.f32 %v2635, 1.442695
    %v3055 = vpow.pop %v3054
    %v3056 = vmul.f32 %v2636, 1.442695
    %v3057 = vpow.pop %v3056
    %v3058 = vmul.f32 %v2637, 1.442695
    %v3059 = vpow.pop %v3058
    %v3060 = vmul.f32 %v2638, 1.442695
    %v3061 = vpow.pop %v3060
    %v3062 = vmul.f32 %v2639, 1.442695
    %v3063 = vpow.pop %v3062
    %v3064 = vmul.f32 %v2640, 1.442695
    %v3065 = vpow.pop %v3064
    %v3066 = vmul.f32 %v2641, 1.442695
    %v3067 = vpow.pop %v3066
    %v3068 = vmul.f32 %v2642, 1.442695
    %v3069 = vpow.pop %v3068
    %v3070 = vmul.f32 %v2643, 1.442695
    %v3071 = vpow.pop %v3070
    %v3072 = vmul.f32 %v2644, 1.442695
    %v3073 = vpow.pop %v3072
    %v3074 = vmul.f32 %v2645, 1.442695
    %v3075 = vpow.pop %v3074
    %v3076 = vmul.f32 %v2646, 1.442695
    %v3077 = vpow.pop %v3076
    %v3078 = vmul.f32 %v2647, 1.442695
    %v3079 = vpow.pop %v3078
    %v3080 = vmul.f32 %v2648, 1.442695
    %v3081 = vpow.pop %v3080
    %v3082 = vmul.f32 %v2649, 1.442695
    %v3083 = vpow.pop %v3082
    %v3084 = vmul.f32 %v2650, 1.442695
    %v3085 = vpow.pop %v3084
    %v3086 = vmul.f32 %v2651, 1.442695
    %v3087 = vpow.pop %v3086
    %v3088 = vmul.f32 %v2652, 1.442695
    %v3089 = vpow.pop %v3088
    %v3090 = vmul.f32 %v2653, 1.442695
    %v3091 = vpow.pop %v3090
    %v3092 = vmul.f32 %v2654, 1.442695
    %v3093 = vpow.pop %v3092
    %v3094 = vmul.f32 %v2655, 1.442695
    %v3095 = vpow.pop %v3094
    %v3096 = vmul.f32 %v2656, 1.442695
    %v3097 = vpow.pop %v3096
    %v3098 = vmul.f32 %v2657, 1.442695
    %v3099 = vpow.pop %v3098
    %v3100 = vmul.f32 %v2658, 1.442695
    %v3101 = vpow.pop %v3100
    %v3102 = vmul.f32 %v2659, 1.442695
    %v3103 = vpow.pop %v3102
    %v3104 = vmul.f32 %v2660, 1.442695
    %v3105 = vpow.pop %v3104
    %v3106 = vmul.f32 %v2661, 1.442695
    %v3107 = vpow.pop %v3106
    %v3108 = vmul.f32 %v2662, 1.442695
    %v3109 = vpow.pop %v3108
    %v3110 = vmul.f32 %v2663, 1.442695
    %v3111 = vpow.pop %v3110
    %v3112 = vmul.f32 %v2664, 1.442695
    %v3113 = vpow.pop %v3112
    %v3114 = vmul.f32 %v2665, 1.442695
    %v3115 = vpow.pop %v3114
    %v3116 = vmul.f32 %v2666, 1.442695
    %v3117 = vpow.pop %v3116
    %v3118 = vmul.f32 %v2667, 1.442695
    %v3119 = vpow.pop %v3118
    %v3120 = vmul.f32 %v2668, 1.442695
    %v3121 = vpow.pop %v3120
    %v3122 = vmul.f32 %v2669, 1.442695
    %v3123 = vpow.pop %v3122
    %v3124 = vmul.f32 %v2670, 1.442695
    %v3125 = vpow.pop %v3124
    %v3126 = vmul.f32 %v2671, 1.442695
    %v3127 = vpow.pop %v3126
    %v3128 = vmul.f32 %v2672, 1.442695
    %v3129 = vpow.pop %v3128
    %v3130 = vmul.f32 %v2673, 1.442695
    %v3131 = vpow.pop %v3130
    %v3132 = vmul.f32 %v2674, 1.442695
    %v3133 = vpow.pop %v3132
    %v3134 = vmul.f32 %v2675, 1.442695
    %v3135 = vpow.pop %v3134
    %v3136 = vmul.f32 %v2676, 1.442695
    %v3137 = vpow.pop %v3136
    %v3138 = vmul.f32 %v2677, 1.442695
    %v3139 = vpow.pop %v3138
    %v3140 = vmul.f32 %v2678, 1.442695
    %v3141 = vpow.pop %v3140
    %v3142 = vmul.f32 %v2679, 1.442695
    %v3143 = vpow.pop %v3142
    %v3144 = vmul.f32 %v2680, 1.442695
    %v3145 = vpow.pop %v3144
    %v3146 = vmul.f32 %v2681, 1.442695
    %v3147 = vpow.pop %v3146
    %v3148 = vmul.f32 %v2682, 1.442695
    %v3149 = vpow.pop %v3148
    %v3150 = vmul.f32 %v2683, 1.442695
    %v3151 = vpow.pop %v3150
    %v3152 = vmul.f32 %v2684, 1.442695
    %v3153 = vpow.pop %v3152
    %v3154 = vmul.f32 %v2685, 1.442695
    %v3155 = vpow.pop %v3154
    %v3156 = vmul.f32 %v2686, 1.442695
    %v3157 = vpow.pop %v3156
    %v3158 = vmul.f32 %v2687, 1.442695
    %v3159 = vpow.pop %v3158
    %v3160 = vmul.f32 %v2688, 1.442695
    %v3161 = vpow.pop %v3160
    %v3162 = vmul.f32 %v2689, 1.442695
    %v3163 = vpow.pop %v3162
    %v3164 = vmul.f32 %v2690, 1.442695
    %v3165 = vpow.pop %v3164
    %v3166 = vmul.f32 %v2691, 1.442695
    %v3167 = vpow.pop %v3166
    %v3168 = vmul.f32 %v2692, 1.442695
    %v3169 = vpow.pop %v3168
    %v3170 = vmul.f32 %v2693, 1.442695
    %v3171 = vpow.pop %v3170
    %v3172 = vmul.f32 %v2694, 1.442695
    %v3173 = vpow.pop %v3172
    %v3174 = vmul.f32 %v2695, 1.442695
    %v3175 = vpow.pop %v3174
    %v3176 = vmul.f32 %v2696, 1.442695
    %v3177 = vpow.pop %v3176
    %v3178 = vmul.f32 %v2697, 1.442695
    %v3179 = vpow.pop %v3178
    %v3180 = vmul.f32 %v2698, 1.442695
    %v3181 = vpow.pop %v3180
    %v3182 = vmul.f32 %v2699, 1.442695
    %v3183 = vpow.pop %v3182
    %v3184 = vmul.f32 %v2700, 1.442695
    %v3185 = vpow.pop %v3184
    %v3186 = vmul.f32 %v2701, 1.442695
    %v3187 = vpow.pop %v3186
    %v3188 = vmul.f32 %v2702, 1.442695
    %v3189 = vpow.pop %v3188
    %v3190 = vmul.f32 %v2703, 1.442695
    %v3191 = vpow.pop %v3190
    %v3192 = vmul.f32 %v2704, 1.442695
    %v3193 = vpow.pop %v3192
    %v3194 = vmul.f32 %v2705, 1.442695
    %v3195 = vpow.pop %v3194
    %v3196 = vmul.f32 %v2706, 1.442695
    %v3197 = vpow.pop %v3196
    %v3198 = vmul.f32 %v2707, 1.442695
    %v3199 = vpow.pop %v3198
    %v3200 = vmul.f32 %v2708, 1.442695
    %v3201 = vpow.pop %v3200
    %v3202 = vmul.f32 %v2709, 1.442695
    %v3203 = vpow.pop %v3202
    %v3204 = vmul.f32 %v2710, 1.442695
    %v3205 = vpow.pop %v3204
    %v3206 = vmul.f32 %v2711, 1.442695
    %v3207 = vpow.pop %v3206
    %v3208 = vmul.f32 %v2712, 1.442695
    %v3209 = vpow.pop %v3208
    %v3210 = vmul.f32 %v2713, 1.442695
    %v3211 = vpow.pop %v3210
    %v3212 = vmul.f32 %v2714, 1.442695
    %v3213 = vpow.pop %v3212
    %v3214 = vmul.f32 %v2715, 1.442695
    %v3215 = vpow.pop %v3214
    %v3216 = vmul.f32 %v2716, 1.442695
    %v3217 = vpow.pop %v3216
    %v3218 = vmul.f32 %v2717, 1.442695
    %v3219 = vpow.pop %v3218
    %v3220 = vmul.f32 %v2718, 1.442695
    %v3221 = vpow.pop %v3220
    %v3222 = vmul.f32 %v2719, 1.442695
    %v3223 = vpow.pop %v3222
    %v3224 = vmul.f32 %v2720, 1.442695
    %v3225 = vpow.pop %v3224
    %v3226 = vmul.f32 %v2721, 1.442695
    %v3227 = vpow.pop %v3226
    %v3228 = vmul.f32 %v2722, 1.442695
    %v3229 = vpow.pop %v3228
    %v3230 = vmul.f32 %v2723, 1.442695
    %v3231 = vpow.pop %v3230
    %v3232 = vmul.f32 %v2724, 1.442695
    %v3233 = vpow.pop %v3232
    %v3234 = vmul.f32 %v2725, 1.442695
    %v3235 = vpow.pop %v3234
    %v3236 = vmul.f32 %v2726, 1.442695
    %v3237 = vpow.pop %v3236
    %v3238 = vmul.f32 %v2727, 1.442695
    %v3239 = vpow.pop %v3238
    %v3240 = vadd.f32 %v2729, %v2731
    %3241 = vadd.xlane.f32.xlu0 %v3240
    %v3242 = vpop.xlane.xlu0 %3241
    %v3243 = vadd.f32 %v2733, %v2735
    %3244 = vadd.xlane.f32.xlu0 %v3243
    %v3245 = vpop.xlane.xlu0 %3244
    %v3246 = vadd.f32 %v2737, %v2739
    %3247 = vadd.xlane.f32.xlu0 %v3246
    %v3248 = vpop.xlane.xlu0 %3247
    %v3249 = vadd.f32 %v2741, %v2743
    %3250 = vadd.xlane.f32.xlu0 %v3249
    %v3251 = vpop.xlane.xlu0 %3250
    %v3252 = vadd.f32 %v2745, %v2747
    %3253 = vadd.xlane.f32.xlu0 %v3252
    %v3254 = vpop.xlane.xlu0 %3253
    %v3255 = vadd.f32 %v2749, %v2751
    %3256 = vadd.xlane.f32.xlu0 %v3255
    %v3257 = vpop.xlane.xlu0 %3256
    %v3258 = vadd.f32 %v2753, %v2755
    %3259 = vadd.xlane.f32.xlu0 %v3258
    %v3260 = vpop.xlane.xlu0 %3259
    %v3261 = vadd.f32 %v2757, %v2759
    %3262 = vadd.xlane.f32.xlu0 %v3261
    %v3263 = vpop.xlane.xlu0 %3262
    %v3264 = vadd.f32 %v2761, %v2763
    %3265 = vadd.xlane.f32.xlu0 %v3264
    %v3266 = vpop.xlane.xlu0 %3265
    %v3267 = vadd.f32 %v2765, %v2767
    %3268 = vadd.xlane.f32.xlu0 %v3267
    %v3269 = vpop.xlane.xlu0 %3268
    %v3270 = vadd.f32 %v2769, %v2771
    %3271 = vadd.xlane.f32.xlu0 %v3270
    %v3272 = vpop.xlane.xlu0 %3271
    %v3273 = vadd.f32 %v2773, %v2775
    %3274 = vadd.xlane.f32.xlu0 %v3273
    %v3275 = vpop.xlane.xlu0 %3274
    %v3276 = vadd.f32 %v2777, %v2779
    %3277 = vadd.xlane.f32.xlu0 %v3276
    %v3278 = vpop.xlane.xlu0 %3277
    %v3279 = vadd.f32 %v2781, %v2783
    %3280 = vadd.xlane.f32.xlu0 %v3279
    %v3281 = vpop.xlane.xlu0 %3280
    %v3282 = vadd.f32 %v2785, %v2787
    %3283 = vadd.xlane.f32.xlu0 %v3282
    %v3284 = vpop.xlane.xlu0 %3283
    %v3285 = vadd.f32 %v2789, %v2791
    %3286 = vadd.xlane.f32.xlu0 %v3285
    %v3287 = vpop.xlane.xlu0 %3286
    %v3288 = vadd.f32 %v2793, %v2795
    %3289 = vadd.xlane.f32.xlu0 %v3288
    %v3290 = vpop.xlane.xlu0 %3289
    %v3291 = vadd.f32 %v2797, %v2799
    %3292 = vadd.xlane.f32.xlu0 %v3291
    %v3293 = vpop.xlane.xlu0 %3292
    %v3294 = vadd.f32 %v2801, %v2803
    %3295 = vadd.xlane.f32.xlu0 %v3294
    %v3296 = vpop.xlane.xlu0 %3295
    %v3297 = vadd.f32 %v2805, %v2807
    %3298 = vadd.xlane.f32.xlu0 %v3297
    %v3299 = vpop.xlane.xlu0 %3298
    %v3300 = vadd.f32 %v2809, %v2811
    %3301 = vadd.xlane.f32.xlu0 %v3300
    %v3302 = vpop.xlane.xlu0 %3301
    %v3303 = vadd.f32 %v2813, %v2815
    %3304 = vadd.xlane.f32.xlu0 %v3303
    %v3305 = vpop.xlane.xlu0 %3304
    %v3306 = vadd.f32 %v2817, %v2819
    %3307 = vadd.xlane.f32.xlu0 %v3306
    %v3308 = vpop.xlane.xlu0 %3307
    %v3309 = vadd.f32 %v2821, %v2823
    %3310 = vadd.xlane.f32.xlu0 %v3309
    %v3311 = vpop.xlane.xlu0 %3310
    %v3312 = vadd.f32 %v2825, %v2827
    %3313 = vadd.xlane.f32.xlu0 %v3312
    %v3314 = vpop.xlane.xlu0 %3313
    %v3315 = vadd.f32 %v2829, %v2831
    %3316 = vadd.xlane.f32.xlu0 %v3315
    %v3317 = vpop.xlane.xlu0 %3316
    %v3318 = vadd.f32 %v2833, %v2835
    %3319 = vadd.xlane.f32.xlu0 %v3318
    %v3320 = vpop.xlane.xlu0 %3319
    %v3321 = vadd.f32 %v2837, %v2839
    %3322 = vadd.xlane.f32.xlu0 %v3321
    %v3323 = vpop.xlane.xlu0 %3322
    %v3324 = vadd.f32 %v2841, %v2843
    %3325 = vadd.xlane.f32.xlu0 %v3324
    %v3326 = vpop.xlane.xlu0 %3325
    %v3327 = vadd.f32 %v2845, %v2847
    %3328 = vadd.xlane.f32.xlu0 %v3327
    %v3329 = vpop.xlane.xlu0 %3328
    %v3330 = vadd.f32 %v2849, %v2851
    %3331 = vadd.xlane.f32.xlu0 %v3330
    %v3332 = vpop.xlane.xlu0 %3331
    %v3333 = vadd.f32 %v2853, %v2855
    %3334 = vadd.xlane.f32.xlu0 %v3333
    %v3335 = vpop.xlane.xlu0 %3334
    %v3336 = vadd.f32 %v2857, %v2859
    %3337 = vadd.xlane.f32.xlu0 %v3336
    %v3338 = vpop.xlane.xlu0 %3337
    %v3339 = vadd.f32 %v2861, %v2863
    %3340 = vadd.xlane.f32.xlu0 %v3339
    %v3341 = vpop.xlane.xlu0 %3340
    %v3342 = vadd.f32 %v2865, %v2867
    %3343 = vadd.xlane.f32.xlu0 %v3342
    %v3344 = vpop.xlane.xlu0 %3343
    %v3345 = vadd.f32 %v2869, %v2871
    %3346 = vadd.xlane.f32.xlu0 %v3345
    %v3347 = vpop.xlane.xlu0 %3346
    %v3348 = vadd.f32 %v2873, %v2875
    %3349 = vadd.xlane.f32.xlu0 %v3348
    %v3350 = vpop.xlane.xlu0 %3349
    %v3351 = vadd.f32 %v2877, %v2879
    %3352 = vadd.xlane.f32.xlu0 %v3351
    %v3353 = vpop.xlane.xlu0 %3352
    %v3354 = vadd.f32 %v2881, %v2883
    %3355 = vadd.xlane.f32.xlu0 %v3354
    %v3356 = vpop.xlane.xlu0 %3355
    %v3357 = vadd.f32 %v2885, %v2887
    %3358 = vadd.xlane.f32.xlu0 %v3357
    %v3359 = vpop.xlane.xlu0 %3358
    %v3360 = vadd.f32 %v2889, %v2891
    %3361 = vadd.xlane.f32.xlu0 %v3360
    %v3362 = vpop.xlane.xlu0 %3361
    %v3363 = vadd.f32 %v2893, %v2895
    %3364 = vadd.xlane.f32.xlu0 %v3363
    %v3365 = vpop.xlane.xlu0 %3364
    %v3366 = vadd.f32 %v2897, %v2899
    %3367 = vadd.xlane.f32.xlu0 %v3366
    %v3368 = vpop.xlane.xlu0 %3367
    %v3369 = vadd.f32 %v2901, %v2903
    %3370 = vadd.xlane.f32.xlu0 %v3369
    %v3371 = vpop.xlane.xlu0 %3370
    %v3372 = vadd.f32 %v2905, %v2907
    %3373 = vadd.xlane.f32.xlu0 %v3372
    %v3374 = vpop.xlane.xlu0 %3373
    %v3375 = vadd.f32 %v2909, %v2911
    %3376 = vadd.xlane.f32.xlu0 %v3375
    %v3377 = vpop.xlane.xlu0 %3376
    %v3378 = vadd.f32 %v2913, %v2915
    %3379 = vadd.xlane.f32.xlu0 %v3378
    %v3380 = vpop.xlane.xlu0 %3379
    %v3381 = vadd.f32 %v2917, %v2919
    %3382 = vadd.xlane.f32.xlu0 %v3381
    %v3383 = vpop.xlane.xlu0 %3382
    %v3384 = vadd.f32 %v2921, %v2923
    %3385 = vadd.xlane.f32.xlu0 %v3384
    %v3386 = vpop.xlane.xlu0 %3385
    %v3387 = vadd.f32 %v2925, %v2927
    %3388 = vadd.xlane.f32.xlu0 %v3387
    %v3389 = vpop.xlane.xlu0 %3388
    %v3390 = vadd.f32 %v2929, %v2931
    %3391 = vadd.xlane.f32.xlu0 %v3390
    %v3392 = vpop.xlane.xlu0 %3391
    %v3393 = vadd.f32 %v2933, %v2935
    %3394 = vadd.xlane.f32.xlu0 %v3393
    %v3395 = vpop.xlane.xlu0 %3394
    %v3396 = vadd.f32 %v2937, %v2939
    %3397 = vadd.xlane.f32.xlu0 %v3396
    %v3398 = vpop.xlane.xlu0 %3397
    %v3399 = vadd.f32 %v2941, %v2943
    %3400 = vadd.xlane.f32.xlu0 %v3399
    %v3401 = vpop.xlane.xlu0 %3400
    %v3402 = vadd.f32 %v2945, %v2947
    %3403 = vadd.xlane.f32.xlu0 %v3402
    %v3404 = vpop.xlane.xlu0 %3403
    %v3405 = vadd.f32 %v2949, %v2951
    %3406 = vadd.xlane.f32.xlu0 %v3405
    %v3407 = vpop.xlane.xlu0 %3406
    %v3408 = vadd.f32 %v2953, %v2955
    %3409 = vadd.xlane.f32.xlu0 %v3408
    %v3410 = vpop.xlane.xlu0 %3409
    %v3411 = vadd.f32 %v2957, %v2959
    %3412 = vadd.xlane.f32.xlu0 %v3411
    %v3413 = vpop.xlane.xlu0 %3412
    %v3414 = vadd.f32 %v2961, %v2963
    %3415 = vadd.xlane.f32.xlu0 %v3414
    %v3416 = vpop.xlane.xlu0 %3415
    %v3417 = vadd.f32 %v2965, %v2967
    %3418 = vadd.xlane.f32.xlu0 %v3417
    %v3419 = vpop.xlane.xlu0 %3418
    %v3420 = vadd.f32 %v2969, %v2971
    %3421 = vadd.xlane.f32.xlu0 %v3420
    %v3422 = vpop.xlane.xlu0 %3421
    %v3423 = vadd.f32 %v2973, %v2975
    %3424 = vadd.xlane.f32.xlu0 %v3423
    %v3425 = vpop.xlane.xlu0 %3424
    %v3426 = vadd.f32 %v2977, %v2979
    %3427 = vadd.xlane.f32.xlu0 %v3426
    %v3428 = vpop.xlane.xlu0 %3427
    %v3429 = vadd.f32 %v2981, %v2983
    %3430 = vadd.xlane.f32.xlu0 %v3429
    %v3431 = vpop.xlane.xlu0 %3430
    %v3432 = vadd.f32 %v2985, %v2987
    %3433 = vadd.xlane.f32.xlu0 %v3432
    %v3434 = vpop.xlane.xlu0 %3433
    %v3435 = vadd.f32 %v2989, %v2991
    %3436 = vadd.xlane.f32.xlu0 %v3435
    %v3437 = vpop.xlane.xlu0 %3436
    %v3438 = vadd.f32 %v2993, %v2995
    %3439 = vadd.xlane.f32.xlu0 %v3438
    %v3440 = vpop.xlane.xlu0 %3439
    %v3441 = vadd.f32 %v2997, %v2999
    %3442 = vadd.xlane.f32.xlu0 %v3441
    %v3443 = vpop.xlane.xlu0 %3442
    %v3444 = vadd.f32 %v3001, %v3003
    %3445 = vadd.xlane.f32.xlu0 %v3444
    %v3446 = vpop.xlane.xlu0 %3445
    %v3447 = vadd.f32 %v3005, %v3007
    %3448 = vadd.xlane.f32.xlu0 %v3447
    %v3449 = vpop.xlane.xlu0 %3448
    %v3450 = vadd.f32 %v3009, %v3011
    %3451 = vadd.xlane.f32.xlu0 %v3450
    %v3452 = vpop.xlane.xlu0 %3451
    %v3453 = vadd.f32 %v3013, %v3015
    %3454 = vadd.xlane.f32.xlu0 %v3453
    %v3455 = vpop.xlane.xlu0 %3454
    %v3456 = vadd.f32 %v3017, %v3019
    %3457 = vadd.xlane.f32.xlu0 %v3456
    %v3458 = vpop.xlane.xlu0 %3457
    %v3459 = vadd.f32 %v3021, %v3023
    %3460 = vadd.xlane.f32.xlu0 %v3459
    %v3461 = vpop.xlane.xlu0 %3460
    %v3462 = vadd.f32 %v3025, %v3027
    %3463 = vadd.xlane.f32.xlu0 %v3462
    %v3464 = vpop.xlane.xlu0 %3463
    %v3465 = vadd.f32 %v3029, %v3031
    %3466 = vadd.xlane.f32.xlu0 %v3465
    %v3467 = vpop.xlane.xlu0 %3466
    %v3468 = vadd.f32 %v3033, %v3035
    %3469 = vadd.xlane.f32.xlu0 %v3468
    %v3470 = vpop.xlane.xlu0 %3469
    %v3471 = vadd.f32 %v3037, %v3039
    %3472 = vadd.xlane.f32.xlu0 %v3471
    %v3473 = vpop.xlane.xlu0 %3472
    %v3474 = vadd.f32 %v3041, %v3043
    %3475 = vadd.xlane.f32.xlu0 %v3474
    %v3476 = vpop.xlane.xlu0 %3475
    %v3477 = vadd.f32 %v3045, %v3047
    %3478 = vadd.xlane.f32.xlu0 %v3477
    %v3479 = vpop.xlane.xlu0 %3478
    %v3480 = vadd.f32 %v3049, %v3051
    %3481 = vadd.xlane.f32.xlu0 %v3480
    %v3482 = vpop.xlane.xlu0 %3481
    %v3483 = vadd.f32 %v3053, %v3055
    %3484 = vadd.xlane.f32.xlu0 %v3483
    %v3485 = vpop.xlane.xlu0 %3484
    %v3486 = vadd.f32 %v3057, %v3059
    %3487 = vadd.xlane.f32.xlu0 %v3486
    %v3488 = vpop.xlane.xlu0 %3487
    %v3489 = vadd.f32 %v3061, %v3063
    %3490 = vadd.xlane.f32.xlu0 %v3489
    %v3491 = vpop.xlane.xlu0 %3490
    %v3492 = vadd.f32 %v3065, %v3067
    %3493 = vadd.xlane.f32.xlu0 %v3492
    %v3494 = vpop.xlane.xlu0 %3493
    %v3495 = vadd.f32 %v3069, %v3071
    %3496 = vadd.xlane.f32.xlu0 %v3495
    %v3497 = vpop.xlane.xlu0 %3496
    %v3498 = vadd.f32 %v3073, %v3075
    %3499 = vadd.xlane.f32.xlu0 %v3498
    %v3500 = vpop.xlane.xlu0 %3499
    %v3501 = vadd.f32 %v3077, %v3079
    %3502 = vadd.xlane.f32.xlu0 %v3501
    %v3503 = vpop.xlane.xlu0 %3502
    %v3504 = vadd.f32 %v3081, %v3083
    %3505 = vadd.xlane.f32.xlu0 %v3504
    %v3506 = vpop.xlane.xlu0 %3505
    %v3507 = vadd.f32 %v3085, %v3087
    %3508 = vadd.xlane.f32.xlu0 %v3507
    %v3509 = vpop.xlane.xlu0 %3508
    %v3510 = vadd.f32 %v3089, %v3091
    %3511 = vadd.xlane.f32.xlu0 %v3510
    %v3512 = vpop.xlane.xlu0 %3511
    %v3513 = vadd.f32 %v3093, %v3095
    %3514 = vadd.xlane.f32.xlu0 %v3513
    %v3515 = vpop.xlane.xlu0 %3514
    %v3516 = vadd.f32 %v3097, %v3099
    %3517 = vadd.xlane.f32.xlu0 %v3516
    %v3518 = vpop.xlane.xlu0 %3517
    %v3519 = vadd.f32 %v3101, %v3103
    %3520 = vadd.xlane.f32.xlu0 %v3519
    %v3521 = vpop.xlane.xlu0 %3520
    %v3522 = vadd.f32 %v3105, %v3107
    %3523 = vadd.xlane.f32.xlu0 %v3522
    %v3524 = vpop.xlane.xlu0 %3523
    %v3525 = vadd.f32 %v3109, %v3111
    %3526 = vadd.xlane.f32.xlu0 %v3525
    %v3527 = vpop.xlane.xlu0 %3526
    %v3528 = vadd.f32 %v3113, %v3115
    %3529 = vadd.xlane.f32.xlu0 %v3528
    %v3530 = vpop.xlane.xlu0 %3529
    %v3531 = vadd.f32 %v3117, %v3119
    %3532 = vadd.xlane.f32.xlu0 %v3531
    %v3533 = vpop.xlane.xlu0 %3532
    %v3534 = vadd.f32 %v3121, %v3123
    %3535 = vadd.xlane.f32.xlu0 %v3534
    %v3536 = vpop.xlane.xlu0 %3535
    %v3537 = vadd.f32 %v3125, %v3127
    %3538 = vadd.xlane.f32.xlu0 %v3537
    %v3539 = vpop.xlane.xlu0 %3538
    %v3540 = vadd.f32 %v3129, %v3131
    %3541 = vadd.xlane.f32.xlu0 %v3540
    %v3542 = vpop.xlane.xlu0 %3541
    %v3543 = vadd.f32 %v3133, %v3135
    %3544 = vadd.xlane.f32.xlu0 %v3543
    %v3545 = vpop.xlane.xlu0 %3544
    %v3546 = vadd.f32 %v3137, %v3139
    %3547 = vadd.xlane.f32.xlu0 %v3546
    %v3548 = vpop.xlane.xlu0 %3547
    %v3549 = vadd.f32 %v3141, %v3143
    %3550 = vadd.xlane.f32.xlu0 %v3549
    %v3551 = vpop.xlane.xlu0 %3550
    %v3552 = vadd.f32 %v3145, %v3147
    %3553 = vadd.xlane.f32.xlu0 %v3552
    %v3554 = vpop.xlane.xlu0 %3553
    %v3555 = vadd.f32 %v3149, %v3151
    %3556 = vadd.xlane.f32.xlu0 %v3555
    %v3557 = vpop.xlane.xlu0 %3556
    %v3558 = vadd.f32 %v3153, %v3155
    %3559 = vadd.xlane.f32.xlu0 %v3558
    %v3560 = vpop.xlane.xlu0 %3559
    %v3561 = vadd.f32 %v3157, %v3159
    %3562 = vadd.xlane.f32.xlu0 %v3561
    %v3563 = vpop.xlane.xlu0 %3562
    %v3564 = vadd.f32 %v3161, %v3163
    %3565 = vadd.xlane.f32.xlu0 %v3564
    %v3566 = vpop.xlane.xlu0 %3565
    %v3567 = vadd.f32 %v3165, %v3167
    %3568 = vadd.xlane.f32.xlu0 %v3567
    %v3569 = vpop.xlane.xlu0 %3568
    %v3570 = vadd.f32 %v3169, %v3171
    %3571 = vadd.xlane.f32.xlu0 %v3570
    %v3572 = vpop.xlane.xlu0 %3571
    %v3573 = vadd.f32 %v3173, %v3175
    %3574 = vadd.xlane.f32.xlu0 %v3573
    %v3575 = vpop.xlane.xlu0 %3574
    %v3576 = vadd.f32 %v3177, %v3179
    %3577 = vadd.xlane.f32.xlu0 %v3576
    %v3578 = vpop.xlane.xlu0 %3577
    %v3579 = vadd.f32 %v3181, %v3183
    %3580 = vadd.xlane.f32.xlu0 %v3579
    %v3581 = vpop.xlane.xlu0 %3580
    %v3582 = vadd.f32 %v3185, %v3187
    %3583 = vadd.xlane.f32.xlu0 %v3582
    %v3584 = vpop.xlane.xlu0 %3583
    %v3585 = vadd.f32 %v3189, %v3191
    %3586 = vadd.xlane.f32.xlu0 %v3585
    %v3587 = vpop.xlane.xlu0 %3586
    %v3588 = vadd.f32 %v3193, %v3195
    %3589 = vadd.xlane.f32.xlu0 %v3588
    %v3590 = vpop.xlane.xlu0 %3589
    %v3591 = vadd.f32 %v3197, %v3199
    %3592 = vadd.xlane.f32.xlu0 %v3591
    %v3593 = vpop.xlane.xlu0 %3592
    %v3594 = vadd.f32 %v3201, %v3203
    %3595 = vadd.xlane.f32.xlu0 %v3594
    %v3596 = vpop.xlane.xlu0 %3595
    %v3597 = vadd.f32 %v3205, %v3207
    %3598 = vadd.xlane.f32.xlu0 %v3597
    %v3599 = vpop.xlane.xlu0 %3598
    %v3600 = vadd.f32 %v3209, %v3211
    %3601 = vadd.xlane.f32.xlu0 %v3600
    %v3602 = vpop.xlane.xlu0 %3601
    %v3603 = vadd.f32 %v3213, %v3215
    %3604 = vadd.xlane.f32.xlu0 %v3603
    %v3605 = vpop.xlane.xlu0 %3604
    %v3606 = vadd.f32 %v3217, %v3219
    %3607 = vadd.xlane.f32.xlu0 %v3606
    %v3608 = vpop.xlane.xlu0 %3607
    %v3609 = vadd.f32 %v3221, %v3223
    %3610 = vadd.xlane.f32.xlu0 %v3609
    %v3611 = vpop.xlane.xlu0 %3610
    %v3612 = vadd.f32 %v3225, %v3227
    %3613 = vadd.xlane.f32.xlu0 %v3612
    %v3614 = vpop.xlane.xlu0 %3613
    %v3615 = vadd.f32 %v3229, %v3231
    %3616 = vadd.xlane.f32.xlu0 %v3615
    %v3617 = vpop.xlane.xlu0 %3616
    %v3618 = vadd.f32 %v3233, %v3235
    %3619 = vadd.xlane.f32.xlu0 %v3618
    %v3620 = vpop.xlane.xlu0 %3619
    %v3621 = vadd.f32 %v3237, %v3239
    %3622 = vadd.xlane.f32.xlu0 %v3621
    %v3623 = vpop.xlane.xlu0 %3622
    %v3624 = vrcp.pop %v3242
    %v3625 = vrcp.pop %v3245
    %v3626 = vrcp.pop %v3248
    %v3627 = vrcp.pop %v3251
    %v3628 = vrcp.pop %v3254
    %v3629 = vrcp.pop %v3257
    %v3630 = vrcp.pop %v3260
    %v3631 = vrcp.pop %v3263
    %v3632 = vrcp.pop %v3266
    %v3633 = vrcp.pop %v3269
    %v3634 = vrcp.pop %v3272
    %v3635 = vrcp.pop %v3275
    %v3636 = vrcp.pop %v3278
    %v3637 = vrcp.pop %v3281
    %v3638 = vrcp.pop %v3284
    %v3639 = vrcp.pop %v3287
    %v3640 = vrcp.pop %v3290
    %v3641 = vrcp.pop %v3293
    %v3642 = vrcp.pop %v3296
    %v3643 = vrcp.pop %v3299
    %v3644 = vrcp.pop %v3302
    %v3645 = vrcp.pop %v3305
    %v3646 = vrcp.pop %v3308
    %v3647 = vrcp.pop %v3311
    %v3648 = vrcp.pop %v3314
    %v3649 = vrcp.pop %v3317
    %v3650 = vrcp.pop %v3320
    %v3651 = vrcp.pop %v3323
    %v3652 = vrcp.pop %v3326
    %v3653 = vrcp.pop %v3329
    %v3654 = vrcp.pop %v3332
    %v3655 = vrcp.pop %v3335
    %v3656 = vrcp.pop %v3338
    %v3657 = vrcp.pop %v3341
    %v3658 = vrcp.pop %v3344
    %v3659 = vrcp.pop %v3347
    %v3660 = vrcp.pop %v3350
    %v3661 = vrcp.pop %v3353
    %v3662 = vrcp.pop %v3356
    %v3663 = vrcp.pop %v3359
    %v3664 = vrcp.pop %v3362
    %v3665 = vrcp.pop %v3365
    %v3666 = vrcp.pop %v3368
    %v3667 = vrcp.pop %v3371
    %v3668 = vrcp.pop %v3374
    %v3669 = vrcp.pop %v3377
    %v3670 = vrcp.pop %v3380
    %v3671 = vrcp.pop %v3383
    %v3672 = vrcp.pop %v3386
    %v3673 = vrcp.pop %v3389
    %v3674 = vrcp.pop %v3392
    %v3675 = vrcp.pop %v3395
    %v3676 = vrcp.pop %v3398
    %v3677 = vrcp.pop %v3401
    %v3678 = vrcp.pop %v3404
    %v3679 = vrcp.pop %v3407
    %v3680 = vrcp.pop %v3410
    %v3681 = vrcp.pop %v3413
    %v3682 = vrcp.pop %v3416
    %v3683 = vrcp.pop %v3419
    %v3684 = vrcp.pop %v3422
    %v3685 = vrcp.pop %v3425
    %v3686 = vrcp.pop %v3428
    %v3687 = vrcp.pop %v3431
    %v3688 = vrcp.pop %v3434
    %v3689 = vrcp.pop %v3437
    %v3690 = vrcp.pop %v3440
    %v3691 = vrcp.pop %v3443
    %v3692 = vrcp.pop %v3446
    %v3693 = vrcp.pop %v3449
    %v3694 = vrcp.pop %v3452
    %v3695 = vrcp.pop %v3455
    %v3696 = vrcp.pop %v3458
    %v3697 = vrcp.pop %v3461
    %v3698 = vrcp.pop %v3464
    %v3699 = vrcp.pop %v3467
    %v3700 = vrcp.pop %v3470
    %v3701 = vrcp.pop %v3473
    %v3702 = vrcp.pop %v3476
    %v3703 = vrcp.pop %v3479
    %v3704 = vrcp.pop %v3482
    %v3705 = vrcp.pop %v3485
    %v3706 = vrcp.pop %v3488
    %v3707 = vrcp.pop %v3491
    %v3708 = vrcp.pop %v3494
    %v3709 = vrcp.pop %v3497
    %v3710 = vrcp.pop %v3500
    %v3711 = vrcp.pop %v3503
    %v3712 = vrcp.pop %v3506
    %v3713 = vrcp.pop %v3509
    %v3714 = vrcp.pop %v3512
    %v3715 = vrcp.pop %v3515
    %v3716 = vrcp.pop %v3518
    %v3717 = vrcp.pop %v3521
    %v3718 = vrcp.pop %v3524
    %v3719 = vrcp.pop %v3527
    %v3720 = vrcp.pop %v3530
    %v3721 = vrcp.pop %v3533
    %v3722 = vrcp.pop %v3536
    %v3723 = vrcp.pop %v3539
    %v3724 = vrcp.pop %v3542
    %v3725 = vrcp.pop %v3545
    %v3726 = vrcp.pop %v3548
    %v3727 = vrcp.pop %v3551
    %v3728 = vrcp.pop %v3554
    %v3729 = vrcp.pop %v3557
    %v3730 = vrcp.pop %v3560
    %v3731 = vrcp.pop %v3563
    %v3732 = vrcp.pop %v3566
    %v3733 = vrcp.pop %v3569
    %v3734 = vrcp.pop %v3572
    %v3735 = vrcp.pop %v3575
    %v3736 = vrcp.pop %v3578
    %v3737 = vrcp.pop %v3581
    %v3738 = vrcp.pop %v3584
    %v3739 = vrcp.pop %v3587
    %v3740 = vrcp.pop %v3590
    %v3741 = vrcp.pop %v3593
    %v3742 = vrcp.pop %v3596
    %v3743 = vrcp.pop %v3599
    %v3744 = vrcp.pop %v3602
    %v3745 = vrcp.pop %v3605
    %v3746 = vrcp.pop %v3608
    %v3747 = vrcp.pop %v3611
    %v3748 = vrcp.pop %v3614
    %v3749 = vrcp.pop %v3617
    %v3750 = vrcp.pop %v3620
    %v3751 = vrcp.pop %v3623
    %3752 = vxpose.xlu0.b32.start [1/16] %v3624, 128
    %3753 = vxpose.xlu0.b32.cont [2/16] %v3625, 128
    %3754 = vxpose.xlu0.b32.cont [3/16] %v3626, 128
    %3755 = vxpose.xlu0.b32.cont [4/16] %v3627, 128
    %3756 = vxpose.xlu0.b32.cont [5/16] %v3628, 128
    %3757 = vxpose.xlu0.b32.cont [6/16] %v3629, 128
    %3758 = vxpose.xlu0.b32.cont [7/16] %v3630, 128
    %3759 = vxpose.xlu0.b32.cont [8/16] %v3631, 128
    %3760 = vxpose.xlu0.b32.cont [9/16] %v3632, 128
    %3761 = vxpose.xlu0.b32.cont [10/16] %v3633, 128
    %3762 = vxpose.xlu0.b32.cont [11/16] %v3634, 128
    %3763 = vxpose.xlu0.b32.cont [12/16] %v3635, 128
    %3764 = vxpose.xlu0.b32.cont [13/16] %v3636, 128
    %3765 = vxpose.xlu0.b32.cont [14/16] %v3637, 128
    %3766 = vxpose.xlu0.b32.cont [15/16] %v3638, 128
    %3767 = vxpose.xlu0.b32.end [16/16] %v3639, 128
    %v3768 = vpop.trf.xlu0
    %v3769 = vpop.trf.xlu0
    %v3770 = vpop.trf.xlu0
    %v3771 = vpop.trf.xlu0
    %v3772 = vpop.trf.xlu0
    %v3773 = vpop.trf.xlu0
    %v3774 = vpop.trf.xlu0
    %v3775 = vpop.trf.xlu0
    %v3776 = vpop.trf.xlu0
    %v3777 = vpop.trf.xlu0
    %v3778 = vpop.trf.xlu0
    %v3779 = vpop.trf.xlu0
    %v3780 = vpop.trf.xlu0
    %v3781 = vpop.trf.xlu0
    %v3782 = vpop.trf.xlu0
    %v3783 = vpop.trf.xlu0
    %3784 = vxpose.xlu0.b32.start [1/16] %v3640, 128
    %3785 = vxpose.xlu0.b32.cont [2/16] %v3641, 128
    %3786 = vxpose.xlu0.b32.cont [3/16] %v3642, 128
    %3787 = vxpose.xlu0.b32.cont [4/16] %v3643, 128
    %3788 = vxpose.xlu0.b32.cont [5/16] %v3644, 128
    %3789 = vxpose.xlu0.b32.cont [6/16] %v3645, 128
    %3790 = vxpose.xlu0.b32.cont [7/16] %v3646, 128
    %3791 = vxpose.xlu0.b32.cont [8/16] %v3647, 128
    %3792 = vxpose.xlu0.b32.cont [9/16] %v3648, 128
    %3793 = vxpose.xlu0.b32.cont [10/16] %v3649, 128
    %3794 = vxpose.xlu0.b32.cont [11/16] %v3650, 128
    %3795 = vxpose.xlu0.b32.cont [12/16] %v3651, 128
    %3796 = vxpose.xlu0.b32.cont [13/16] %v3652, 128
    %3797 = vxpose.xlu0.b32.cont [14/16] %v3653, 128
    %3798 = vxpose.xlu0.b32.cont [15/16] %v3654, 128
    %3799 = vxpose.xlu0.b32.end [16/16] %v3655, 128
    %v3800 = vpop.trf.xlu0
    %v3801 = vpop.trf.xlu0
    %v3802 = vpop.trf.xlu0
    %v3803 = vpop.trf.xlu0
    %v3804 = vpop.trf.xlu0
    %v3805 = vpop.trf.xlu0
    %v3806 = vpop.trf.xlu0
    %v3807 = vpop.trf.xlu0
    %v3808 = vpop.trf.xlu0
    %v3809 = vpop.trf.xlu0
    %v3810 = vpop.trf.xlu0
    %v3811 = vpop.trf.xlu0
    %v3812 = vpop.trf.xlu0
    %v3813 = vpop.trf.xlu0
    %v3814 = vpop.trf.xlu0
    %v3815 = vpop.trf.xlu0
    %3816 = vxpose.xlu0.b32.start [1/16] %v3656, 128
    %3817 = vxpose.xlu0.b32.cont [2/16] %v3657, 128
    %3818 = vxpose.xlu0.b32.cont [3/16] %v3658, 128
    %3819 = vxpose.xlu0.b32.cont [4/16] %v3659, 128
    %3820 = vxpose.xlu0.b32.cont [5/16] %v3660, 128
    %3821 = vxpose.xlu0.b32.cont [6/16] %v3661, 128
    %3822 = vxpose.xlu0.b32.cont [7/16] %v3662, 128
    %3823 = vxpose.xlu0.b32.cont [8/16] %v3663, 128
    %3824 = vxpose.xlu0.b32.cont [9/16] %v3664, 128
    %3825 = vxpose.xlu0.b32.cont [10/16] %v3665, 128
    %3826 = vxpose.xlu0.b32.cont [11/16] %v3666, 128
    %3827 = vxpose.xlu0.b32.cont [12/16] %v3667, 128
    %3828 = vxpose.xlu0.b32.cont [13/16] %v3668, 128
    %3829 = vxpose.xlu0.b32.cont [14/16] %v3669, 128
    %3830 = vxpose.xlu0.b32.cont [15/16] %v3670, 128
    %3831 = vxpose.xlu0.b32.end [16/16] %v3671, 128
    %v3832 = vpop.trf.xlu0
    %v3833 = vpop.trf.xlu0
    %v3834 = vpop.trf.xlu0
    %v3835 = vpop.trf.xlu0
    %v3836 = vpop.trf.xlu0
    %v3837 = vpop.trf.xlu0
    %v3838 = vpop.trf.xlu0
    %v3839 = vpop.trf.xlu0
    %v3840 = vpop.trf.xlu0
    %v3841 = vpop.trf.xlu0
    %v3842 = vpop.trf.xlu0
    %v3843 = vpop.trf.xlu0
    %v3844 = vpop.trf.xlu0
    %v3845 = vpop.trf.xlu0
    %v3846 = vpop.trf.xlu0
    %v3847 = vpop.trf.xlu0
    %3848 = vxpose.xlu0.b32.start [1/16] %v3672, 128
    %3849 = vxpose.xlu0.b32.cont [2/16] %v3673, 128
    %3850 = vxpose.xlu0.b32.cont [3/16] %v3674, 128
    %3851 = vxpose.xlu0.b32.cont [4/16] %v3675, 128
    %3852 = vxpose.xlu0.b32.cont [5/16] %v3676, 128
    %3853 = vxpose.xlu0.b32.cont [6/16] %v3677, 128
    %3854 = vxpose.xlu0.b32.cont [7/16] %v3678, 128
    %3855 = vxpose.xlu0.b32.cont [8/16] %v3679, 128
    %3856 = vxpose.xlu0.b32.cont [9/16] %v3680, 128
    %3857 = vxpose.xlu0.b32.cont [10/16] %v3681, 128
    %3858 = vxpose.xlu0.b32.cont [11/16] %v3682, 128
    %3859 = vxpose.xlu0.b32.cont [12/16] %v3683, 128
    %3860 = vxpose.xlu0.b32.cont [13/16] %v3684, 128
    %3861 = vxpose.xlu0.b32.cont [14/16] %v3685, 128
    %3862 = vxpose.xlu0.b32.cont [15/16] %v3686, 128
    %3863 = vxpose.xlu0.b32.end [16/16] %v3687, 128
    %v3864 = vpop.trf.xlu0
    %v3865 = vpop.trf.xlu0
    %v3866 = vpop.trf.xlu0
    %v3867 = vpop.trf.xlu0
    %v3868 = vpop.trf.xlu0
    %v3869 = vpop.trf.xlu0
    %v3870 = vpop.trf.xlu0
    %v3871 = vpop.trf.xlu0
    %v3872 = vpop.trf.xlu0
    %v3873 = vpop.trf.xlu0
    %v3874 = vpop.trf.xlu0
    %v3875 = vpop.trf.xlu0
    %v3876 = vpop.trf.xlu0
    %v3877 = vpop.trf.xlu0
    %v3878 = vpop.trf.xlu0
    %v3879 = vpop.trf.xlu0
    %3880 = vxpose.xlu0.b32.start [1/16] %v3688, 128
    %3881 = vxpose.xlu0.b32.cont [2/16] %v3689, 128
    %3882 = vxpose.xlu0.b32.cont [3/16] %v3690, 128
    %3883 = vxpose.xlu0.b32.cont [4/16] %v3691, 128
    %3884 = vxpose.xlu0.b32.cont [5/16] %v3692, 128
    %3885 = vxpose.xlu0.b32.cont [6/16] %v3693, 128
    %3886 = vxpose.xlu0.b32.cont [7/16] %v3694, 128
    %3887 = vxpose.xlu0.b32.cont [8/16] %v3695, 128
    %3888 = vxpose.xlu0.b32.cont [9/16] %v3696, 128
    %3889 = vxpose.xlu0.b32.cont [10/16] %v3697, 128
    %3890 = vxpose.xlu0.b32.cont [11/16] %v3698, 128
    %3891 = vxpose.xlu0.b32.cont [12/16] %v3699, 128
    %3892 = vxpose.xlu0.b32.cont [13/16] %v3700, 128
    %3893 = vxpose.xlu0.b32.cont [14/16] %v3701, 128
    %3894 = vxpose.xlu0.b32.cont [15/16] %v3702, 128
    %3895 = vxpose.xlu0.b32.end [16/16] %v3703, 128
    %v3896 = vpop.trf.xlu0
    %v3897 = vpop.trf.xlu0
    %v3898 = vpop.trf.xlu0
    %v3899 = vpop.trf.xlu0
    %v3900 = vpop.trf.xlu0
    %v3901 = vpop.trf.xlu0
    %v3902 = vpop.trf.xlu0
    %v3903 = vpop.trf.xlu0
    %v3904 = vpop.trf.xlu0
    %v3905 = vpop.trf.xlu0
    %v3906 = vpop.trf.xlu0
    %v3907 = vpop.trf.xlu0
    %v3908 = vpop.trf.xlu0
    %v3909 = vpop.trf.xlu0
    %v3910 = vpop.trf.xlu0
    %v3911 = vpop.trf.xlu0
    %3912 = vxpose.xlu0.b32.start [1/16] %v3704, 128
    %3913 = vxpose.xlu0.b32.cont [2/16] %v3705, 128
    %3914 = vxpose.xlu0.b32.cont [3/16] %v3706, 128
    %3915 = vxpose.xlu0.b32.cont [4/16] %v3707, 128
    %3916 = vxpose.xlu0.b32.cont [5/16] %v3708, 128
    %3917 = vxpose.xlu0.b32.cont [6/16] %v3709, 128
    %3918 = vxpose.xlu0.b32.cont [7/16] %v3710, 128
    %3919 = vxpose.xlu0.b32.cont [8/16] %v3711, 128
    %3920 = vxpose.xlu0.b32.cont [9/16] %v3712, 128
    %3921 = vxpose.xlu0.b32.cont [10/16] %v3713, 128
    %3922 = vxpose.xlu0.b32.cont [11/16] %v3714, 128
    %3923 = vxpose.xlu0.b32.cont [12/16] %v3715, 128
    %3924 = vxpose.xlu0.b32.cont [13/16] %v3716, 128
    %3925 = vxpose.xlu0.b32.cont [14/16] %v3717, 128
    %3926 = vxpose.xlu0.b32.cont [15/16] %v3718, 128
    %3927 = vxpose.xlu0.b32.end [16/16] %v3719, 128
    %v3928 = vpop.trf.xlu0
    %v3929 = vpop.trf.xlu0
    %v3930 = vpop.trf.xlu0
    %v3931 = vpop.trf.xlu0
    %v3932 = vpop.trf.xlu0
    %v3933 = vpop.trf.xlu0
    %v3934 = vpop.trf.xlu0
    %v3935 = vpop.trf.xlu0
    %v3936 = vpop.trf.xlu0
    %v3937 = vpop.trf.xlu0
    %v3938 = vpop.trf.xlu0
    %v3939 = vpop.trf.xlu0
    %v3940 = vpop.trf.xlu0
    %v3941 = vpop.trf.xlu0
    %v3942 = vpop.trf.xlu0
    %v3943 = vpop.trf.xlu0
    %3944 = vxpose.xlu0.b32.start [1/16] %v3720, 128
    %3945 = vxpose.xlu0.b32.cont [2/16] %v3721, 128
    %3946 = vxpose.xlu0.b32.cont [3/16] %v3722, 128
    %3947 = vxpose.xlu0.b32.cont [4/16] %v3723, 128
    %3948 = vxpose.xlu0.b32.cont [5/16] %v3724, 128
    %3949 = vxpose.xlu0.b32.cont [6/16] %v3725, 128
    %3950 = vxpose.xlu0.b32.cont [7/16] %v3726, 128
    %3951 = vxpose.xlu0.b32.cont [8/16] %v3727, 128
    %3952 = vxpose.xlu0.b32.cont [9/16] %v3728, 128
    %3953 = vxpose.xlu0.b32.cont [10/16] %v3729, 128
    %3954 = vxpose.xlu0.b32.cont [11/16] %v3730, 128
    %3955 = vxpose.xlu0.b32.cont [12/16] %v3731, 128
    %3956 = vxpose.xlu0.b32.cont [13/16] %v3732, 128
    %3957 = vxpose.xlu0.b32.cont [14/16] %v3733, 128
    %3958 = vxpose.xlu0.b32.cont [15/16] %v3734, 128
    %3959 = vxpose.xlu0.b32.end [16/16] %v3735, 128
    %v3960 = vpop.trf.xlu0
    %v3961 = vpop.trf.xlu0
    %v3962 = vpop.trf.xlu0
    %v3963 = vpop.trf.xlu0
    %v3964 = vpop.trf.xlu0
    %v3965 = vpop.trf.xlu0
    %v3966 = vpop.trf.xlu0
    %v3967 = vpop.trf.xlu0
    %v3968 = vpop.trf.xlu0
    %v3969 = vpop.trf.xlu0
    %v3970 = vpop.trf.xlu0
    %v3971 = vpop.trf.xlu0
    %v3972 = vpop.trf.xlu0
    %v3973 = vpop.trf.xlu0
    %v3974 = vpop.trf.xlu0
    %v3975 = vpop.trf.xlu0
    %3976 = vxpose.xlu0.b32.start [1/16] %v3736, 128
    %3977 = vxpose.xlu0.b32.cont [2/16] %v3737, 128
    %3978 = vxpose.xlu0.b32.cont [3/16] %v3738, 128
    %3979 = vxpose.xlu0.b32.cont [4/16] %v3739, 128
    %3980 = vxpose.xlu0.b32.cont [5/16] %v3740, 128
    %3981 = vxpose.xlu0.b32.cont [6/16] %v3741, 128
    %3982 = vxpose.xlu0.b32.cont [7/16] %v3742, 128
    %3983 = vxpose.xlu0.b32.cont [8/16] %v3743, 128
    %3984 = vxpose.xlu0.b32.cont [9/16] %v3744, 128
    %3985 = vxpose.xlu0.b32.cont [10/16] %v3745, 128
    %3986 = vxpose.xlu0.b32.cont [11/16] %v3746, 128
    %3987 = vxpose.xlu0.b32.cont [12/16] %v3747, 128
    %3988 = vxpose.xlu0.b32.cont [13/16] %v3748, 128
    %3989 = vxpose.xlu0.b32.cont [14/16] %v3749, 128
    %3990 = vxpose.xlu0.b32.cont [15/16] %v3750, 128
    %3991 = vxpose.xlu0.b32.end [16/16] %v3751, 128
    %v3992 = vpop.trf.xlu0
    %v3993 = vpop.trf.xlu0
    %v3994 = vpop.trf.xlu0
    %v3995 = vpop.trf.xlu0
    %v3996 = vpop.trf.xlu0
    %v3997 = vpop.trf.xlu0
    %v3998 = vpop.trf.xlu0
    %v3999 = vpop.trf.xlu0
    %v4000 = vpop.trf.xlu0
    %v4001 = vpop.trf.xlu0
    %v4002 = vpop.trf.xlu0
    %v4003 = vpop.trf.xlu0
    %v4004 = vpop.trf.xlu0
    %v4005 = vpop.trf.xlu0
    %v4006 = vpop.trf.xlu0
    %v4007 = vpop.trf.xlu0
    %4008 = vmatprep.subr.mxu0 %v2731
    %4009 = vmatpush1.xpose.msra.mxu0 %v2729
    %4010 = vmatprep.subr.mxu0 %v2735
    %4011 = vmatpush1.xpose.msra.mxu0 %v2733
    %4012 = vmatprep.subr.mxu0 %v2739
    %4013 = vmatpush1.xpose.msra.mxu0 %v2737
    %4014 = vmatprep.subr.mxu0 %v2743
    %4015 = vmatpush1.xpose.msra.mxu0 %v2741
    %4016 = vmatprep.subr.mxu0 %v2747
    %4017 = vmatpush1.xpose.msra.mxu0 %v2745
    %4018 = vmatprep.subr.mxu0 %v2751
    %4019 = vmatpush1.xpose.msra.mxu0 %v2749
    %4020 = vmatprep.subr.mxu0 %v2755
    %4021 = vmatpush1.xpose.msra.mxu0 %v2753
    %4022 = vmatprep.subr.mxu0 %v2759
    %4023 = vmatpush1.xpose.msra.mxu0 %v2757
    %4024 = vmatprep.subr.mxu0 %v2763
    %4025 = vmatpush1.xpose.msra.mxu0 %v2761
    %4026 = vmatprep.subr.mxu0 %v2767
    %4027 = vmatpush1.xpose.msra.mxu0 %v2765
    %4028 = vmatprep.subr.mxu0 %v2771
    %4029 = vmatpush1.xpose.msra.mxu0 %v2769
    %4030 = vmatprep.subr.mxu0 %v2775
    %4031 = vmatpush1.xpose.msra.mxu0 %v2773
    %4032 = vmatprep.subr.mxu0 %v2779
    %4033 = vmatpush1.xpose.msra.mxu0 %v2777
    %4034 = vmatprep.subr.mxu0 %v2783
    %4035 = vmatpush1.xpose.msra.mxu0 %v2781
    %4036 = vmatprep.subr.mxu0 %v2787
    %4037 = vmatpush1.xpose.msra.mxu0 %v2785
    %4038 = vmatprep.subr.mxu0 %v2791
    %4039 = vmatpush1.xpose.msra.mxu0 %v2789
    %4040 = vmatprep.subr.mxu0 %v2795
    %4041 = vmatpush1.xpose.msra.mxu0 %v2793
    %4042 = vmatprep.subr.mxu0 %v2799
    %4043 = vmatpush1.xpose.msra.mxu0 %v2797
    %4044 = vmatprep.subr.mxu0 %v2803
    %4045 = vmatpush1.xpose.msra.mxu0 %v2801
    %4046 = vmatprep.subr.mxu0 %v2807
    %4047 = vmatpush1.xpose.msra.mxu0 %v2805
    %4048 = vmatprep.subr.mxu0 %v2811
    %4049 = vmatpush1.xpose.msra.mxu0 %v2809
    %4050 = vmatprep.subr.mxu0 %v2815
    %4051 = vmatpush1.xpose.msra.mxu0 %v2813
    %4052 = vmatprep.subr.mxu0 %v2819
    %4053 = vmatpush1.xpose.msra.mxu0 %v2817
    %4054 = vmatprep.subr.mxu0 %v2823
    %4055 = vmatpush1.xpose.msra.mxu0 %v2821
    %4056 = vmatprep.subr.mxu0 %v2827
    %4057 = vmatpush1.xpose.msra.mxu0 %v2825
    %4058 = vmatprep.subr.mxu0 %v2831
    %4059 = vmatpush1.xpose.msra.mxu0 %v2829
    %4060 = vmatprep.subr.mxu0 %v2835
    %4061 = vmatpush1.xpose.msra.mxu0 %v2833
    %4062 = vmatprep.subr.mxu0 %v2839
    %4063 = vmatpush1.xpose.msra.mxu0 %v2837
    %4064 = vmatprep.subr.mxu0 %v2843
    %4065 = vmatpush1.xpose.msra.mxu0 %v2841
    %4066 = vmatprep.subr.mxu0 %v2847
    %4067 = vmatpush1.xpose.msra.mxu0 %v2845
    %4068 = vmatprep.subr.mxu0 %v2851
    %4069 = vmatpush1.xpose.msra.mxu0 %v2849
    %4070 = vmatprep.subr.mxu0 %v2855
    %4071 = vmatpush1.xpose.msra.mxu0 %v2853
    %4072 = vmatprep.mubr.f32.mxu0 %v399
    %4073 = vmatmul.mubr.f32.gmra.mrb[0].mxu0 %v397
    %v4074 = vpop.f32.mrb[0].mxu0
    %v4075 = vadd.f32 0.0, %v4074
    %v4076 = vpop.f32.mrb[0].mxu0
    %v4077 = vadd.f32 0.0, %v4076
    %4078 = vdwg.mxu0
    %4079 = vmatprep.subr.mxu0 %v2859
    %4080 = vmatpush1.xpose.msra.mxu0 %v2857
    %4081 = vmatprep.subr.mxu0 %v2863
    %4082 = vmatpush1.xpose.msra.mxu0 %v2861
    %4083 = vmatprep.subr.mxu0 %v2867
    %4084 = vmatpush1.xpose.msra.mxu0 %v2865
    %4085 = vmatprep.subr.mxu0 %v2871
    %4086 = vmatpush1.xpose.msra.mxu0 %v2869
    %4087 = vmatprep.subr.mxu0 %v2875
    %4088 = vmatpush1.xpose.msra.mxu0 %v2873
    %4089 = vmatprep.subr.mxu0 %v2879
    %4090 = vmatpush1.xpose.msra.mxu0 %v2877
    %4091 = vmatprep.subr.mxu0 %v2883
    %4092 = vmatpush1.xpose.msra.mxu0 %v2881
    %4093 = vmatprep.subr.mxu0 %v2887
    %4094 = vmatpush1.xpose.msra.mxu0 %v2885
    %4095 = vmatprep.subr.mxu0 %v2891
    %4096 = vmatpush1.xpose.msra.mxu0 %v2889
    %4097 = vmatprep.subr.mxu0 %v2895
    %4098 = vmatpush1.xpose.msra.mxu0 %v2893
    %4099 = vmatprep.subr.mxu0 %v2899
    %4100 = vmatpush1.xpose.msra.mxu0 %v2897
    %4101 = vmatprep.subr.mxu0 %v2903
    %4102 = vmatpush1.xpose.msra.mxu0 %v2901
    %4103 = vmatprep.subr.mxu0 %v2907
    %4104 = vmatpush1.xpose.msra.mxu0 %v2905
    %4105 = vmatprep.subr.mxu0 %v2911
    %4106 = vmatpush1.xpose.msra.mxu0 %v2909
    %4107 = vmatprep.subr.mxu0 %v2915
    %4108 = vmatpush1.xpose.msra.mxu0 %v2913
    %4109 = vmatprep.subr.mxu0 %v2919
    %4110 = vmatpush1.xpose.msra.mxu0 %v2917
    %4111 = vmatprep.subr.mxu0 %v2923
    %4112 = vmatpush1.xpose.msra.mxu0 %v2921
    %4113 = vmatprep.subr.mxu0 %v2927
    %4114 = vmatpush1.xpose.msra.mxu0 %v2925
    %4115 = vmatprep.subr.mxu0 %v2931
    %4116 = vmatpush1.xpose.msra.mxu0 %v2929
    %4117 = vmatprep.subr.mxu0 %v2935
    %4118 = vmatpush1.xpose.msra.mxu0 %v2933
    %4119 = vmatprep.subr.mxu0 %v2939
    %4120 = vmatpush1.xpose.msra.mxu0 %v2937
    %4121 = vmatprep.subr.mxu0 %v2943
    %4122 = vmatpush1.xpose.msra.mxu0 %v2941
    %4123 = vmatprep.subr.mxu0 %v2947
    %4124 = vmatpush1.xpose.msra.mxu0 %v2945
    %4125 = vmatprep.subr.mxu0 %v2951
    %4126 = vmatpush1.xpose.msra.mxu0 %v2949
    %4127 = vmatprep.subr.mxu0 %v2955
    %4128 = vmatpush1.xpose.msra.mxu0 %v2953
    %4129 = vmatprep.subr.mxu0 %v2959
    %4130 = vmatpush1.xpose.msra.mxu0 %v2957
    %4131 = vmatprep.subr.mxu0 %v2963
    %4132 = vmatpush1.xpose.msra.mxu0 %v2961
    %4133 = vmatprep.subr.mxu0 %v2967
    %4134 = vmatpush1.xpose.msra.mxu0 %v2965
    %4135 = vmatprep.subr.mxu0 %v2971
    %4136 = vmatpush1.xpose.msra.mxu0 %v2969
    %4137 = vmatprep.subr.mxu0 %v2975
    %4138 = vmatpush1.xpose.msra.mxu0 %v2973
    %4139 = vmatprep.subr.mxu0 %v2979
    %4140 = vmatpush1.xpose.msra.mxu0 %v2977
    %4141 = vmatprep.subr.mxu0 %v2983
    %4142 = vmatpush1.xpose.msra.mxu0 %v2981
    %4143 = vmatprep.mubr.f32.mxu0 %v405
    %4144 = vmatmul.mubr.f32.gmra.mrb[0].mxu0 %v403
    %v4145 = vpop.f32.mrb[0].mxu0
    %v4146 = vadd.f32 0.0, %v4145
    %v4147 = vpop.f32.mrb[0].mxu0
    %v4148 = vadd.f32 0.0, %v4147
    %4149 = vdwg.mxu0
    %4150 = vmatprep.subr.mxu0 %v2987
    %4151 = vmatpush1.xpose.msra.mxu0 %v2985
    %4152 = vmatprep.subr.mxu0 %v2991
    %4153 = vmatpush1.xpose.msra.mxu0 %v2989
    %4154 = vmatprep.subr.mxu0 %v2995
    %4155 = vmatpush1.xpose.msra.mxu0 %v2993
    %4156 = vmatprep.subr.mxu0 %v2999
    %4157 = vmatpush1.xpose.msra.mxu0 %v2997
    %4158 = vmatprep.subr.mxu0 %v3003
    %4159 = vmatpush1.xpose.msra.mxu0 %v3001
    %4160 = vmatprep.subr.mxu0 %v3007
    %4161 = vmatpush1.xpose.msra.mxu0 %v3005
    %4162 = vmatprep.subr.mxu0 %v3011
    %4163 = vmatpush1.xpose.msra.mxu0 %v3009
    %4164 = vmatprep.subr.mxu0 %v3015
    %4165 = vmatpush1.xpose.msra.mxu0 %v3013
    %4166 = vmatprep.subr.mxu0 %v3019
    %4167 = vmatpush1.xpose.msra.mxu0 %v3017
    %4168 = vmatprep.subr.mxu0 %v3023
    %4169 = vmatpush1.xpose.msra.mxu0 %v3021
    %4170 = vmatprep.subr.mxu0 %v3027
    %4171 = vmatpush1.xpose.msra.mxu0 %v3025
    %4172 = vmatprep.subr.mxu0 %v3031
    %4173 = vmatpush1.xpose.msra.mxu0 %v3029
    %4174 = vmatprep.subr.mxu0 %v3035
    %4175 = vmatpush1.xpose.msra.mxu0 %v3033
    %4176 = vmatprep.subr.mxu0 %v3039
    %4177 = vmatpush1.xpose.msra.mxu0 %v3037
    %4178 = vmatprep.subr.mxu0 %v3043
    %4179 = vmatpush1.xpose.msra.mxu0 %v3041
    %4180 = vmatprep.subr.mxu0 %v3047
    %4181 = vmatpush1.xpose.msra.mxu0 %v3045
    %4182 = vmatprep.subr.mxu0 %v3051
    %4183 = vmatpush1.xpose.msra.mxu0 %v3049
    %4184 = vmatprep.subr.mxu0 %v3055
    %4185 = vmatpush1.xpose.msra.mxu0 %v3053
    %4186 = vmatprep.subr.mxu0 %v3059
    %4187 = vmatpush1.xpose.msra.mxu0 %v3057
    %4188 = vmatprep.subr.mxu0 %v3063
    %4189 = vmatpush1.xpose.msra.mxu0 %v3061
    %4190 = vmatprep.subr.mxu0 %v3067
    %4191 = vmatpush1.xpose.msra.mxu0 %v3065
    %4192 = vmatprep.subr.mxu0 %v3071
    %4193 = vmatpush1.xpose.msra.mxu0 %v3069
    %4194 = vmatprep.subr.mxu0 %v3075
    %4195 = vmatpush1.xpose.msra.mxu0 %v3073
    %4196 = vmatprep.subr.mxu0 %v3079
    %4197 = vmatpush1.xpose.msra.mxu0 %v3077
    %4198 = vmatprep.subr.mxu0 %v3083
    %4199 = vmatpush1.xpose.msra.mxu0 %v3081
    %4200 = vmatprep.subr.mxu0 %v3087
    %4201 = vmatpush1.xpose.msra.mxu0 %v3085
    %4202 = vmatprep.subr.mxu0 %v3091
    %4203 = vmatpush1.xpose.msra.mxu0 %v3089
    %4204 = vmatprep.subr.mxu0 %v3095
    %4205 = vmatpush1.xpose.msra.mxu0 %v3093
    %4206 = vmatprep.subr.mxu0 %v3099
    %4207 = vmatpush1.xpose.msra.mxu0 %v3097
    %4208 = vmatprep.subr.mxu0 %v3103
    %4209 = vmatpush1.xpose.msra.mxu0 %v3101
    %4210 = vmatprep.subr.mxu0 %v3107
    %4211 = vmatpush1.xpose.msra.mxu0 %v3105
    %4212 = vmatprep.subr.mxu0 %v3111
    %4213 = vmatpush1.xpose.msra.mxu0 %v3109
    %4214 = vmatprep.mubr.f32.mxu0 %v411
    %4215 = vmatmul.mubr.f32.gmra.mrb[0].mxu0 %v409
    %v4216 = vpop.f32.mrb[0].mxu0
    %v4217 = vadd.f32 0.0, %v4216
    %v4218 = vpop.f32.mrb[0].mxu0
    %v4219 = vadd.f32 0.0, %v4218
    %4220 = vdwg.mxu0
    %4221 = vmatprep.subr.mxu0 %v3115
    %4222 = vmatpush1.xpose.msra.mxu0 %v3113
    %4223 = vmatprep.subr.mxu0 %v3119
    %4224 = vmatpush1.xpose.msra.mxu0 %v3117
    %4225 = vmatprep.subr.mxu0 %v3123
    %4226 = vmatpush1.xpose.msra.mxu0 %v3121
    %4227 = vmatprep.subr.mxu0 %v3127
    %4228 = vmatpush1.xpose.msra.mxu0 %v3125
    %4229 = vmatprep.subr.mxu0 %v3131
    %4230 = vmatpush1.xpose.msra.mxu0 %v3129
    %4231 = vmatprep.subr.mxu0 %v3135
    %4232 = vmatpush1.xpose.msra.mxu0 %v3133
    %4233 = vmatprep.subr.mxu0 %v3139
    %4234 = vmatpush1.xpose.msra.mxu0 %v3137
    %4235 = vmatprep.subr.mxu0 %v3143
    %4236 = vmatpush1.xpose.msra.mxu0 %v3141
    %4237 = vmatprep.subr.mxu0 %v3147
    %4238 = vmatpush1.xpose.msra.mxu0 %v3145
    %4239 = vmatprep.subr.mxu0 %v3151
    %4240 = vmatpush1.xpose.msra.mxu0 %v3149
    %4241 = vmatprep.subr.mxu0 %v3155
    %4242 = vmatpush1.xpose.msra.mxu0 %v3153
    %4243 = vmatprep.subr.mxu0 %v3159
    %4244 = vmatpush1.xpose.msra.mxu0 %v3157
    %4245 = vmatprep.subr.mxu0 %v3163
    %4246 = vmatpush1.xpose.msra.mxu0 %v3161
    %4247 = vmatprep.subr.mxu0 %v3167
    %4248 = vmatpush1.xpose.msra.mxu0 %v3165
    %4249 = vmatprep.subr.mxu0 %v3171
    %4250 = vmatpush1.xpose.msra.mxu0 %v3169
    %4251 = vmatprep.subr.mxu0 %v3175
    %4252 = vmatpush1.xpose.msra.mxu0 %v3173
    %4253 = vmatprep.subr.mxu0 %v3179
    %4254 = vmatpush1.xpose.msra.mxu0 %v3177
    %4255 = vmatprep.subr.mxu0 %v3183
    %4256 = vmatpush1.xpose.msra.mxu0 %v3181
    %4257 = vmatprep.subr.mxu0 %v3187
    %4258 = vmatpush1.xpose.msra.mxu0 %v3185
    %4259 = vmatprep.subr.mxu0 %v3191
    %4260 = vmatpush1.xpose.msra.mxu0 %v3189
    %4261 = vmatprep.subr.mxu0 %v3195
    %4262 = vmatpush1.xpose.msra.mxu0 %v3193
    %4263 = vmatprep.subr.mxu0 %v3199
    %4264 = vmatpush1.xpose.msra.mxu0 %v3197
    %4265 = vmatprep.subr.mxu0 %v3203
    %4266 = vmatpush1.xpose.msra.mxu0 %v3201
    %4267 = vmatprep.subr.mxu0 %v3207
    %4268 = vmatpush1.xpose.msra.mxu0 %v3205
    %4269 = vmatprep.subr.mxu0 %v3211
    %4270 = vmatpush1.xpose.msra.mxu0 %v3209
    %4271 = vmatprep.subr.mxu0 %v3215
    %4272 = vmatpush1.xpose.msra.mxu0 %v3213
    %4273 = vmatprep.subr.mxu0 %v3219
    %4274 = vmatpush1.xpose.msra.mxu0 %v3217
    %4275 = vmatprep.subr.mxu0 %v3223
    %4276 = vmatpush1.xpose.msra.mxu0 %v3221
    %4277 = vmatprep.subr.mxu0 %v3227
    %4278 = vmatpush1.xpose.msra.mxu0 %v3225
    %4279 = vmatprep.subr.mxu0 %v3231
    %4280 = vmatpush1.xpose.msra.mxu0 %v3229
    %4281 = vmatprep.subr.mxu0 %v3235
    %4282 = vmatpush1.xpose.msra.mxu0 %v3233
    %4283 = vmatprep.subr.mxu0 %v3239
    %4284 = vmatpush1.xpose.msra.mxu0 %v3237
    %4285 = vmatprep.mubr.f32.mxu0 %v417
    %4286 = vmatmul.mubr.f32.gmra.mrb[0].mxu0 %v415
    %v4287 = vpop.f32.mrb[0].mxu0
    %v4288 = vadd.f32 0.0, %v4287
    %v4289 = vpop.f32.mrb[0].mxu0
    %v4290 = vadd.f32 0.0, %v4289
    %4291 = vdwg.mxu0
    %v4292 = vlaneseq
    %v4293 = vshrl.u32 %v4292, 7
    %v4294 = vsub.s32 0, %v4293
    %v4295 = vrot.slane %v3768, %v4294
    %v4296 = vlaneseq
    %v4297 = vshrl.u32 %v4296, 7
    %v4298 = vsub.s32 0, %v4297
    %v4299 = vrot.slane %v3800, %v4298
    %v4300 = vlaneseq
    %v4301 = vshrl.u32 %v4300, 7
    %v4302 = vsub.s32 0, %v4301
    %v4303 = vrot.slane %v3832, %v4302
    %v4304 = vlaneseq
    %v4305 = vshrl.u32 %v4304, 7
    %v4306 = vsub.s32 0, %v4305
    %v4307 = vrot.slane %v3864, %v4306
    %v4308 = vlaneseq
    %v4309 = vshrl.u32 %v4308, 7
    %v4310 = vsub.s32 0, %v4309
    %v4311 = vrot.slane %v3896, %v4310
    %v4312 = vlaneseq
    %v4313 = vshrl.u32 %v4312, 7
    %v4314 = vsub.s32 0, %v4313
    %v4315 = vrot.slane %v3928, %v4314
    %v4316 = vlaneseq
    %v4317 = vshrl.u32 %v4316, 7
    %v4318 = vsub.s32 0, %v4317
    %v4319 = vrot.slane %v3960, %v4318
    %v4320 = vlaneseq
    %v4321 = vshrl.u32 %v4320, 7
    %v4322 = vsub.s32 0, %v4321
    %v4323 = vrot.slane %v3992, %v4322
    %v4324 = vmul.f32 %v4075, %v4295
    %v4325 = vmul.f32 %v4077, %v4299
    %v4326 = vmul.f32 %v4146, %v4303
    %v4327 = vmul.f32 %v4148, %v4307
    %v4328 = vmul.f32 %v4217, %v4311
    %v4329 = vmul.f32 %v4219, %v4315
    %v4330 = vmul.f32 %v4288, %v4319
    %v4331 = vmul.f32 %v4290, %v4323
    %4332 = vset.pattern.permute.xlu0 3
    %4333 = vperm.xlu0 %4332, %v24
    %v4334 = vpop.permute.xlu0 %4333
    %4336 = vset.pattern.permute.xlu0 3
    %4337 = vperm.xlu0 %4336, %v25
    %v4338 = vpop.permute.xlu0 %4337
    %4340 = vset.pattern.permute.xlu0 3
    %4341 = vperm.xlu0 %4340, %v26
    %v4342 = vpop.permute.xlu0 %4341
    %4344 = vset.pattern.permute.xlu0 3
    %4345 = vperm.xlu0 %4344, %v27
    %v4346 = vpop.permute.xlu0 %4345
    %v4349 = vsel %vm245, %v48, 0
    %v4352 = vsel %vm245, %v49, 0
    %v4355 = vsel %vm245, %v50, 0
    %v4358 = vsel %vm245, %v51, 0
    %4360 = vmatprep.subr.mxu0 %v4325
    %4361 = vmatpush1.msra.mxu0 %v4324
    %4362 = vmatprep.subr.mxu0 %v4327
    %4363 = vmatpush1.msra.mxu0 %v4326
    %4364 = vmatprep.subr.mxu0 %v4329
    %4365 = vmatpush1.msra.mxu0 %v4328
    %4366 = vmatprep.subr.mxu0 %v4331
    %4367 = vmatpush1.msra.mxu0 %v4330
    %4368 = vmatprep.subr.mxu0 0.0
    %4369 = vmatpush1.msra.mxu0 0.0
    %4370 = vmatprep.subr.mxu0 0.0
    %4371 = vmatpush1.msra.mxu0 0.0
    %4372 = vmatprep.subr.mxu0 0.0
    %4373 = vmatpush1.msra.mxu0 0.0
    %4374 = vmatprep.subr.mxu0 0.0
    %4375 = vmatpush1.msra.mxu0 0.0
    %4376 = vmatprep.subr.mxu0 0.0
    %4377 = vmatpush1.msra.mxu0 0.0
    %4378 = vmatprep.subr.mxu0 0.0
    %4379 = vmatpush1.msra.mxu0 0.0
    %4380 = vmatprep.subr.mxu0 0.0
    %4381 = vmatpush1.msra.mxu0 0.0
    %4382 = vmatprep.subr.mxu0 0.0
    %4383 = vmatpush1.msra.mxu0 0.0
    %4384 = vmatprep.subr.mxu0 0.0
    %4385 = vmatpush1.msra.mxu0 0.0
    %4386 = vmatprep.subr.mxu0 0.0
    %4387 = vmatpush1.msra.mxu0 0.0
    %4388 = vmatprep.subr.mxu0 0.0
    %4389 = vmatpush1.msra.mxu0 0.0
    %4390 = vmatprep.subr.mxu0 0.0
    %4391 = vmatpush1.msra.mxu0 0.0
    %4392 = vmatprep.subr.mxu0 0.0
    %4393 = vmatpush1.msra.mxu0 0.0
    %4394 = vmatprep.subr.mxu0 0.0
    %4395 = vmatpush1.msra.mxu0 0.0
    %4396 = vmatprep.subr.mxu0 0.0
    %4397 = vmatpush1.msra.mxu0 0.0
    %4398 = vmatprep.subr.mxu0 0.0
    %4399 = vmatpush1.msra.mxu0 0.0
    %4400 = vmatprep.subr.mxu0 0.0
    %4401 = vmatpush1.msra.mxu0 0.0
    %4402 = vmatprep.subr.mxu0 0.0
    %4403 = vmatpush1.msra.mxu0 0.0
    %4404 = vmatprep.subr.mxu0 0.0
    %4405 = vmatpush1.msra.mxu0 0.0
    %4406 = vmatprep.subr.mxu0 0.0
    %4407 = vmatpush1.msra.mxu0 0.0
    %4408 = vmatprep.subr.mxu0 0.0
    %4409 = vmatpush1.msra.mxu0 0.0
    %4410 = vmatprep.subr.mxu0 0.0
    %4411 = vmatpush1.msra.mxu0 0.0
    %4412 = vmatprep.subr.mxu0 0.0
    %4413 = vmatpush1.msra.mxu0 0.0
    %4414 = vmatprep.subr.mxu0 0.0
    %4415 = vmatpush1.msra.mxu0 0.0
    %4416 = vmatprep.subr.mxu0 0.0
    %4417 = vmatpush1.msra.mxu0 0.0
    %4418 = vmatprep.subr.mxu0 0.0
    %4419 = vmatpush1.msra.mxu0 0.0
    %4420 = vmatprep.subr.mxu0 0.0
    %4421 = vmatpush1.msra.mxu0 0.0
    %4422 = vmatprep.subr.mxu0 0.0
    %4423 = vmatpush1.msra.mxu0 0.0
    %4424 = vmatprep.mubr.f32.mxu0 0.0
    %4425 = vmatmul.mubr.f32.gmra.mrb[0].mxu0 %v4349
    %v4426 = vpop.f32.mrb[0].mxu0
    %v4427 = vadd.f32 %v4334, %v4426
    %v4428 = vpop.f32.mrb[0].mxu0
    %v4429 = vadd.f32 %v4334, %v4428
    %4430 = vmatprep.mubr.f32.mxu0 0.0
    %4431 = vmatmul.mubr.f32.gmra.mrb[0].mxu0 %v4352
    %v4432 = vpop.f32.mrb[0].mxu0
    %v4433 = vadd.f32 %v4338, %v4432
    %v4434 = vpop.f32.mrb[0].mxu0
    %v4435 = vadd.f32 %v4338, %v4434
    %4436 = vmatprep.mubr.f32.mxu0 0.0
    %4437 = vmatmul.mubr.f32.gmra.mrb[0].mxu0 %v4355
    %v4438 = vpop.f32.mrb[0].mxu0
    %v4439 = vadd.f32 %v4342, %v4438
    %v4440 = vpop.f32.mrb[0].mxu0
    %v4441 = vadd.f32 %v4342, %v4440
    %4442 = vmatprep.mubr.f32.mxu0 0.0
    %4443 = vmatmul.mubr.f32.gmra.mrb[0].mxu0 %v4358
    %v4444 = vpop.f32.mrb[0].mxu0
    %v4445 = vadd.f32 %v4346, %v4444
    %v4446 = vpop.f32.mrb[0].mxu0
    %v4447 = vadd.f32 %v4346, %v4446
    %4448 = vdwg.mxu0
    %v4449 = vadd.f32 %v4427, %v60
    %v4450 = vadd.f32 %v4429, %v61
    %v4451 = vadd.f32 %v4433, %v62
    %v4452 = vadd.f32 %v4435, %v63
    %v4453 = vadd.f32 %v4439, %v64
    %v4454 = vadd.f32 %v4441, %v65
    %v4455 = vadd.f32 %v4445, %v66
    %v4456 = vadd.f32 %v4447, %v67
    %v4457 = vadd.f32 %v4449, %v4451
    %v4458 = vadd.f32 %v4457, %v4453
    %v4459 = vadd.f32 %v4458, %v4455
    %v4460 = vrot.slane %v4459, 4
    %v4461 = vadd.f32 %v4459, %v4460
    %v4462 = vrot.slane %v4461, 2
    %v4463 = vadd.f32 %v4461, %v4462
    %v4464 = vrot.slane %v4463, 1
    %v4465 = vadd.f32 %v4463, %v4464
    %v4466 = vadd.f32 %v4450, %v4452
    %v4467 = vadd.f32 %v4466, %v4454
    %v4468 = vadd.f32 %v4467, %v4456
    %v4469 = vrot.slane %v4468, 4
    %v4470 = vadd.f32 %v4468, %v4469
    %v4471 = vrot.slane %v4470, 2
    %v4472 = vadd.f32 %v4470, %v4471
    %v4473 = vrot.slane %v4472, 1
    %v4474 = vadd.f32 %v4472, %v4473
    %v4475 = vmul.f32 %v4465, %v86
    %v4476 = vmul.f32 %v4474, %v86
    %v4477 = vsub.f32 %v4449, %v4475
    %v4478 = vsub.f32 %v4450, %v4476
    %v4479 = vsub.f32 %v4451, %v4475
    %v4480 = vsub.f32 %v4452, %v4476
    %v4481 = vsub.f32 %v4453, %v4475
    %v4482 = vsub.f32 %v4454, %v4476
    %v4483 = vsub.f32 %v4455, %v4475
    %v4484 = vsub.f32 %v4456, %v4476
    %v4485 = vmul.f32 %v4477, %v4477
    %v4486 = vmul.f32 %v4478, %v4478
    %v4487 = vmul.f32 %v4479, %v4479
    %v4488 = vmul.f32 %v4480, %v4480
    %v4489 = vmul.f32 %v4481, %v4481
    %v4490 = vmul.f32 %v4482, %v4482
    %v4491 = vmul.f32 %v4483, %v4483
    %v4492 = vmul.f32 %v4484, %v4484
    %v4493 = vadd.f32 %v4485, %v4487
    %v4494 = vadd.f32 %v4493, %v4489
    %v4495 = vadd.f32 %v4494, %v4491
    %v4496 = vrot.slane %v4495, 4
    %v4497 = vadd.f32 %v4495, %v4496
    %v4498 = vrot.slane %v4497, 2
    %v4499 = vadd.f32 %v4497, %v4498
    %v4500 = vrot.slane %v4499, 1
    %v4501 = vadd.f32 %v4499, %v4500
    %v4502 = vadd.f32 %v4486, %v4488
    %v4503 = vadd.f32 %v4502, %v4490
    %v4504 = vadd.f32 %v4503, %v4492
    %v4505 = vrot.slane %v4504, 4
    %v4506 = vadd.f32 %v4504, %v4505
    %v4507 = vrot.slane %v4506, 2
    %v4508 = vadd.f32 %v4506, %v4507
    %v4509 = vrot.slane %v4508, 1
    %v4510 = vadd.f32 %v4508, %v4509
    %v4511 = vmul.f32 %v4501, %v86
    %v4512 = vmul.f32 %v4510, %v86
    %v4513 = vadd.f32 %v4511, 1e-05
    %v4514 = vadd.f32 %v4512, 1e-05
    %v4515 = vrsqrt.pop %v4513
    %v4516 = vrsqrt.pop %v4514
    %v4517 = vmul.f32 %v4477, %v4515
    %v4518 = vmul.f32 %v4478, %v4516
    %v4519 = vmul.f32 %v4479, %v4515
    %v4520 = vmul.f32 %v4480, %v4516
    %v4521 = vmul.f32 %v4481, %v4515
    %v4522 = vmul.f32 %v4482, %v4516
    %v4523 = vmul.f32 %v4483, %v4515
    %v4524 = vmul.f32 %v4484, %v4516
    %4525 = vset.pattern.permute.xlu0 4
    %4526 = vperm.xlu0 %4525, %v24
    %v4527 = vpop.permute.xlu0 %4526
    %4529 = vset.pattern.permute.xlu0 4
    %4530 = vperm.xlu0 %4529, %v25
    %v4531 = vpop.permute.xlu0 %4530
    %4533 = vset.pattern.permute.xlu0 4
    %4534 = vperm.xlu0 %4533, %v26
    %v4535 = vpop.permute.xlu0 %4534
    %4537 = vset.pattern.permute.xlu0 4
    %4538 = vperm.xlu0 %4537, %v27
    %v4539 = vpop.permute.xlu0 %4538
    %v4541 = vmul.f32 %v4517, %v4527
    %v4542 = vmul.f32 %v4518, %v4527
    %v4543 = vmul.f32 %v4519, %v4531
    %v4544 = vmul.f32 %v4520, %v4531
    %v4545 = vmul.f32 %v4521, %v4535
    %v4546 = vmul.f32 %v4522, %v4535
    %v4547 = vmul.f32 %v4523, %v4539
    %v4548 = vmul.f32 %v4524, %v4539
    %4549 = vset.pattern.permute.xlu0 5
    %4550 = vperm.xlu0 %4549, %v24
    %v4551 = vpop.permute.xlu0 %4550
    %4553 = vset.pattern.permute.xlu0 5
    %4554 = vperm.xlu0 %4553, %v25
    %v4555 = vpop.permute.xlu0 %4554
    %4557 = vset.pattern.permute.xlu0 5
    %4558 = vperm.xlu0 %4557, %v26
    %v4559 = vpop.permute.xlu0 %4558
    %4561 = vset.pattern.permute.xlu0 5
    %4562 = vperm.xlu0 %4561, %v27
    %v4563 = vpop.permute.xlu0 %4562
    %v4565 = vadd.f32 %v4541, %v4551
    %v4566 = vadd.f32 %v4542, %v4551
    %v4567 = vadd.f32 %v4543, %v4555
    %v4568 = vadd.f32 %v4544, %v4555
    %v4569 = vadd.f32 %v4545, %v4559
    %v4570 = vadd.f32 %v4546, %v4559
    %v4571 = vadd.f32 %v4547, %v4563
    %v4572 = vadd.f32 %v4548, %v4563
    %4573 = vset.pattern.permute.xlu0 6
    %4574 = vperm.xlu0 %4573, %v24
    %v4575 = vpop.permute.xlu0 %4574
    %4577 = vset.pattern.permute.xlu0 6
    %4578 = vperm.xlu0 %4577, %v25
    %v4579 = vpop.permute.xlu0 %4578
    %4581 = vset.pattern.permute.xlu0 6
    %4582 = vperm.xlu0 %4581, %v26
    %v4583 = vpop.permute.xlu0 %4582
    %4585 = vset.pattern.permute.xlu0 6
    %4586 = vperm.xlu0 %4585, %v27
    %v4587 = vpop.permute.xlu0 %4586
    %v4590 = vsel %vm245, %v52, 0
    %v4593 = vsel %vm245, %v53, 0
    %v4596 = vsel %vm245, %v54, 0
    %v4599 = vsel %vm245, %v55, 0
    %4601 = vmatprep.subr.mxu0 %v4566
    %4602 = vmatpush1.msra.mxu0 %v4565
    %4603 = vmatprep.subr.mxu0 %v4568
    %4604 = vmatpush1.msra.mxu0 %v4567
    %4605 = vmatprep.subr.mxu0 %v4570
    %4606 = vmatpush1.msra.mxu0 %v4569
    %4607 = vmatprep.subr.mxu0 %v4572
    %4608 = vmatpush1.msra.mxu0 %v4571
    %4609 = vmatprep.subr.mxu0 0.0
    %4610 = vmatpush1.msra.mxu0 0.0
    %4611 = vmatprep.subr.mxu0 0.0
    %4612 = vmatpush1.msra.mxu0 0.0
    %4613 = vmatprep.subr.mxu0 0.0
    %4614 = vmatpush1.msra.mxu0 0.0
    %4615 = vmatprep.subr.mxu0 0.0
    %4616 = vmatpush1.msra.mxu0 0.0
    %4617 = vmatprep.subr.mxu0 0.0
    %4618 = vmatpush1.msra.mxu0 0.0
    %4619 = vmatprep.subr.mxu0 0.0
    %4620 = vmatpush1.msra.mxu0 0.0
    %4621 = vmatprep.subr.mxu0 0.0
    %4622 = vmatpush1.msra.mxu0 0.0
    %4623 = vmatprep.subr.mxu0 0.0
    %4624 = vmatpush1.msra.mxu0 0.0
    %4625 = vmatprep.subr.mxu0 0.0
    %4626 = vmatpush1.msra.mxu0 0.0
    %4627 = vmatprep.subr.mxu0 0.0
    %4628 = vmatpush1.msra.mxu0 0.0
    %4629 = vmatprep.subr.mxu0 0.0
    %4630 = vmatpush1.msra.mxu0 0.0
    %4631 = vmatprep.subr.mxu0 0.0
    %4632 = vmatpush1.msra.mxu0 0.0
    %4633 = vmatprep.subr.mxu0 0.0
    %4634 = vmatpush1.msra.mxu0 0.0
    %4635 = vmatprep.subr.mxu0 0.0
    %4636 = vmatpush1.msra.mxu0 0.0
    %4637 = vmatprep.subr.mxu0 0.0
    %4638 = vmatpush1.msra.mxu0 0.0
    %4639 = vmatprep.subr.mxu0 0.0
    %4640 = vmatpush1.msra.mxu0 0.0
    %4641 = vmatprep.subr.mxu0 0.0
    %4642 = vmatpush1.msra.mxu0 0.0
    %4643 = vmatprep.subr.mxu0 0.0
    %4644 = vmatpush1.msra.mxu0 0.0
    %4645 = vmatprep.subr.mxu0 0.0
    %4646 = vmatpush1.msra.mxu0 0.0
    %4647 = vmatprep.subr.mxu0 0.0
    %4648 = vmatpush1.msra.mxu0 0.0
    %4649 = vmatprep.subr.mxu0 0.0
    %4650 = vmatpush1.msra.mxu0 0.0
    %4651 = vmatprep.subr.mxu0 0.0
    %4652 = vmatpush1.msra.mxu0 0.0
    %4653 = vmatprep.subr.mxu0 0.0
    %4654 = vmatpush1.msra.mxu0 0.0
    %4655 = vmatprep.subr.mxu0 0.0
    %4656 = vmatpush1.msra.mxu0 0.0
    %4657 = vmatprep.subr.mxu0 0.0
    %4658 = vmatpush1.msra.mxu0 0.0
    %4659 = vmatprep.subr.mxu0 0.0
    %4660 = vmatpush1.msra.mxu0 0.0
    %4661 = vmatprep.subr.mxu0 0.0
    %4662 = vmatpush1.msra.mxu0 0.0
    %4663 = vmatprep.subr.mxu0 0.0
    %4664 = vmatpush1.msra.mxu0 0.0
    %4665 = vmatprep.mubr.f32.mxu0 0.0
    %4666 = vmatmul.mubr.f32.gmra.mrb[0].mxu0 %v4590
    %v4667 = vpop.f32.mrb[0].mxu0
    %v4668 = vadd.f32 %v4575, %v4667
    %v4669 = vpop.f32.mrb[0].mxu0
    %v4670 = vadd.f32 %v4575, %v4669
    %4671 = vmatprep.mubr.f32.mxu0 0.0
    %4672 = vmatmul.mubr.f32.gmra.mrb[0].mxu0 %v4593
    %v4673 = vpop.f32.mrb[0].mxu0
    %v4674 = vadd.f32 %v4579, %v4673
    %v4675 = vpop.f32.mrb[0].mxu0
    %v4676 = vadd.f32 %v4579, %v4675
    %4677 = vmatprep.mubr.f32.mxu0 0.0
    %4678 = vmatmul.mubr.f32.gmra.mrb[0].mxu0 %v4596
    %v4679 = vpop.f32.mrb[0].mxu0
    %v4680 = vadd.f32 %v4583, %v4679
    %v4681 = vpop.f32.mrb[0].mxu0
    %v4682 = vadd.f32 %v4583, %v4681
    %4683 = vmatprep.mubr.f32.mxu0 0.0
    %4684 = vmatmul.mubr.f32.gmra.mrb[0].mxu0 %v4599
    %v4685 = vpop.f32.mrb[0].mxu0
    %v4686 = vadd.f32 %v4587, %v4685
    %v4687 = vpop.f32.mrb[0].mxu0
    %v4688 = vadd.f32 %v4587, %v4687
    %4689 = vdwg.mxu0
    %v4690 = vmul.f32 %v4668, 0.5
    %v4691 = vmul.f32 %v4670, 0.5
    %v4692 = vmul.f32 %v4674, 0.5
    %v4693 = vmul.f32 %v4676, 0.5
    %v4694 = vmul.f32 %v4680, 0.5
    %v4695 = vmul.f32 %v4682, 0.5
    %v4696 = vmul.f32 %v4686, 0.5
    %v4697 = vmul.f32 %v4688, 0.5
    %v4698 = vmul.f32 %v4668, 0.70710677
    %v4699 = vmul.f32 %v4670, 0.70710677
    %v4700 = vmul.f32 %v4674, 0.70710677
    %v4701 = vmul.f32 %v4676, 0.70710677
    %v4702 = vmul.f32 %v4680, 0.70710677
    %v4703 = vmul.f32 %v4682, 0.70710677
    %v4704 = vmul.f32 %v4686, 0.70710677
    %v4705 = vmul.f32 %v4688, 0.70710677
    %v4706 = verf.f32.pop %v4698
    %v4707 = verf.f32.pop %v4699
    %v4708 = verf.f32.pop %v4700
    %v4709 = verf.f32.pop %v4701
    %v4710 = verf.f32.pop %v4702
    %v4711 = verf.f32.pop %v4703
    %v4712 = verf.f32.pop %v4704
    %v4713 = verf.f32.pop %v4705
    %v4714 = vadd.f32 %v4706, 1.0
    %v4715 = vadd.f32 %v4707, 1.0
    %v4716 = vadd.f32 %v4708, 1.0
    %v4717 = vadd.f32 %v4709, 1.0
    %v4718 = vadd.f32 %v4710, 1.0
    %v4719 = vadd.f32 %v4711, 1.0
    %v4720 = vadd.f32 %v4712, 1.0
    %v4721 = vadd.f32 %v4713, 1.0
    %v4722 = vmul.f32 %v4690, %v4714
    %v4723 = vmul.f32 %v4691, %v4715
    %v4724 = vmul.f32 %v4692, %v4716
    %v4725 = vmul.f32 %v4693, %v4717
    %v4726 = vmul.f32 %v4694, %v4718
    %v4727 = vmul.f32 %v4695, %v4719
    %v4728 = vmul.f32 %v4696, %v4720
    %v4729 = vmul.f32 %v4697, %v4721
    %4730 = vset.pattern.permute.xlu0 7
    %4731 = vperm.xlu0 %4730, %v24
    %v4732 = vpop.permute.xlu0 %4731
    %4734 = vset.pattern.permute.xlu0 7
    %4735 = vperm.xlu0 %4734, %v25
    %v4736 = vpop.permute.xlu0 %4735
    %4738 = vset.pattern.permute.xlu0 7
    %4739 = vperm.xlu0 %4738, %v26
    %v4740 = vpop.permute.xlu0 %4739
    %4742 = vset.pattern.permute.xlu0 7
    %4743 = vperm.xlu0 %4742, %v27
    %v4744 = vpop.permute.xlu0 %4743
    %v4747 = vsel %vm245, %v56, 0
    %v4750 = vsel %vm245, %v57, 0
    %v4753 = vsel %vm245, %v58, 0
    %v4756 = vsel %vm245, %v59, 0
    %4758 = vmatprep.subr.mxu0 %v4723
    %4759 = vmatpush1.msra.mxu0 %v4722
    %4760 = vmatprep.subr.mxu0 %v4725
    %4761 = vmatpush1.msra.mxu0 %v4724
    %4762 = vmatprep.subr.mxu0 %v4727
    %4763 = vmatpush1.msra.mxu0 %v4726
    %4764 = vmatprep.subr.mxu0 %v4729
    %4765 = vmatpush1.msra.mxu0 %v4728
    %4766 = vmatprep.subr.mxu0 0.0
    %4767 = vmatpush1.msra.mxu0 0.0
    %4768 = vmatprep.subr.mxu0 0.0
    %4769 = vmatpush1.msra.mxu0 0.0
    %4770 = vmatprep.subr.mxu0 0.0
    %4771 = vmatpush1.msra.mxu0 0.0
    %4772 = vmatprep.subr.mxu0 0.0
    %4773 = vmatpush1.msra.mxu0 0.0
    %4774 = vmatprep.subr.mxu0 0.0
    %4775 = vmatpush1.msra.mxu0 0.0
    %4776 = vmatprep.subr.mxu0 0.0
    %4777 = vmatpush1.msra.mxu0 0.0
    %4778 = vmatprep.subr.mxu0 0.0
    %4779 = vmatpush1.msra.mxu0 0.0
    %4780 = vmatprep.subr.mxu0 0.0
    %4781 = vmatpush1.msra.mxu0 0.0
    %4782 = vmatprep.subr.mxu0 0.0
    %4783 = vmatpush1.msra.mxu0 0.0
    %4784 = vmatprep.subr.mxu0 0.0
    %4785 = vmatpush1.msra.mxu0 0.0
    %4786 = vmatprep.subr.mxu0 0.0
    %4787 = vmatpush1.msra.mxu0 0.0
    %4788 = vmatprep.subr.mxu0 0.0
    %4789 = vmatpush1.msra.mxu0 0.0
    %4790 = vmatprep.subr.mxu0 0.0
    %4791 = vmatpush1.msra.mxu0 0.0
    %4792 = vmatprep.subr.mxu0 0.0
    %4793 = vmatpush1.msra.mxu0 0.0
    %4794 = vmatprep.subr.mxu0 0.0
    %4795 = vmatpush1.msra.mxu0 0.0
    %4796 = vmatprep.subr.mxu0 0.0
    %4797 = vmatpush1.msra.mxu0 0.0
    %4798 = vmatprep.subr.mxu0 0.0
    %4799 = vmatpush1.msra.mxu0 0.0
    %4800 = vmatprep.subr.mxu0 0.0
    %4801 = vmatpush1.msra.mxu0 0.0
    %4802 = vmatprep.subr.mxu0 0.0
    %4803 = vmatpush1.msra.mxu0 0.0
    %4804 = vmatprep.subr.mxu0 0.0
    %4805 = vmatpush1.msra.mxu0 0.0
    %4806 = vmatprep.subr.mxu0 0.0
    %4807 = vmatpush1.msra.mxu0 0.0
    %4808 = vmatprep.subr.mxu0 0.0
    %4809 = vmatpush1.msra.mxu0 0.0
    %4810 = vmatprep.subr.mxu0 0.0
    %4811 = vmatpush1.msra.mxu0 0.0
    %4812 = vmatprep.subr.mxu0 0.0
    %4813 = vmatpush1.msra.mxu0 0.0
    %4814 = vmatprep.subr.mxu0 0.0
    %4815 = vmatpush1.msra.mxu0 0.0
    %4816 = vmatprep.subr.mxu0 0.0
    %4817 = vmatpush1.msra.mxu0 0.0
    %4818 = vmatprep.subr.mxu0 0.0
    %4819 = vmatpush1.msra.mxu0 0.0
    %4820 = vmatprep.subr.mxu0 0.0
    %4821 = vmatpush1.msra.mxu0 0.0
    %4822 = vmatprep.mubr.f32.mxu0 0.0
    %4823 = vmatmul.mubr.f32.gmra.mrb[0].mxu0 %v4747
    %v4824 = vpop.f32.mrb[0].mxu0
    %v4825 = vadd.f32 %v4732, %v4824
    %v4826 = vpop.f32.mrb[0].mxu0
    %v4827 = vadd.f32 %v4732, %v4826
    %4828 = vmatprep.mubr.f32.mxu0 0.0
    %4829 = vmatmul.mubr.f32.gmra.mrb[0].mxu0 %v4750
    %v4830 = vpop.f32.mrb[0].mxu0
    %v4831 = vadd.f32 %v4736, %v4830
    %v4832 = vpop.f32.mrb[0].mxu0
    %v4833 = vadd.f32 %v4736, %v4832
    %4834 = vmatprep.mubr.f32.mxu0 0.0
    %4835 = vmatmul.mubr.f32.gmra.mrb[0].mxu0 %v4753
    %v4836 = vpop.f32.mrb[0].mxu0
    %v4837 = vadd.f32 %v4740, %v4836
    %v4838 = vpop.f32.mrb[0].mxu0
    %v4839 = vadd.f32 %v4740, %v4838
    %4840 = vmatprep.mubr.f32.mxu0 0.0
    %4841 = vmatmul.mubr.f32.gmra.mrb[0].mxu0 %v4756
    %v4842 = vpop.f32.mrb[0].mxu0
    %v4843 = vadd.f32 %v4744, %v4842
    %v4844 = vpop.f32.mrb[0].mxu0
    %v4845 = vadd.f32 %v4744, %v4844
    %4846 = vdwg.mxu0
    %v4847 = vadd.f32 %v4449, %v4825
    %v4848 = vadd.f32 %v4450, %v4827
    %v4849 = vadd.f32 %v4451, %v4831
    %v4850 = vadd.f32 %v4452, %v4833
    %v4851 = vadd.f32 %v4453, %v4837
    %v4852 = vadd.f32 %v4454, %v4839
    %v4853 = vadd.f32 %v4455, %v4843
    %v4854 = vadd.f32 %v4456, %v4845
    %4855 = vst [vmem:[#allocation2] sm:$0xff] %v4847
    %4856 = vst [vmem:[#allocation2 + $0x8] sm:$0xff] %v4848
    %4857 = vst [vmem:[#allocation2 + $0x10] sm:$0xff] %v4849
    %4858 = vst [vmem:[#allocation2 + $0x18] sm:$0xff] %v4850
    %4859 = vst [vmem:[#allocation2 + $0x20] sm:$0xff] %v4851
    %4860 = vst [vmem:[#allocation2 + $0x28] sm:$0xff] %v4852
    %4861 = vst [vmem:[#allocation2 + $0x30] sm:$0xff] %v4853
    %4862 = vst [vmem:[#allocation2 + $0x38] sm:$0xff] %v4854
    %s4863 = scalar_lea.vmem %s0, 64
    %v4864 = vld [vmem:[%s4863] sm:$0xff]
    %v4865 = vld [vmem:[%s4863 + $0x8] sm:$0xff]
    %v4866 = vld [vmem:[%s4863 + $0x10] sm:$0xff]
    %v4867 = vld [vmem:[%s4863 + $0x18] sm:$0xff]
    %v4868 = vld [vmem:[%s4863 + $0x20] sm:$0xff]
    %v4869 = vld [vmem:[%s4863 + $0x28] sm:$0xff]
    %v4870 = vld [vmem:[%s4863 + $0x30] sm:$0xff]
    %v4871 = vld [vmem:[%s4863 + $0x38] sm:$0xff]
    %v4872 = vadd.f32 %v4864, %v4866
    %v4873 = vadd.f32 %v4872, %v4868
    %v4874 = vadd.f32 %v4873, %v4870
    %v4875 = vrot.slane %v4874, 4
    %v4876 = vadd.f32 %v4874, %v4875
    %v4877 = vrot.slane %v4876, 2
    %v4878 = vadd.f32 %v4876, %v4877
    %v4879 = vrot.slane %v4878, 1
    %v4880 = vadd.f32 %v4878, %v4879
    %v4881 = vadd.f32 %v4865, %v4867
    %v4882 = vadd.f32 %v4881, %v4869
    %v4883 = vadd.f32 %v4882, %v4871
    %v4884 = vrot.slane %v4883, 4
    %v4885 = vadd.f32 %v4883, %v4884
    %v4886 = vrot.slane %v4885, 2
    %v4887 = vadd.f32 %v4885, %v4886
    %v4888 = vrot.slane %v4887, 1
    %v4889 = vadd.f32 %v4887, %v4888
    %v4890 = vmul.f32 %v4880, %v86
    %v4891 = vmul.f32 %v4889, %v86
    %v4892 = vsub.f32 %v4864, %v4890
    %v4893 = vsub.f32 %v4865, %v4891
    %v4894 = vsub.f32 %v4866, %v4890
    %v4895 = vsub.f32 %v4867, %v4891
    %v4896 = vsub.f32 %v4868, %v4890
    %v4897 = vsub.f32 %v4869, %v4891
    %v4898 = vsub.f32 %v4870, %v4890
    %v4899 = vsub.f32 %v4871, %v4891
    %v4900 = vmul.f32 %v4892, %v4892
    %v4901 = vmul.f32 %v4893, %v4893
    %v4902 = vmul.f32 %v4894, %v4894
    %v4903 = vmul.f32 %v4895, %v4895
    %v4904 = vmul.f32 %v4896, %v4896
    %v4905 = vmul.f32 %v4897, %v4897
    %v4906 = vmul.f32 %v4898, %v4898
    %v4907 = vmul.f32 %v4899, %v4899
    %v4908 = vadd.f32 %v4900, %v4902
    %v4909 = vadd.f32 %v4908, %v4904
    %v4910 = vadd.f32 %v4909, %v4906
    %v4911 = vrot.slane %v4910, 4
    %v4912 = vadd.f32 %v4910, %v4911
    %v4913 = vrot.slane %v4912, 2
    %v4914 = vadd.f32 %v4912, %v4913
    %v4915 = vrot.slane %v4914, 1
    %v4916 = vadd.f32 %v4914, %v4915
    %v4917 = vadd.f32 %v4901, %v4903
    %v4918 = vadd.f32 %v4917, %v4905
    %v4919 = vadd.f32 %v4918, %v4907
    %v4920 = vrot.slane %v4919, 4
    %v4921 = vadd.f32 %v4919, %v4920
    %v4922 = vrot.slane %v4921, 2
    %v4923 = vadd.f32 %v4921, %v4922
    %v4924 = vrot.slane %v4923, 1
    %v4925 = vadd.f32 %v4923, %v4924
    %v4926 = vmul.f32 %v4916, %v86
    %v4927 = vmul.f32 %v4925, %v86
    %v4928 = vadd.f32 %v4926, 1e-05
    %v4929 = vadd.f32 %v4927, 1e-05
    %v4930 = vrsqrt.pop %v4928
    %v4931 = vrsqrt.pop %v4929
    %v4932 = vmul.f32 %v4892, %v4930
    %v4933 = vmul.f32 %v4893, %v4931
    %v4934 = vmul.f32 %v4894, %v4930
    %v4935 = vmul.f32 %v4895, %v4931
    %v4936 = vmul.f32 %v4896, %v4930
    %v4937 = vmul.f32 %v4897, %v4931
    %v4938 = vmul.f32 %v4898, %v4930
    %v4939 = vmul.f32 %v4899, %v4931
    %v4940 = vmul.f32 %v4932, %v140
    %v4941 = vmul.f32 %v4933, %v140
    %v4942 = vmul.f32 %v4934, %v145
    %v4943 = vmul.f32 %v4935, %v145
    %v4944 = vmul.f32 %v4936, %v150
    %v4945 = vmul.f32 %v4937, %v150
    %v4946 = vmul.f32 %v4938, %v155
    %v4947 = vmul.f32 %v4939, %v155
    %v4948 = vadd.f32 %v4940, %v167
    %v4949 = vadd.f32 %v4941, %v167
    %v4950 = vadd.f32 %v4942, %v171
    %v4951 = vadd.f32 %v4943, %v171
    %v4952 = vadd.f32 %v4944, %v175
    %v4953 = vadd.f32 %v4945, %v175
    %v4954 = vadd.f32 %v4946, %v179
    %v4955 = vadd.f32 %v4947, %v179
    %4956 = vmatprep.subr.mxu0 %v4949
    %4957 = vmatpush1.msra.mxu0 %v4948
    %4958 = vmatprep.subr.mxu0 %v4951
    %4959 = vmatpush1.msra.mxu0 %v4950
    %4960 = vmatprep.subr.mxu0 %v4953
    %4961 = vmatpush1.msra.mxu0 %v4952
    %4962 = vmatprep.subr.mxu0 %v4955
    %4963 = vmatpush1.msra.mxu0 %v4954
    %4964 = vmatprep.subr.mxu0 0.0
    %4965 = vmatpush1.msra.mxu0 0.0
    %4966 = vmatprep.subr.mxu0 0.0
    %4967 = vmatpush1.msra.mxu0 0.0
    %4968 = vmatprep.subr.mxu0 0.0
    %4969 = vmatpush1.msra.mxu0 0.0
    %4970 = vmatprep.subr.mxu0 0.0
    %4971 = vmatpush1.msra.mxu0 0.0
    %4972 = vmatprep.subr.mxu0 0.0
    %4973 = vmatpush1.msra.mxu0 0.0
    %4974 = vmatprep.subr.mxu0 0.0
    %4975 = vmatpush1.msra.mxu0 0.0
    %4976 = vmatprep.subr.mxu0 0.0
    %4977 = vmatpush1.msra.mxu0 0.0
    %4978 = vmatprep.subr.mxu0 0.0
    %4979 = vmatpush1.msra.mxu0 0.0
    %4980 = vmatprep.subr.mxu0 0.0
    %4981 = vmatpush1.msra.mxu0 0.0
    %4982 = vmatprep.subr.mxu0 0.0
    %4983 = vmatpush1.msra.mxu0 0.0
    %4984 = vmatprep.subr.mxu0 0.0
    %4985 = vmatpush1.msra.mxu0 0.0
    %4986 = vmatprep.subr.mxu0 0.0
    %4987 = vmatpush1.msra.mxu0 0.0
    %4988 = vmatprep.subr.mxu0 0.0
    %4989 = vmatpush1.msra.mxu0 0.0
    %4990 = vmatprep.subr.mxu0 0.0
    %4991 = vmatpush1.msra.mxu0 0.0
    %4992 = vmatprep.subr.mxu0 0.0
    %4993 = vmatpush1.msra.mxu0 0.0
    %4994 = vmatprep.subr.mxu0 0.0
    %4995 = vmatpush1.msra.mxu0 0.0
    %4996 = vmatprep.subr.mxu0 0.0
    %4997 = vmatpush1.msra.mxu0 0.0
    %4998 = vmatprep.subr.mxu0 0.0
    %4999 = vmatpush1.msra.mxu0 0.0
    %5000 = vmatprep.subr.mxu0 0.0
    %5001 = vmatpush1.msra.mxu0 0.0
    %5002 = vmatprep.subr.mxu0 0.0
    %5003 = vmatpush1.msra.mxu0 0.0
    %5004 = vmatprep.subr.mxu0 0.0
    %5005 = vmatpush1.msra.mxu0 0.0
    %5006 = vmatprep.subr.mxu0 0.0
    %5007 = vmatpush1.msra.mxu0 0.0
    %5008 = vmatprep.subr.mxu0 0.0
    %5009 = vmatpush1.msra.mxu0 0.0
    %5010 = vmatprep.subr.mxu0 0.0
    %5011 = vmatpush1.msra.mxu0 0.0
    %5012 = vmatprep.subr.mxu0 0.0
    %5013 = vmatpush1.msra.mxu0 0.0
    %5014 = vmatprep.subr.mxu0 0.0
    %5015 = vmatpush1.msra.mxu0 0.0
    %5016 = vmatprep.subr.mxu0 0.0
    %5017 = vmatpush1.msra.mxu0 0.0
    %5018 = vmatprep.subr.mxu0 0.0
    %5019 = vmatpush1.msra.mxu0 0.0
    %5020 = vmatprep.mubr.f32.mxu0 0.0
    %5021 = vmatmul.mubr.f32.gmra.mrb[0].mxu0 %v247
    %v5022 = vpop.f32.mrb[0].mxu0
    %v5023 = vadd.f32 %v191, %v5022
    %v5024 = vpop.f32.mrb[0].mxu0
    %v5025 = vadd.f32 %v191, %v5024
    %5026 = vmatprep.mubr.f32.mxu0 0.0
    %5027 = vmatmul.mubr.f32.gmra.mrb[0].mxu0 %v250
    %v5028 = vpop.f32.mrb[0].mxu0
    %v5029 = vadd.f32 %v195, %v5028
    %v5030 = vpop.f32.mrb[0].mxu0
    %v5031 = vadd.f32 %v195, %v5030
    %5032 = vmatprep.mubr.f32.mxu0 0.0
    %5033 = vmatmul.mubr.f32.gmra.mrb[0].mxu0 %v253
    %v5034 = vpop.f32.mrb[0].mxu0
    %v5035 = vadd.f32 %v199, %v5034
    %v5036 = vpop.f32.mrb[0].mxu0
    %v5037 = vadd.f32 %v199, %v5036
    %5038 = vmatprep.mubr.f32.mxu0 0.0
    %5039 = vmatmul.mubr.f32.gmra.mrb[0].mxu0 %v256
    %v5040 = vpop.f32.mrb[0].mxu0
    %v5041 = vadd.f32 %v203, %v5040
    %v5042 = vpop.f32.mrb[0].mxu0
    %v5043 = vadd.f32 %v203, %v5042
    %5044 = vmatprep.mubr.f32.mxu0 0.0
    %5045 = vmatmul.mubr.f32.gmra.mrb[0].mxu0 %v259
    %v5046 = vpop.f32.mrb[0].mxu0
    %v5047 = vadd.f32 %v208, %v5046
    %v5048 = vpop.f32.mrb[0].mxu0
    %v5049 = vadd.f32 %v208, %v5048
    %5050 = vmatprep.mubr.f32.mxu0 0.0
    %5051 = vmatmul.mubr.f32.gmra.mrb[0].mxu0 %v262
    %v5052 = vpop.f32.mrb[0].mxu0
    %v5053 = vadd.f32 %v213, %v5052
    %v5054 = vpop.f32.mrb[0].mxu0
    %v5055 = vadd.f32 %v213, %v5054
    %5056 = vmatprep.mubr.f32.mxu0 0.0
    %5057 = vmatmul.mubr.f32.gmra.mrb[0].mxu0 %v265
    %v5058 = vpop.f32.mrb[0].mxu0
    %v5059 = vadd.f32 %v218, %v5058
    %v5060 = vpop.f32.mrb[0].mxu0
    %v5061 = vadd.f32 %v218, %v5060
    %5062 = vmatprep.mubr.f32.mxu0 0.0
    %5063 = vmatmul.mubr.f32.gmra.mrb[0].mxu0 %v268
    %v5064 = vpop.f32.mrb[0].mxu0
    %v5065 = vadd.f32 %v223, %v5064
    %v5066 = vpop.f32.mrb[0].mxu0
    %v5067 = vadd.f32 %v223, %v5066
    %5068 = vmatprep.mubr.f32.mxu0 0.0
    %5069 = vmatmul.mubr.f32.gmra.mrb[0].mxu0 %v271
    %v5070 = vpop.f32.mrb[0].mxu0
    %v5071 = vadd.f32 %v228, %v5070
    %v5072 = vpop.f32.mrb[0].mxu0
    %v5073 = vadd.f32 %v228, %v5072
    %5074 = vmatprep.mubr.f32.mxu0 0.0
    %5075 = vmatmul.mubr.f32.gmra.mrb[0].mxu0 %v274
    %v5076 = vpop.f32.mrb[0].mxu0
    %v5077 = vadd.f32 %v233, %v5076
    %v5078 = vpop.f32.mrb[0].mxu0
    %v5079 = vadd.f32 %v233, %v5078
    %5080 = vmatprep.mubr.f32.mxu0 0.0
    %5081 = vmatmul.mubr.f32.gmra.mrb[0].mxu0 %v277
    %v5082 = vpop.f32.mrb[0].mxu0
    %v5083 = vadd.f32 %v238, %v5082
    %v5084 = vpop.f32.mrb[0].mxu0
    %v5085 = vadd.f32 %v238, %v5084
    %5086 = vmatprep.mubr.f32.mxu0 0.0
    %5087 = vmatmul.mubr.f32.gmra.mrb[0].mxu0 %v280
    %v5088 = vpop.f32.mrb[0].mxu0
    %v5089 = vadd.f32 %v243, %v5088
    %v5090 = vpop.f32.mrb[0].mxu0
    %v5091 = vadd.f32 %v243, %v5090
    %5092 = vdwg.mxu0
    %5093 = vxpose.xlu0.b32.start [1/16] %v5023, 128
    %5094 = vxpose.xlu0.b32.cont [2/16] 0.0, 128
    %5095 = vxpose.xlu0.b32.cont [3/16] 0.0, 128
    %5096 = vxpose.xlu0.b32.cont [4/16] 0.0, 128
    %5097 = vxpose.xlu0.b32.cont [5/16] 0.0, 128
    %5098 = vxpose.xlu0.b32.cont [6/16] 0.0, 128
    %5099 = vxpose.xlu0.b32.cont [7/16] 0.0, 128
    %5100 = vxpose.xlu0.b32.cont [8/16] 0.0, 128
    %5101 = vxpose.xlu0.b32.cont [9/16] 0.0, 128
    %5102 = vxpose.xlu0.b32.cont [10/16] 0.0, 128
    %5103 = vxpose.xlu0.b32.cont [11/16] 0.0, 128
    %5104 = vxpose.xlu0.b32.cont [12/16] 0.0, 128
    %5105 = vxpose.xlu0.b32.cont [13/16] 0.0, 128
    %5106 = vxpose.xlu0.b32.cont [14/16] 0.0, 128
    %5107 = vxpose.xlu0.b32.cont [15/16] 0.0, 128
    %5108 = vxpose.xlu0.b32.end [16/16] 0.0, 128
    %v5109 = vpop.trf.xlu0
    %v5110 = vpop.trf.xlu0
    %v5111 = vpop.trf.xlu0
    %v5112 = vpop.trf.xlu0
    %v5113 = vpop.trf.xlu0
    %v5114 = vpop.trf.xlu0
    %v5115 = vpop.trf.xlu0
    %v5116 = vpop.trf.xlu0
    %v5117 = vpop.trf.xlu0
    %v5118 = vpop.trf.xlu0
    %v5119 = vpop.trf.xlu0
    %v5120 = vpop.trf.xlu0
    %v5121 = vpop.trf.xlu0
    %v5122 = vpop.trf.xlu0
    %v5123 = vpop.trf.xlu0
    %v5124 = vpop.trf.xlu0
    %5125 = vxpose.xlu0.b32.start [1/16] %v5025, 128
    %5126 = vxpose.xlu0.b32.cont [2/16] 0.0, 128
    %5127 = vxpose.xlu0.b32.cont [3/16] 0.0, 128
    %5128 = vxpose.xlu0.b32.cont [4/16] 0.0, 128
    %5129 = vxpose.xlu0.b32.cont [5/16] 0.0, 128
    %5130 = vxpose.xlu0.b32.cont [6/16] 0.0, 128
    %5131 = vxpose.xlu0.b32.cont [7/16] 0.0, 128
    %5132 = vxpose.xlu0.b32.cont [8/16] 0.0, 128
    %5133 = vxpose.xlu0.b32.cont [9/16] 0.0, 128
    %5134 = vxpose.xlu0.b32.cont [10/16] 0.0, 128
    %5135 = vxpose.xlu0.b32.cont [11/16] 0.0, 128
    %5136 = vxpose.xlu0.b32.cont [12/16] 0.0, 128
    %5137 = vxpose.xlu0.b32.cont [13/16] 0.0, 128
    %5138 = vxpose.xlu0.b32.cont [14/16] 0.0, 128
    %5139 = vxpose.xlu0.b32.cont [15/16] 0.0, 128
    %5140 = vxpose.xlu0.b32.end [16/16] 0.0, 128
    %v5141 = vpop.trf.xlu0
    %v5142 = vpop.trf.xlu0
    %v5143 = vpop.trf.xlu0
    %v5144 = vpop.trf.xlu0
    %v5145 = vpop.trf.xlu0
    %v5146 = vpop.trf.xlu0
    %v5147 = vpop.trf.xlu0
    %v5148 = vpop.trf.xlu0
    %v5149 = vpop.trf.xlu0
    %v5150 = vpop.trf.xlu0
    %v5151 = vpop.trf.xlu0
    %v5152 = vpop.trf.xlu0
    %v5153 = vpop.trf.xlu0
    %v5154 = vpop.trf.xlu0
    %v5155 = vpop.trf.xlu0
    %v5156 = vpop.trf.xlu0
    %v5158 = vsel %vm483, %v5109, 0
    %v5161 = vsel %vm483, %v5110, 0
    %v5164 = vsel %vm483, %v5111, 0
    %v5167 = vsel %vm483, %v5112, 0
    %v5170 = vsel %vm483, %v5113, 0
    %v5173 = vsel %vm483, %v5114, 0
    %v5176 = vsel %vm483, %v5115, 0
    %v5179 = vsel %vm483, %v5116, 0
    %v5182 = vsel %vm483, %v5117, 0
    %v5185 = vsel %vm483, %v5118, 0
    %v5188 = vsel %vm483, %v5119, 0
    %v5191 = vsel %vm483, %v5120, 0
    %v5194 = vsel %vm483, %v5121, 0
    %v5197 = vsel %vm483, %v5122, 0
    %v5200 = vsel %vm483, %v5123, 0
    %v5203 = vsel %vm483, %v5124, 0
    %v5206 = vsel %vm483, %v5141, 0
    %v5209 = vsel %vm483, %v5142, 0
    %v5212 = vsel %vm483, %v5143, 0
    %v5215 = vsel %vm483, %v5144, 0
    %v5218 = vsel %vm483, %v5145, 0
    %v5221 = vsel %vm483, %v5146, 0
    %v5224 = vsel %vm483, %v5147, 0
    %v5227 = vsel %vm483, %v5148, 0
    %v5230 = vsel %vm483, %v5149, 0
    %v5233 = vsel %vm483, %v5150, 0
    %v5236 = vsel %vm483, %v5151, 0
    %v5239 = vsel %vm483, %v5152, 0
    %v5242 = vsel %vm483, %v5153, 0
    %v5245 = vsel %vm483, %v5154, 0
    %v5248 = vsel %vm483, %v5155, 0
    %v5251 = vsel %vm483, %v5156, 0
    %5253 = vmatprep.subr.mxu0 %v5049
    %5254 = vmatpush1.msra.mxu0 %v5047
    %5255 = vmatprep.subr.mxu0 0.0
    %5256 = vmatpush1.msra.mxu0 0.0
    %5257 = vmatprep.subr.mxu0 0.0
    %5258 = vmatpush1.msra.mxu0 0.0
    %5259 = vmatprep.subr.mxu0 0.0
    %5260 = vmatpush1.msra.mxu0 0.0
    %5261 = vmatprep.subr.mxu0 0.0
    %5262 = vmatpush1.msra.mxu0 0.0
    %5263 = vmatprep.subr.mxu0 0.0
    %5264 = vmatpush1.msra.mxu0 0.0
    %5265 = vmatprep.subr.mxu0 0.0
    %5266 = vmatpush1.msra.mxu0 0.0
    %5267 = vmatprep.subr.mxu0 0.0
    %5268 = vmatpush1.msra.mxu0 0.0
    %5269 = vmatprep.subr.mxu0 0.0
    %5270 = vmatpush1.msra.mxu0 0.0
    %5271 = vmatprep.subr.mxu0 0.0
    %5272 = vmatpush1.msra.mxu0 0.0
    %5273 = vmatprep.subr.mxu0 0.0
    %5274 = vmatpush1.msra.mxu0 0.0
    %5275 = vmatprep.subr.mxu0 0.0
    %5276 = vmatpush1.msra.mxu0 0.0
    %5277 = vmatprep.subr.mxu0 0.0
    %5278 = vmatpush1.msra.mxu0 0.0
    %5279 = vmatprep.subr.mxu0 0.0
    %5280 = vmatpush1.msra.mxu0 0.0
    %5281 = vmatprep.subr.mxu0 0.0
    %5282 = vmatpush1.msra.mxu0 0.0
    %5283 = vmatprep.subr.mxu0 0.0
    %5284 = vmatpush1.msra.mxu0 0.0
    %5285 = vmatprep.subr.mxu0 0.0
    %5286 = vmatpush1.msra.mxu0 0.0
    %5287 = vmatprep.subr.mxu0 0.0
    %5288 = vmatpush1.msra.mxu0 0.0
    %5289 = vmatprep.subr.mxu0 0.0
    %5290 = vmatpush1.msra.mxu0 0.0
    %5291 = vmatprep.subr.mxu0 0.0
    %5292 = vmatpush1.msra.mxu0 0.0
    %5293 = vmatprep.subr.mxu0 0.0
    %5294 = vmatpush1.msra.mxu0 0.0
    %5295 = vmatprep.subr.mxu0 0.0
    %5296 = vmatpush1.msra.mxu0 0.0
    %5297 = vmatprep.subr.mxu0 0.0
    %5298 = vmatpush1.msra.mxu0 0.0
    %5299 = vmatprep.subr.mxu0 0.0
    %5300 = vmatpush1.msra.mxu0 0.0
    %5301 = vmatprep.subr.mxu0 0.0
    %5302 = vmatpush1.msra.mxu0 0.0
    %5303 = vmatprep.subr.mxu0 0.0
    %5304 = vmatpush1.msra.mxu0 0.0
    %5305 = vmatprep.subr.mxu0 0.0
    %5306 = vmatpush1.msra.mxu0 0.0
    %5307 = vmatprep.subr.mxu0 0.0
    %5308 = vmatpush1.msra.mxu0 0.0
    %5309 = vmatprep.subr.mxu0 0.0
    %5310 = vmatpush1.msra.mxu0 0.0
    %5311 = vmatprep.subr.mxu0 0.0
    %5312 = vmatpush1.msra.mxu0 0.0
    %5313 = vmatprep.subr.mxu0 0.0
    %5314 = vmatpush1.msra.mxu0 0.0
    %5315 = vmatprep.subr.mxu0 0.0
    %5316 = vmatpush1.msra.mxu0 0.0
    %5317 = vmatprep.mubr.f32.mxu0 0.0
    %5318 = vmatmul.mubr.f32.gmra.mrb[0].mxu0 %v5158
    %v5319 = vpop.f32.mrb[0].mxu0
    %v5320 = vadd.f32 0.0, %v5319
    %v5321 = vpop.f32.mrb[0].mxu0
    %v5322 = vadd.f32 0.0, %v5321
    %5323 = vmatprep.mubr.f32.mxu0 0.0
    %5324 = vmatmul.mubr.f32.gmra.mrb[0].mxu0 %v5161
    %v5325 = vpop.f32.mrb[0].mxu0
    %v5326 = vadd.f32 0.0, %v5325
    %v5327 = vpop.f32.mrb[0].mxu0
    %v5328 = vadd.f32 0.0, %v5327
    %5329 = vmatprep.mubr.f32.mxu0 0.0
    %5330 = vmatmul.mubr.f32.gmra.mrb[0].mxu0 %v5164
    %v5331 = vpop.f32.mrb[0].mxu0
    %v5332 = vadd.f32 0.0, %v5331
    %v5333 = vpop.f32.mrb[0].mxu0
    %v5334 = vadd.f32 0.0, %v5333
    %5335 = vmatprep.mubr.f32.mxu0 0.0
    %5336 = vmatmul.mubr.f32.gmra.mrb[0].mxu0 %v5167
    %v5337 = vpop.f32.mrb[0].mxu0
    %v5338 = vadd.f32 0.0, %v5337
    %v5339 = vpop.f32.mrb[0].mxu0
    %v5340 = vadd.f32 0.0, %v5339
    %5341 = vmatprep.mubr.f32.mxu0 0.0
    %5342 = vmatmul.mubr.f32.gmra.mrb[0].mxu0 %v5170
    %v5343 = vpop.f32.mrb[0].mxu0
    %v5344 = vadd.f32 0.0, %v5343
    %v5345 = vpop.f32.mrb[0].mxu0
    %v5346 = vadd.f32 0.0, %v5345
    %5347 = vmatprep.mubr.f32.mxu0 0.0
    %5348 = vmatmul.mubr.f32.gmra.mrb[0].mxu0 %v5173
    %v5349 = vpop.f32.mrb[0].mxu0
    %v5350 = vadd.f32 0.0, %v5349
    %v5351 = vpop.f32.mrb[0].mxu0
    %v5352 = vadd.f32 0.0, %v5351
    %5353 = vmatprep.mubr.f32.mxu0 0.0
    %5354 = vmatmul.mubr.f32.gmra.mrb[0].mxu0 %v5176
    %v5355 = vpop.f32.mrb[0].mxu0
    %v5356 = vadd.f32 0.0, %v5355
    %v5357 = vpop.f32.mrb[0].mxu0
    %v5358 = vadd.f32 0.0, %v5357
    %5359 = vmatprep.mubr.f32.mxu0 0.0
    %5360 = vmatmul.mubr.f32.gmra.mrb[0].mxu0 %v5179
    %v5361 = vpop.f32.mrb[0].mxu0
    %v5362 = vadd.f32 0.0, %v5361
    %v5363 = vpop.f32.mrb[0].mxu0
    %v5364 = vadd.f32 0.0, %v5363
    %5365 = vmatprep.mubr.f32.mxu0 0.0
    %5366 = vmatmul.mubr.f32.gmra.mrb[0].mxu0 %v5182
    %v5367 = vpop.f32.mrb[0].mxu0
    %v5368 = vadd.f32 0.0, %v5367
    %v5369 = vpop.f32.mrb[0].mxu0
    %v5370 = vadd.f32 0.0, %v5369
    %5371 = vmatprep.mubr.f32.mxu0 0.0
    %5372 = vmatmul.mubr.f32.gmra.mrb[0].mxu0 %v5185
    %v5373 = vpop.f32.mrb[0].mxu0
    %v5374 = vadd.f32 0.0, %v5373
    %v5375 = vpop.f32.mrb[0].mxu0
    %v5376 = vadd.f32 0.0, %v5375
    %5377 = vmatprep.mubr.f32.mxu0 0.0
    %5378 = vmatmul.mubr.f32.gmra.mrb[0].mxu0 %v5188
    %v5379 = vpop.f32.mrb[0].mxu0
    %v5380 = vadd.f32 0.0, %v5379
    %v5381 = vpop.f32.mrb[0].mxu0
    %v5382 = vadd.f32 0.0, %v5381
    %5383 = vmatprep.mubr.f32.mxu0 0.0
    %5384 = vmatmul.mubr.f32.gmra.mrb[0].mxu0 %v5191
    %v5385 = vpop.f32.mrb[0].mxu0
    %v5386 = vadd.f32 0.0, %v5385
    %v5387 = vpop.f32.mrb[0].mxu0
    %v5388 = vadd.f32 0.0, %v5387
    %5389 = vmatprep.mubr.f32.mxu0 0.0
    %5390 = vmatmul.mubr.f32.gmra.mrb[0].mxu0 %v5194
    %v5391 = vpop.f32.mrb[0].mxu0
    %v5392 = vadd.f32 0.0, %v5391
    %v5393 = vpop.f32.mrb[0].mxu0
    %v5394 = vadd.f32 0.0, %v5393
    %5395 = vmatprep.mubr.f32.mxu0 0.0
    %5396 = vmatmul.mubr.f32.gmra.mrb[0].mxu0 %v5197
    %v5397 = vpop.f32.mrb[0].mxu0
    %v5398 = vadd.f32 0.0, %v5397
    %v5399 = vpop.f32.mrb[0].mxu0
    %v5400 = vadd.f32 0.0, %v5399
    %5401 = vmatprep.mubr.f32.mxu0 0.0
    %5402 = vmatmul.mubr.f32.gmra.mrb[0].mxu0 %v5200
    %v5403 = vpop.f32.mrb[0].mxu0
    %v5404 = vadd.f32 0.0, %v5403
    %v5405 = vpop.f32.mrb[0].mxu0
    %v5406 = vadd.f32 0.0, %v5405
    %5407 = vmatprep.mubr.f32.mxu0 0.0
    %5408 = vmatmul.mubr.f32.gmra.mrb[0].mxu0 %v5203
    %v5409 = vpop.f32.mrb[0].mxu0
    %v5410 = vadd.f32 0.0, %v5409
    %v5411 = vpop.f32.mrb[0].mxu0
    %v5412 = vadd.f32 0.0, %v5411
    %5413 = vmatprep.mubr.f32.mxu0 0.0
    %5414 = vmatmul.mubr.f32.gmra.mrb[0].mxu0 %v5206
    %v5415 = vpop.f32.mrb[0].mxu0
    %v5416 = vadd.f32 0.0, %v5415
    %v5417 = vpop.f32.mrb[0].mxu0
    %v5418 = vadd.f32 0.0, %v5417
    %5419 = vmatprep.mubr.f32.mxu0 0.0
    %5420 = vmatmul.mubr.f32.gmra.mrb[0].mxu0 %v5209
    %v5421 = vpop.f32.mrb[0].mxu0
    %v5422 = vadd.f32 0.0, %v5421
    %v5423 = vpop.f32.mrb[0].mxu0
    %v5424 = vadd.f32 0.0, %v5423
    %5425 = vmatprep.mubr.f32.mxu0 0.0
    %5426 = vmatmul.mubr.f32.gmra.mrb[0].mxu0 %v5212
    %v5427 = vpop.f32.mrb[0].mxu0
    %v5428 = vadd.f32 0.0, %v5427
    %v5429 = vpop.f32.mrb[0].mxu0
    %v5430 = vadd.f32 0.0, %v5429
    %5431 = vmatprep.mubr.f32.mxu0 0.0
    %5432 = vmatmul.mubr.f32.gmra.mrb[0].mxu0 %v5215
    %v5433 = vpop.f32.mrb[0].mxu0
    %v5434 = vadd.f32 0.0, %v5433
    %v5435 = vpop.f32.mrb[0].mxu0
    %v5436 = vadd.f32 0.0, %v5435
    %5437 = vmatprep.mubr.f32.mxu0 0.0
    %5438 = vmatmul.mubr.f32.gmra.mrb[0].mxu0 %v5218
    %v5439 = vpop.f32.mrb[0].mxu0
    %v5440 = vadd.f32 0.0, %v5439
    %v5441 = vpop.f32.mrb[0].mxu0
    %v5442 = vadd.f32 0.0, %v5441
    %5443 = vmatprep.mubr.f32.mxu0 0.0
    %5444 = vmatmul.mubr.f32.gmra.mrb[0].mxu0 %v5221
    %v5445 = vpop.f32.mrb[0].mxu0
    %v5446 = vadd.f32 0.0, %v5445
    %v5447 = vpop.f32.mrb[0].mxu0
    %v5448 = vadd.f32 0.0, %v5447
    %5449 = vmatprep.mubr.f32.mxu0 0.0
    %5450 = vmatmul.mubr.f32.gmra.mrb[0].mxu0 %v5224
    %v5451 = vpop.f32.mrb[0].mxu0
    %v5452 = vadd.f32 0.0, %v5451
    %v5453 = vpop.f32.mrb[0].mxu0
    %v5454 = vadd.f32 0.0, %v5453
    %5455 = vmatprep.mubr.f32.mxu0 0.0
    %5456 = vmatmul.mubr.f32.gmra.mrb[0].mxu0 %v5227
    %v5457 = vpop.f32.mrb[0].mxu0
    %v5458 = vadd.f32 0.0, %v5457
    %v5459 = vpop.f32.mrb[0].mxu0
    %v5460 = vadd.f32 0.0, %v5459
    %5461 = vmatprep.mubr.f32.mxu0 0.0
    %5462 = vmatmul.mubr.f32.gmra.mrb[0].mxu0 %v5230
    %v5463 = vpop.f32.mrb[0].mxu0
    %v5464 = vadd.f32 0.0, %v5463
    %v5465 = vpop.f32.mrb[0].mxu0
    %v5466 = vadd.f32 0.0, %v5465
    %5467 = vmatprep.mubr.f32.mxu0 0.0
    %5468 = vmatmul.mubr.f32.gmra.mrb[0].mxu0 %v5233
    %v5469 = vpop.f32.mrb[0].mxu0
    %v5470 = vadd.f32 0.0, %v5469
    %v5471 = vpop.f32.mrb[0].mxu0
    %v5472 = vadd.f32 0.0, %v5471
    %5473 = vmatprep.mubr.f32.mxu0 0.0
    %5474 = vmatmul.mubr.f32.gmra.mrb[0].mxu0 %v5236
    %v5475 = vpop.f32.mrb[0].mxu0
    %v5476 = vadd.f32 0.0, %v5475
    %v5477 = vpop.f32.mrb[0].mxu0
    %v5478 = vadd.f32 0.0, %v5477
    %5479 = vmatprep.mubr.f32.mxu0 0.0
    %5480 = vmatmul.mubr.f32.gmra.mrb[0].mxu0 %v5239
    %v5481 = vpop.f32.mrb[0].mxu0
    %v5482 = vadd.f32 0.0, %v5481
    %v5483 = vpop.f32.mrb[0].mxu0
    %v5484 = vadd.f32 0.0, %v5483
    %5485 = vmatprep.mubr.f32.mxu0 0.0
    %5486 = vmatmul.mubr.f32.gmra.mrb[0].mxu0 %v5242
    %v5487 = vpop.f32.mrb[0].mxu0
    %v5488 = vadd.f32 0.0, %v5487
    %v5489 = vpop.f32.mrb[0].mxu0
    %v5490 = vadd.f32 0.0, %v5489
    %5491 = vmatprep.mubr.f32.mxu0 0.0
    %5492 = vmatmul.mubr.f32.gmra.mrb[0].mxu0 %v5245
    %v5493 = vpop.f32.mrb[0].mxu0
    %v5494 = vadd.f32 0.0, %v5493
    %v5495 = vpop.f32.mrb[0].mxu0
    %v5496 = vadd.f32 0.0, %v5495
    %5497 = vmatprep.mubr.f32.mxu0 0.0
    %5498 = vmatmul.mubr.f32.gmra.mrb[0].mxu0 %v5248
    %v5499 = vpop.f32.mrb[0].mxu0
    %v5500 = vadd.f32 0.0, %v5499
    %v5501 = vpop.f32.mrb[0].mxu0
    %v5502 = vadd.f32 0.0, %v5501
    %5503 = vmatprep.mubr.f32.mxu0 0.0
    %5504 = vmatmul.mubr.f32.gmra.mrb[0].mxu0 %v5251
    %v5505 = vpop.f32.mrb[0].mxu0
    %v5506 = vadd.f32 0.0, %v5505
    %v5507 = vpop.f32.mrb[0].mxu0
    %v5508 = vadd.f32 0.0, %v5507
    %5509 = vdwg.mxu0
    %5510 = vxpose.xlu0.b32.start [1/16] %v5029, 128
    %5511 = vxpose.xlu0.b32.cont [2/16] 0.0, 128
    %5512 = vxpose.xlu0.b32.cont [3/16] 0.0, 128
    %5513 = vxpose.xlu0.b32.cont [4/16] 0.0, 128
    %5514 = vxpose.xlu0.b32.cont [5/16] 0.0, 128
    %5515 = vxpose.xlu0.b32.cont [6/16] 0.0, 128
    %5516 = vxpose.xlu0.b32.cont [7/16] 0.0, 128
    %5517 = vxpose.xlu0.b32.cont [8/16] 0.0, 128
    %5518 = vxpose.xlu0.b32.cont [9/16] 0.0, 128
    %5519 = vxpose.xlu0.b32.cont [10/16] 0.0, 128
    %5520 = vxpose.xlu0.b32.cont [11/16] 0.0, 128
    %5521 = vxpose.xlu0.b32.cont [12/16] 0.0, 128
    %5522 = vxpose.xlu0.b32.cont [13/16] 0.0, 128
    %5523 = vxpose.xlu0.b32.cont [14/16] 0.0, 128
    %5524 = vxpose.xlu0.b32.cont [15/16] 0.0, 128
    %5525 = vxpose.xlu0.b32.end [16/16] 0.0, 128
    %v5526 = vpop.trf.xlu0
    %v5527 = vpop.trf.xlu0
    %v5528 = vpop.trf.xlu0
    %v5529 = vpop.trf.xlu0
    %v5530 = vpop.trf.xlu0
    %v5531 = vpop.trf.xlu0
    %v5532 = vpop.trf.xlu0
    %v5533 = vpop.trf.xlu0
    %v5534 = vpop.trf.xlu0
    %v5535 = vpop.trf.xlu0
    %v5536 = vpop.trf.xlu0
    %v5537 = vpop.trf.xlu0
    %v5538 = vpop.trf.xlu0
    %v5539 = vpop.trf.xlu0
    %v5540 = vpop.trf.xlu0
    %v5541 = vpop.trf.xlu0
    %5542 = vxpose.xlu0.b32.start [1/16] %v5031, 128
    %5543 = vxpose.xlu0.b32.cont [2/16] 0.0, 128
    %5544 = vxpose.xlu0.b32.cont [3/16] 0.0, 128
    %5545 = vxpose.xlu0.b32.cont [4/16] 0.0, 128
    %5546 = vxpose.xlu0.b32.cont [5/16] 0.0, 128
    %5547 = vxpose.xlu0.b32.cont [6/16] 0.0, 128
    %5548 = vxpose.xlu0.b32.cont [7/16] 0.0, 128
    %5549 = vxpose.xlu0.b32.cont [8/16] 0.0, 128
    %5550 = vxpose.xlu0.b32.cont [9/16] 0.0, 128
    %5551 = vxpose.xlu0.b32.cont [10/16] 0.0, 128
    %5552 = vxpose.xlu0.b32.cont [11/16] 0.0, 128
    %5553 = vxpose.xlu0.b32.cont [12/16] 0.0, 128
    %5554 = vxpose.xlu0.b32.cont [13/16] 0.0, 128
    %5555 = vxpose.xlu0.b32.cont [14/16] 0.0, 128
    %5556 = vxpose.xlu0.b32.cont [15/16] 0.0, 128
    %5557 = vxpose.xlu0.b32.end [16/16] 0.0, 128
    %v5558 = vpop.trf.xlu0
    %v5559 = vpop.trf.xlu0
    %v5560 = vpop.trf.xlu0
    %v5561 = vpop.trf.xlu0
    %v5562 = vpop.trf.xlu0
    %v5563 = vpop.trf.xlu0
    %v5564 = vpop.trf.xlu0
    %v5565 = vpop.trf.xlu0
    %v5566 = vpop.trf.xlu0
    %v5567 = vpop.trf.xlu0
    %v5568 = vpop.trf.xlu0
    %v5569 = vpop.trf.xlu0
    %v5570 = vpop.trf.xlu0
    %v5571 = vpop.trf.xlu0
    %v5572 = vpop.trf.xlu0
    %v5573 = vpop.trf.xlu0
    %v5575 = vsel %vm483, %v5526, 0
    %v5578 = vsel %vm483, %v5527, 0
    %v5581 = vsel %vm483, %v5528, 0
    %v5584 = vsel %vm483, %v5529, 0
    %v5587 = vsel %vm483, %v5530, 0
    %v5590 = vsel %vm483, %v5531, 0
    %v5593 = vsel %vm483, %v5532, 0
    %v5596 = vsel %vm483, %v5533, 0
    %v5599 = vsel %vm483, %v5534, 0
    %v5602 = vsel %vm483, %v5535, 0
    %v5605 = vsel %vm483, %v5536, 0
    %v5608 = vsel %vm483, %v5537, 0
    %v5611 = vsel %vm483, %v5538, 0
    %v5614 = vsel %vm483, %v5539, 0
    %v5617 = vsel %vm483, %v5540, 0
    %v5620 = vsel %vm483, %v5541, 0
    %v5623 = vsel %vm483, %v5558, 0
    %v5626 = vsel %vm483, %v5559, 0
    %v5629 = vsel %vm483, %v5560, 0
    %v5632 = vsel %vm483, %v5561, 0
    %v5635 = vsel %vm483, %v5562, 0
    %v5638 = vsel %vm483, %v5563, 0
    %v5641 = vsel %vm483, %v5564, 0
    %v5644 = vsel %vm483, %v5565, 0
    %v5647 = vsel %vm483, %v5566, 0
    %v5650 = vsel %vm483, %v5567, 0
    %v5653 = vsel %vm483, %v5568, 0
    %v5656 = vsel %vm483, %v5569, 0
    %v5659 = vsel %vm483, %v5570, 0
    %v5662 = vsel %vm483, %v5571, 0
    %v5665 = vsel %vm483, %v5572, 0
    %v5668 = vsel %vm483, %v5573, 0
    %5670 = vmatprep.subr.mxu0 %v5055
    %5671 = vmatpush1.msra.mxu0 %v5053
    %5672 = vmatprep.subr.mxu0 0.0
    %5673 = vmatpush1.msra.mxu0 0.0
    %5674 = vmatprep.subr.mxu0 0.0
    %5675 = vmatpush1.msra.mxu0 0.0
    %5676 = vmatprep.subr.mxu0 0.0
    %5677 = vmatpush1.msra.mxu0 0.0
    %5678 = vmatprep.subr.mxu0 0.0
    %5679 = vmatpush1.msra.mxu0 0.0
    %5680 = vmatprep.subr.mxu0 0.0
    %5681 = vmatpush1.msra.mxu0 0.0
    %5682 = vmatprep.subr.mxu0 0.0
    %5683 = vmatpush1.msra.mxu0 0.0
    %5684 = vmatprep.subr.mxu0 0.0
    %5685 = vmatpush1.msra.mxu0 0.0
    %5686 = vmatprep.subr.mxu0 0.0
    %5687 = vmatpush1.msra.mxu0 0.0
    %5688 = vmatprep.subr.mxu0 0.0
    %5689 = vmatpush1.msra.mxu0 0.0
    %5690 = vmatprep.subr.mxu0 0.0
    %5691 = vmatpush1.msra.mxu0 0.0
    %5692 = vmatprep.subr.mxu0 0.0
    %5693 = vmatpush1.msra.mxu0 0.0
    %5694 = vmatprep.subr.mxu0 0.0
    %5695 = vmatpush1.msra.mxu0 0.0
    %5696 = vmatprep.subr.mxu0 0.0
    %5697 = vmatpush1.msra.mxu0 0.0
    %5698 = vmatprep.subr.mxu0 0.0
    %5699 = vmatpush1.msra.mxu0 0.0
    %5700 = vmatprep.subr.mxu0 0.0
    %5701 = vmatpush1.msra.mxu0 0.0
    %5702 = vmatprep.subr.mxu0 0.0
    %5703 = vmatpush1.msra.mxu0 0.0
    %5704 = vmatprep.subr.mxu0 0.0
    %5705 = vmatpush1.msra.mxu0 0.0
    %5706 = vmatprep.subr.mxu0 0.0
    %5707 = vmatpush1.msra.mxu0 0.0
    %5708 = vmatprep.subr.mxu0 0.0
    %5709 = vmatpush1.msra.mxu0 0.0
    %5710 = vmatprep.subr.mxu0 0.0
    %5711 = vmatpush1.msra.mxu0 0.0
    %5712 = vmatprep.subr.mxu0 0.0
    %5713 = vmatpush1.msra.mxu0 0.0
    %5714 = vmatprep.subr.mxu0 0.0
    %5715 = vmatpush1.msra.mxu0 0.0
    %5716 = vmatprep.subr.mxu0 0.0
    %5717 = vmatpush1.msra.mxu0 0.0
    %5718 = vmatprep.subr.mxu0 0.0
    %5719 = vmatpush1.msra.mxu0 0.0
    %5720 = vmatprep.subr.mxu0 0.0
    %5721 = vmatpush1.msra.mxu0 0.0
    %5722 = vmatprep.subr.mxu0 0.0
    %5723 = vmatpush1.msra.mxu0 0.0
    %5724 = vmatprep.subr.mxu0 0.0
    %5725 = vmatpush1.msra.mxu0 0.0
    %5726 = vmatprep.subr.mxu0 0.0
    %5727 = vmatpush1.msra.mxu0 0.0
    %5728 = vmatprep.subr.mxu0 0.0
    %5729 = vmatpush1.msra.mxu0 0.0
    %5730 = vmatprep.subr.mxu0 0.0
    %5731 = vmatpush1.msra.mxu0 0.0
    %5732 = vmatprep.subr.mxu0 0.0
    %5733 = vmatpush1.msra.mxu0 0.0
    %5734 = vmatprep.mubr.f32.mxu0 0.0
    %5735 = vmatmul.mubr.f32.gmra.mrb[0].mxu0 %v5575
    %v5736 = vpop.f32.mrb[0].mxu0
    %v5737 = vadd.f32 0.0, %v5736
    %v5738 = vpop.f32.mrb[0].mxu0
    %v5739 = vadd.f32 0.0, %v5738
    %5740 = vmatprep.mubr.f32.mxu0 0.0
    %5741 = vmatmul.mubr.f32.gmra.mrb[0].mxu0 %v5578
    %v5742 = vpop.f32.mrb[0].mxu0
    %v5743 = vadd.f32 0.0, %v5742
    %v5744 = vpop.f32.mrb[0].mxu0
    %v5745 = vadd.f32 0.0, %v5744
    %5746 = vmatprep.mubr.f32.mxu0 0.0
    %5747 = vmatmul.mubr.f32.gmra.mrb[0].mxu0 %v5581
    %v5748 = vpop.f32.mrb[0].mxu0
    %v5749 = vadd.f32 0.0, %v5748
    %v5750 = vpop.f32.mrb[0].mxu0
    %v5751 = vadd.f32 0.0, %v5750
    %5752 = vmatprep.mubr.f32.mxu0 0.0
    %5753 = vmatmul.mubr.f32.gmra.mrb[0].mxu0 %v5584
    %v5754 = vpop.f32.mrb[0].mxu0
    %v5755 = vadd.f32 0.0, %v5754
    %v5756 = vpop.f32.mrb[0].mxu0
    %v5757 = vadd.f32 0.0, %v5756
    %5758 = vmatprep.mubr.f32.mxu0 0.0
    %5759 = vmatmul.mubr.f32.gmra.mrb[0].mxu0 %v5587
    %v5760 = vpop.f32.mrb[0].mxu0
    %v5761 = vadd.f32 0.0, %v5760
    %v5762 = vpop.f32.mrb[0].mxu0
    %v5763 = vadd.f32 0.0, %v5762
    %5764 = vmatprep.mubr.f32.mxu0 0.0
    %5765 = vmatmul.mubr.f32.gmra.mrb[0].mxu0 %v5590
    %v5766 = vpop.f32.mrb[0].mxu0
    %v5767 = vadd.f32 0.0, %v5766
    %v5768 = vpop.f32.mrb[0].mxu0
    %v5769 = vadd.f32 0.0, %v5768
    %5770 = vmatprep.mubr.f32.mxu0 0.0
    %5771 = vmatmul.mubr.f32.gmra.mrb[0].mxu0 %v5593
    %v5772 = vpop.f32.mrb[0].mxu0
    %v5773 = vadd.f32 0.0, %v5772
    %v5774 = vpop.f32.mrb[0].mxu0
    %v5775 = vadd.f32 0.0, %v5774
    %5776 = vmatprep.mubr.f32.mxu0 0.0
    %5777 = vmatmul.mubr.f32.gmra.mrb[0].mxu0 %v5596
    %v5778 = vpop.f32.mrb[0].mxu0
    %v5779 = vadd.f32 0.0, %v5778
    %v5780 = vpop.f32.mrb[0].mxu0
    %v5781 = vadd.f32 0.0, %v5780
    %5782 = vmatprep.mubr.f32.mxu0 0.0
    %5783 = vmatmul.mubr.f32.gmra.mrb[0].mxu0 %v5599
    %v5784 = vpop.f32.mrb[0].mxu0
    %v5785 = vadd.f32 0.0, %v5784
    %v5786 = vpop.f32.mrb[0].mxu0
    %v5787 = vadd.f32 0.0, %v5786
    %5788 = vmatprep.mubr.f32.mxu0 0.0
    %5789 = vmatmul.mubr.f32.gmra.mrb[0].mxu0 %v5602
    %v5790 = vpop.f32.mrb[0].mxu0
    %v5791 = vadd.f32 0.0, %v5790
    %v5792 = vpop.f32.mrb[0].mxu0
    %v5793 = vadd.f32 0.0, %v5792
    %5794 = vmatprep.mubr.f32.mxu0 0.0
    %5795 = vmatmul.mubr.f32.gmra.mrb[0].mxu0 %v5605
    %v5796 = vpop.f32.mrb[0].mxu0
    %v5797 = vadd.f32 0.0, %v5796
    %v5798 = vpop.f32.mrb[0].mxu0
    %v5799 = vadd.f32 0.0, %v5798
    %5800 = vmatprep.mubr.f32.mxu0 0.0
    %5801 = vmatmul.mubr.f32.gmra.mrb[0].mxu0 %v5608
    %v5802 = vpop.f32.mrb[0].mxu0
    %v5803 = vadd.f32 0.0, %v5802
    %v5804 = vpop.f32.mrb[0].mxu0
    %v5805 = vadd.f32 0.0, %v5804
    %5806 = vmatprep.mubr.f32.mxu0 0.0
    %5807 = vmatmul.mubr.f32.gmra.mrb[0].mxu0 %v5611
    %v5808 = vpop.f32.mrb[0].mxu0
    %v5809 = vadd.f32 0.0, %v5808
    %v5810 = vpop.f32.mrb[0].mxu0
    %v5811 = vadd.f32 0.0, %v5810
    %5812 = vmatprep.mubr.f32.mxu0 0.0
    %5813 = vmatmul.mubr.f32.gmra.mrb[0].mxu0 %v5614
    %v5814 = vpop.f32.mrb[0].mxu0
    %v5815 = vadd.f32 0.0, %v5814
    %v5816 = vpop.f32.mrb[0].mxu0
    %v5817 = vadd.f32 0.0, %v5816
    %5818 = vmatprep.mubr.f32.mxu0 0.0
    %5819 = vmatmul.mubr.f32.gmra.mrb[0].mxu0 %v5617
    %v5820 = vpop.f32.mrb[0].mxu0
    %v5821 = vadd.f32 0.0, %v5820
    %v5822 = vpop.f32.mrb[0].mxu0
    %v5823 = vadd.f32 0.0, %v5822
    %5824 = vmatprep.mubr.f32.mxu0 0.0
    %5825 = vmatmul.mubr.f32.gmra.mrb[0].mxu0 %v5620
    %v5826 = vpop.f32.mrb[0].mxu0
    %v5827 = vadd.f32 0.0, %v5826
    %v5828 = vpop.f32.mrb[0].mxu0
    %v5829 = vadd.f32 0.0, %v5828
    %5830 = vmatprep.mubr.f32.mxu0 0.0
    %5831 = vmatmul.mubr.f32.gmra.mrb[0].mxu0 %v5623
    %v5832 = vpop.f32.mrb[0].mxu0
    %v5833 = vadd.f32 0.0, %v5832
    %v5834 = vpop.f32.mrb[0].mxu0
    %v5835 = vadd.f32 0.0, %v5834
    %5836 = vmatprep.mubr.f32.mxu0 0.0
    %5837 = vmatmul.mubr.f32.gmra.mrb[0].mxu0 %v5626
    %v5838 = vpop.f32.mrb[0].mxu0
    %v5839 = vadd.f32 0.0, %v5838
    %v5840 = vpop.f32.mrb[0].mxu0
    %v5841 = vadd.f32 0.0, %v5840
    %5842 = vmatprep.mubr.f32.mxu0 0.0
    %5843 = vmatmul.mubr.f32.gmra.mrb[0].mxu0 %v5629
    %v5844 = vpop.f32.mrb[0].mxu0
    %v5845 = vadd.f32 0.0, %v5844
    %v5846 = vpop.f32.mrb[0].mxu0
    %v5847 = vadd.f32 0.0, %v5846
    %5848 = vmatprep.mubr.f32.mxu0 0.0
    %5849 = vmatmul.mubr.f32.gmra.mrb[0].mxu0 %v5632
    %v5850 = vpop.f32.mrb[0].mxu0
    %v5851 = vadd.f32 0.0, %v5850
    %v5852 = vpop.f32.mrb[0].mxu0
    %v5853 = vadd.f32 0.0, %v5852
    %5854 = vmatprep.mubr.f32.mxu0 0.0
    %5855 = vmatmul.mubr.f32.gmra.mrb[0].mxu0 %v5635
    %v5856 = vpop.f32.mrb[0].mxu0
    %v5857 = vadd.f32 0.0, %v5856
    %v5858 = vpop.f32.mrb[0].mxu0
    %v5859 = vadd.f32 0.0, %v5858
    %5860 = vmatprep.mubr.f32.mxu0 0.0
    %5861 = vmatmul.mubr.f32.gmra.mrb[0].mxu0 %v5638
    %v5862 = vpop.f32.mrb[0].mxu0
    %v5863 = vadd.f32 0.0, %v5862
    %v5864 = vpop.f32.mrb[0].mxu0
    %v5865 = vadd.f32 0.0, %v5864
    %5866 = vmatprep.mubr.f32.mxu0 0.0
    %5867 = vmatmul.mubr.f32.gmra.mrb[0].mxu0 %v5641
    %v5868 = vpop.f32.mrb[0].mxu0
    %v5869 = vadd.f32 0.0, %v5868
    %v5870 = vpop.f32.mrb[0].mxu0
    %v5871 = vadd.f32 0.0, %v5870
    %5872 = vmatprep.mubr.f32.mxu0 0.0
    %5873 = vmatmul.mubr.f32.gmra.mrb[0].mxu0 %v5644
    %v5874 = vpop.f32.mrb[0].mxu0
    %v5875 = vadd.f32 0.0, %v5874
    %v5876 = vpop.f32.mrb[0].mxu0
    %v5877 = vadd.f32 0.0, %v5876
    %5878 = vmatprep.mubr.f32.mxu0 0.0
    %5879 = vmatmul.mubr.f32.gmra.mrb[0].mxu0 %v5647
    %v5880 = vpop.f32.mrb[0].mxu0
    %v5881 = vadd.f32 0.0, %v5880
    %v5882 = vpop.f32.mrb[0].mxu0
    %v5883 = vadd.f32 0.0, %v5882
    %5884 = vmatprep.mubr.f32.mxu0 0.0
    %5885 = vmatmul.mubr.f32.gmra.mrb[0].mxu0 %v5650
    %v5886 = vpop.f32.mrb[0].mxu0
    %v5887 = vadd.f32 0.0, %v5886
    %v5888 = vpop.f32.mrb[0].mxu0
    %v5889 = vadd.f32 0.0, %v5888
    %5890 = vmatprep.mubr.f32.mxu0 0.0
    %5891 = vmatmul.mubr.f32.gmra.mrb[0].mxu0 %v5653
    %v5892 = vpop.f32.mrb[0].mxu0
    %v5893 = vadd.f32 0.0, %v5892
    %v5894 = vpop.f32.mrb[0].mxu0
    %v5895 = vadd.f32 0.0, %v5894
    %5896 = vmatprep.mubr.f32.mxu0 0.0
    %5897 = vmatmul.mubr.f32.gmra.mrb[0].mxu0 %v5656
    %v5898 = vpop.f32.mrb[0].mxu0
    %v5899 = vadd.f32 0.0, %v5898
    %v5900 = vpop.f32.mrb[0].mxu0
    %v5901 = vadd.f32 0.0, %v5900
    %5902 = vmatprep.mubr.f32.mxu0 0.0
    %5903 = vmatmul.mubr.f32.gmra.mrb[0].mxu0 %v5659
    %v5904 = vpop.f32.mrb[0].mxu0
    %v5905 = vadd.f32 0.0, %v5904
    %v5906 = vpop.f32.mrb[0].mxu0
    %v5907 = vadd.f32 0.0, %v5906
    %5908 = vmatprep.mubr.f32.mxu0 0.0
    %5909 = vmatmul.mubr.f32.gmra.mrb[0].mxu0 %v5662
    %v5910 = vpop.f32.mrb[0].mxu0
    %v5911 = vadd.f32 0.0, %v5910
    %v5912 = vpop.f32.mrb[0].mxu0
    %v5913 = vadd.f32 0.0, %v5912
    %5914 = vmatprep.mubr.f32.mxu0 0.0
    %5915 = vmatmul.mubr.f32.gmra.mrb[0].mxu0 %v5665
    %v5916 = vpop.f32.mrb[0].mxu0
    %v5917 = vadd.f32 0.0, %v5916
    %v5918 = vpop.f32.mrb[0].mxu0
    %v5919 = vadd.f32 0.0, %v5918
    %5920 = vmatprep.mubr.f32.mxu0 0.0
    %5921 = vmatmul.mubr.f32.gmra.mrb[0].mxu0 %v5668
    %v5922 = vpop.f32.mrb[0].mxu0
    %v5923 = vadd.f32 0.0, %v5922
    %v5924 = vpop.f32.mrb[0].mxu0
    %v5925 = vadd.f32 0.0, %v5924
    %5926 = vdwg.mxu0
    %5927 = vxpose.xlu0.b32.start [1/16] %v5035, 128
    %5928 = vxpose.xlu0.b32.cont [2/16] 0.0, 128
    %5929 = vxpose.xlu0.b32.cont [3/16] 0.0, 128
    %5930 = vxpose.xlu0.b32.cont [4/16] 0.0, 128
    %5931 = vxpose.xlu0.b32.cont [5/16] 0.0, 128
    %5932 = vxpose.xlu0.b32.cont [6/16] 0.0, 128
    %5933 = vxpose.xlu0.b32.cont [7/16] 0.0, 128
    %5934 = vxpose.xlu0.b32.cont [8/16] 0.0, 128
    %5935 = vxpose.xlu0.b32.cont [9/16] 0.0, 128
    %5936 = vxpose.xlu0.b32.cont [10/16] 0.0, 128
    %5937 = vxpose.xlu0.b32.cont [11/16] 0.0, 128
    %5938 = vxpose.xlu0.b32.cont [12/16] 0.0, 128
    %5939 = vxpose.xlu0.b32.cont [13/16] 0.0, 128
    %5940 = vxpose.xlu0.b32.cont [14/16] 0.0, 128
    %5941 = vxpose.xlu0.b32.cont [15/16] 0.0, 128
    %5942 = vxpose.xlu0.b32.end [16/16] 0.0, 128
    %v5943 = vpop.trf.xlu0
    %v5944 = vpop.trf.xlu0
    %v5945 = vpop.trf.xlu0
    %v5946 = vpop.trf.xlu0
    %v5947 = vpop.trf.xlu0
    %v5948 = vpop.trf.xlu0
    %v5949 = vpop.trf.xlu0
    %v5950 = vpop.trf.xlu0
    %v5951 = vpop.trf.xlu0
    %v5952 = vpop.trf.xlu0
    %v5953 = vpop.trf.xlu0
    %v5954 = vpop.trf.xlu0
    %v5955 = vpop.trf.xlu0
    %v5956 = vpop.trf.xlu0
    %v5957 = vpop.trf.xlu0
    %v5958 = vpop.trf.xlu0
    %5959 = vxpose.xlu0.b32.start [1/16] %v5037, 128
    %5960 = vxpose.xlu0.b32.cont [2/16] 0.0, 128
    %5961 = vxpose.xlu0.b32.cont [3/16] 0.0, 128
    %5962 = vxpose.xlu0.b32.cont [4/16] 0.0, 128
    %5963 = vxpose.xlu0.b32.cont [5/16] 0.0, 128
    %5964 = vxpose.xlu0.b32.cont [6/16] 0.0, 128
    %5965 = vxpose.xlu0.b32.cont [7/16] 0.0, 128
    %5966 = vxpose.xlu0.b32.cont [8/16] 0.0, 128
    %5967 = vxpose.xlu0.b32.cont [9/16] 0.0, 128
    %5968 = vxpose.xlu0.b32.cont [10/16] 0.0, 128
    %5969 = vxpose.xlu0.b32.cont [11/16] 0.0, 128
    %5970 = vxpose.xlu0.b32.cont [12/16] 0.0, 128
    %5971 = vxpose.xlu0.b32.cont [13/16] 0.0, 128
    %5972 = vxpose.xlu0.b32.cont [14/16] 0.0, 128
    %5973 = vxpose.xlu0.b32.cont [15/16] 0.0, 128
    %5974 = vxpose.xlu0.b32.end [16/16] 0.0, 128
    %v5975 = vpop.trf.xlu0
    %v5976 = vpop.trf.xlu0
    %v5977 = vpop.trf.xlu0
    %v5978 = vpop.trf.xlu0
    %v5979 = vpop.trf.xlu0
    %v5980 = vpop.trf.xlu0
    %v5981 = vpop.trf.xlu0
    %v5982 = vpop.trf.xlu0
    %v5983 = vpop.trf.xlu0
    %v5984 = vpop.trf.xlu0
    %v5985 = vpop.trf.xlu0
    %v5986 = vpop.trf.xlu0
    %v5987 = vpop.trf.xlu0
    %v5988 = vpop.trf.xlu0
    %v5989 = vpop.trf.xlu0
    %v5990 = vpop.trf.xlu0
    %v5992 = vsel %vm483, %v5943, 0
    %v5995 = vsel %vm483, %v5944, 0
    %v5998 = vsel %vm483, %v5945, 0
    %v6001 = vsel %vm483, %v5946, 0
    %v6004 = vsel %vm483, %v5947, 0
    %v6007 = vsel %vm483, %v5948, 0
    %v6010 = vsel %vm483, %v5949, 0
    %v6013 = vsel %vm483, %v5950, 0
    %v6016 = vsel %vm483, %v5951, 0
    %v6019 = vsel %vm483, %v5952, 0
    %v6022 = vsel %vm483, %v5953, 0
    %v6025 = vsel %vm483, %v5954, 0
    %v6028 = vsel %vm483, %v5955, 0
    %v6031 = vsel %vm483, %v5956, 0
    %v6034 = vsel %vm483, %v5957, 0
    %v6037 = vsel %vm483, %v5958, 0
    %v6040 = vsel %vm483, %v5975, 0
    %v6043 = vsel %vm483, %v5976, 0
    %v6046 = vsel %vm483, %v5977, 0
    %v6049 = vsel %vm483, %v5978, 0
    %v6052 = vsel %vm483, %v5979, 0
    %v6055 = vsel %vm483, %v5980, 0
    %v6058 = vsel %vm483, %v5981, 0
    %v6061 = vsel %vm483, %v5982, 0
    %v6064 = vsel %vm483, %v5983, 0
    %v6067 = vsel %vm483, %v5984, 0
    %v6070 = vsel %vm483, %v5985, 0
    %v6073 = vsel %vm483, %v5986, 0
    %v6076 = vsel %vm483, %v5987, 0
    %v6079 = vsel %vm483, %v5988, 0
    %v6082 = vsel %vm483, %v5989, 0
    %v6085 = vsel %vm483, %v5990, 0
    %6087 = vmatprep.subr.mxu0 %v5061
    %6088 = vmatpush1.msra.mxu0 %v5059
    %6089 = vmatprep.subr.mxu0 0.0
    %6090 = vmatpush1.msra.mxu0 0.0
    %6091 = vmatprep.subr.mxu0 0.0
    %6092 = vmatpush1.msra.mxu0 0.0
    %6093 = vmatprep.subr.mxu0 0.0
    %6094 = vmatpush1.msra.mxu0 0.0
    %6095 = vmatprep.subr.mxu0 0.0
    %6096 = vmatpush1.msra.mxu0 0.0
    %6097 = vmatprep.subr.mxu0 0.0
    %6098 = vmatpush1.msra.mxu0 0.0
    %6099 = vmatprep.subr.mxu0 0.0
    %6100 = vmatpush1.msra.mxu0 0.0
    %6101 = vmatprep.subr.mxu0 0.0
    %6102 = vmatpush1.msra.mxu0 0.0
    %6103 = vmatprep.subr.mxu0 0.0
    %6104 = vmatpush1.msra.mxu0 0.0
    %6105 = vmatprep.subr.mxu0 0.0
    %6106 = vmatpush1.msra.mxu0 0.0
    %6107 = vmatprep.subr.mxu0 0.0
    %6108 = vmatpush1.msra.mxu0 0.0
    %6109 = vmatprep.subr.mxu0 0.0
    %6110 = vmatpush1.msra.mxu0 0.0
    %6111 = vmatprep.subr.mxu0 0.0
    %6112 = vmatpush1.msra.mxu0 0.0
    %6113 = vmatprep.subr.mxu0 0.0
    %6114 = vmatpush1.msra.mxu0 0.0
    %6115 = vmatprep.subr.mxu0 0.0
    %6116 = vmatpush1.msra.mxu0 0.0
    %6117 = vmatprep.subr.mxu0 0.0
    %6118 = vmatpush1.msra.mxu0 0.0
    %6119 = vmatprep.subr.mxu0 0.0
    %6120 = vmatpush1.msra.mxu0 0.0
    %6121 = vmatprep.subr.mxu0 0.0
    %6122 = vmatpush1.msra.mxu0 0.0
    %6123 = vmatprep.subr.mxu0 0.0
    %6124 = vmatpush1.msra.mxu0 0.0
    %6125 = vmatprep.subr.mxu0 0.0
    %6126 = vmatpush1.msra.mxu0 0.0
    %6127 = vmatprep.subr.mxu0 0.0
    %6128 = vmatpush1.msra.mxu0 0.0
    %6129 = vmatprep.subr.mxu0 0.0
    %6130 = vmatpush1.msra.mxu0 0.0
    %6131 = vmatprep.subr.mxu0 0.0
    %6132 = vmatpush1.msra.mxu0 0.0
    %6133 = vmatprep.subr.mxu0 0.0
    %6134 = vmatpush1.msra.mxu0 0.0
    %6135 = vmatprep.subr.mxu0 0.0
    %6136 = vmatpush1.msra.mxu0 0.0
    %6137 = vmatprep.subr.mxu0 0.0
    %6138 = vmatpush1.msra.mxu0 0.0
    %6139 = vmatprep.subr.mxu0 0.0
    %6140 = vmatpush1.msra.mxu0 0.0
    %6141 = vmatprep.subr.mxu0 0.0
    %6142 = vmatpush1.msra.mxu0 0.0
    %6143 = vmatprep.subr.mxu0 0.0
    %6144 = vmatpush1.msra.mxu0 0.0
    %6145 = vmatprep.subr.mxu0 0.0
    %6146 = vmatpush1.msra.mxu0 0.0
    %6147 = vmatprep.subr.mxu0 0.0
    %6148 = vmatpush1.msra.mxu0 0.0
    %6149 = vmatprep.subr.mxu0 0.0
    %6150 = vmatpush1.msra.mxu0 0.0
    %6151 = vmatprep.mubr.f32.mxu0 0.0
    %6152 = vmatmul.mubr.f32.gmra.mrb[0].mxu0 %v5992
    %v6153 = vpop.f32.mrb[0].mxu0
    %v6154 = vadd.f32 0.0, %v6153
    %v6155 = vpop.f32.mrb[0].mxu0
    %v6156 = vadd.f32 0.0, %v6155
    %6157 = vmatprep.mubr.f32.mxu0 0.0
    %6158 = vmatmul.mubr.f32.gmra.mrb[0].mxu0 %v5995
    %v6159 = vpop.f32.mrb[0].mxu0
    %v6160 = vadd.f32 0.0, %v6159
    %v6161 = vpop.f32.mrb[0].mxu0
    %v6162 = vadd.f32 0.0, %v6161
    %6163 = vmatprep.mubr.f32.mxu0 0.0
    %6164 = vmatmul.mubr.f32.gmra.mrb[0].mxu0 %v5998
    %v6165 = vpop.f32.mrb[0].mxu0
    %v6166 = vadd.f32 0.0, %v6165
    %v6167 = vpop.f32.mrb[0].mxu0
    %v6168 = vadd.f32 0.0, %v6167
    %6169 = vmatprep.mubr.f32.mxu0 0.0
    %6170 = vmatmul.mubr.f32.gmra.mrb[0].mxu0 %v6001
    %v6171 = vpop.f32.mrb[0].mxu0
    %v6172 = vadd.f32 0.0, %v6171
    %v6173 = vpop.f32.mrb[0].mxu0
    %v6174 = vadd.f32 0.0, %v6173
    %6175 = vmatprep.mubr.f32.mxu0 0.0
    %6176 = vmatmul.mubr.f32.gmra.mrb[0].mxu0 %v6004
    %v6177 = vpop.f32.mrb[0].mxu0
    %v6178 = vadd.f32 0.0, %v6177
    %v6179 = vpop.f32.mrb[0].mxu0
    %v6180 = vadd.f32 0.0, %v6179
    %6181 = vmatprep.mubr.f32.mxu0 0.0
    %6182 = vmatmul.mubr.f32.gmra.mrb[0].mxu0 %v6007
    %v6183 = vpop.f32.mrb[0].mxu0
    %v6184 = vadd.f32 0.0, %v6183
    %v6185 = vpop.f32.mrb[0].mxu0
    %v6186 = vadd.f32 0.0, %v6185
    %6187 = vmatprep.mubr.f32.mxu0 0.0
    %6188 = vmatmul.mubr.f32.gmra.mrb[0].mxu0 %v6010
    %v6189 = vpop.f32.mrb[0].mxu0
    %v6190 = vadd.f32 0.0, %v6189
    %v6191 = vpop.f32.mrb[0].mxu0
    %v6192 = vadd.f32 0.0, %v6191
    %6193 = vmatprep.mubr.f32.mxu0 0.0
    %6194 = vmatmul.mubr.f32.gmra.mrb[0].mxu0 %v6013
    %v6195 = vpop.f32.mrb[0].mxu0
    %v6196 = vadd.f32 0.0, %v6195
    %v6197 = vpop.f32.mrb[0].mxu0
    %v6198 = vadd.f32 0.0, %v6197
    %6199 = vmatprep.mubr.f32.mxu0 0.0
    %6200 = vmatmul.mubr.f32.gmra.mrb[0].mxu0 %v6016
    %v6201 = vpop.f32.mrb[0].mxu0
    %v6202 = vadd.f32 0.0, %v6201
    %v6203 = vpop.f32.mrb[0].mxu0
    %v6204 = vadd.f32 0.0, %v6203
    %6205 = vmatprep.mubr.f32.mxu0 0.0
    %6206 = vmatmul.mubr.f32.gmra.mrb[0].mxu0 %v6019
    %v6207 = vpop.f32.mrb[0].mxu0
    %v6208 = vadd.f32 0.0, %v6207
    %v6209 = vpop.f32.mrb[0].mxu0
    %v6210 = vadd.f32 0.0, %v6209
    %6211 = vmatprep.mubr.f32.mxu0 0.0
    %6212 = vmatmul.mubr.f32.gmra.mrb[0].mxu0 %v6022
    %v6213 = vpop.f32.mrb[0].mxu0
    %v6214 = vadd.f32 0.0, %v6213
    %v6215 = vpop.f32.mrb[0].mxu0
    %v6216 = vadd.f32 0.0, %v6215
    %6217 = vmatprep.mubr.f32.mxu0 0.0
    %6218 = vmatmul.mubr.f32.gmra.mrb[0].mxu0 %v6025
    %v6219 = vpop.f32.mrb[0].mxu0
    %v6220 = vadd.f32 0.0, %v6219
    %v6221 = vpop.f32.mrb[0].mxu0
    %v6222 = vadd.f32 0.0, %v6221
    %6223 = vmatprep.mubr.f32.mxu0 0.0
    %6224 = vmatmul.mubr.f32.gmra.mrb[0].mxu0 %v6028
    %v6225 = vpop.f32.mrb[0].mxu0
    %v6226 = vadd.f32 0.0, %v6225
    %v6227 = vpop.f32.mrb[0].mxu0
    %v6228 = vadd.f32 0.0, %v6227
    %6229 = vmatprep.mubr.f32.mxu0 0.0
    %6230 = vmatmul.mubr.f32.gmra.mrb[0].mxu0 %v6031
    %v6231 = vpop.f32.mrb[0].mxu0
    %v6232 = vadd.f32 0.0, %v6231
    %v6233 = vpop.f32.mrb[0].mxu0
    %v6234 = vadd.f32 0.0, %v6233
    %6235 = vmatprep.mubr.f32.mxu0 0.0
    %6236 = vmatmul.mubr.f32.gmra.mrb[0].mxu0 %v6034
    %v6237 = vpop.f32.mrb[0].mxu0
    %v6238 = vadd.f32 0.0, %v6237
    %v6239 = vpop.f32.mrb[0].mxu0
    %v6240 = vadd.f32 0.0, %v6239
    %6241 = vmatprep.mubr.f32.mxu0 0.0
    %6242 = vmatmul.mubr.f32.gmra.mrb[0].mxu0 %v6037
    %v6243 = vpop.f32.mrb[0].mxu0
    %v6244 = vadd.f32 0.0, %v6243
    %v6245 = vpop.f32.mrb[0].mxu0
    %v6246 = vadd.f32 0.0, %v6245
    %6247 = vmatprep.mubr.f32.mxu0 0.0
    %6248 = vmatmul.mubr.f32.gmra.mrb[0].mxu0 %v6040
    %v6249 = vpop.f32.mrb[0].mxu0
    %v6250 = vadd.f32 0.0, %v6249
    %v6251 = vpop.f32.mrb[0].mxu0
    %v6252 = vadd.f32 0.0, %v6251
    %6253 = vmatprep.mubr.f32.mxu0 0.0
    %6254 = vmatmul.mubr.f32.gmra.mrb[0].mxu0 %v6043
    %v6255 = vpop.f32.mrb[0].mxu0
    %v6256 = vadd.f32 0.0, %v6255
    %v6257 = vpop.f32.mrb[0].mxu0
    %v6258 = vadd.f32 0.0, %v6257
    %6259 = vmatprep.mubr.f32.mxu0 0.0
    %6260 = vmatmul.mubr.f32.gmra.mrb[0].mxu0 %v6046
    %v6261 = vpop.f32.mrb[0].mxu0
    %v6262 = vadd.f32 0.0, %v6261
    %v6263 = vpop.f32.mrb[0].mxu0
    %v6264 = vadd.f32 0.0, %v6263
    %6265 = vmatprep.mubr.f32.mxu0 0.0
    %6266 = vmatmul.mubr.f32.gmra.mrb[0].mxu0 %v6049
    %v6267 = vpop.f32.mrb[0].mxu0
    %v6268 = vadd.f32 0.0, %v6267
    %v6269 = vpop.f32.mrb[0].mxu0
    %v6270 = vadd.f32 0.0, %v6269
    %6271 = vmatprep.mubr.f32.mxu0 0.0
    %6272 = vmatmul.mubr.f32.gmra.mrb[0].mxu0 %v6052
    %v6273 = vpop.f32.mrb[0].mxu0
    %v6274 = vadd.f32 0.0, %v6273
    %v6275 = vpop.f32.mrb[0].mxu0
    %v6276 = vadd.f32 0.0, %v6275
    %6277 = vmatprep.mubr.f32.mxu0 0.0
    %6278 = vmatmul.mubr.f32.gmra.mrb[0].mxu0 %v6055
    %v6279 = vpop.f32.mrb[0].mxu0
    %v6280 = vadd.f32 0.0, %v6279
    %v6281 = vpop.f32.mrb[0].mxu0
    %v6282 = vadd.f32 0.0, %v6281
    %6283 = vmatprep.mubr.f32.mxu0 0.0
    %6284 = vmatmul.mubr.f32.gmra.mrb[0].mxu0 %v6058
    %v6285 = vpop.f32.mrb[0].mxu0
    %v6286 = vadd.f32 0.0, %v6285
    %v6287 = vpop.f32.mrb[0].mxu0
    %v6288 = vadd.f32 0.0, %v6287
    %6289 = vmatprep.mubr.f32.mxu0 0.0
    %6290 = vmatmul.mubr.f32.gmra.mrb[0].mxu0 %v6061
    %v6291 = vpop.f32.mrb[0].mxu0
    %v6292 = vadd.f32 0.0, %v6291
    %v6293 = vpop.f32.mrb[0].mxu0
    %v6294 = vadd.f32 0.0, %v6293
    %6295 = vmatprep.mubr.f32.mxu0 0.0
    %6296 = vmatmul.mubr.f32.gmra.mrb[0].mxu0 %v6064
    %v6297 = vpop.f32.mrb[0].mxu0
    %v6298 = vadd.f32 0.0, %v6297
    %v6299 = vpop.f32.mrb[0].mxu0
    %v6300 = vadd.f32 0.0, %v6299
    %6301 = vmatprep.mubr.f32.mxu0 0.0
    %6302 = vmatmul.mubr.f32.gmra.mrb[0].mxu0 %v6067
    %v6303 = vpop.f32.mrb[0].mxu0
    %v6304 = vadd.f32 0.0, %v6303
    %v6305 = vpop.f32.mrb[0].mxu0
    %v6306 = vadd.f32 0.0, %v6305
    %6307 = vmatprep.mubr.f32.mxu0 0.0
    %6308 = vmatmul.mubr.f32.gmra.mrb[0].mxu0 %v6070
    %v6309 = vpop.f32.mrb[0].mxu0
    %v6310 = vadd.f32 0.0, %v6309
    %v6311 = vpop.f32.mrb[0].mxu0
    %v6312 = vadd.f32 0.0, %v6311
    %6313 = vmatprep.mubr.f32.mxu0 0.0
    %6314 = vmatmul.mubr.f32.gmra.mrb[0].mxu0 %v6073
    %v6315 = vpop.f32.mrb[0].mxu0
    %v6316 = vadd.f32 0.0, %v6315
    %v6317 = vpop.f32.mrb[0].mxu0
    %v6318 = vadd.f32 0.0, %v6317
    %6319 = vmatprep.mubr.f32.mxu0 0.0
    %6320 = vmatmul.mubr.f32.gmra.mrb[0].mxu0 %v6076
    %v6321 = vpop.f32.mrb[0].mxu0
    %v6322 = vadd.f32 0.0, %v6321
    %v6323 = vpop.f32.mrb[0].mxu0
    %v6324 = vadd.f32 0.0, %v6323
    %6325 = vmatprep.mubr.f32.mxu0 0.0
    %6326 = vmatmul.mubr.f32.gmra.mrb[0].mxu0 %v6079
    %v6327 = vpop.f32.mrb[0].mxu0
    %v6328 = vadd.f32 0.0, %v6327
    %v6329 = vpop.f32.mrb[0].mxu0
    %v6330 = vadd.f32 0.0, %v6329
    %6331 = vmatprep.mubr.f32.mxu0 0.0
    %6332 = vmatmul.mubr.f32.gmra.mrb[0].mxu0 %v6082
    %v6333 = vpop.f32.mrb[0].mxu0
    %v6334 = vadd.f32 0.0, %v6333
    %v6335 = vpop.f32.mrb[0].mxu0
    %v6336 = vadd.f32 0.0, %v6335
    %6337 = vmatprep.mubr.f32.mxu0 0.0
    %6338 = vmatmul.mubr.f32.gmra.mrb[0].mxu0 %v6085
    %v6339 = vpop.f32.mrb[0].mxu0
    %v6340 = vadd.f32 0.0, %v6339
    %v6341 = vpop.f32.mrb[0].mxu0
    %v6342 = vadd.f32 0.0, %v6341
    %6343 = vdwg.mxu0
    %6344 = vxpose.xlu0.b32.start [1/16] %v5041, 128
    %6345 = vxpose.xlu0.b32.cont [2/16] 0.0, 128
    %6346 = vxpose.xlu0.b32.cont [3/16] 0.0, 128
    %6347 = vxpose.xlu0.b32.cont [4/16] 0.0, 128
    %6348 = vxpose.xlu0.b32.cont [5/16] 0.0, 128
    %6349 = vxpose.xlu0.b32.cont [6/16] 0.0, 128
    %6350 = vxpose.xlu0.b32.cont [7/16] 0.0, 128
    %6351 = vxpose.xlu0.b32.cont [8/16] 0.0, 128
    %6352 = vxpose.xlu0.b32.cont [9/16] 0.0, 128
    %6353 = vxpose.xlu0.b32.cont [10/16] 0.0, 128
    %6354 = vxpose.xlu0.b32.cont [11/16] 0.0, 128
    %6355 = vxpose.xlu0.b32.cont [12/16] 0.0, 128
    %6356 = vxpose.xlu0.b32.cont [13/16] 0.0, 128
    %6357 = vxpose.xlu0.b32.cont [14/16] 0.0, 128
    %6358 = vxpose.xlu0.b32.cont [15/16] 0.0, 128
    %6359 = vxpose.xlu0.b32.end [16/16] 0.0, 128
    %v6360 = vpop.trf.xlu0
    %v6361 = vpop.trf.xlu0
    %v6362 = vpop.trf.xlu0
    %v6363 = vpop.trf.xlu0
    %v6364 = vpop.trf.xlu0
    %v6365 = vpop.trf.xlu0
    %v6366 = vpop.trf.xlu0
    %v6367 = vpop.trf.xlu0
    %v6368 = vpop.trf.xlu0
    %v6369 = vpop.trf.xlu0
    %v6370 = vpop.trf.xlu0
    %v6371 = vpop.trf.xlu0
    %v6372 = vpop.trf.xlu0
    %v6373 = vpop.trf.xlu0
    %v6374 = vpop.trf.xlu0
    %v6375 = vpop.trf.xlu0
    %6376 = vxpose.xlu0.b32.start [1/16] %v5043, 128
    %6377 = vxpose.xlu0.b32.cont [2/16] 0.0, 128
    %6378 = vxpose.xlu0.b32.cont [3/16] 0.0, 128
    %6379 = vxpose.xlu0.b32.cont [4/16] 0.0, 128
    %6380 = vxpose.xlu0.b32.cont [5/16] 0.0, 128
    %6381 = vxpose.xlu0.b32.cont [6/16] 0.0, 128
    %6382 = vxpose.xlu0.b32.cont [7/16] 0.0, 128
    %6383 = vxpose.xlu0.b32.cont [8/16] 0.0, 128
    %6384 = vxpose.xlu0.b32.cont [9/16] 0.0, 128
    %6385 = vxpose.xlu0.b32.cont [10/16] 0.0, 128
    %6386 = vxpose.xlu0.b32.cont [11/16] 0.0, 128
    %6387 = vxpose.xlu0.b32.cont [12/16] 0.0, 128
    %6388 = vxpose.xlu0.b32.cont [13/16] 0.0, 128
    %6389 = vxpose.xlu0.b32.cont [14/16] 0.0, 128
    %6390 = vxpose.xlu0.b32.cont [15/16] 0.0, 128
    %6391 = vxpose.xlu0.b32.end [16/16] 0.0, 128
    %v6392 = vpop.trf.xlu0
    %v6393 = vpop.trf.xlu0
    %v6394 = vpop.trf.xlu0
    %v6395 = vpop.trf.xlu0
    %v6396 = vpop.trf.xlu0
    %v6397 = vpop.trf.xlu0
    %v6398 = vpop.trf.xlu0
    %v6399 = vpop.trf.xlu0
    %v6400 = vpop.trf.xlu0
    %v6401 = vpop.trf.xlu0
    %v6402 = vpop.trf.xlu0
    %v6403 = vpop.trf.xlu0
    %v6404 = vpop.trf.xlu0
    %v6405 = vpop.trf.xlu0
    %v6406 = vpop.trf.xlu0
    %v6407 = vpop.trf.xlu0
    %v6409 = vsel %vm483, %v6360, 0
    %v6412 = vsel %vm483, %v6361, 0
    %v6415 = vsel %vm483, %v6362, 0
    %v6418 = vsel %vm483, %v6363, 0
    %v6421 = vsel %vm483, %v6364, 0
    %v6424 = vsel %vm483, %v6365, 0
    %v6427 = vsel %vm483, %v6366, 0
    %v6430 = vsel %vm483, %v6367, 0
    %v6433 = vsel %vm483, %v6368, 0
    %v6436 = vsel %vm483, %v6369, 0
    %v6439 = vsel %vm483, %v6370, 0
    %v6442 = vsel %vm483, %v6371, 0
    %v6445 = vsel %vm483, %v6372, 0
    %v6448 = vsel %vm483, %v6373, 0
    %v6451 = vsel %vm483, %v6374, 0
    %v6454 = vsel %vm483, %v6375, 0
    %v6457 = vsel %vm483, %v6392, 0
    %v6460 = vsel %vm483, %v6393, 0
    %v6463 = vsel %vm483, %v6394, 0
    %v6466 = vsel %vm483, %v6395, 0
    %v6469 = vsel %vm483, %v6396, 0
    %v6472 = vsel %vm483, %v6397, 0
    %v6475 = vsel %vm483, %v6398, 0
    %v6478 = vsel %vm483, %v6399, 0
    %v6481 = vsel %vm483, %v6400, 0
    %v6484 = vsel %vm483, %v6401, 0
    %v6487 = vsel %vm483, %v6402, 0
    %v6490 = vsel %vm483, %v6403, 0
    %v6493 = vsel %vm483, %v6404, 0
    %v6496 = vsel %vm483, %v6405, 0
    %v6499 = vsel %vm483, %v6406, 0
    %v6502 = vsel %vm483, %v6407, 0
    %6504 = vmatprep.subr.mxu0 %v5067
    %6505 = vmatpush1.msra.mxu0 %v5065
    %6506 = vmatprep.subr.mxu0 0.0
    %6507 = vmatpush1.msra.mxu0 0.0
    %6508 = vmatprep.subr.mxu0 0.0
    %6509 = vmatpush1.msra.mxu0 0.0
    %6510 = vmatprep.subr.mxu0 0.0
    %6511 = vmatpush1.msra.mxu0 0.0
    %6512 = vmatprep.subr.mxu0 0.0
    %6513 = vmatpush1.msra.mxu0 0.0
    %6514 = vmatprep.subr.mxu0 0.0
    %6515 = vmatpush1.msra.mxu0 0.0
    %6516 = vmatprep.subr.mxu0 0.0
    %6517 = vmatpush1.msra.mxu0 0.0
    %6518 = vmatprep.subr.mxu0 0.0
    %6519 = vmatpush1.msra.mxu0 0.0
    %6520 = vmatprep.subr.mxu0 0.0
    %6521 = vmatpush1.msra.mxu0 0.0
    %6522 = vmatprep.subr.mxu0 0.0
    %6523 = vmatpush1.msra.mxu0 0.0
    %6524 = vmatprep.subr.mxu0 0.0
    %6525 = vmatpush1.msra.mxu0 0.0
    %6526 = vmatprep.subr.mxu0 0.0
    %6527 = vmatpush1.msra.mxu0 0.0
    %6528 = vmatprep.subr.mxu0 0.0
    %6529 = vmatpush1.msra.mxu0 0.0
    %6530 = vmatprep.subr.mxu0 0.0
    %6531 = vmatpush1.msra.mxu0 0.0
    %6532 = vmatprep.subr.mxu0 0.0
    %6533 = vmatpush1.msra.mxu0 0.0
    %6534 = vmatprep.subr.mxu0 0.0
    %6535 = vmatpush1.msra.mxu0 0.0
    %6536 = vmatprep.subr.mxu0 0.0
    %6537 = vmatpush1.msra.mxu0 0.0
    %6538 = vmatprep.subr.mxu0 0.0
    %6539 = vmatpush1.msra.mxu0 0.0
    %6540 = vmatprep.subr.mxu0 0.0
    %6541 = vmatpush1.msra.mxu0 0.0
    %6542 = vmatprep.subr.mxu0 0.0
    %6543 = vmatpush1.msra.mxu0 0.0
    %6544 = vmatprep.subr.mxu0 0.0
    %6545 = vmatpush1.msra.mxu0 0.0
    %6546 = vmatprep.subr.mxu0 0.0
    %6547 = vmatpush1.msra.mxu0 0.0
    %6548 = vmatprep.subr.mxu0 0.0
    %6549 = vmatpush1.msra.mxu0 0.0
    %6550 = vmatprep.subr.mxu0 0.0
    %6551 = vmatpush1.msra.mxu0 0.0
    %6552 = vmatprep.subr.mxu0 0.0
    %6553 = vmatpush1.msra.mxu0 0.0
    %6554 = vmatprep.subr.mxu0 0.0
    %6555 = vmatpush1.msra.mxu0 0.0
    %6556 = vmatprep.subr.mxu0 0.0
    %6557 = vmatpush1.msra.mxu0 0.0
    %6558 = vmatprep.subr.mxu0 0.0
    %6559 = vmatpush1.msra.mxu0 0.0
    %6560 = vmatprep.subr.mxu0 0.0
    %6561 = vmatpush1.msra.mxu0 0.0
    %6562 = vmatprep.subr.mxu0 0.0
    %6563 = vmatpush1.msra.mxu0 0.0
    %6564 = vmatprep.subr.mxu0 0.0
    %6565 = vmatpush1.msra.mxu0 0.0
    %6566 = vmatprep.subr.mxu0 0.0
    %6567 = vmatpush1.msra.mxu0 0.0
    %6568 = vmatprep.mubr.f32.mxu0 0.0
    %6569 = vmatmul.mubr.f32.gmra.mrb[0].mxu0 %v6409
    %v6570 = vpop.f32.mrb[0].mxu0
    %v6571 = vadd.f32 0.0, %v6570
    %v6572 = vpop.f32.mrb[0].mxu0
    %v6573 = vadd.f32 0.0, %v6572
    %6574 = vmatprep.mubr.f32.mxu0 0.0
    %6575 = vmatmul.mubr.f32.gmra.mrb[0].mxu0 %v6412
    %v6576 = vpop.f32.mrb[0].mxu0
    %v6577 = vadd.f32 0.0, %v6576
    %v6578 = vpop.f32.mrb[0].mxu0
    %v6579 = vadd.f32 0.0, %v6578
    %6580 = vmatprep.mubr.f32.mxu0 0.0
    %6581 = vmatmul.mubr.f32.gmra.mrb[0].mxu0 %v6415
    %v6582 = vpop.f32.mrb[0].mxu0
    %v6583 = vadd.f32 0.0, %v6582
    %v6584 = vpop.f32.mrb[0].mxu0
    %v6585 = vadd.f32 0.0, %v6584
    %6586 = vmatprep.mubr.f32.mxu0 0.0
    %6587 = vmatmul.mubr.f32.gmra.mrb[0].mxu0 %v6418
    %v6588 = vpop.f32.mrb[0].mxu0
    %v6589 = vadd.f32 0.0, %v6588
    %v6590 = vpop.f32.mrb[0].mxu0
    %v6591 = vadd.f32 0.0, %v6590
    %6592 = vmatprep.mubr.f32.mxu0 0.0
    %6593 = vmatmul.mubr.f32.gmra.mrb[0].mxu0 %v6421
    %v6594 = vpop.f32.mrb[0].mxu0
    %v6595 = vadd.f32 0.0, %v6594
    %v6596 = vpop.f32.mrb[0].mxu0
    %v6597 = vadd.f32 0.0, %v6596
    %6598 = vmatprep.mubr.f32.mxu0 0.0
    %6599 = vmatmul.mubr.f32.gmra.mrb[0].mxu0 %v6424
    %v6600 = vpop.f32.mrb[0].mxu0
    %v6601 = vadd.f32 0.0, %v6600
    %v6602 = vpop.f32.mrb[0].mxu0
    %v6603 = vadd.f32 0.0, %v6602
    %6604 = vmatprep.mubr.f32.mxu0 0.0
    %6605 = vmatmul.mubr.f32.gmra.mrb[0].mxu0 %v6427
    %v6606 = vpop.f32.mrb[0].mxu0
    %v6607 = vadd.f32 0.0, %v6606
    %v6608 = vpop.f32.mrb[0].mxu0
    %v6609 = vadd.f32 0.0, %v6608
    %6610 = vmatprep.mubr.f32.mxu0 0.0
    %6611 = vmatmul.mubr.f32.gmra.mrb[0].mxu0 %v6430
    %v6612 = vpop.f32.mrb[0].mxu0
    %v6613 = vadd.f32 0.0, %v6612
    %v6614 = vpop.f32.mrb[0].mxu0
    %v6615 = vadd.f32 0.0, %v6614
    %6616 = vmatprep.mubr.f32.mxu0 0.0
    %6617 = vmatmul.mubr.f32.gmra.mrb[0].mxu0 %v6433
    %v6618 = vpop.f32.mrb[0].mxu0
    %v6619 = vadd.f32 0.0, %v6618
    %v6620 = vpop.f32.mrb[0].mxu0
    %v6621 = vadd.f32 0.0, %v6620
    %6622 = vmatprep.mubr.f32.mxu0 0.0
    %6623 = vmatmul.mubr.f32.gmra.mrb[0].mxu0 %v6436
    %v6624 = vpop.f32.mrb[0].mxu0
    %v6625 = vadd.f32 0.0, %v6624
    %v6626 = vpop.f32.mrb[0].mxu0
    %v6627 = vadd.f32 0.0, %v6626
    %6628 = vmatprep.mubr.f32.mxu0 0.0
    %6629 = vmatmul.mubr.f32.gmra.mrb[0].mxu0 %v6439
    %v6630 = vpop.f32.mrb[0].mxu0
    %v6631 = vadd.f32 0.0, %v6630
    %v6632 = vpop.f32.mrb[0].mxu0
    %v6633 = vadd.f32 0.0, %v6632
    %6634 = vmatprep.mubr.f32.mxu0 0.0
    %6635 = vmatmul.mubr.f32.gmra.mrb[0].mxu0 %v6442
    %v6636 = vpop.f32.mrb[0].mxu0
    %v6637 = vadd.f32 0.0, %v6636
    %v6638 = vpop.f32.mrb[0].mxu0
    %v6639 = vadd.f32 0.0, %v6638
    %6640 = vmatprep.mubr.f32.mxu0 0.0
    %6641 = vmatmul.mubr.f32.gmra.mrb[0].mxu0 %v6445
    %v6642 = vpop.f32.mrb[0].mxu0
    %v6643 = vadd.f32 0.0, %v6642
    %v6644 = vpop.f32.mrb[0].mxu0
    %v6645 = vadd.f32 0.0, %v6644
    %6646 = vmatprep.mubr.f32.mxu0 0.0
    %6647 = vmatmul.mubr.f32.gmra.mrb[0].mxu0 %v6448
    %v6648 = vpop.f32.mrb[0].mxu0
    %v6649 = vadd.f32 0.0, %v6648
    %v6650 = vpop.f32.mrb[0].mxu0
    %v6651 = vadd.f32 0.0, %v6650
    %6652 = vmatprep.mubr.f32.mxu0 0.0
    %6653 = vmatmul.mubr.f32.gmra.mrb[0].mxu0 %v6451
    %v6654 = vpop.f32.mrb[0].mxu0
    %v6655 = vadd.f32 0.0, %v6654
    %v6656 = vpop.f32.mrb[0].mxu0
    %v6657 = vadd.f32 0.0, %v6656
    %6658 = vmatprep.mubr.f32.mxu0 0.0
    %6659 = vmatmul.mubr.f32.gmra.mrb[0].mxu0 %v6454
    %v6660 = vpop.f32.mrb[0].mxu0
    %v6661 = vadd.f32 0.0, %v6660
    %v6662 = vpop.f32.mrb[0].mxu0
    %v6663 = vadd.f32 0.0, %v6662
    %6664 = vmatprep.mubr.f32.mxu0 0.0
    %6665 = vmatmul.mubr.f32.gmra.mrb[0].mxu0 %v6457
    %v6666 = vpop.f32.mrb[0].mxu0
    %v6667 = vadd.f32 0.0, %v6666
    %v6668 = vpop.f32.mrb[0].mxu0
    %v6669 = vadd.f32 0.0, %v6668
    %6670 = vmatprep.mubr.f32.mxu0 0.0
    %6671 = vmatmul.mubr.f32.gmra.mrb[0].mxu0 %v6460
    %v6672 = vpop.f32.mrb[0].mxu0
    %v6673 = vadd.f32 0.0, %v6672
    %v6674 = vpop.f32.mrb[0].mxu0
    %v6675 = vadd.f32 0.0, %v6674
    %6676 = vmatprep.mubr.f32.mxu0 0.0
    %6677 = vmatmul.mubr.f32.gmra.mrb[0].mxu0 %v6463
    %v6678 = vpop.f32.mrb[0].mxu0
    %v6679 = vadd.f32 0.0, %v6678
    %v6680 = vpop.f32.mrb[0].mxu0
    %v6681 = vadd.f32 0.0, %v6680
    %6682 = vmatprep.mubr.f32.mxu0 0.0
    %6683 = vmatmul.mubr.f32.gmra.mrb[0].mxu0 %v6466
    %v6684 = vpop.f32.mrb[0].mxu0
    %v6685 = vadd.f32 0.0, %v6684
    %v6686 = vpop.f32.mrb[0].mxu0
    %v6687 = vadd.f32 0.0, %v6686
    %6688 = vmatprep.mubr.f32.mxu0 0.0
    %6689 = vmatmul.mubr.f32.gmra.mrb[0].mxu0 %v6469
    %v6690 = vpop.f32.mrb[0].mxu0
    %v6691 = vadd.f32 0.0, %v6690
    %v6692 = vpop.f32.mrb[0].mxu0
    %v6693 = vadd.f32 0.0, %v6692
    %6694 = vmatprep.mubr.f32.mxu0 0.0
    %6695 = vmatmul.mubr.f32.gmra.mrb[0].mxu0 %v6472
    %v6696 = vpop.f32.mrb[0].mxu0
    %v6697 = vadd.f32 0.0, %v6696
    %v6698 = vpop.f32.mrb[0].mxu0
    %v6699 = vadd.f32 0.0, %v6698
    %6700 = vmatprep.mubr.f32.mxu0 0.0
    %6701 = vmatmul.mubr.f32.gmra.mrb[0].mxu0 %v6475
    %v6702 = vpop.f32.mrb[0].mxu0
    %v6703 = vadd.f32 0.0, %v6702
    %v6704 = vpop.f32.mrb[0].mxu0
    %v6705 = vadd.f32 0.0, %v6704
    %6706 = vmatprep.mubr.f32.mxu0 0.0
    %6707 = vmatmul.mubr.f32.gmra.mrb[0].mxu0 %v6478
    %v6708 = vpop.f32.mrb[0].mxu0
    %v6709 = vadd.f32 0.0, %v6708
    %v6710 = vpop.f32.mrb[0].mxu0
    %v6711 = vadd.f32 0.0, %v6710
    %6712 = vmatprep.mubr.f32.mxu0 0.0
    %6713 = vmatmul.mubr.f32.gmra.mrb[0].mxu0 %v6481
    %v6714 = vpop.f32.mrb[0].mxu0
    %v6715 = vadd.f32 0.0, %v6714
    %v6716 = vpop.f32.mrb[0].mxu0
    %v6717 = vadd.f32 0.0, %v6716
    %6718 = vmatprep.mubr.f32.mxu0 0.0
    %6719 = vmatmul.mubr.f32.gmra.mrb[0].mxu0 %v6484
    %v6720 = vpop.f32.mrb[0].mxu0
    %v6721 = vadd.f32 0.0, %v6720
    %v6722 = vpop.f32.mrb[0].mxu0
    %v6723 = vadd.f32 0.0, %v6722
    %6724 = vmatprep.mubr.f32.mxu0 0.0
    %6725 = vmatmul.mubr.f32.gmra.mrb[0].mxu0 %v6487
    %v6726 = vpop.f32.mrb[0].mxu0
    %v6727 = vadd.f32 0.0, %v6726
    %v6728 = vpop.f32.mrb[0].mxu0
    %v6729 = vadd.f32 0.0, %v6728
    %6730 = vmatprep.mubr.f32.mxu0 0.0
    %6731 = vmatmul.mubr.f32.gmra.mrb[0].mxu0 %v6490
    %v6732 = vpop.f32.mrb[0].mxu0
    %v6733 = vadd.f32 0.0, %v6732
    %v6734 = vpop.f32.mrb[0].mxu0
    %v6735 = vadd.f32 0.0, %v6734
    %6736 = vmatprep.mubr.f32.mxu0 0.0
    %6737 = vmatmul.mubr.f32.gmra.mrb[0].mxu0 %v6493
    %v6738 = vpop.f32.mrb[0].mxu0
    %v6739 = vadd.f32 0.0, %v6738
    %v6740 = vpop.f32.mrb[0].mxu0
    %v6741 = vadd.f32 0.0, %v6740
    %6742 = vmatprep.mubr.f32.mxu0 0.0
    %6743 = vmatmul.mubr.f32.gmra.mrb[0].mxu0 %v6496
    %v6744 = vpop.f32.mrb[0].mxu0
    %v6745 = vadd.f32 0.0, %v6744
    %v6746 = vpop.f32.mrb[0].mxu0
    %v6747 = vadd.f32 0.0, %v6746
    %6748 = vmatprep.mubr.f32.mxu0 0.0
    %6749 = vmatmul.mubr.f32.gmra.mrb[0].mxu0 %v6499
    %v6750 = vpop.f32.mrb[0].mxu0
    %v6751 = vadd.f32 0.0, %v6750
    %v6752 = vpop.f32.mrb[0].mxu0
    %v6753 = vadd.f32 0.0, %v6752
    %6754 = vmatprep.mubr.f32.mxu0 0.0
    %6755 = vmatmul.mubr.f32.gmra.mrb[0].mxu0 %v6502
    %v6756 = vpop.f32.mrb[0].mxu0
    %v6757 = vadd.f32 0.0, %v6756
    %v6758 = vpop.f32.mrb[0].mxu0
    %v6759 = vadd.f32 0.0, %v6758
    %6760 = vdwg.mxu0
    %v6761 = vmax.f32 %v5320, %v5322
    %6762 = vmax.xlane.f32.xlu0 %v6761
    %v6763 = vpop.xlane.xlu0 %6762
    %v6764 = vmax.f32 %v5326, %v5328
    %6765 = vmax.xlane.f32.xlu0 %v6764
    %v6766 = vpop.xlane.xlu0 %6765
    %v6767 = vmax.f32 %v5332, %v5334
    %6768 = vmax.xlane.f32.xlu0 %v6767
    %v6769 = vpop.xlane.xlu0 %6768
    %v6770 = vmax.f32 %v5338, %v5340
    %6771 = vmax.xlane.f32.xlu0 %v6770
    %v6772 = vpop.xlane.xlu0 %6771
    %v6773 = vmax.f32 %v5344, %v5346
    %6774 = vmax.xlane.f32.xlu0 %v6773
    %v6775 = vpop.xlane.xlu0 %6774
    %v6776 = vmax.f32 %v5350, %v5352
    %6777 = vmax.xlane.f32.xlu0 %v6776
    %v6778 = vpop.xlane.xlu0 %6777
    %v6779 = vmax.f32 %v5356, %v5358
    %6780 = vmax.xlane.f32.xlu0 %v6779
    %v6781 = vpop.xlane.xlu0 %6780
    %v6782 = vmax.f32 %v5362, %v5364
    %6783 = vmax.xlane.f32.xlu0 %v6782
    %v6784 = vpop.xlane.xlu0 %6783
    %v6785 = vmax.f32 %v5368, %v5370
    %6786 = vmax.xlane.f32.xlu0 %v6785
    %v6787 = vpop.xlane.xlu0 %6786
    %v6788 = vmax.f32 %v5374, %v5376
    %6789 = vmax.xlane.f32.xlu0 %v6788
    %v6790 = vpop.xlane.xlu0 %6789
    %v6791 = vmax.f32 %v5380, %v5382
    %6792 = vmax.xlane.f32.xlu0 %v6791
    %v6793 = vpop.xlane.xlu0 %6792
    %v6794 = vmax.f32 %v5386, %v5388
    %6795 = vmax.xlane.f32.xlu0 %v6794
    %v6796 = vpop.xlane.xlu0 %6795
    %v6797 = vmax.f32 %v5392, %v5394
    %6798 = vmax.xlane.f32.xlu0 %v6797
    %v6799 = vpop.xlane.xlu0 %6798
    %v6800 = vmax.f32 %v5398, %v5400
    %6801 = vmax.xlane.f32.xlu0 %v6800
    %v6802 = vpop.xlane.xlu0 %6801
    %v6803 = vmax.f32 %v5404, %v5406
    %6804 = vmax.xlane.f32.xlu0 %v6803
    %v6805 = vpop.xlane.xlu0 %6804
    %v6806 = vmax.f32 %v5410, %v5412
    %6807 = vmax.xlane.f32.xlu0 %v6806
    %v6808 = vpop.xlane.xlu0 %6807
    %v6809 = vmax.f32 %v5416, %v5418
    %6810 = vmax.xlane.f32.xlu0 %v6809
    %v6811 = vpop.xlane.xlu0 %6810
    %v6812 = vmax.f32 %v5422, %v5424
    %6813 = vmax.xlane.f32.xlu0 %v6812
    %v6814 = vpop.xlane.xlu0 %6813
    %v6815 = vmax.f32 %v5428, %v5430
    %6816 = vmax.xlane.f32.xlu0 %v6815
    %v6817 = vpop.xlane.xlu0 %6816
    %v6818 = vmax.f32 %v5434, %v5436
    %6819 = vmax.xlane.f32.xlu0 %v6818
    %v6820 = vpop.xlane.xlu0 %6819
    %v6821 = vmax.f32 %v5440, %v5442
    %6822 = vmax.xlane.f32.xlu0 %v6821
    %v6823 = vpop.xlane.xlu0 %6822
    %v6824 = vmax.f32 %v5446, %v5448
    %6825 = vmax.xlane.f32.xlu0 %v6824
    %v6826 = vpop.xlane.xlu0 %6825
    %v6827 = vmax.f32 %v5452, %v5454
    %6828 = vmax.xlane.f32.xlu0 %v6827
    %v6829 = vpop.xlane.xlu0 %6828
    %v6830 = vmax.f32 %v5458, %v5460
    %6831 = vmax.xlane.f32.xlu0 %v6830
    %v6832 = vpop.xlane.xlu0 %6831
    %v6833 = vmax.f32 %v5464, %v5466
    %6834 = vmax.xlane.f32.xlu0 %v6833
    %v6835 = vpop.xlane.xlu0 %6834
    %v6836 = vmax.f32 %v5470, %v5472
    %6837 = vmax.xlane.f32.xlu0 %v6836
    %v6838 = vpop.xlane.xlu0 %6837
    %v6839 = vmax.f32 %v5476, %v5478
    %6840 = vmax.xlane.f32.xlu0 %v6839
    %v6841 = vpop.xlane.xlu0 %6840
    %v6842 = vmax.f32 %v5482, %v5484
    %6843 = vmax.xlane.f32.xlu0 %v6842
    %v6844 = vpop.xlane.xlu0 %6843
    %v6845 = vmax.f32 %v5488, %v5490
    %6846 = vmax.xlane.f32.xlu0 %v6845
    %v6847 = vpop.xlane.xlu0 %6846
    %v6848 = vmax.f32 %v5494, %v5496
    %6849 = vmax.xlane.f32.xlu0 %v6848
    %v6850 = vpop.xlane.xlu0 %6849
    %v6851 = vmax.f32 %v5500, %v5502
    %6852 = vmax.xlane.f32.xlu0 %v6851
    %v6853 = vpop.xlane.xlu0 %6852
    %v6854 = vmax.f32 %v5506, %v5508
    %6855 = vmax.xlane.f32.xlu0 %v6854
    %v6856 = vpop.xlane.xlu0 %6855
    %v6857 = vmax.f32 %v5737, %v5739
    %6858 = vmax.xlane.f32.xlu0 %v6857
    %v6859 = vpop.xlane.xlu0 %6858
    %v6860 = vmax.f32 %v5743, %v5745
    %6861 = vmax.xlane.f32.xlu0 %v6860
    %v6862 = vpop.xlane.xlu0 %6861
    %v6863 = vmax.f32 %v5749, %v5751
    %6864 = vmax.xlane.f32.xlu0 %v6863
    %v6865 = vpop.xlane.xlu0 %6864
    %v6866 = vmax.f32 %v5755, %v5757
    %6867 = vmax.xlane.f32.xlu0 %v6866
    %v6868 = vpop.xlane.xlu0 %6867
    %v6869 = vmax.f32 %v5761, %v5763
    %6870 = vmax.xlane.f32.xlu0 %v6869
    %v6871 = vpop.xlane.xlu0 %6870
    %v6872 = vmax.f32 %v5767, %v5769
    %6873 = vmax.xlane.f32.xlu0 %v6872
    %v6874 = vpop.xlane.xlu0 %6873
    %v6875 = vmax.f32 %v5773, %v5775
    %6876 = vmax.xlane.f32.xlu0 %v6875
    %v6877 = vpop.xlane.xlu0 %6876
    %v6878 = vmax.f32 %v5779, %v5781
    %6879 = vmax.xlane.f32.xlu0 %v6878
    %v6880 = vpop.xlane.xlu0 %6879
    %v6881 = vmax.f32 %v5785, %v5787
    %6882 = vmax.xlane.f32.xlu0 %v6881
    %v6883 = vpop.xlane.xlu0 %6882
    %v6884 = vmax.f32 %v5791, %v5793
    %6885 = vmax.xlane.f32.xlu0 %v6884
    %v6886 = vpop.xlane.xlu0 %6885
    %v6887 = vmax.f32 %v5797, %v5799
    %6888 = vmax.xlane.f32.xlu0 %v6887
    %v6889 = vpop.xlane.xlu0 %6888
    %v6890 = vmax.f32 %v5803, %v5805
    %6891 = vmax.xlane.f32.xlu0 %v6890
    %v6892 = vpop.xlane.xlu0 %6891
    %v6893 = vmax.f32 %v5809, %v5811
    %6894 = vmax.xlane.f32.xlu0 %v6893
    %v6895 = vpop.xlane.xlu0 %6894
    %v6896 = vmax.f32 %v5815, %v5817
    %6897 = vmax.xlane.f32.xlu0 %v6896
    %v6898 = vpop.xlane.xlu0 %6897
    %v6899 = vmax.f32 %v5821, %v5823
    %6900 = vmax.xlane.f32.xlu0 %v6899
    %v6901 = vpop.xlane.xlu0 %6900
    %v6902 = vmax.f32 %v5827, %v5829
    %6903 = vmax.xlane.f32.xlu0 %v6902
    %v6904 = vpop.xlane.xlu0 %6903
    %v6905 = vmax.f32 %v5833, %v5835
    %6906 = vmax.xlane.f32.xlu0 %v6905
    %v6907 = vpop.xlane.xlu0 %6906
    %v6908 = vmax.f32 %v5839, %v5841
    %6909 = vmax.xlane.f32.xlu0 %v6908
    %v6910 = vpop.xlane.xlu0 %6909
    %v6911 = vmax.f32 %v5845, %v5847
    %6912 = vmax.xlane.f32.xlu0 %v6911
    %v6913 = vpop.xlane.xlu0 %6912
    %v6914 = vmax.f32 %v5851, %v5853
    %6915 = vmax.xlane.f32.xlu0 %v6914
    %v6916 = vpop.xlane.xlu0 %6915
    %v6917 = vmax.f32 %v5857, %v5859
    %6918 = vmax.xlane.f32.xlu0 %v6917
    %v6919 = vpop.xlane.xlu0 %6918
    %v6920 = vmax.f32 %v5863, %v5865
    %6921 = vmax.xlane.f32.xlu0 %v6920
    %v6922 = vpop.xlane.xlu0 %6921
    %v6923 = vmax.f32 %v5869, %v5871
    %6924 = vmax.xlane.f32.xlu0 %v6923
    %v6925 = vpop.xlane.xlu0 %6924
    %v6926 = vmax.f32 %v5875, %v5877
    %6927 = vmax.xlane.f32.xlu0 %v6926
    %v6928 = vpop.xlane.xlu0 %6927
    %v6929 = vmax.f32 %v5881, %v5883
    %6930 = vmax.xlane.f32.xlu0 %v6929
    %v6931 = vpop.xlane.xlu0 %6930
    %v6932 = vmax.f32 %v5887, %v5889
    %6933 = vmax.xlane.f32.xlu0 %v6932
    %v6934 = vpop.xlane.xlu0 %6933
    %v6935 = vmax.f32 %v5893, %v5895
    %6936 = vmax.xlane.f32.xlu0 %v6935
    %v6937 = vpop.xlane.xlu0 %6936
    %v6938 = vmax.f32 %v5899, %v5901
    %6939 = vmax.xlane.f32.xlu0 %v6938
    %v6940 = vpop.xlane.xlu0 %6939
    %v6941 = vmax.f32 %v5905, %v5907
    %6942 = vmax.xlane.f32.xlu0 %v6941
    %v6943 = vpop.xlane.xlu0 %6942
    %v6944 = vmax.f32 %v5911, %v5913
    %6945 = vmax.xlane.f32.xlu0 %v6944
    %v6946 = vpop.xlane.xlu0 %6945
    %v6947 = vmax.f32 %v5917, %v5919
    %6948 = vmax.xlane.f32.xlu0 %v6947
    %v6949 = vpop.xlane.xlu0 %6948
    %v6950 = vmax.f32 %v5923, %v5925
    %6951 = vmax.xlane.f32.xlu0 %v6950
    %v6952 = vpop.xlane.xlu0 %6951
    %v6953 = vmax.f32 %v6154, %v6156
    %6954 = vmax.xlane.f32.xlu0 %v6953
    %v6955 = vpop.xlane.xlu0 %6954
    %v6956 = vmax.f32 %v6160, %v6162
    %6957 = vmax.xlane.f32.xlu0 %v6956
    %v6958 = vpop.xlane.xlu0 %6957
    %v6959 = vmax.f32 %v6166, %v6168
    %6960 = vmax.xlane.f32.xlu0 %v6959
    %v6961 = vpop.xlane.xlu0 %6960
    %v6962 = vmax.f32 %v6172, %v6174
    %6963 = vmax.xlane.f32.xlu0 %v6962
    %v6964 = vpop.xlane.xlu0 %6963
    %v6965 = vmax.f32 %v6178, %v6180
    %6966 = vmax.xlane.f32.xlu0 %v6965
    %v6967 = vpop.xlane.xlu0 %6966
    %v6968 = vmax.f32 %v6184, %v6186
    %6969 = vmax.xlane.f32.xlu0 %v6968
    %v6970 = vpop.xlane.xlu0 %6969
    %v6971 = vmax.f32 %v6190, %v6192
    %6972 = vmax.xlane.f32.xlu0 %v6971
    %v6973 = vpop.xlane.xlu0 %6972
    %v6974 = vmax.f32 %v6196, %v6198
    %6975 = vmax.xlane.f32.xlu0 %v6974
    %v6976 = vpop.xlane.xlu0 %6975
    %v6977 = vmax.f32 %v6202, %v6204
    %6978 = vmax.xlane.f32.xlu0 %v6977
    %v6979 = vpop.xlane.xlu0 %6978
    %v6980 = vmax.f32 %v6208, %v6210
    %6981 = vmax.xlane.f32.xlu0 %v6980
    %v6982 = vpop.xlane.xlu0 %6981
    %v6983 = vmax.f32 %v6214, %v6216
    %6984 = vmax.xlane.f32.xlu0 %v6983
    %v6985 = vpop.xlane.xlu0 %6984
    %v6986 = vmax.f32 %v6220, %v6222
    %6987 = vmax.xlane.f32.xlu0 %v6986
    %v6988 = vpop.xlane.xlu0 %6987
    %v6989 = vmax.f32 %v6226, %v6228
    %6990 = vmax.xlane.f32.xlu0 %v6989
    %v6991 = vpop.xlane.xlu0 %6990
    %v6992 = vmax.f32 %v6232, %v6234
    %6993 = vmax.xlane.f32.xlu0 %v6992
    %v6994 = vpop.xlane.xlu0 %6993
    %v6995 = vmax.f32 %v6238, %v6240
    %6996 = vmax.xlane.f32.xlu0 %v6995
    %v6997 = vpop.xlane.xlu0 %6996
    %v6998 = vmax.f32 %v6244, %v6246
    %6999 = vmax.xlane.f32.xlu0 %v6998
    %v7000 = vpop.xlane.xlu0 %6999
    %v7001 = vmax.f32 %v6250, %v6252
    %7002 = vmax.xlane.f32.xlu0 %v7001
    %v7003 = vpop.xlane.xlu0 %7002
    %v7004 = vmax.f32 %v6256, %v6258
    %7005 = vmax.xlane.f32.xlu0 %v7004
    %v7006 = vpop.xlane.xlu0 %7005
    %v7007 = vmax.f32 %v6262, %v6264
    %7008 = vmax.xlane.f32.xlu0 %v7007
    %v7009 = vpop.xlane.xlu0 %7008
    %v7010 = vmax.f32 %v6268, %v6270
    %7011 = vmax.xlane.f32.xlu0 %v7010
    %v7012 = vpop.xlane.xlu0 %7011
    %v7013 = vmax.f32 %v6274, %v6276
    %7014 = vmax.xlane.f32.xlu0 %v7013
    %v7015 = vpop.xlane.xlu0 %7014
    %v7016 = vmax.f32 %v6280, %v6282
    %7017 = vmax.xlane.f32.xlu0 %v7016
    %v7018 = vpop.xlane.xlu0 %7017
    %v7019 = vmax.f32 %v6286, %v6288
    %7020 = vmax.xlane.f32.xlu0 %v7019
    %v7021 = vpop.xlane.xlu0 %7020
    %v7022 = vmax.f32 %v6292, %v6294
    %7023 = vmax.xlane.f32.xlu0 %v7022
    %v7024 = vpop.xlane.xlu0 %7023
    %v7025 = vmax.f32 %v6298, %v6300
    %7026 = vmax.xlane.f32.xlu0 %v7025
    %v7027 = vpop.xlane.xlu0 %7026
    %v7028 = vmax.f32 %v6304, %v6306
    %7029 = vmax.xlane.f32.xlu0 %v7028
    %v7030 = vpop.xlane.xlu0 %7029
    %v7031 = vmax.f32 %v6310, %v6312
    %7032 = vmax.xlane.f32.xlu0 %v7031
    %v7033 = vpop.xlane.xlu0 %7032
    %v7034 = vmax.f32 %v6316, %v6318
    %7035 = vmax.xlane.f32.xlu0 %v7034
    %v7036 = vpop.xlane.xlu0 %7035
    %v7037 = vmax.f32 %v6322, %v6324
    %7038 = vmax.xlane.f32.xlu0 %v7037
    %v7039 = vpop.xlane.xlu0 %7038
    %v7040 = vmax.f32 %v6328, %v6330
    %7041 = vmax.xlane.f32.xlu0 %v7040
    %v7042 = vpop.xlane.xlu0 %7041
    %v7043 = vmax.f32 %v6334, %v6336
    %7044 = vmax.xlane.f32.xlu0 %v7043
    %v7045 = vpop.xlane.xlu0 %7044
    %v7046 = vmax.f32 %v6340, %v6342
    %7047 = vmax.xlane.f32.xlu0 %v7046
    %v7048 = vpop.xlane.xlu0 %7047
    %v7049 = vmax.f32 %v6571, %v6573
    %7050 = vmax.xlane.f32.xlu0 %v7049
    %v7051 = vpop.xlane.xlu0 %7050
    %v7052 = vmax.f32 %v6577, %v6579
    %7053 = vmax.xlane.f32.xlu0 %v7052
    %v7054 = vpop.xlane.xlu0 %7053
    %v7055 = vmax.f32 %v6583, %v6585
    %7056 = vmax.xlane.f32.xlu0 %v7055
    %v7057 = vpop.xlane.xlu0 %7056
    %v7058 = vmax.f32 %v6589, %v6591
    %7059 = vmax.xlane.f32.xlu0 %v7058
    %v7060 = vpop.xlane.xlu0 %7059
    %v7061 = vmax.f32 %v6595, %v6597
    %7062 = vmax.xlane.f32.xlu0 %v7061
    %v7063 = vpop.xlane.xlu0 %7062
    %v7064 = vmax.f32 %v6601, %v6603
    %7065 = vmax.xlane.f32.xlu0 %v7064
    %v7066 = vpop.xlane.xlu0 %7065
    %v7067 = vmax.f32 %v6607, %v6609
    %7068 = vmax.xlane.f32.xlu0 %v7067
    %v7069 = vpop.xlane.xlu0 %7068
    %v7070 = vmax.f32 %v6613, %v6615
    %7071 = vmax.xlane.f32.xlu0 %v7070
    %v7072 = vpop.xlane.xlu0 %7071
    %v7073 = vmax.f32 %v6619, %v6621
    %7074 = vmax.xlane.f32.xlu0 %v7073
    %v7075 = vpop.xlane.xlu0 %7074
    %v7076 = vmax.f32 %v6625, %v6627
    %7077 = vmax.xlane.f32.xlu0 %v7076
    %v7078 = vpop.xlane.xlu0 %7077
    %v7079 = vmax.f32 %v6631, %v6633
    %7080 = vmax.xlane.f32.xlu0 %v7079
    %v7081 = vpop.xlane.xlu0 %7080
    %v7082 = vmax.f32 %v6637, %v6639
    %7083 = vmax.xlane.f32.xlu0 %v7082
    %v7084 = vpop.xlane.xlu0 %7083
    %v7085 = vmax.f32 %v6643, %v6645
    %7086 = vmax.xlane.f32.xlu0 %v7085
    %v7087 = vpop.xlane.xlu0 %7086
    %v7088 = vmax.f32 %v6649, %v6651
    %7089 = vmax.xlane.f32.xlu0 %v7088
    %v7090 = vpop.xlane.xlu0 %7089
    %v7091 = vmax.f32 %v6655, %v6657
    %7092 = vmax.xlane.f32.xlu0 %v7091
    %v7093 = vpop.xlane.xlu0 %7092
    %v7094 = vmax.f32 %v6661, %v6663
    %7095 = vmax.xlane.f32.xlu0 %v7094
    %v7096 = vpop.xlane.xlu0 %7095
    %v7097 = vmax.f32 %v6667, %v6669
    %7098 = vmax.xlane.f32.xlu0 %v7097
    %v7099 = vpop.xlane.xlu0 %7098
    %v7100 = vmax.f32 %v6673, %v6675
    %7101 = vmax.xlane.f32.xlu0 %v7100
    %v7102 = vpop.xlane.xlu0 %7101
    %v7103 = vmax.f32 %v6679, %v6681
    %7104 = vmax.xlane.f32.xlu0 %v7103
    %v7105 = vpop.xlane.xlu0 %7104
    %v7106 = vmax.f32 %v6685, %v6687
    %7107 = vmax.xlane.f32.xlu0 %v7106
    %v7108 = vpop.xlane.xlu0 %7107
    %v7109 = vmax.f32 %v6691, %v6693
    %7110 = vmax.xlane.f32.xlu0 %v7109
    %v7111 = vpop.xlane.xlu0 %7110
    %v7112 = vmax.f32 %v6697, %v6699
    %7113 = vmax.xlane.f32.xlu0 %v7112
    %v7114 = vpop.xlane.xlu0 %7113
    %v7115 = vmax.f32 %v6703, %v6705
    %7116 = vmax.xlane.f32.xlu0 %v7115
    %v7117 = vpop.xlane.xlu0 %7116
    %v7118 = vmax.f32 %v6709, %v6711
    %7119 = vmax.xlane.f32.xlu0 %v7118
    %v7120 = vpop.xlane.xlu0 %7119
    %v7121 = vmax.f32 %v6715, %v6717
    %7122 = vmax.xlane.f32.xlu0 %v7121
    %v7123 = vpop.xlane.xlu0 %7122
    %v7124 = vmax.f32 %v6721, %v6723
    %7125 = vmax.xlane.f32.xlu0 %v7124
    %v7126 = vpop.xlane.xlu0 %7125
    %v7127 = vmax.f32 %v6727, %v6729
    %7128 = vmax.xlane.f32.xlu0 %v7127
    %v7129 = vpop.xlane.xlu0 %7128
    %v7130 = vmax.f32 %v6733, %v6735
    %7131 = vmax.xlane.f32.xlu0 %v7130
    %v7132 = vpop.xlane.xlu0 %7131
    %v7133 = vmax.f32 %v6739, %v6741
    %7134 = vmax.xlane.f32.xlu0 %v7133
    %v7135 = vpop.xlane.xlu0 %7134
    %v7136 = vmax.f32 %v6745, %v6747
    %7137 = vmax.xlane.f32.xlu0 %v7136
    %v7138 = vpop.xlane.xlu0 %7137
    %v7139 = vmax.f32 %v6751, %v6753
    %7140 = vmax.xlane.f32.xlu0 %v7139
    %v7141 = vpop.xlane.xlu0 %7140
    %v7142 = vmax.f32 %v6757, %v6759
    %7143 = vmax.xlane.f32.xlu0 %v7142
    %v7144 = vpop.xlane.xlu0 %7143
    %v7145 = vsub.f32 %v5320, %v6763
    %v7146 = vsub.f32 %v5322, %v6763
    %v7147 = vsub.f32 %v5326, %v6766
    %v7148 = vsub.f32 %v5328, %v6766
    %v7149 = vsub.f32 %v5332, %v6769
    %v7150 = vsub.f32 %v5334, %v6769
    %v7151 = vsub.f32 %v5338, %v6772
    %v7152 = vsub.f32 %v5340, %v6772
    %v7153 = vsub.f32 %v5344, %v6775
    %v7154 = vsub.f32 %v5346, %v6775
    %v7155 = vsub.f32 %v5350, %v6778
    %v7156 = vsub.f32 %v5352, %v6778
    %v7157 = vsub.f32 %v5356, %v6781
    %v7158 = vsub.f32 %v5358, %v6781
    %v7159 = vsub.f32 %v5362, %v6784
    %v7160 = vsub.f32 %v5364, %v6784
    %v7161 = vsub.f32 %v5368, %v6787
    %v7162 = vsub.f32 %v5370, %v6787
    %v7163 = vsub.f32 %v5374, %v6790
    %v7164 = vsub.f32 %v5376, %v6790
    %v7165 = vsub.f32 %v5380, %v6793
    %v7166 = vsub.f32 %v5382, %v6793
    %v7167 = vsub.f32 %v5386, %v6796
    %v7168 = vsub.f32 %v5388, %v6796
    %v7169 = vsub.f32 %v5392, %v6799
    %v7170 = vsub.f32 %v5394, %v6799
    %v7171 = vsub.f32 %v5398, %v6802
    %v7172 = vsub.f32 %v5400, %v6802
    %v7173 = vsub.f32 %v5404, %v6805
    %v7174 = vsub.f32 %v5406, %v6805
    %v7175 = vsub.f32 %v5410, %v6808
    %v7176 = vsub.f32 %v5412, %v6808
    %v7177 = vsub.f32 %v5416, %v6811
    %v7178 = vsub.f32 %v5418, %v6811
    %v7179 = vsub.f32 %v5422, %v6814
    %v7180 = vsub.f32 %v5424, %v6814
    %v7181 = vsub.f32 %v5428, %v6817
    %v7182 = vsub.f32 %v5430, %v6817
    %v7183 = vsub.f32 %v5434, %v6820
    %v7184 = vsub.f32 %v5436, %v6820
    %v7185 = vsub.f32 %v5440, %v6823
    %v7186 = vsub.f32 %v5442, %v6823
    %v7187 = vsub.f32 %v5446, %v6826
    %v7188 = vsub.f32 %v5448, %v6826
    %v7189 = vsub.f32 %v5452, %v6829
    %v7190 = vsub.f32 %v5454, %v6829
    %v7191 = vsub.f32 %v5458, %v6832
    %v7192 = vsub.f32 %v5460, %v6832
    %v7193 = vsub.f32 %v5464, %v6835
    %v7194 = vsub.f32 %v5466, %v6835
    %v7195 = vsub.f32 %v5470, %v6838
    %v7196 = vsub.f32 %v5472, %v6838
    %v7197 = vsub.f32 %v5476, %v6841
    %v7198 = vsub.f32 %v5478, %v6841
    %v7199 = vsub.f32 %v5482, %v6844
    %v7200 = vsub.f32 %v5484, %v6844
    %v7201 = vsub.f32 %v5488, %v6847
    %v7202 = vsub.f32 %v5490, %v6847
    %v7203 = vsub.f32 %v5494, %v6850
    %v7204 = vsub.f32 %v5496, %v6850
    %v7205 = vsub.f32 %v5500, %v6853
    %v7206 = vsub.f32 %v5502, %v6853
    %v7207 = vsub.f32 %v5506, %v6856
    %v7208 = vsub.f32 %v5508, %v6856
    %v7209 = vsub.f32 %v5737, %v6859
    %v7210 = vsub.f32 %v5739, %v6859
    %v7211 = vsub.f32 %v5743, %v6862
    %v7212 = vsub.f32 %v5745, %v6862
    %v7213 = vsub.f32 %v5749, %v6865
    %v7214 = vsub.f32 %v5751, %v6865
    %v7215 = vsub.f32 %v5755, %v6868
    %v7216 = vsub.f32 %v5757, %v6868
    %v7217 = vsub.f32 %v5761, %v6871
    %v7218 = vsub.f32 %v5763, %v6871
    %v7219 = vsub.f32 %v5767, %v6874
    %v7220 = vsub.f32 %v5769, %v6874
    %v7221 = vsub.f32 %v5773, %v6877
    %v7222 = vsub.f32 %v5775, %v6877
    %v7223 = vsub.f32 %v5779, %v6880
    %v7224 = vsub.f32 %v5781, %v6880
    %v7225 = vsub.f32 %v5785, %v6883
    %v7226 = vsub.f32 %v5787, %v6883
    %v7227 = vsub.f32 %v5791, %v6886
    %v7228 = vsub.f32 %v5793, %v6886
    %v7229 = vsub.f32 %v5797, %v6889
    %v7230 = vsub.f32 %v5799, %v6889
    %v7231 = vsub.f32 %v5803, %v6892
    %v7232 = vsub.f32 %v5805, %v6892
    %v7233 = vsub.f32 %v5809, %v6895
    %v7234 = vsub.f32 %v5811, %v6895
    %v7235 = vsub.f32 %v5815, %v6898
    %v7236 = vsub.f32 %v5817, %v6898
    %v7237 = vsub.f32 %v5821, %v6901
    %v7238 = vsub.f32 %v5823, %v6901
    %v7239 = vsub.f32 %v5827, %v6904
    %v7240 = vsub.f32 %v5829, %v6904
    %v7241 = vsub.f32 %v5833, %v6907
    %v7242 = vsub.f32 %v5835, %v6907
    %v7243 = vsub.f32 %v5839, %v6910
    %v7244 = vsub.f32 %v5841, %v6910
    %v7245 = vsub.f32 %v5845, %v6913
    %v7246 = vsub.f32 %v5847, %v6913
    %v7247 = vsub.f32 %v5851, %v6916
    %v7248 = vsub.f32 %v5853, %v6916
    %v7249 = vsub.f32 %v5857, %v6919
    %v7250 = vsub.f32 %v5859, %v6919
    %v7251 = vsub.f32 %v5863, %v6922
    %v7252 = vsub.f32 %v5865, %v6922
    %v7253 = vsub.f32 %v5869, %v6925
    %v7254 = vsub.f32 %v5871, %v6925
    %v7255 = vsub.f32 %v5875, %v6928
    %v7256 = vsub.f32 %v5877, %v6928
    %v7257 = vsub.f32 %v5881, %v6931
    %v7258 = vsub.f32 %v5883, %v6931
    %v7259 = vsub.f32 %v5887, %v6934
    %v7260 = vsub.f32 %v5889, %v6934
    %v7261 = vsub.f32 %v5893, %v6937
    %v7262 = vsub.f32 %v5895, %v6937
    %v7263 = vsub.f32 %v5899, %v6940
    %v7264 = vsub.f32 %v5901, %v6940
    %v7265 = vsub.f32 %v5905, %v6943
    %v7266 = vsub.f32 %v5907, %v6943
    %v7267 = vsub.f32 %v5911, %v6946
    %v7268 = vsub.f32 %v5913, %v6946
    %v7269 = vsub.f32 %v5917, %v6949
    %v7270 = vsub.f32 %v5919, %v6949
    %v7271 = vsub.f32 %v5923, %v6952
    %v7272 = vsub.f32 %v5925, %v6952
    %v7273 = vsub.f32 %v6154, %v6955
    %v7274 = vsub.f32 %v6156, %v6955
    %v7275 = vsub.f32 %v6160, %v6958
    %v7276 = vsub.f32 %v6162, %v6958
    %v7277 = vsub.f32 %v6166, %v6961
    %v7278 = vsub.f32 %v6168, %v6961
    %v7279 = vsub.f32 %v6172, %v6964
    %v7280 = vsub.f32 %v6174, %v6964
    %v7281 = vsub.f32 %v6178, %v6967
    %v7282 = vsub.f32 %v6180, %v6967
    %v7283 = vsub.f32 %v6184, %v6970
    %v7284 = vsub.f32 %v6186, %v6970
    %v7285 = vsub.f32 %v6190, %v6973
    %v7286 = vsub.f32 %v6192, %v6973
    %v7287 = vsub.f32 %v6196, %v6976
    %v7288 = vsub.f32 %v6198, %v6976
    %v7289 = vsub.f32 %v6202, %v6979
    %v7290 = vsub.f32 %v6204, %v6979
    %v7291 = vsub.f32 %v6208, %v6982
    %v7292 = vsub.f32 %v6210, %v6982
    %v7293 = vsub.f32 %v6214, %v6985
    %v7294 = vsub.f32 %v6216, %v6985
    %v7295 = vsub.f32 %v6220, %v6988
    %v7296 = vsub.f32 %v6222, %v6988
    %v7297 = vsub.f32 %v6226, %v6991
    %v7298 = vsub.f32 %v6228, %v6991
    %v7299 = vsub.f32 %v6232, %v6994
    %v7300 = vsub.f32 %v6234, %v6994
    %v7301 = vsub.f32 %v6238, %v6997
    %v7302 = vsub.f32 %v6240, %v6997
    %v7303 = vsub.f32 %v6244, %v7000
    %v7304 = vsub.f32 %v6246, %v7000
    %v7305 = vsub.f32 %v6250, %v7003
    %v7306 = vsub.f32 %v6252, %v7003
    %v7307 = vsub.f32 %v6256, %v7006
    %v7308 = vsub.f32 %v6258, %v7006
    %v7309 = vsub.f32 %v6262, %v7009
    %v7310 = vsub.f32 %v6264, %v7009
    %v7311 = vsub.f32 %v6268, %v7012
    %v7312 = vsub.f32 %v6270, %v7012
    %v7313 = vsub.f32 %v6274, %v7015
    %v7314 = vsub.f32 %v6276, %v7015
    %v7315 = vsub.f32 %v6280, %v7018
    %v7316 = vsub.f32 %v6282, %v7018
    %v7317 = vsub.f32 %v6286, %v7021
    %v7318 = vsub.f32 %v6288, %v7021
    %v7319 = vsub.f32 %v6292, %v7024
    %v7320 = vsub.f32 %v6294, %v7024
    %v7321 = vsub.f32 %v6298, %v7027
    %v7322 = vsub.f32 %v6300, %v7027
    %v7323 = vsub.f32 %v6304, %v7030
    %v7324 = vsub.f32 %v6306, %v7030
    %v7325 = vsub.f32 %v6310, %v7033
    %v7326 = vsub.f32 %v6312, %v7033
    %v7327 = vsub.f32 %v6316, %v7036
    %v7328 = vsub.f32 %v6318, %v7036
    %v7329 = vsub.f32 %v6322, %v7039
    %v7330 = vsub.f32 %v6324, %v7039
    %v7331 = vsub.f32 %v6328, %v7042
    %v7332 = vsub.f32 %v6330, %v7042
    %v7333 = vsub.f32 %v6334, %v7045
    %v7334 = vsub.f32 %v6336, %v7045
    %v7335 = vsub.f32 %v6340, %v7048
    %v7336 = vsub.f32 %v6342, %v7048
    %v7337 = vsub.f32 %v6571, %v7051
    %v7338 = vsub.f32 %v6573, %v7051
    %v7339 = vsub.f32 %v6577, %v7054
    %v7340 = vsub.f32 %v6579, %v7054
    %v7341 = vsub.f32 %v6583, %v7057
    %v7342 = vsub.f32 %v6585, %v7057
    %v7343 = vsub.f32 %v6589, %v7060
    %v7344 = vsub.f32 %v6591, %v7060
    %v7345 = vsub.f32 %v6595, %v7063
    %v7346 = vsub.f32 %v6597, %v7063
    %v7347 = vsub.f32 %v6601, %v7066
    %v7348 = vsub.f32 %v6603, %v7066
    %v7349 = vsub.f32 %v6607, %v7069
    %v7350 = vsub.f32 %v6609, %v7069
    %v7351 = vsub.f32 %v6613, %v7072
    %v7352 = vsub.f32 %v6615, %v7072
    %v7353 = vsub.f32 %v6619, %v7075
    %v7354 = vsub.f32 %v6621, %v7075
    %v7355 = vsub.f32 %v6625, %v7078
    %v7356 = vsub.f32 %v6627, %v7078
    %v7357 = vsub.f32 %v6631, %v7081
    %v7358 = vsub.f32 %v6633, %v7081
    %v7359 = vsub.f32 %v6637, %v7084
    %v7360 = vsub.f32 %v6639, %v7084
    %v7361 = vsub.f32 %v6643, %v7087
    %v7362 = vsub.f32 %v6645, %v7087
    %v7363 = vsub.f32 %v6649, %v7090
    %v7364 = vsub.f32 %v6651, %v7090
    %v7365 = vsub.f32 %v6655, %v7093
    %v7366 = vsub.f32 %v6657, %v7093
    %v7367 = vsub.f32 %v6661, %v7096
    %v7368 = vsub.f32 %v6663, %v7096
    %v7369 = vsub.f32 %v6667, %v7099
    %v7370 = vsub.f32 %v6669, %v7099
    %v7371 = vsub.f32 %v6673, %v7102
    %v7372 = vsub.f32 %v6675, %v7102
    %v7373 = vsub.f32 %v6679, %v7105
    %v7374 = vsub.f32 %v6681, %v7105
    %v7375 = vsub.f32 %v6685, %v7108
    %v7376 = vsub.f32 %v6687, %v7108
    %v7377 = vsub.f32 %v6691, %v7111
    %v7378 = vsub.f32 %v6693, %v7111
    %v7379 = vsub.f32 %v6697, %v7114
    %v7380 = vsub.f32 %v6699, %v7114
    %v7381 = vsub.f32 %v6703, %v7117
    %v7382 = vsub.f32 %v6705, %v7117
    %v7383 = vsub.f32 %v6709, %v7120
    %v7384 = vsub.f32 %v6711, %v7120
    %v7385 = vsub.f32 %v6715, %v7123
    %v7386 = vsub.f32 %v6717, %v7123
    %v7387 = vsub.f32 %v6721, %v7126
    %v7388 = vsub.f32 %v6723, %v7126
    %v7389 = vsub.f32 %v6727, %v7129
    %v7390 = vsub.f32 %v6729, %v7129
    %v7391 = vsub.f32 %v6733, %v7132
    %v7392 = vsub.f32 %v6735, %v7132
    %v7393 = vsub.f32 %v6739, %v7135
    %v7394 = vsub.f32 %v6741, %v7135
    %v7395 = vsub.f32 %v6745, %v7138
    %v7396 = vsub.f32 %v6747, %v7138
    %v7397 = vsub.f32 %v6751, %v7141
    %v7398 = vsub.f32 %v6753, %v7141
    %v7399 = vsub.f32 %v6757, %v7144
    %v7400 = vsub.f32 %v6759, %v7144
    %v7401 = vmul.f32 %v7145, 1.442695
    %v7402 = vpow.pop %v7401
    %v7403 = vmul.f32 %v7146, 1.442695
    %v7404 = vpow.pop %v7403
    %v7405 = vmul.f32 %v7147, 1.442695
    %v7406 = vpow.pop %v7405
    %v7407 = vmul.f32 %v7148, 1.442695
    %v7408 = vpow.pop %v7407
    %v7409 = vmul.f32 %v7149, 1.442695
    %v7410 = vpow.pop %v7409
    %v7411 = vmul.f32 %v7150, 1.442695
    %v7412 = vpow.pop %v7411
    %v7413 = vmul.f32 %v7151, 1.442695
    %v7414 = vpow.pop %v7413
    %v7415 = vmul.f32 %v7152, 1.442695
    %v7416 = vpow.pop %v7415
    %v7417 = vmul.f32 %v7153, 1.442695
    %v7418 = vpow.pop %v7417
    %v7419 = vmul.f32 %v7154, 1.442695
    %v7420 = vpow.pop %v7419
    %v7421 = vmul.f32 %v7155, 1.442695
    %v7422 = vpow.pop %v7421
    %v7423 = vmul.f32 %v7156, 1.442695
    %v7424 = vpow.pop %v7423
    %v7425 = vmul.f32 %v7157, 1.442695
    %v7426 = vpow.pop %v7425
    %v7427 = vmul.f32 %v7158, 1.442695
    %v7428 = vpow.pop %v7427
    %v7429 = vmul.f32 %v7159, 1.442695
    %v7430 = vpow.pop %v7429
    %v7431 = vmul.f32 %v7160, 1.442695
    %v7432 = vpow.pop %v7431
    %v7433 = vmul.f32 %v7161, 1.442695
    %v7434 = vpow.pop %v7433
    %v7435 = vmul.f32 %v7162, 1.442695
    %v7436 = vpow.pop %v7435
    %v7437 = vmul.f32 %v7163, 1.442695
    %v7438 = vpow.pop %v7437
    %v7439 = vmul.f32 %v7164, 1.442695
    %v7440 = vpow.pop %v7439
    %v7441 = vmul.f32 %v7165, 1.442695
    %v7442 = vpow.pop %v7441
    %v7443 = vmul.f32 %v7166, 1.442695
    %v7444 = vpow.pop %v7443
    %v7445 = vmul.f32 %v7167, 1.442695
    %v7446 = vpow.pop %v7445
    %v7447 = vmul.f32 %v7168, 1.442695
    %v7448 = vpow.pop %v7447
    %v7449 = vmul.f32 %v7169, 1.442695
    %v7450 = vpow.pop %v7449
    %v7451 = vmul.f32 %v7170, 1.442695
    %v7452 = vpow.pop %v7451
    %v7453 = vmul.f32 %v7171, 1.442695
    %v7454 = vpow.pop %v7453
    %v7455 = vmul.f32 %v7172, 1.442695
    %v7456 = vpow.pop %v7455
    %v7457 = vmul.f32 %v7173, 1.442695
    %v7458 = vpow.pop %v7457
    %v7459 = vmul.f32 %v7174, 1.442695
    %v7460 = vpow.pop %v7459
    %v7461 = vmul.f32 %v7175, 1.442695
    %v7462 = vpow.pop %v7461
    %v7463 = vmul.f32 %v7176, 1.442695
    %v7464 = vpow.pop %v7463
    %v7465 = vmul.f32 %v7177, 1.442695
    %v7466 = vpow.pop %v7465
    %v7467 = vmul.f32 %v7178, 1.442695
    %v7468 = vpow.pop %v7467
    %v7469 = vmul.f32 %v7179, 1.442695
    %v7470 = vpow.pop %v7469
    %v7471 = vmul.f32 %v7180, 1.442695
    %v7472 = vpow.pop %v7471
    %v7473 = vmul.f32 %v7181, 1.442695
    %v7474 = vpow.pop %v7473
    %v7475 = vmul.f32 %v7182, 1.442695
    %v7476 = vpow.pop %v7475
    %v7477 = vmul.f32 %v7183, 1.442695
    %v7478 = vpow.pop %v7477
    %v7479 = vmul.f32 %v7184, 1.442695
    %v7480 = vpow.pop %v7479
    %v7481 = vmul.f32 %v7185, 1.442695
    %v7482 = vpow.pop %v7481
    %v7483 = vmul.f32 %v7186, 1.442695
    %v7484 = vpow.pop %v7483
    %v7485 = vmul.f32 %v7187, 1.442695
    %v7486 = vpow.pop %v7485
    %v7487 = vmul.f32 %v7188, 1.442695
    %v7488 = vpow.pop %v7487
    %v7489 = vmul.f32 %v7189, 1.442695
    %v7490 = vpow.pop %v7489
    %v7491 = vmul.f32 %v7190, 1.442695
    %v7492 = vpow.pop %v7491
    %v7493 = vmul.f32 %v7191, 1.442695
    %v7494 = vpow.pop %v7493
    %v7495 = vmul.f32 %v7192, 1.442695
    %v7496 = vpow.pop %v7495
    %v7497 = vmul.f32 %v7193, 1.442695
    %v7498 = vpow.pop %v7497
    %v7499 = vmul.f32 %v7194, 1.442695
    %v7500 = vpow.pop %v7499
    %v7501 = vmul.f32 %v7195, 1.442695
    %v7502 = vpow.pop %v7501
    %v7503 = vmul.f32 %v7196, 1.442695
    %v7504 = vpow.pop %v7503
    %v7505 = vmul.f32 %v7197, 1.442695
    %v7506 = vpow.pop %v7505
    %v7507 = vmul.f32 %v7198, 1.442695
    %v7508 = vpow.pop %v7507
    %v7509 = vmul.f32 %v7199, 1.442695
    %v7510 = vpow.pop %v7509
    %v7511 = vmul.f32 %v7200, 1.442695
    %v7512 = vpow.pop %v7511
    %v7513 = vmul.f32 %v7201, 1.442695
    %v7514 = vpow.pop %v7513
    %v7515 = vmul.f32 %v7202, 1.442695
    %v7516 = vpow.pop %v7515
    %v7517 = vmul.f32 %v7203, 1.442695
    %v7518 = vpow.pop %v7517
    %v7519 = vmul.f32 %v7204, 1.442695
    %v7520 = vpow.pop %v7519
    %v7521 = vmul.f32 %v7205, 1.442695
    %v7522 = vpow.pop %v7521
    %v7523 = vmul.f32 %v7206, 1.442695
    %v7524 = vpow.pop %v7523
    %v7525 = vmul.f32 %v7207, 1.442695
    %v7526 = vpow.pop %v7525
    %v7527 = vmul.f32 %v7208, 1.442695
    %v7528 = vpow.pop %v7527
    %v7529 = vmul.f32 %v7209, 1.442695
    %v7530 = vpow.pop %v7529
    %v7531 = vmul.f32 %v7210, 1.442695
    %v7532 = vpow.pop %v7531
    %v7533 = vmul.f32 %v7211, 1.442695
    %v7534 = vpow.pop %v7533
    %v7535 = vmul.f32 %v7212, 1.442695
    %v7536 = vpow.pop %v7535
    %v7537 = vmul.f32 %v7213, 1.442695
    %v7538 = vpow.pop %v7537
    %v7539 = vmul.f32 %v7214, 1.442695
    %v7540 = vpow.pop %v7539
    %v7541 = vmul.f32 %v7215, 1.442695
    %v7542 = vpow.pop %v7541
    %v7543 = vmul.f32 %v7216, 1.442695
    %v7544 = vpow.pop %v7543
    %v7545 = vmul.f32 %v7217, 1.442695
    %v7546 = vpow.pop %v7545
    %v7547 = vmul.f32 %v7218, 1.442695
    %v7548 = vpow.pop %v7547
    %v7549 = vmul.f32 %v7219, 1.442695
    %v7550 = vpow.pop %v7549
    %v7551 = vmul.f32 %v7220, 1.442695
    %v7552 = vpow.pop %v7551
    %v7553 = vmul.f32 %v7221, 1.442695
    %v7554 = vpow.pop %v7553
    %v7555 = vmul.f32 %v7222, 1.442695
    %v7556 = vpow.pop %v7555
    %v7557 = vmul.f32 %v7223, 1.442695
    %v7558 = vpow.pop %v7557
    %v7559 = vmul.f32 %v7224, 1.442695
    %v7560 = vpow.pop %v7559
    %v7561 = vmul.f32 %v7225, 1.442695
    %v7562 = vpow.pop %v7561
    %v7563 = vmul.f32 %v7226, 1.442695
    %v7564 = vpow.pop %v7563
    %v7565 = vmul.f32 %v7227, 1.442695
    %v7566 = vpow.pop %v7565
    %v7567 = vmul.f32 %v7228, 1.442695
    %v7568 = vpow.pop %v7567
    %v7569 = vmul.f32 %v7229, 1.442695
    %v7570 = vpow.pop %v7569
    %v7571 = vmul.f32 %v7230, 1.442695
    %v7572 = vpow.pop %v7571
    %v7573 = vmul.f32 %v7231, 1.442695
    %v7574 = vpow.pop %v7573
    %v7575 = vmul.f32 %v7232, 1.442695
    %v7576 = vpow.pop %v7575
    %v7577 = vmul.f32 %v7233, 1.442695
    %v7578 = vpow.pop %v7577
    %v7579 = vmul.f32 %v7234, 1.442695
    %v7580 = vpow.pop %v7579
    %v7581 = vmul.f32 %v7235, 1.442695
    %v7582 = vpow.pop %v7581
    %v7583 = vmul.f32 %v7236, 1.442695
    %v7584 = vpow.pop %v7583
    %v7585 = vmul.f32 %v7237, 1.442695
    %v7586 = vpow.pop %v7585
    %v7587 = vmul.f32 %v7238, 1.442695
    %v7588 = vpow.pop %v7587
    %v7589 = vmul.f32 %v7239, 1.442695
    %v7590 = vpow.pop %v7589
    %v7591 = vmul.f32 %v7240, 1.442695
    %v7592 = vpow.pop %v7591
    %v7593 = vmul.f32 %v7241, 1.442695
    %v7594 = vpow.pop %v7593
    %v7595 = vmul.f32 %v7242, 1.442695
    %v7596 = vpow.pop %v7595
    %v7597 = vmul.f32 %v7243, 1.442695
    %v7598 = vpow.pop %v7597
    %v7599 = vmul.f32 %v7244, 1.442695
    %v7600 = vpow.pop %v7599
    %v7601 = vmul.f32 %v7245, 1.442695
    %v7602 = vpow.pop %v7601
    %v7603 = vmul.f32 %v7246, 1.442695
    %v7604 = vpow.pop %v7603
    %v7605 = vmul.f32 %v7247, 1.442695
    %v7606 = vpow.pop %v7605
    %v7607 = vmul.f32 %v7248, 1.442695
    %v7608 = vpow.pop %v7607
    %v7609 = vmul.f32 %v7249, 1.442695
    %v7610 = vpow.pop %v7609
    %v7611 = vmul.f32 %v7250, 1.442695
    %v7612 = vpow.pop %v7611
    %v7613 = vmul.f32 %v7251, 1.442695
    %v7614 = vpow.pop %v7613
    %v7615 = vmul.f32 %v7252, 1.442695
    %v7616 = vpow.pop %v7615
    %v7617 = vmul.f32 %v7253, 1.442695
    %v7618 = vpow.pop %v7617
    %v7619 = vmul.f32 %v7254, 1.442695
    %v7620 = vpow.pop %v7619
    %v7621 = vmul.f32 %v7255, 1.442695
    %v7622 = vpow.pop %v7621
    %v7623 = vmul.f32 %v7256, 1.442695
    %v7624 = vpow.pop %v7623
    %v7625 = vmul.f32 %v7257, 1.442695
    %v7626 = vpow.pop %v7625
    %v7627 = vmul.f32 %v7258, 1.442695
    %v7628 = vpow.pop %v7627
    %v7629 = vmul.f32 %v7259, 1.442695
    %v7630 = vpow.pop %v7629
    %v7631 = vmul.f32 %v7260, 1.442695
    %v7632 = vpow.pop %v7631
    %v7633 = vmul.f32 %v7261, 1.442695
    %v7634 = vpow.pop %v7633
    %v7635 = vmul.f32 %v7262, 1.442695
    %v7636 = vpow.pop %v7635
    %v7637 = vmul.f32 %v7263, 1.442695
    %v7638 = vpow.pop %v7637
    %v7639 = vmul.f32 %v7264, 1.442695
    %v7640 = vpow.pop %v7639
    %v7641 = vmul.f32 %v7265, 1.442695
    %v7642 = vpow.pop %v7641
    %v7643 = vmul.f32 %v7266, 1.442695
    %v7644 = vpow.pop %v7643
    %v7645 = vmul.f32 %v7267, 1.442695
    %v7646 = vpow.pop %v7645
    %v7647 = vmul.f32 %v7268, 1.442695
    %v7648 = vpow.pop %v7647
    %v7649 = vmul.f32 %v7269, 1.442695
    %v7650 = vpow.pop %v7649
    %v7651 = vmul.f32 %v7270, 1.442695
    %v7652 = vpow.pop %v7651
    %v7653 = vmul.f32 %v7271, 1.442695
    %v7654 = vpow.pop %v7653
    %v7655 = vmul.f32 %v7272, 1.442695
    %v7656 = vpow.pop %v7655
    %v7657 = vmul.f32 %v7273, 1.442695
    %v7658 = vpow.pop %v7657
    %v7659 = vmul.f32 %v7274, 1.442695
    %v7660 = vpow.pop %v7659
    %v7661 = vmul.f32 %v7275, 1.442695
    %v7662 = vpow.pop %v7661
    %v7663 = vmul.f32 %v7276, 1.442695
    %v7664 = vpow.pop %v7663
    %v7665 = vmul.f32 %v7277, 1.442695
    %v7666 = vpow.pop %v7665
    %v7667 = vmul.f32 %v7278, 1.442695
    %v7668 = vpow.pop %v7667
    %v7669 = vmul.f32 %v7279, 1.442695
    %v7670 = vpow.pop %v7669
    %v7671 = vmul.f32 %v7280, 1.442695
    %v7672 = vpow.pop %v7671
    %v7673 = vmul.f32 %v7281, 1.442695
    %v7674 = vpow.pop %v7673
    %v7675 = vmul.f32 %v7282, 1.442695
    %v7676 = vpow.pop %v7675
    %v7677 = vmul.f32 %v7283, 1.442695
    %v7678 = vpow.pop %v7677
    %v7679 = vmul.f32 %v7284, 1.442695
    %v7680 = vpow.pop %v7679
    %v7681 = vmul.f32 %v7285, 1.442695
    %v7682 = vpow.pop %v7681
    %v7683 = vmul.f32 %v7286, 1.442695
    %v7684 = vpow.pop %v7683
    %v7685 = vmul.f32 %v7287, 1.442695
    %v7686 = vpow.pop %v7685
    %v7687 = vmul.f32 %v7288, 1.442695
    %v7688 = vpow.pop %v7687
    %v7689 = vmul.f32 %v7289, 1.442695
    %v7690 = vpow.pop %v7689
    %v7691 = vmul.f32 %v7290, 1.442695
    %v7692 = vpow.pop %v7691
    %v7693 = vmul.f32 %v7291, 1.442695
    %v7694 = vpow.pop %v7693
    %v7695 = vmul.f32 %v7292, 1.442695
    %v7696 = vpow.pop %v7695
    %v7697 = vmul.f32 %v7293, 1.442695
    %v7698 = vpow.pop %v7697
    %v7699 = vmul.f32 %v7294, 1.442695
    %v7700 = vpow.pop %v7699
    %v7701 = vmul.f32 %v7295, 1.442695
    %v7702 = vpow.pop %v7701
    %v7703 = vmul.f32 %v7296, 1.442695
    %v7704 = vpow.pop %v7703
    %v7705 = vmul.f32 %v7297, 1.442695
    %v7706 = vpow.pop %v7705
    %v7707 = vmul.f32 %v7298, 1.442695
    %v7708 = vpow.pop %v7707
    %v7709 = vmul.f32 %v7299, 1.442695
    %v7710 = vpow.pop %v7709
    %v7711 = vmul.f32 %v7300, 1.442695
    %v7712 = vpow.pop %v7711
    %v7713 = vmul.f32 %v7301, 1.442695
    %v7714 = vpow.pop %v7713
    %v7715 = vmul.f32 %v7302, 1.442695
    %v7716 = vpow.pop %v7715
    %v7717 = vmul.f32 %v7303, 1.442695
    %v7718 = vpow.pop %v7717
    %v7719 = vmul.f32 %v7304, 1.442695
    %v7720 = vpow.pop %v7719
    %v7721 = vmul.f32 %v7305, 1.442695
    %v7722 = vpow.pop %v7721
    %v7723 = vmul.f32 %v7306, 1.442695
    %v7724 = vpow.pop %v7723
    %v7725 = vmul.f32 %v7307, 1.442695
    %v7726 = vpow.pop %v7725
    %v7727 = vmul.f32 %v7308, 1.442695
    %v7728 = vpow.pop %v7727
    %v7729 = vmul.f32 %v7309, 1.442695
    %v7730 = vpow.pop %v7729
    %v7731 = vmul.f32 %v7310, 1.442695
    %v7732 = vpow.pop %v7731
    %v7733 = vmul.f32 %v7311, 1.442695
    %v7734 = vpow.pop %v7733
    %v7735 = vmul.f32 %v7312, 1.442695
    %v7736 = vpow.pop %v7735
    %v7737 = vmul.f32 %v7313, 1.442695
    %v7738 = vpow.pop %v7737
    %v7739 = vmul.f32 %v7314, 1.442695
    %v7740 = vpow.pop %v7739
    %v7741 = vmul.f32 %v7315, 1.442695
    %v7742 = vpow.pop %v7741
    %v7743 = vmul.f32 %v7316, 1.442695
    %v7744 = vpow.pop %v7743
    %v7745 = vmul.f32 %v7317, 1.442695
    %v7746 = vpow.pop %v7745
    %v7747 = vmul.f32 %v7318, 1.442695
    %v7748 = vpow.pop %v7747
    %v7749 = vmul.f32 %v7319, 1.442695
    %v7750 = vpow.pop %v7749
    %v7751 = vmul.f32 %v7320, 1.442695
    %v7752 = vpow.pop %v7751
    %v7753 = vmul.f32 %v7321, 1.442695
    %v7754 = vpow.pop %v7753
    %v7755 = vmul.f32 %v7322, 1.442695
    %v7756 = vpow.pop %v7755
    %v7757 = vmul.f32 %v7323, 1.442695
    %v7758 = vpow.pop %v7757
    %v7759 = vmul.f32 %v7324, 1.442695
    %v7760 = vpow.pop %v7759
    %v7761 = vmul.f32 %v7325, 1.442695
    %v7762 = vpow.pop %v7761
    %v7763 = vmul.f32 %v7326, 1.442695
    %v7764 = vpow.pop %v7763
    %v7765 = vmul.f32 %v7327, 1.442695
    %v7766 = vpow.pop %v7765
    %v7767 = vmul.f32 %v7328, 1.442695
    %v7768 = vpow.pop %v7767
    %v7769 = vmul.f32 %v7329, 1.442695
    %v7770 = vpow.pop %v7769
    %v7771 = vmul.f32 %v7330, 1.442695
    %v7772 = vpow.pop %v7771
    %v7773 = vmul.f32 %v7331, 1.442695
    %v7774 = vpow.pop %v7773
    %v7775 = vmul.f32 %v7332, 1.442695
    %v7776 = vpow.pop %v7775
    %v7777 = vmul.f32 %v7333, 1.442695
    %v7778 = vpow.pop %v7777
    %v7779 = vmul.f32 %v7334, 1.442695
    %v7780 = vpow.pop %v7779
    %v7781 = vmul.f32 %v7335, 1.442695
    %v7782 = vpow.pop %v7781
    %v7783 = vmul.f32 %v7336, 1.442695
    %v7784 = vpow.pop %v7783
    %v7785 = vmul.f32 %v7337, 1.442695
    %v7786 = vpow.pop %v7785
    %v7787 = vmul.f32 %v7338, 1.442695
    %v7788 = vpow.pop %v7787
    %v7789 = vmul.f32 %v7339, 1.442695
    %v7790 = vpow.pop %v7789
    %v7791 = vmul.f32 %v7340, 1.442695
    %v7792 = vpow.pop %v7791
    %v7793 = vmul.f32 %v7341, 1.442695
    %v7794 = vpow.pop %v7793
    %v7795 = vmul.f32 %v7342, 1.442695
    %v7796 = vpow.pop %v7795
    %v7797 = vmul.f32 %v7343, 1.442695
    %v7798 = vpow.pop %v7797
    %v7799 = vmul.f32 %v7344, 1.442695
    %v7800 = vpow.pop %v7799
    %v7801 = vmul.f32 %v7345, 1.442695
    %v7802 = vpow.pop %v7801
    %v7803 = vmul.f32 %v7346, 1.442695
    %v7804 = vpow.pop %v7803
    %v7805 = vmul.f32 %v7347, 1.442695
    %v7806 = vpow.pop %v7805
    %v7807 = vmul.f32 %v7348, 1.442695
    %v7808 = vpow.pop %v7807
    %v7809 = vmul.f32 %v7349, 1.442695
    %v7810 = vpow.pop %v7809
    %v7811 = vmul.f32 %v7350, 1.442695
    %v7812 = vpow.pop %v7811
    %v7813 = vmul.f32 %v7351, 1.442695
    %v7814 = vpow.pop %v7813
    %v7815 = vmul.f32 %v7352, 1.442695
    %v7816 = vpow.pop %v7815
    %v7817 = vmul.f32 %v7353, 1.442695
    %v7818 = vpow.pop %v7817
    %v7819 = vmul.f32 %v7354, 1.442695
    %v7820 = vpow.pop %v7819
    %v7821 = vmul.f32 %v7355, 1.442695
    %v7822 = vpow.pop %v7821
    %v7823 = vmul.f32 %v7356, 1.442695
    %v7824 = vpow.pop %v7823
    %v7825 = vmul.f32 %v7357, 1.442695
    %v7826 = vpow.pop %v7825
    %v7827 = vmul.f32 %v7358, 1.442695
    %v7828 = vpow.pop %v7827
    %v7829 = vmul.f32 %v7359, 1.442695
    %v7830 = vpow.pop %v7829
    %v7831 = vmul.f32 %v7360, 1.442695
    %v7832 = vpow.pop %v7831
    %v7833 = vmul.f32 %v7361, 1.442695
    %v7834 = vpow.pop %v7833
    %v7835 = vmul.f32 %v7362, 1.442695
    %v7836 = vpow.pop %v7835
    %v7837 = vmul.f32 %v7363, 1.442695
    %v7838 = vpow.pop %v7837
    %v7839 = vmul.f32 %v7364, 1.442695
    %v7840 = vpow.pop %v7839
    %v7841 = vmul.f32 %v7365, 1.442695
    %v7842 = vpow.pop %v7841
    %v7843 = vmul.f32 %v7366, 1.442695
    %v7844 = vpow.pop %v7843
    %v7845 = vmul.f32 %v7367, 1.442695
    %v7846 = vpow.pop %v7845
    %v7847 = vmul.f32 %v7368, 1.442695
    %v7848 = vpow.pop %v7847
    %v7849 = vmul.f32 %v7369, 1.442695
    %v7850 = vpow.pop %v7849
    %v7851 = vmul.f32 %v7370, 1.442695
    %v7852 = vpow.pop %v7851
    %v7853 = vmul.f32 %v7371, 1.442695
    %v7854 = vpow.pop %v7853
    %v7855 = vmul.f32 %v7372, 1.442695
    %v7856 = vpow.pop %v7855
    %v7857 = vmul.f32 %v7373, 1.442695
    %v7858 = vpow.pop %v7857
    %v7859 = vmul.f32 %v7374, 1.442695
    %v7860 = vpow.pop %v7859
    %v7861 = vmul.f32 %v7375, 1.442695
    %v7862 = vpow.pop %v7861
    %v7863 = vmul.f32 %v7376, 1.442695
    %v7864 = vpow.pop %v7863
    %v7865 = vmul.f32 %v7377, 1.442695
    %v7866 = vpow.pop %v7865
    %v7867 = vmul.f32 %v7378, 1.442695
    %v7868 = vpow.pop %v7867
    %v7869 = vmul.f32 %v7379, 1.442695
    %v7870 = vpow.pop %v7869
    %v7871 = vmul.f32 %v7380, 1.442695
    %v7872 = vpow.pop %v7871
    %v7873 = vmul.f32 %v7381, 1.442695
    %v7874 = vpow.pop %v7873
    %v7875 = vmul.f32 %v7382, 1.442695
    %v7876 = vpow.pop %v7875
    %v7877 = vmul.f32 %v7383, 1.442695
    %v7878 = vpow.pop %v7877
    %v7879 = vmul.f32 %v7384, 1.442695
    %v7880 = vpow.pop %v7879
    %v7881 = vmul.f32 %v7385, 1.442695
    %v7882 = vpow.pop %v7881
    %v7883 = vmul.f32 %v7386, 1.442695
    %v7884 = vpow.pop %v7883
    %v7885 = vmul.f32 %v7387, 1.442695
    %v7886 = vpow.pop %v7885
    %v7887 = vmul.f32 %v7388, 1.442695
    %v7888 = vpow.pop %v7887
    %v7889 = vmul.f32 %v7389, 1.442695
    %v7890 = vpow.pop %v7889
    %v7891 = vmul.f32 %v7390, 1.442695
    %v7892 = vpow.pop %v7891
    %v7893 = vmul.f32 %v7391, 1.442695
    %v7894 = vpow.pop %v7893
    %v7895 = vmul.f32 %v7392, 1.442695
    %v7896 = vpow.pop %v7895
    %v7897 = vmul.f32 %v7393, 1.442695
    %v7898 = vpow.pop %v7897
    %v7899 = vmul.f32 %v7394, 1.442695
    %v7900 = vpow.pop %v7899
    %v7901 = vmul.f32 %v7395, 1.442695
    %v7902 = vpow.pop %v7901
    %v7903 = vmul.f32 %v7396, 1.442695
    %v7904 = vpow.pop %v7903
    %v7905 = vmul.f32 %v7397, 1.442695
    %v7906 = vpow.pop %v7905
    %v7907 = vmul.f32 %v7398, 1.442695
    %v7908 = vpow.pop %v7907
    %v7909 = vmul.f32 %v7399, 1.442695
    %v7910 = vpow.pop %v7909
    %v7911 = vmul.f32 %v7400, 1.442695
    %v7912 = vpow.pop %v7911
    %v7913 = vadd.f32 %v7402, %v7404
    %7914 = vadd.xlane.f32.xlu0 %v7913
    %v7915 = vpop.xlane.xlu0 %7914
    %v7916 = vadd.f32 %v7406, %v7408
    %7917 = vadd.xlane.f32.xlu0 %v7916
    %v7918 = vpop.xlane.xlu0 %7917
    %v7919 = vadd.f32 %v7410, %v7412
    %7920 = vadd.xlane.f32.xlu0 %v7919
    %v7921 = vpop.xlane.xlu0 %7920
    %v7922 = vadd.f32 %v7414, %v7416
    %7923 = vadd.xlane.f32.xlu0 %v7922
    %v7924 = vpop.xlane.xlu0 %7923
    %v7925 = vadd.f32 %v7418, %v7420
    %7926 = vadd.xlane.f32.xlu0 %v7925
    %v7927 = vpop.xlane.xlu0 %7926
    %v7928 = vadd.f32 %v7422, %v7424
    %7929 = vadd.xlane.f32.xlu0 %v7928
    %v7930 = vpop.xlane.xlu0 %7929
    %v7931 = vadd.f32 %v7426, %v7428
    %7932 = vadd.xlane.f32.xlu0 %v7931
    %v7933 = vpop.xlane.xlu0 %7932
    %v7934 = vadd.f32 %v7430, %v7432
    %7935 = vadd.xlane.f32.xlu0 %v7934
    %v7936 = vpop.xlane.xlu0 %7935
    %v7937 = vadd.f32 %v7434, %v7436
    %7938 = vadd.xlane.f32.xlu0 %v7937
    %v7939 = vpop.xlane.xlu0 %7938
    %v7940 = vadd.f32 %v7438, %v7440
    %7941 = vadd.xlane.f32.xlu0 %v7940
    %v7942 = vpop.xlane.xlu0 %7941
    %v7943 = vadd.f32 %v7442, %v7444
    %7944 = vadd.xlane.f32.xlu0 %v7943
    %v7945 = vpop.xlane.xlu0 %7944
    %v7946 = vadd.f32 %v7446, %v7448
    %7947 = vadd.xlane.f32.xlu0 %v7946
    %v7948 = vpop.xlane.xlu0 %7947
    %v7949 = vadd.f32 %v7450, %v7452
    %7950 = vadd.xlane.f32.xlu0 %v7949
    %v7951 = vpop.xlane.xlu0 %7950
    %v7952 = vadd.f32 %v7454, %v7456
    %7953 = vadd.xlane.f32.xlu0 %v7952
    %v7954 = vpop.xlane.xlu0 %7953
    %v7955 = vadd.f32 %v7458, %v7460
    %7956 = vadd.xlane.f32.xlu0 %v7955
    %v7957 = vpop.xlane.xlu0 %7956
    %v7958 = vadd.f32 %v7462, %v7464
    %7959 = vadd.xlane.f32.xlu0 %v7958
    %v7960 = vpop.xlane.xlu0 %7959
    %v7961 = vadd.f32 %v7466, %v7468
    %7962 = vadd.xlane.f32.xlu0 %v7961
    %v7963 = vpop.xlane.xlu0 %7962
    %v7964 = vadd.f32 %v7470, %v7472
    %7965 = vadd.xlane.f32.xlu0 %v7964
    %v7966 = vpop.xlane.xlu0 %7965
    %v7967 = vadd.f32 %v7474, %v7476
    %7968 = vadd.xlane.f32.xlu0 %v7967
    %v7969 = vpop.xlane.xlu0 %7968
    %v7970 = vadd.f32 %v7478, %v7480
    %7971 = vadd.xlane.f32.xlu0 %v7970
    %v7972 = vpop.xlane.xlu0 %7971
    %v7973 = vadd.f32 %v7482, %v7484
    %7974 = vadd.xlane.f32.xlu0 %v7973
    %v7975 = vpop.xlane.xlu0 %7974
    %v7976 = vadd.f32 %v7486, %v7488
    %7977 = vadd.xlane.f32.xlu0 %v7976
    %v7978 = vpop.xlane.xlu0 %7977
    %v7979 = vadd.f32 %v7490, %v7492
    %7980 = vadd.xlane.f32.xlu0 %v7979
    %v7981 = vpop.xlane.xlu0 %7980
    %v7982 = vadd.f32 %v7494, %v7496
    %7983 = vadd.xlane.f32.xlu0 %v7982
    %v7984 = vpop.xlane.xlu0 %7983
    %v7985 = vadd.f32 %v7498, %v7500
    %7986 = vadd.xlane.f32.xlu0 %v7985
    %v7987 = vpop.xlane.xlu0 %7986
    %v7988 = vadd.f32 %v7502, %v7504
    %7989 = vadd.xlane.f32.xlu0 %v7988
    %v7990 = vpop.xlane.xlu0 %7989
    %v7991 = vadd.f32 %v7506, %v7508
    %7992 = vadd.xlane.f32.xlu0 %v7991
    %v7993 = vpop.xlane.xlu0 %7992
    %v7994 = vadd.f32 %v7510, %v7512
    %7995 = vadd.xlane.f32.xlu0 %v7994
    %v7996 = vpop.xlane.xlu0 %7995
    %v7997 = vadd.f32 %v7514, %v7516
    %7998 = vadd.xlane.f32.xlu0 %v7997
    %v7999 = vpop.xlane.xlu0 %7998
    %v8000 = vadd.f32 %v7518, %v7520
    %8001 = vadd.xlane.f32.xlu0 %v8000
    %v8002 = vpop.xlane.xlu0 %8001
    %v8003 = vadd.f32 %v7522, %v7524
    %8004 = vadd.xlane.f32.xlu0 %v8003
    %v8005 = vpop.xlane.xlu0 %8004
    %v8006 = vadd.f32 %v7526, %v7528
    %8007 = vadd.xlane.f32.xlu0 %v8006
    %v8008 = vpop.xlane.xlu0 %8007
    %v8009 = vadd.f32 %v7530, %v7532
    %8010 = vadd.xlane.f32.xlu0 %v8009
    %v8011 = vpop.xlane.xlu0 %8010
    %v8012 = vadd.f32 %v7534, %v7536
    %8013 = vadd.xlane.f32.xlu0 %v8012
    %v8014 = vpop.xlane.xlu0 %8013
    %v8015 = vadd.f32 %v7538, %v7540
    %8016 = vadd.xlane.f32.xlu0 %v8015
    %v8017 = vpop.xlane.xlu0 %8016
    %v8018 = vadd.f32 %v7542, %v7544
    %8019 = vadd.xlane.f32.xlu0 %v8018
    %v8020 = vpop.xlane.xlu0 %8019
    %v8021 = vadd.f32 %v7546, %v7548
    %8022 = vadd.xlane.f32.xlu0 %v8021
    %v8023 = vpop.xlane.xlu0 %8022
    %v8024 = vadd.f32 %v7550, %v7552
    %8025 = vadd.xlane.f32.xlu0 %v8024
    %v8026 = vpop.xlane.xlu0 %8025
    %v8027 = vadd.f32 %v7554, %v7556
    %8028 = vadd.xlane.f32.xlu0 %v8027
    %v8029 = vpop.xlane.xlu0 %8028
    %v8030 = vadd.f32 %v7558, %v7560
    %8031 = vadd.xlane.f32.xlu0 %v8030
    %v8032 = vpop.xlane.xlu0 %8031
    %v8033 = vadd.f32 %v7562, %v7564
    %8034 = vadd.xlane.f32.xlu0 %v8033
    %v8035 = vpop.xlane.xlu0 %8034
    %v8036 = vadd.f32 %v7566, %v7568
    %8037 = vadd.xlane.f32.xlu0 %v8036
    %v8038 = vpop.xlane.xlu0 %8037
    %v8039 = vadd.f32 %v7570, %v7572
    %8040 = vadd.xlane.f32.xlu0 %v8039
    %v8041 = vpop.xlane.xlu0 %8040
    %v8042 = vadd.f32 %v7574, %v7576
    %8043 = vadd.xlane.f32.xlu0 %v8042
    %v8044 = vpop.xlane.xlu0 %8043
    %v8045 = vadd.f32 %v7578, %v7580
    %8046 = vadd.xlane.f32.xlu0 %v8045
    %v8047 = vpop.xlane.xlu0 %8046
    %v8048 = vadd.f32 %v7582, %v7584
    %8049 = vadd.xlane.f32.xlu0 %v8048
    %v8050 = vpop.xlane.xlu0 %8049
    %v8051 = vadd.f32 %v7586, %v7588
    %8052 = vadd.xlane.f32.xlu0 %v8051
    %v8053 = vpop.xlane.xlu0 %8052
    %v8054 = vadd.f32 %v7590, %v7592
    %8055 = vadd.xlane.f32.xlu0 %v8054
    %v8056 = vpop.xlane.xlu0 %8055
    %v8057 = vadd.f32 %v7594, %v7596
    %8058 = vadd.xlane.f32.xlu0 %v8057
    %v8059 = vpop.xlane.xlu0 %8058
    %v8060 = vadd.f32 %v7598, %v7600
    %8061 = vadd.xlane.f32.xlu0 %v8060
    %v8062 = vpop.xlane.xlu0 %8061
    %v8063 = vadd.f32 %v7602, %v7604
    %8064 = vadd.xlane.f32.xlu0 %v8063
    %v8065 = vpop.xlane.xlu0 %8064
    %v8066 = vadd.f32 %v7606, %v7608
    %8067 = vadd.xlane.f32.xlu0 %v8066
    %v8068 = vpop.xlane.xlu0 %8067
    %v8069 = vadd.f32 %v7610, %v7612
    %8070 = vadd.xlane.f32.xlu0 %v8069
    %v8071 = vpop.xlane.xlu0 %8070
    %v8072 = vadd.f32 %v7614, %v7616
    %8073 = vadd.xlane.f32.xlu0 %v8072
    %v8074 = vpop.xlane.xlu0 %8073
    %v8075 = vadd.f32 %v7618, %v7620
    %8076 = vadd.xlane.f32.xlu0 %v8075
    %v8077 = vpop.xlane.xlu0 %8076
    %v8078 = vadd.f32 %v7622, %v7624
    %8079 = vadd.xlane.f32.xlu0 %v8078
    %v8080 = vpop.xlane.xlu0 %8079
    %v8081 = vadd.f32 %v7626, %v7628
    %8082 = vadd.xlane.f32.xlu0 %v8081
    %v8083 = vpop.xlane.xlu0 %8082
    %v8084 = vadd.f32 %v7630, %v7632
    %8085 = vadd.xlane.f32.xlu0 %v8084
    %v8086 = vpop.xlane.xlu0 %8085
    %v8087 = vadd.f32 %v7634, %v7636
    %8088 = vadd.xlane.f32.xlu0 %v8087
    %v8089 = vpop.xlane.xlu0 %8088
    %v8090 = vadd.f32 %v7638, %v7640
    %8091 = vadd.xlane.f32.xlu0 %v8090
    %v8092 = vpop.xlane.xlu0 %8091
    %v8093 = vadd.f32 %v7642, %v7644
    %8094 = vadd.xlane.f32.xlu0 %v8093
    %v8095 = vpop.xlane.xlu0 %8094
    %v8096 = vadd.f32 %v7646, %v7648
    %8097 = vadd.xlane.f32.xlu0 %v8096
    %v8098 = vpop.xlane.xlu0 %8097
    %v8099 = vadd.f32 %v7650, %v7652
    %8100 = vadd.xlane.f32.xlu0 %v8099
    %v8101 = vpop.xlane.xlu0 %8100
    %v8102 = vadd.f32 %v7654, %v7656
    %8103 = vadd.xlane.f32.xlu0 %v8102
    %v8104 = vpop.xlane.xlu0 %8103
    %v8105 = vadd.f32 %v7658, %v7660
    %8106 = vadd.xlane.f32.xlu0 %v8105
    %v8107 = vpop.xlane.xlu0 %8106
    %v8108 = vadd.f32 %v7662, %v7664
    %8109 = vadd.xlane.f32.xlu0 %v8108
    %v8110 = vpop.xlane.xlu0 %8109
    %v8111 = vadd.f32 %v7666, %v7668
    %8112 = vadd.xlane.f32.xlu0 %v8111
    %v8113 = vpop.xlane.xlu0 %8112
    %v8114 = vadd.f32 %v7670, %v7672
    %8115 = vadd.xlane.f32.xlu0 %v8114
    %v8116 = vpop.xlane.xlu0 %8115
    %v8117 = vadd.f32 %v7674, %v7676
    %8118 = vadd.xlane.f32.xlu0 %v8117
    %v8119 = vpop.xlane.xlu0 %8118
    %v8120 = vadd.f32 %v7678, %v7680
    %8121 = vadd.xlane.f32.xlu0 %v8120
    %v8122 = vpop.xlane.xlu0 %8121
    %v8123 = vadd.f32 %v7682, %v7684
    %8124 = vadd.xlane.f32.xlu0 %v8123
    %v8125 = vpop.xlane.xlu0 %8124
    %v8126 = vadd.f32 %v7686, %v7688
    %8127 = vadd.xlane.f32.xlu0 %v8126
    %v8128 = vpop.xlane.xlu0 %8127
    %v8129 = vadd.f32 %v7690, %v7692
    %8130 = vadd.xlane.f32.xlu0 %v8129
    %v8131 = vpop.xlane.xlu0 %8130
    %v8132 = vadd.f32 %v7694, %v7696
    %8133 = vadd.xlane.f32.xlu0 %v8132
    %v8134 = vpop.xlane.xlu0 %8133
    %v8135 = vadd.f32 %v7698, %v7700
    %8136 = vadd.xlane.f32.xlu0 %v8135
    %v8137 = vpop.xlane.xlu0 %8136
    %v8138 = vadd.f32 %v7702, %v7704
    %8139 = vadd.xlane.f32.xlu0 %v8138
    %v8140 = vpop.xlane.xlu0 %8139
    %v8141 = vadd.f32 %v7706, %v7708
    %8142 = vadd.xlane.f32.xlu0 %v8141
    %v8143 = vpop.xlane.xlu0 %8142
    %v8144 = vadd.f32 %v7710, %v7712
    %8145 = vadd.xlane.f32.xlu0 %v8144
    %v8146 = vpop.xlane.xlu0 %8145
    %v8147 = vadd.f32 %v7714, %v7716
    %8148 = vadd.xlane.f32.xlu0 %v8147
    %v8149 = vpop.xlane.xlu0 %8148
    %v8150 = vadd.f32 %v7718, %v7720
    %8151 = vadd.xlane.f32.xlu0 %v8150
    %v8152 = vpop.xlane.xlu0 %8151
    %v8153 = vadd.f32 %v7722, %v7724
    %8154 = vadd.xlane.f32.xlu0 %v8153
    %v8155 = vpop.xlane.xlu0 %8154
    %v8156 = vadd.f32 %v7726, %v7728
    %8157 = vadd.xlane.f32.xlu0 %v8156
    %v8158 = vpop.xlane.xlu0 %8157
    %v8159 = vadd.f32 %v7730, %v7732
    %8160 = vadd.xlane.f32.xlu0 %v8159
    %v8161 = vpop.xlane.xlu0 %8160
    %v8162 = vadd.f32 %v7734, %v7736
    %8163 = vadd.xlane.f32.xlu0 %v8162
    %v8164 = vpop.xlane.xlu0 %8163
    %v8165 = vadd.f32 %v7738, %v7740
    %8166 = vadd.xlane.f32.xlu0 %v8165
    %v8167 = vpop.xlane.xlu0 %8166
    %v8168 = vadd.f32 %v7742, %v7744
    %8169 = vadd.xlane.f32.xlu0 %v8168
    %v8170 = vpop.xlane.xlu0 %8169
    %v8171 = vadd.f32 %v7746, %v7748
    %8172 = vadd.xlane.f32.xlu0 %v8171
    %v8173 = vpop.xlane.xlu0 %8172
    %v8174 = vadd.f32 %v7750, %v7752
    %8175 = vadd.xlane.f32.xlu0 %v8174
    %v8176 = vpop.xlane.xlu0 %8175
    %v8177 = vadd.f32 %v7754, %v7756
    %8178 = vadd.xlane.f32.xlu0 %v8177
    %v8179 = vpop.xlane.xlu0 %8178
    %v8180 = vadd.f32 %v7758, %v7760
    %8181 = vadd.xlane.f32.xlu0 %v8180
    %v8182 = vpop.xlane.xlu0 %8181
    %v8183 = vadd.f32 %v7762, %v7764
    %8184 = vadd.xlane.f32.xlu0 %v8183
    %v8185 = vpop.xlane.xlu0 %8184
    %v8186 = vadd.f32 %v7766, %v7768
    %8187 = vadd.xlane.f32.xlu0 %v8186
    %v8188 = vpop.xlane.xlu0 %8187
    %v8189 = vadd.f32 %v7770, %v7772
    %8190 = vadd.xlane.f32.xlu0 %v8189
    %v8191 = vpop.xlane.xlu0 %8190
    %v8192 = vadd.f32 %v7774, %v7776
    %8193 = vadd.xlane.f32.xlu0 %v8192
    %v8194 = vpop.xlane.xlu0 %8193
    %v8195 = vadd.f32 %v7778, %v7780
    %8196 = vadd.xlane.f32.xlu0 %v8195
    %v8197 = vpop.xlane.xlu0 %8196
    %v8198 = vadd.f32 %v7782, %v7784
    %8199 = vadd.xlane.f32.xlu0 %v8198
    %v8200 = vpop.xlane.xlu0 %8199
    %v8201 = vadd.f32 %v7786, %v7788
    %8202 = vadd.xlane.f32.xlu0 %v8201
    %v8203 = vpop.xlane.xlu0 %8202
    %v8204 = vadd.f32 %v7790, %v7792
    %8205 = vadd.xlane.f32.xlu0 %v8204
    %v8206 = vpop.xlane.xlu0 %8205
    %v8207 = vadd.f32 %v7794, %v7796
    %8208 = vadd.xlane.f32.xlu0 %v8207
    %v8209 = vpop.xlane.xlu0 %8208
    %v8210 = vadd.f32 %v7798, %v7800
    %8211 = vadd.xlane.f32.xlu0 %v8210
    %v8212 = vpop.xlane.xlu0 %8211
    %v8213 = vadd.f32 %v7802, %v7804
    %8214 = vadd.xlane.f32.xlu0 %v8213
    %v8215 = vpop.xlane.xlu0 %8214
    %v8216 = vadd.f32 %v7806, %v7808
    %8217 = vadd.xlane.f32.xlu0 %v8216
    %v8218 = vpop.xlane.xlu0 %8217
    %v8219 = vadd.f32 %v7810, %v7812
    %8220 = vadd.xlane.f32.xlu0 %v8219
    %v8221 = vpop.xlane.xlu0 %8220
    %v8222 = vadd.f32 %v7814, %v7816
    %8223 = vadd.xlane.f32.xlu0 %v8222
    %v8224 = vpop.xlane.xlu0 %8223
    %v8225 = vadd.f32 %v7818, %v7820
    %8226 = vadd.xlane.f32.xlu0 %v8225
    %v8227 = vpop.xlane.xlu0 %8226
    %v8228 = vadd.f32 %v7822, %v7824
    %8229 = vadd.xlane.f32.xlu0 %v8228
    %v8230 = vpop.xlane.xlu0 %8229
    %v8231 = vadd.f32 %v7826, %v7828
    %8232 = vadd.xlane.f32.xlu0 %v8231
    %v8233 = vpop.xlane.xlu0 %8232
    %v8234 = vadd.f32 %v7830, %v7832
    %8235 = vadd.xlane.f32.xlu0 %v8234
    %v8236 = vpop.xlane.xlu0 %8235
    %v8237 = vadd.f32 %v7834, %v7836
    %8238 = vadd.xlane.f32.xlu0 %v8237
    %v8239 = vpop.xlane.xlu0 %8238
    %v8240 = vadd.f32 %v7838, %v7840
    %8241 = vadd.xlane.f32.xlu0 %v8240
    %v8242 = vpop.xlane.xlu0 %8241
    %v8243 = vadd.f32 %v7842, %v7844
    %8244 = vadd.xlane.f32.xlu0 %v8243
    %v8245 = vpop.xlane.xlu0 %8244
    %v8246 = vadd.f32 %v7846, %v7848
    %8247 = vadd.xlane.f32.xlu0 %v8246
    %v8248 = vpop.xlane.xlu0 %8247
    %v8249 = vadd.f32 %v7850, %v7852
    %8250 = vadd.xlane.f32.xlu0 %v8249
    %v8251 = vpop.xlane.xlu0 %8250
    %v8252 = vadd.f32 %v7854, %v7856
    %8253 = vadd.xlane.f32.xlu0 %v8252
    %v8254 = vpop.xlane.xlu0 %8253
    %v8255 = vadd.f32 %v7858, %v7860
    %8256 = vadd.xlane.f32.xlu0 %v8255
    %v8257 = vpop.xlane.xlu0 %8256
    %v8258 = vadd.f32 %v7862, %v7864
    %8259 = vadd.xlane.f32.xlu0 %v8258
    %v8260 = vpop.xlane.xlu0 %8259
    %v8261 = vadd.f32 %v7866, %v7868
    %8262 = vadd.xlane.f32.xlu0 %v8261
    %v8263 = vpop.xlane.xlu0 %8262
    %v8264 = vadd.f32 %v7870, %v7872
    %8265 = vadd.xlane.f32.xlu0 %v8264
    %v8266 = vpop.xlane.xlu0 %8265
    %v8267 = vadd.f32 %v7874, %v7876
    %8268 = vadd.xlane.f32.xlu0 %v8267
    %v8269 = vpop.xlane.xlu0 %8268
    %v8270 = vadd.f32 %v7878, %v7880
    %8271 = vadd.xlane.f32.xlu0 %v8270
    %v8272 = vpop.xlane.xlu0 %8271
    %v8273 = vadd.f32 %v7882, %v7884
    %8274 = vadd.xlane.f32.xlu0 %v8273
    %v8275 = vpop.xlane.xlu0 %8274
    %v8276 = vadd.f32 %v7886, %v7888
    %8277 = vadd.xlane.f32.xlu0 %v8276
    %v8278 = vpop.xlane.xlu0 %8277
    %v8279 = vadd.f32 %v7890, %v7892
    %8280 = vadd.xlane.f32.xlu0 %v8279
    %v8281 = vpop.xlane.xlu0 %8280
    %v8282 = vadd.f32 %v7894, %v7896
    %8283 = vadd.xlane.f32.xlu0 %v8282
    %v8284 = vpop.xlane.xlu0 %8283
    %v8285 = vadd.f32 %v7898, %v7900
    %8286 = vadd.xlane.f32.xlu0 %v8285
    %v8287 = vpop.xlane.xlu0 %8286
    %v8288 = vadd.f32 %v7902, %v7904
    %8289 = vadd.xlane.f32.xlu0 %v8288
    %v8290 = vpop.xlane.xlu0 %8289
    %v8291 = vadd.f32 %v7906, %v7908
    %8292 = vadd.xlane.f32.xlu0 %v8291
    %v8293 = vpop.xlane.xlu0 %8292
    %v8294 = vadd.f32 %v7910, %v7912
    %8295 = vadd.xlane.f32.xlu0 %v8294
    %v8296 = vpop.xlane.xlu0 %8295
    %v8297 = vrcp.pop %v7915
    %v8298 = vrcp.pop %v7918
    %v8299 = vrcp.pop %v7921
    %v8300 = vrcp.pop %v7924
    %v8301 = vrcp.pop %v7927
    %v8302 = vrcp.pop %v7930
    %v8303 = vrcp.pop %v7933
    %v8304 = vrcp.pop %v7936
    %v8305 = vrcp.pop %v7939
    %v8306 = vrcp.pop %v7942
    %v8307 = vrcp.pop %v7945
    %v8308 = vrcp.pop %v7948
    %v8309 = vrcp.pop %v7951
    %v8310 = vrcp.pop %v7954
    %v8311 = vrcp.pop %v7957
    %v8312 = vrcp.pop %v7960
    %v8313 = vrcp.pop %v7963
    %v8314 = vrcp.pop %v7966
    %v8315 = vrcp.pop %v7969
    %v8316 = vrcp.pop %v7972
    %v8317 = vrcp.pop %v7975
    %v8318 = vrcp.pop %v7978
    %v8319 = vrcp.pop %v7981
    %v8320 = vrcp.pop %v7984
    %v8321 = vrcp.pop %v7987
    %v8322 = vrcp.pop %v7990
    %v8323 = vrcp.pop %v7993
    %v8324 = vrcp.pop %v7996
    %v8325 = vrcp.pop %v7999
    %v8326 = vrcp.pop %v8002
    %v8327 = vrcp.pop %v8005
    %v8328 = vrcp.pop %v8008
    %v8329 = vrcp.pop %v8011
    %v8330 = vrcp.pop %v8014
    %v8331 = vrcp.pop %v8017
    %v8332 = vrcp.pop %v8020
    %v8333 = vrcp.pop %v8023
    %v8334 = vrcp.pop %v8026
    %v8335 = vrcp.pop %v8029
    %v8336 = vrcp.pop %v8032
    %v8337 = vrcp.pop %v8035
    %v8338 = vrcp.pop %v8038
    %v8339 = vrcp.pop %v8041
    %v8340 = vrcp.pop %v8044
    %v8341 = vrcp.pop %v8047
    %v8342 = vrcp.pop %v8050
    %v8343 = vrcp.pop %v8053
    %v8344 = vrcp.pop %v8056
    %v8345 = vrcp.pop %v8059
    %v8346 = vrcp.pop %v8062
    %v8347 = vrcp.pop %v8065
    %v8348 = vrcp.pop %v8068
    %v8349 = vrcp.pop %v8071
    %v8350 = vrcp.pop %v8074
    %v8351 = vrcp.pop %v8077
    %v8352 = vrcp.pop %v8080
    %v8353 = vrcp.pop %v8083
    %v8354 = vrcp.pop %v8086
    %v8355 = vrcp.pop %v8089
    %v8356 = vrcp.pop %v8092
    %v8357 = vrcp.pop %v8095
    %v8358 = vrcp.pop %v8098
    %v8359 = vrcp.pop %v8101
    %v8360 = vrcp.pop %v8104
    %v8361 = vrcp.pop %v8107
    %v8362 = vrcp.pop %v8110
    %v8363 = vrcp.pop %v8113
    %v8364 = vrcp.pop %v8116
    %v8365 = vrcp.pop %v8119
    %v8366 = vrcp.pop %v8122
    %v8367 = vrcp.pop %v8125
    %v8368 = vrcp.pop %v8128
    %v8369 = vrcp.pop %v8131
    %v8370 = vrcp.pop %v8134
    %v8371 = vrcp.pop %v8137
    %v8372 = vrcp.pop %v8140
    %v8373 = vrcp.pop %v8143
    %v8374 = vrcp.pop %v8146
    %v8375 = vrcp.pop %v8149
    %v8376 = vrcp.pop %v8152
    %v8377 = vrcp.pop %v8155
    %v8378 = vrcp.pop %v8158
    %v8379 = vrcp.pop %v8161
    %v8380 = vrcp.pop %v8164
    %v8381 = vrcp.pop %v8167
    %v8382 = vrcp.pop %v8170
    %v8383 = vrcp.pop %v8173
    %v8384 = vrcp.pop %v8176
    %v8385 = vrcp.pop %v8179
    %v8386 = vrcp.pop %v8182
    %v8387 = vrcp.pop %v8185
    %v8388 = vrcp.pop %v8188
    %v8389 = vrcp.pop %v8191
    %v8390 = vrcp.pop %v8194
    %v8391 = vrcp.pop %v8197
    %v8392 = vrcp.pop %v8200
    %v8393 = vrcp.pop %v8203
    %v8394 = vrcp.pop %v8206
    %v8395 = vrcp.pop %v8209
    %v8396 = vrcp.pop %v8212
    %v8397 = vrcp.pop %v8215
    %v8398 = vrcp.pop %v8218
    %v8399 = vrcp.pop %v8221
    %v8400 = vrcp.pop %v8224
    %v8401 = vrcp.pop %v8227
    %v8402 = vrcp.pop %v8230
    %v8403 = vrcp.pop %v8233
    %v8404 = vrcp.pop %v8236
    %v8405 = vrcp.pop %v8239
    %v8406 = vrcp.pop %v8242
    %v8407 = vrcp.pop %v8245
    %v8408 = vrcp.pop %v8248
    %v8409 = vrcp.pop %v8251
    %v8410 = vrcp.pop %v8254
    %v8411 = vrcp.pop %v8257
    %v8412 = vrcp.pop %v8260
    %v8413 = vrcp.pop %v8263
    %v8414 = vrcp.pop %v8266
    %v8415 = vrcp.pop %v8269
    %v8416 = vrcp.pop %v8272
    %v8417 = vrcp.pop %v8275
    %v8418 = vrcp.pop %v8278
    %v8419 = vrcp.pop %v8281
    %v8420 = vrcp.pop %v8284
    %v8421 = vrcp.pop %v8287
    %v8422 = vrcp.pop %v8290
    %v8423 = vrcp.pop %v8293
    %v8424 = vrcp.pop %v8296
    %8425 = vxpose.xlu0.b32.start [1/16] %v8297, 128
    %8426 = vxpose.xlu0.b32.cont [2/16] %v8298, 128
    %8427 = vxpose.xlu0.b32.cont [3/16] %v8299, 128
    %8428 = vxpose.xlu0.b32.cont [4/16] %v8300, 128
    %8429 = vxpose.xlu0.b32.cont [5/16] %v8301, 128
    %8430 = vxpose.xlu0.b32.cont [6/16] %v8302, 128
    %8431 = vxpose.xlu0.b32.cont [7/16] %v8303, 128
    %8432 = vxpose.xlu0.b32.cont [8/16] %v8304, 128
    %8433 = vxpose.xlu0.b32.cont [9/16] %v8305, 128
    %8434 = vxpose.xlu0.b32.cont [10/16] %v8306, 128
    %8435 = vxpose.xlu0.b32.cont [11/16] %v8307, 128
    %8436 = vxpose.xlu0.b32.cont [12/16] %v8308, 128
    %8437 = vxpose.xlu0.b32.cont [13/16] %v8309, 128
    %8438 = vxpose.xlu0.b32.cont [14/16] %v8310, 128
    %8439 = vxpose.xlu0.b32.cont [15/16] %v8311, 128
    %8440 = vxpose.xlu0.b32.end [16/16] %v8312, 128
    %v8441 = vpop.trf.xlu0
    %v8442 = vpop.trf.xlu0
    %v8443 = vpop.trf.xlu0
    %v8444 = vpop.trf.xlu0
    %v8445 = vpop.trf.xlu0
    %v8446 = vpop.trf.xlu0
    %v8447 = vpop.trf.xlu0
    %v8448 = vpop.trf.xlu0
    %v8449 = vpop.trf.xlu0
    %v8450 = vpop.trf.xlu0
    %v8451 = vpop.trf.xlu0
    %v8452 = vpop.trf.xlu0
    %v8453 = vpop.trf.xlu0
    %v8454 = vpop.trf.xlu0
    %v8455 = vpop.trf.xlu0
    %v8456 = vpop.trf.xlu0
    %8457 = vxpose.xlu0.b32.start [1/16] %v8313, 128
    %8458 = vxpose.xlu0.b32.cont [2/16] %v8314, 128
    %8459 = vxpose.xlu0.b32.cont [3/16] %v8315, 128
    %8460 = vxpose.xlu0.b32.cont [4/16] %v8316, 128
    %8461 = vxpose.xlu0.b32.cont [5/16] %v8317, 128
    %8462 = vxpose.xlu0.b32.cont [6/16] %v8318, 128
    %8463 = vxpose.xlu0.b32.cont [7/16] %v8319, 128
    %8464 = vxpose.xlu0.b32.cont [8/16] %v8320, 128
    %8465 = vxpose.xlu0.b32.cont [9/16] %v8321, 128
    %8466 = vxpose.xlu0.b32.cont [10/16] %v8322, 128
    %8467 = vxpose.xlu0.b32.cont [11/16] %v8323, 128
    %8468 = vxpose.xlu0.b32.cont [12/16] %v8324, 128
    %8469 = vxpose.xlu0.b32.cont [13/16] %v8325, 128
    %8470 = vxpose.xlu0.b32.cont [14/16] %v8326, 128
    %8471 = vxpose.xlu0.b32.cont [15/16] %v8327, 128
    %8472 = vxpose.xlu0.b32.end [16/16] %v8328, 128
    %v8473 = vpop.trf.xlu0
    %v8474 = vpop.trf.xlu0
    %v8475 = vpop.trf.xlu0
    %v8476 = vpop.trf.xlu0
    %v8477 = vpop.trf.xlu0
    %v8478 = vpop.trf.xlu0
    %v8479 = vpop.trf.xlu0
    %v8480 = vpop.trf.xlu0
    %v8481 = vpop.trf.xlu0
    %v8482 = vpop.trf.xlu0
    %v8483 = vpop.trf.xlu0
    %v8484 = vpop.trf.xlu0
    %v8485 = vpop.trf.xlu0
    %v8486 = vpop.trf.xlu0
    %v8487 = vpop.trf.xlu0
    %v8488 = vpop.trf.xlu0
    %8489 = vxpose.xlu0.b32.start [1/16] %v8329, 128
    %8490 = vxpose.xlu0.b32.cont [2/16] %v8330, 128
    %8491 = vxpose.xlu0.b32.cont [3/16] %v8331, 128
    %8492 = vxpose.xlu0.b32.cont [4/16] %v8332, 128
    %8493 = vxpose.xlu0.b32.cont [5/16] %v8333, 128
    %8494 = vxpose.xlu0.b32.cont [6/16] %v8334, 128
    %8495 = vxpose.xlu0.b32.cont [7/16] %v8335, 128
    %8496 = vxpose.xlu0.b32.cont [8/16] %v8336, 128
    %8497 = vxpose.xlu0.b32.cont [9/16] %v8337, 128
    %8498 = vxpose.xlu0.b32.cont [10/16] %v8338, 128
    %8499 = vxpose.xlu0.b32.cont [11/16] %v8339, 128
    %8500 = vxpose.xlu0.b32.cont [12/16] %v8340, 128
    %8501 = vxpose.xlu0.b32.cont [13/16] %v8341, 128
    %8502 = vxpose.xlu0.b32.cont [14/16] %v8342, 128
    %8503 = vxpose.xlu0.b32.cont [15/16] %v8343, 128
    %8504 = vxpose.xlu0.b32.end [16/16] %v8344, 128
    %v8505 = vpop.trf.xlu0
    %v8506 = vpop.trf.xlu0
    %v8507 = vpop.trf.xlu0
    %v8508 = vpop.trf.xlu0
    %v8509 = vpop.trf.xlu0
    %v8510 = vpop.trf.xlu0
    %v8511 = vpop.trf.xlu0
    %v8512 = vpop.trf.xlu0
    %v8513 = vpop.trf.xlu0
    %v8514 = vpop.trf.xlu0
    %v8515 = vpop.trf.xlu0
    %v8516 = vpop.trf.xlu0
    %v8517 = vpop.trf.xlu0
    %v8518 = vpop.trf.xlu0
    %v8519 = vpop.trf.xlu0
    %v8520 = vpop.trf.xlu0
    %8521 = vxpose.xlu0.b32.start [1/16] %v8345, 128
    %8522 = vxpose.xlu0.b32.cont [2/16] %v8346, 128
    %8523 = vxpose.xlu0.b32.cont [3/16] %v8347, 128
    %8524 = vxpose.xlu0.b32.cont [4/16] %v8348, 128
    %8525 = vxpose.xlu0.b32.cont [5/16] %v8349, 128
    %8526 = vxpose.xlu0.b32.cont [6/16] %v8350, 128
    %8527 = vxpose.xlu0.b32.cont [7/16] %v8351, 128
    %8528 = vxpose.xlu0.b32.cont [8/16] %v8352, 128
    %8529 = vxpose.xlu0.b32.cont [9/16] %v8353, 128
    %8530 = vxpose.xlu0.b32.cont [10/16] %v8354, 128
    %8531 = vxpose.xlu0.b32.cont [11/16] %v8355, 128
    %8532 = vxpose.xlu0.b32.cont [12/16] %v8356, 128
    %8533 = vxpose.xlu0.b32.cont [13/16] %v8357, 128
    %8534 = vxpose.xlu0.b32.cont [14/16] %v8358, 128
    %8535 = vxpose.xlu0.b32.cont [15/16] %v8359, 128
    %8536 = vxpose.xlu0.b32.end [16/16] %v8360, 128
    %v8537 = vpop.trf.xlu0
    %v8538 = vpop.trf.xlu0
    %v8539 = vpop.trf.xlu0
    %v8540 = vpop.trf.xlu0
    %v8541 = vpop.trf.xlu0
    %v8542 = vpop.trf.xlu0
    %v8543 = vpop.trf.xlu0
    %v8544 = vpop.trf.xlu0
    %v8545 = vpop.trf.xlu0
    %v8546 = vpop.trf.xlu0
    %v8547 = vpop.trf.xlu0
    %v8548 = vpop.trf.xlu0
    %v8549 = vpop.trf.xlu0
    %v8550 = vpop.trf.xlu0
    %v8551 = vpop.trf.xlu0
    %v8552 = vpop.trf.xlu0
    %8553 = vxpose.xlu0.b32.start [1/16] %v8361, 128
    %8554 = vxpose.xlu0.b32.cont [2/16] %v8362, 128
    %8555 = vxpose.xlu0.b32.cont [3/16] %v8363, 128
    %8556 = vxpose.xlu0.b32.cont [4/16] %v8364, 128
    %8557 = vxpose.xlu0.b32.cont [5/16] %v8365, 128
    %8558 = vxpose.xlu0.b32.cont [6/16] %v8366, 128
    %8559 = vxpose.xlu0.b32.cont [7/16] %v8367, 128
    %8560 = vxpose.xlu0.b32.cont [8/16] %v8368, 128
    %8561 = vxpose.xlu0.b32.cont [9/16] %v8369, 128
    %8562 = vxpose.xlu0.b32.cont [10/16] %v8370, 128
    %8563 = vxpose.xlu0.b32.cont [11/16] %v8371, 128
    %8564 = vxpose.xlu0.b32.cont [12/16] %v8372, 128
    %8565 = vxpose.xlu0.b32.cont [13/16] %v8373, 128
    %8566 = vxpose.xlu0.b32.cont [14/16] %v8374, 128
    %8567 = vxpose.xlu0.b32.cont [15/16] %v8375, 128
    %8568 = vxpose.xlu0.b32.end [16/16] %v8376, 128
    %v8569 = vpop.trf.xlu0
    %v8570 = vpop.trf.xlu0
    %v8571 = vpop.trf.xlu0
    %v8572 = vpop.trf.xlu0
    %v8573 = vpop.trf.xlu0
    %v8574 = vpop.trf.xlu0
    %v8575 = vpop.trf.xlu0
    %v8576 = vpop.trf.xlu0
    %v8577 = vpop.trf.xlu0
    %v8578 = vpop.trf.xlu0
    %v8579 = vpop.trf.xlu0
    %v8580 = vpop.trf.xlu0
    %v8581 = vpop.trf.xlu0
    %v8582 = vpop.trf.xlu0
    %v8583 = vpop.trf.xlu0
    %v8584 = vpop.trf.xlu0
    %8585 = vxpose.xlu0.b32.start [1/16] %v8377, 128
    %8586 = vxpose.xlu0.b32.cont [2/16] %v8378, 128
    %8587 = vxpose.xlu0.b32.cont [3/16] %v8379, 128
    %8588 = vxpose.xlu0.b32.cont [4/16] %v8380, 128
    %8589 = vxpose.xlu0.b32.cont [5/16] %v8381, 128
    %8590 = vxpose.xlu0.b32.cont [6/16] %v8382, 128
    %8591 = vxpose.xlu0.b32.cont [7/16] %v8383, 128
    %8592 = vxpose.xlu0.b32.cont [8/16] %v8384, 128
    %8593 = vxpose.xlu0.b32.cont [9/16] %v8385, 128
    %8594 = vxpose.xlu0.b32.cont [10/16] %v8386, 128
    %8595 = vxpose.xlu0.b32.cont [11/16] %v8387, 128
    %8596 = vxpose.xlu0.b32.cont [12/16] %v8388, 128
    %8597 = vxpose.xlu0.b32.cont [13/16] %v8389, 128
    %8598 = vxpose.xlu0.b32.cont [14/16] %v8390, 128
    %8599 = vxpose.xlu0.b32.cont [15/16] %v8391, 128
    %8600 = vxpose.xlu0.b32.end [16/16] %v8392, 128
    %v8601 = vpop.trf.xlu0
    %v8602 = vpop.trf.xlu0
    %v8603 = vpop.trf.xlu0
    %v8604 = vpop.trf.xlu0
    %v8605 = vpop.trf.xlu0
    %v8606 = vpop.trf.xlu0
    %v8607 = vpop.trf.xlu0
    %v8608 = vpop.trf.xlu0
    %v8609 = vpop.trf.xlu0
    %v8610 = vpop.trf.xlu0
    %v8611 = vpop.trf.xlu0
    %v8612 = vpop.trf.xlu0
    %v8613 = vpop.trf.xlu0
    %v8614 = vpop.trf.xlu0
    %v8615 = vpop.trf.xlu0
    %v8616 = vpop.trf.xlu0
    %8617 = vxpose.xlu0.b32.start [1/16] %v8393, 128
    %8618 = vxpose.xlu0.b32.cont [2/16] %v8394, 128
    %8619 = vxpose.xlu0.b32.cont [3/16] %v8395, 128
    %8620 = vxpose.xlu0.b32.cont [4/16] %v8396, 128
    %8621 = vxpose.xlu0.b32.cont [5/16] %v8397, 128
    %8622 = vxpose.xlu0.b32.cont [6/16] %v8398, 128
    %8623 = vxpose.xlu0.b32.cont [7/16] %v8399, 128
    %8624 = vxpose.xlu0.b32.cont [8/16] %v8400, 128
    %8625 = vxpose.xlu0.b32.cont [9/16] %v8401, 128
    %8626 = vxpose.xlu0.b32.cont [10/16] %v8402, 128
    %8627 = vxpose.xlu0.b32.cont [11/16] %v8403, 128
    %8628 = vxpose.xlu0.b32.cont [12/16] %v8404, 128
    %8629 = vxpose.xlu0.b32.cont [13/16] %v8405, 128
    %8630 = vxpose.xlu0.b32.cont [14/16] %v8406, 128
    %8631 = vxpose.xlu0.b32.cont [15/16] %v8407, 128
    %8632 = vxpose.xlu0.b32.end [16/16] %v8408, 128
    %v8633 = vpop.trf.xlu0
    %v8634 = vpop.trf.xlu0
    %v8635 = vpop.trf.xlu0
    %v8636 = vpop.trf.xlu0
    %v8637 = vpop.trf.xlu0
    %v8638 = vpop.trf.xlu0
    %v8639 = vpop.trf.xlu0
    %v8640 = vpop.trf.xlu0
    %v8641 = vpop.trf.xlu0
    %v8642 = vpop.trf.xlu0
    %v8643 = vpop.trf.xlu0
    %v8644 = vpop.trf.xlu0
    %v8645 = vpop.trf.xlu0
    %v8646 = vpop.trf.xlu0
    %v8647 = vpop.trf.xlu0
    %v8648 = vpop.trf.xlu0
    %8649 = vxpose.xlu0.b32.start [1/16] %v8409, 128
    %8650 = vxpose.xlu0.b32.cont [2/16] %v8410, 128
    %8651 = vxpose.xlu0.b32.cont [3/16] %v8411, 128
    %8652 = vxpose.xlu0.b32.cont [4/16] %v8412, 128
    %8653 = vxpose.xlu0.b32.cont [5/16] %v8413, 128
    %8654 = vxpose.xlu0.b32.cont [6/16] %v8414, 128
    %8655 = vxpose.xlu0.b32.cont [7/16] %v8415, 128
    %8656 = vxpose.xlu0.b32.cont [8/16] %v8416, 128
    %8657 = vxpose.xlu0.b32.cont [9/16] %v8417, 128
    %8658 = vxpose.xlu0.b32.cont [10/16] %v8418, 128
    %8659 = vxpose.xlu0.b32.cont [11/16] %v8419, 128
    %8660 = vxpose.xlu0.b32.cont [12/16] %v8420, 128
    %8661 = vxpose.xlu0.b32.cont [13/16] %v8421, 128
    %8662 = vxpose.xlu0.b32.cont [14/16] %v8422, 128
    %8663 = vxpose.xlu0.b32.cont [15/16] %v8423, 128
    %8664 = vxpose.xlu0.b32.end [16/16] %v8424, 128
    %v8665 = vpop.trf.xlu0
    %v8666 = vpop.trf.xlu0
    %v8667 = vpop.trf.xlu0
    %v8668 = vpop.trf.xlu0
    %v8669 = vpop.trf.xlu0
    %v8670 = vpop.trf.xlu0
    %v8671 = vpop.trf.xlu0
    %v8672 = vpop.trf.xlu0
    %v8673 = vpop.trf.xlu0
    %v8674 = vpop.trf.xlu0
    %v8675 = vpop.trf.xlu0
    %v8676 = vpop.trf.xlu0
    %v8677 = vpop.trf.xlu0
    %v8678 = vpop.trf.xlu0
    %v8679 = vpop.trf.xlu0
    %v8680 = vpop.trf.xlu0
    %8681 = vmatprep.subr.mxu0 %v7404
    %8682 = vmatpush1.xpose.msra.mxu0 %v7402
    %8683 = vmatprep.subr.mxu0 %v7408
    %8684 = vmatpush1.xpose.msra.mxu0 %v7406
    %8685 = vmatprep.subr.mxu0 %v7412
    %8686 = vmatpush1.xpose.msra.mxu0 %v7410
    %8687 = vmatprep.subr.mxu0 %v7416
    %8688 = vmatpush1.xpose.msra.mxu0 %v7414
    %8689 = vmatprep.subr.mxu0 %v7420
    %8690 = vmatpush1.xpose.msra.mxu0 %v7418
    %8691 = vmatprep.subr.mxu0 %v7424
    %8692 = vmatpush1.xpose.msra.mxu0 %v7422
    %8693 = vmatprep.subr.mxu0 %v7428
    %8694 = vmatpush1.xpose.msra.mxu0 %v7426
    %8695 = vmatprep.subr.mxu0 %v7432
    %8696 = vmatpush1.xpose.msra.mxu0 %v7430
    %8697 = vmatprep.subr.mxu0 %v7436
    %8698 = vmatpush1.xpose.msra.mxu0 %v7434
    %8699 = vmatprep.subr.mxu0 %v7440
    %8700 = vmatpush1.xpose.msra.mxu0 %v7438
    %8701 = vmatprep.subr.mxu0 %v7444
    %8702 = vmatpush1.xpose.msra.mxu0 %v7442
    %8703 = vmatprep.subr.mxu0 %v7448
    %8704 = vmatpush1.xpose.msra.mxu0 %v7446
    %8705 = vmatprep.subr.mxu0 %v7452
    %8706 = vmatpush1.xpose.msra.mxu0 %v7450
    %8707 = vmatprep.subr.mxu0 %v7456
    %8708 = vmatpush1.xpose.msra.mxu0 %v7454
    %8709 = vmatprep.subr.mxu0 %v7460
    %8710 = vmatpush1.xpose.msra.mxu0 %v7458
    %8711 = vmatprep.subr.mxu0 %v7464
    %8712 = vmatpush1.xpose.msra.mxu0 %v7462
    %8713 = vmatprep.subr.mxu0 %v7468
    %8714 = vmatpush1.xpose.msra.mxu0 %v7466
    %8715 = vmatprep.subr.mxu0 %v7472
    %8716 = vmatpush1.xpose.msra.mxu0 %v7470
    %8717 = vmatprep.subr.mxu0 %v7476
    %8718 = vmatpush1.xpose.msra.mxu0 %v7474
    %8719 = vmatprep.subr.mxu0 %v7480
    %8720 = vmatpush1.xpose.msra.mxu0 %v7478
    %8721 = vmatprep.subr.mxu0 %v7484
    %8722 = vmatpush1.xpose.msra.mxu0 %v7482
    %8723 = vmatprep.subr.mxu0 %v7488
    %8724 = vmatpush1.xpose.msra.mxu0 %v7486
    %8725 = vmatprep.subr.mxu0 %v7492
    %8726 = vmatpush1.xpose.msra.mxu0 %v7490
    %8727 = vmatprep.subr.mxu0 %v7496
    %8728 = vmatpush1.xpose.msra.mxu0 %v7494
    %8729 = vmatprep.subr.mxu0 %v7500
    %8730 = vmatpush1.xpose.msra.mxu0 %v7498
    %8731 = vmatprep.subr.mxu0 %v7504
    %8732 = vmatpush1.xpose.msra.mxu0 %v7502
    %8733 = vmatprep.subr.mxu0 %v7508
    %8734 = vmatpush1.xpose.msra.mxu0 %v7506
    %8735 = vmatprep.subr.mxu0 %v7512
    %8736 = vmatpush1.xpose.msra.mxu0 %v7510
    %8737 = vmatprep.subr.mxu0 %v7516
    %8738 = vmatpush1.xpose.msra.mxu0 %v7514
    %8739 = vmatprep.subr.mxu0 %v7520
    %8740 = vmatpush1.xpose.msra.mxu0 %v7518
    %8741 = vmatprep.subr.mxu0 %v7524
    %8742 = vmatpush1.xpose.msra.mxu0 %v7522
    %8743 = vmatprep.subr.mxu0 %v7528
    %8744 = vmatpush1.xpose.msra.mxu0 %v7526
    %8745 = vmatprep.mubr.f32.mxu0 %v5073
    %8746 = vmatmul.mubr.f32.gmra.mrb[0].mxu0 %v5071
    %v8747 = vpop.f32.mrb[0].mxu0
    %v8748 = vadd.f32 0.0, %v8747
    %v8749 = vpop.f32.mrb[0].mxu0
    %v8750 = vadd.f32 0.0, %v8749
    %8751 = vdwg.mxu0
    %8752 = vmatprep.subr.mxu0 %v7532
    %8753 = vmatpush1.xpose.msra.mxu0 %v7530
    %8754 = vmatprep.subr.mxu0 %v7536
    %8755 = vmatpush1.xpose.msra.mxu0 %v7534
    %8756 = vmatprep.subr.mxu0 %v7540
    %8757 = vmatpush1.xpose.msra.mxu0 %v7538
    %8758 = vmatprep.subr.mxu0 %v7544
    %8759 = vmatpush1.xpose.msra.mxu0 %v7542
    %8760 = vmatprep.subr.mxu0 %v7548
    %8761 = vmatpush1.xpose.msra.mxu0 %v7546
    %8762 = vmatprep.subr.mxu0 %v7552
    %8763 = vmatpush1.xpose.msra.mxu0 %v7550
    %8764 = vmatprep.subr.mxu0 %v7556
    %8765 = vmatpush1.xpose.msra.mxu0 %v7554
    %8766 = vmatprep.subr.mxu0 %v7560
    %8767 = vmatpush1.xpose.msra.mxu0 %v7558
    %8768 = vmatprep.subr.mxu0 %v7564
    %8769 = vmatpush1.xpose.msra.mxu0 %v7562
    %8770 = vmatprep.subr.mxu0 %v7568
    %8771 = vmatpush1.xpose.msra.mxu0 %v7566
    %8772 = vmatprep.subr.mxu0 %v7572
    %8773 = vmatpush1.xpose.msra.mxu0 %v7570
    %8774 = vmatprep.subr.mxu0 %v7576
    %8775 = vmatpush1.xpose.msra.mxu0 %v7574
    %8776 = vmatprep.subr.mxu0 %v7580
    %8777 = vmatpush1.xpose.msra.mxu0 %v7578
    %8778 = vmatprep.subr.mxu0 %v7584
    %8779 = vmatpush1.xpose.msra.mxu0 %v7582
    %8780 = vmatprep.subr.mxu0 %v7588
    %8781 = vmatpush1.xpose.msra.mxu0 %v7586
    %8782 = vmatprep.subr.mxu0 %v7592
    %8783 = vmatpush1.xpose.msra.mxu0 %v7590
    %8784 = vmatprep.subr.mxu0 %v7596
    %8785 = vmatpush1.xpose.msra.mxu0 %v7594
    %8786 = vmatprep.subr.mxu0 %v7600
    %8787 = vmatpush1.xpose.msra.mxu0 %v7598
    %8788 = vmatprep.subr.mxu0 %v7604
    %8789 = vmatpush1.xpose.msra.mxu0 %v7602
    %8790 = vmatprep.subr.mxu0 %v7608
    %8791 = vmatpush1.xpose.msra.mxu0 %v7606
    %8792 = vmatprep.subr.mxu0 %v7612
    %8793 = vmatpush1.xpose.msra.mxu0 %v7610
    %8794 = vmatprep.subr.mxu0 %v7616
    %8795 = vmatpush1.xpose.msra.mxu0 %v7614
    %8796 = vmatprep.subr.mxu0 %v7620
    %8797 = vmatpush1.xpose.msra.mxu0 %v7618
    %8798 = vmatprep.subr.mxu0 %v7624
    %8799 = vmatpush1.xpose.msra.mxu0 %v7622
    %8800 = vmatprep.subr.mxu0 %v7628
    %8801 = vmatpush1.xpose.msra.mxu0 %v7626
    %8802 = vmatprep.subr.mxu0 %v7632
    %8803 = vmatpush1.xpose.msra.mxu0 %v7630
    %8804 = vmatprep.subr.mxu0 %v7636
    %8805 = vmatpush1.xpose.msra.mxu0 %v7634
    %8806 = vmatprep.subr.mxu0 %v7640
    %8807 = vmatpush1.xpose.msra.mxu0 %v7638
    %8808 = vmatprep.subr.mxu0 %v7644
    %8809 = vmatpush1.xpose.msra.mxu0 %v7642
    %8810 = vmatprep.subr.mxu0 %v7648
    %8811 = vmatpush1.xpose.msra.mxu0 %v7646
    %8812 = vmatprep.subr.mxu0 %v7652
    %8813 = vmatpush1.xpose.msra.mxu0 %v7650
    %8814 = vmatprep.subr.mxu0 %v7656
    %8815 = vmatpush1.xpose.msra.mxu0 %v7654
    %8816 = vmatprep.mubr.f32.mxu0 %v5079
    %8817 = vmatmul.mubr.f32.gmra.mrb[0].mxu0 %v5077
    %v8818 = vpop.f32.mrb[0].mxu0
    %v8819 = vadd.f32 0.0, %v8818
    %v8820 = vpop.f32.mrb[0].mxu0
    %v8821 = vadd.f32 0.0, %v8820
    %8822 = vdwg.mxu0
    %8823 = vmatprep.subr.mxu0 %v7660
    %8824 = vmatpush1.xpose.msra.mxu0 %v7658
    %8825 = vmatprep.subr.mxu0 %v7664
    %8826 = vmatpush1.xpose.msra.mxu0 %v7662
    %8827 = vmatprep.subr.mxu0 %v7668
    %8828 = vmatpush1.xpose.msra.mxu0 %v7666
    %8829 = vmatprep.subr.mxu0 %v7672
    %8830 = vmatpush1.xpose.msra.mxu0 %v7670
    %8831 = vmatprep.subr.mxu0 %v7676
    %8832 = vmatpush1.xpose.msra.mxu0 %v7674
    %8833 = vmatprep.subr.mxu0 %v7680
    %8834 = vmatpush1.xpose.msra.mxu0 %v7678
    %8835 = vmatprep.subr.mxu0 %v7684
    %8836 = vmatpush1.xpose.msra.mxu0 %v7682
    %8837 = vmatprep.subr.mxu0 %v7688
    %8838 = vmatpush1.xpose.msra.mxu0 %v7686
    %8839 = vmatprep.subr.mxu0 %v7692
    %8840 = vmatpush1.xpose.msra.mxu0 %v7690
    %8841 = vmatprep.subr.mxu0 %v7696
    %8842 = vmatpush1.xpose.msra.mxu0 %v7694
    %8843 = vmatprep.subr.mxu0 %v7700
    %8844 = vmatpush1.xpose.msra.mxu0 %v7698
    %8845 = vmatprep.subr.mxu0 %v7704
    %8846 = vmatpush1.xpose.msra.mxu0 %v7702
    %8847 = vmatprep.subr.mxu0 %v7708
    %8848 = vmatpush1.xpose.msra.mxu0 %v7706
    %8849 = vmatprep.subr.mxu0 %v7712
    %8850 = vmatpush1.xpose.msra.mxu0 %v7710
    %8851 = vmatprep.subr.mxu0 %v7716
    %8852 = vmatpush1.xpose.msra.mxu0 %v7714
    %8853 = vmatprep.subr.mxu0 %v7720
    %8854 = vmatpush1.xpose.msra.mxu0 %v7718
    %8855 = vmatprep.subr.mxu0 %v7724
    %8856 = vmatpush1.xpose.msra.mxu0 %v7722
    %8857 = vmatprep.subr.mxu0 %v7728
    %8858 = vmatpush1.xpose.msra.mxu0 %v7726
    %8859 = vmatprep.subr.mxu0 %v7732
    %8860 = vmatpush1.xpose.msra.mxu0 %v7730
    %8861 = vmatprep.subr.mxu0 %v7736
    %8862 = vmatpush1.xpose.msra.mxu0 %v7734
    %8863 = vmatprep.subr.mxu0 %v7740
    %8864 = vmatpush1.xpose.msra.mxu0 %v7738
    %8865 = vmatprep.subr.mxu0 %v7744
    %8866 = vmatpush1.xpose.msra.mxu0 %v7742
    %8867 = vmatprep.subr.mxu0 %v7748
    %8868 = vmatpush1.xpose.msra.mxu0 %v7746
    %8869 = vmatprep.subr.mxu0 %v7752
    %8870 = vmatpush1.xpose.msra.mxu0 %v7750
    %8871 = vmatprep.subr.mxu0 %v7756
    %8872 = vmatpush1.xpose.msra.mxu0 %v7754
    %8873 = vmatprep.subr.mxu0 %v7760
    %8874 = vmatpush1.xpose.msra.mxu0 %v7758
    %8875 = vmatprep.subr.mxu0 %v7764
    %8876 = vmatpush1.xpose.msra.mxu0 %v7762
    %8877 = vmatprep.subr.mxu0 %v7768
    %8878 = vmatpush1.xpose.msra.mxu0 %v7766
    %8879 = vmatprep.subr.mxu0 %v7772
    %8880 = vmatpush1.xpose.msra.mxu0 %v7770
    %8881 = vmatprep.subr.mxu0 %v7776
    %8882 = vmatpush1.xpose.msra.mxu0 %v7774
    %8883 = vmatprep.subr.mxu0 %v7780
    %8884 = vmatpush1.xpose.msra.mxu0 %v7778
    %8885 = vmatprep.subr.mxu0 %v7784
    %8886 = vmatpush1.xpose.msra.mxu0 %v7782
    %8887 = vmatprep.mubr.f32.mxu0 %v5085
    %8888 = vmatmul.mubr.f32.gmra.mrb[0].mxu0 %v5083
    %v8889 = vpop.f32.mrb[0].mxu0
    %v8890 = vadd.f32 0.0, %v8889
    %v8891 = vpop.f32.mrb[0].mxu0
    %v8892 = vadd.f32 0.0, %v8891
    %8893 = vdwg.mxu0
    %8894 = vmatprep.subr.mxu0 %v7788
    %8895 = vmatpush1.xpose.msra.mxu0 %v7786
    %8896 = vmatprep.subr.mxu0 %v7792
    %8897 = vmatpush1.xpose.msra.mxu0 %v7790
    %8898 = vmatprep.subr.mxu0 %v7796
    %8899 = vmatpush1.xpose.msra.mxu0 %v7794
    %8900 = vmatprep.subr.mxu0 %v7800
    %8901 = vmatpush1.xpose.msra.mxu0 %v7798
    %8902 = vmatprep.subr.mxu0 %v7804
    %8903 = vmatpush1.xpose.msra.mxu0 %v7802
    %8904 = vmatprep.subr.mxu0 %v7808
    %8905 = vmatpush1.xpose.msra.mxu0 %v7806
    %8906 = vmatprep.subr.mxu0 %v7812
    %8907 = vmatpush1.xpose.msra.mxu0 %v7810
    %8908 = vmatprep.subr.mxu0 %v7816
    %8909 = vmatpush1.xpose.msra.mxu0 %v7814
    %8910 = vmatprep.subr.mxu0 %v7820
    %8911 = vmatpush1.xpose.msra.mxu0 %v7818
    %8912 = vmatprep.subr.mxu0 %v7824
    %8913 = vmatpush1.xpose.msra.mxu0 %v7822
    %8914 = vmatprep.subr.mxu0 %v7828
    %8915 = vmatpush1.xpose.msra.mxu0 %v7826
    %8916 = vmatprep.subr.mxu0 %v7832
    %8917 = vmatpush1.xpose.msra.mxu0 %v7830
    %8918 = vmatprep.subr.mxu0 %v7836
    %8919 = vmatpush1.xpose.msra.mxu0 %v7834
    %8920 = vmatprep.subr.mxu0 %v7840
    %8921 = vmatpush1.xpose.msra.mxu0 %v7838
    %8922 = vmatprep.subr.mxu0 %v7844
    %8923 = vmatpush1.xpose.msra.mxu0 %v7842
    %8924 = vmatprep.subr.mxu0 %v7848
    %8925 = vmatpush1.xpose.msra.mxu0 %v7846
    %8926 = vmatprep.subr.mxu0 %v7852
    %8927 = vmatpush1.xpose.msra.mxu0 %v7850
    %8928 = vmatprep.subr.mxu0 %v7856
    %8929 = vmatpush1.xpose.msra.mxu0 %v7854
    %8930 = vmatprep.subr.mxu0 %v7860
    %8931 = vmatpush1.xpose.msra.mxu0 %v7858
    %8932 = vmatprep.subr.mxu0 %v7864
    %8933 = vmatpush1.xpose.msra.mxu0 %v7862
    %8934 = vmatprep.subr.mxu0 %v7868
    %8935 = vmatpush1.xpose.msra.mxu0 %v7866
    %8936 = vmatprep.subr.mxu0 %v7872
    %8937 = vmatpush1.xpose.msra.mxu0 %v7870
    %8938 = vmatprep.subr.mxu0 %v7876
    %8939 = vmatpush1.xpose.msra.mxu0 %v7874
    %8940 = vmatprep.subr.mxu0 %v7880
    %8941 = vmatpush1.xpose.msra.mxu0 %v7878
    %8942 = vmatprep.subr.mxu0 %v7884
    %8943 = vmatpush1.xpose.msra.mxu0 %v7882
    %8944 = vmatprep.subr.mxu0 %v7888
    %8945 = vmatpush1.xpose.msra.mxu0 %v7886
    %8946 = vmatprep.subr.mxu0 %v7892
    %8947 = vmatpush1.xpose.msra.mxu0 %v7890
    %8948 = vmatprep.subr.mxu0 %v7896
    %8949 = vmatpush1.xpose.msra.mxu0 %v7894
    %8950 = vmatprep.subr.mxu0 %v7900
    %8951 = vmatpush1.xpose.msra.mxu0 %v7898
    %8952 = vmatprep.subr.mxu0 %v7904
    %8953 = vmatpush1.xpose.msra.mxu0 %v7902
    %8954 = vmatprep.subr.mxu0 %v7908
    %8955 = vmatpush1.xpose.msra.mxu0 %v7906
    %8956 = vmatprep.subr.mxu0 %v7912
    %8957 = vmatpush1.xpose.msra.mxu0 %v7910
    %8958 = vmatprep.mubr.f32.mxu0 %v5091
    %8959 = vmatmul.mubr.f32.gmra.mrb[0].mxu0 %v5089
    %v8960 = vpop.f32.mrb[0].mxu0
    %v8961 = vadd.f32 0.0, %v8960
    %v8962 = vpop.f32.mrb[0].mxu0
    %v8963 = vadd.f32 0.0, %v8962
    %8964 = vdwg.mxu0
    %v8965 = vlaneseq
    %v8966 = vshrl.u32 %v8965, 7
    %v8967 = vsub.s32 0, %v8966
    %v8968 = vrot.slane %v8441, %v8967
    %v8969 = vlaneseq
    %v8970 = vshrl.u32 %v8969, 7
    %v8971 = vsub.s32 0, %v8970
    %v8972 = vrot.slane %v8473, %v8971
    %v8973 = vlaneseq
    %v8974 = vshrl.u32 %v8973, 7
    %v8975 = vsub.s32 0, %v8974
    %v8976 = vrot.slane %v8505, %v8975
    %v8977 = vlaneseq
    %v8978 = vshrl.u32 %v8977, 7
    %v8979 = vsub.s32 0, %v8978
    %v8980 = vrot.slane %v8537, %v8979
    %v8981 = vlaneseq
    %v8982 = vshrl.u32 %v8981, 7
    %v8983 = vsub.s32 0, %v8982
    %v8984 = vrot.slane %v8569, %v8983
    %v8985 = vlaneseq
    %v8986 = vshrl.u32 %v8985, 7
    %v8987 = vsub.s32 0, %v8986
    %v8988 = vrot.slane %v8601, %v8987
    %v8989 = vlaneseq
    %v8990 = vshrl.u32 %v8989, 7
    %v8991 = vsub.s32 0, %v8990
    %v8992 = vrot.slane %v8633, %v8991
    %v8993 = vlaneseq
    %v8994 = vshrl.u32 %v8993, 7
    %v8995 = vsub.s32 0, %v8994
    %v8996 = vrot.slane %v8665, %v8995
    %v8997 = vmul.f32 %v8748, %v8968
    %v8998 = vmul.f32 %v8750, %v8972
    %v8999 = vmul.f32 %v8819, %v8976
    %v9000 = vmul.f32 %v8821, %v8980
    %v9001 = vmul.f32 %v8890, %v8984
    %v9002 = vmul.f32 %v8892, %v8988
    %v9003 = vmul.f32 %v8961, %v8992
    %v9004 = vmul.f32 %v8963, %v8996
    %9005 = vmatprep.subr.mxu0 %v8998
    %9006 = vmatpush1.msra.mxu0 %v8997
    %9007 = vmatprep.subr.mxu0 %v9000
    %9008 = vmatpush1.msra.mxu0 %v8999
    %9009 = vmatprep.subr.mxu0 %v9002
    %9010 = vmatpush1.msra.mxu0 %v9001
    %9011 = vmatprep.subr.mxu0 %v9004
    %9012 = vmatpush1.msra.mxu0 %v9003
    %9013 = vmatprep.subr.mxu0 0.0
    %9014 = vmatpush1.msra.mxu0 0.0
    %9015 = vmatprep.subr.mxu0 0.0
    %9016 = vmatpush1.msra.mxu0 0.0
    %9017 = vmatprep.subr.mxu0 0.0
    %9018 = vmatpush1.msra.mxu0 0.0
    %9019 = vmatprep.subr.mxu0 0.0
    %9020 = vmatpush1.msra.mxu0 0.0
    %9021 = vmatprep.subr.mxu0 0.0
    %9022 = vmatpush1.msra.mxu0 0.0
    %9023 = vmatprep.subr.mxu0 0.0
    %9024 = vmatpush1.msra.mxu0 0.0
    %9025 = vmatprep.subr.mxu0 0.0
    %9026 = vmatpush1.msra.mxu0 0.0
    %9027 = vmatprep.subr.mxu0 0.0
    %9028 = vmatpush1.msra.mxu0 0.0
    %9029 = vmatprep.subr.mxu0 0.0
    %9030 = vmatpush1.msra.mxu0 0.0
    %9031 = vmatprep.subr.mxu0 0.0
    %9032 = vmatpush1.msra.mxu0 0.0
    %9033 = vmatprep.subr.mxu0 0.0
    %9034 = vmatpush1.msra.mxu0 0.0
    %9035 = vmatprep.subr.mxu0 0.0
    %9036 = vmatpush1.msra.mxu0 0.0
    %9037 = vmatprep.subr.mxu0 0.0
    %9038 = vmatpush1.msra.mxu0 0.0
    %9039 = vmatprep.subr.mxu0 0.0
    %9040 = vmatpush1.msra.mxu0 0.0
    %9041 = vmatprep.subr.mxu0 0.0
    %9042 = vmatpush1.msra.mxu0 0.0
    %9043 = vmatprep.subr.mxu0 0.0
    %9044 = vmatpush1.msra.mxu0 0.0
    %9045 = vmatprep.subr.mxu0 0.0
    %9046 = vmatpush1.msra.mxu0 0.0
    %9047 = vmatprep.subr.mxu0 0.0
    %9048 = vmatpush1.msra.mxu0 0.0
    %9049 = vmatprep.subr.mxu0 0.0
    %9050 = vmatpush1.msra.mxu0 0.0
    %9051 = vmatprep.subr.mxu0 0.0
    %9052 = vmatpush1.msra.mxu0 0.0
    %9053 = vmatprep.subr.mxu0 0.0
    %9054 = vmatpush1.msra.mxu0 0.0
    %9055 = vmatprep.subr.mxu0 0.0
    %9056 = vmatpush1.msra.mxu0 0.0
    %9057 = vmatprep.subr.mxu0 0.0
    %9058 = vmatpush1.msra.mxu0 0.0
    %9059 = vmatprep.subr.mxu0 0.0
    %9060 = vmatpush1.msra.mxu0 0.0
    %9061 = vmatprep.subr.mxu0 0.0
    %9062 = vmatpush1.msra.mxu0 0.0
    %9063 = vmatprep.subr.mxu0 0.0
    %9064 = vmatpush1.msra.mxu0 0.0
    %9065 = vmatprep.subr.mxu0 0.0
    %9066 = vmatpush1.msra.mxu0 0.0
    %9067 = vmatprep.subr.mxu0 0.0
    %9068 = vmatpush1.msra.mxu0 0.0
    %9069 = vmatprep.mubr.f32.mxu0 0.0
    %9070 = vmatmul.mubr.f32.gmra.mrb[0].mxu0 %v4349
    %v9071 = vpop.f32.mrb[0].mxu0
    %v9072 = vadd.f32 %v4334, %v9071
    %v9073 = vpop.f32.mrb[0].mxu0
    %v9074 = vadd.f32 %v4334, %v9073
    %9075 = vmatprep.mubr.f32.mxu0 0.0
    %9076 = vmatmul.mubr.f32.gmra.mrb[0].mxu0 %v4352
    %v9077 = vpop.f32.mrb[0].mxu0
    %v9078 = vadd.f32 %v4338, %v9077
    %v9079 = vpop.f32.mrb[0].mxu0
    %v9080 = vadd.f32 %v4338, %v9079
    %9081 = vmatprep.mubr.f32.mxu0 0.0
    %9082 = vmatmul.mubr.f32.gmra.mrb[0].mxu0 %v4355
    %v9083 = vpop.f32.mrb[0].mxu0
    %v9084 = vadd.f32 %v4342, %v9083
    %v9085 = vpop.f32.mrb[0].mxu0
    %v9086 = vadd.f32 %v4342, %v9085
    %9087 = vmatprep.mubr.f32.mxu0 0.0
    %9088 = vmatmul.mubr.f32.gmra.mrb[0].mxu0 %v4358
    %v9089 = vpop.f32.mrb[0].mxu0
    %v9090 = vadd.f32 %v4346, %v9089
    %v9091 = vpop.f32.mrb[0].mxu0
    %v9092 = vadd.f32 %v4346, %v9091
    %9093 = vdwg.mxu0
    %v9094 = vadd.f32 %v9072, %v4864
    %v9095 = vadd.f32 %v9074, %v4865
    %v9096 = vadd.f32 %v9078, %v4866
    %v9097 = vadd.f32 %v9080, %v4867
    %v9098 = vadd.f32 %v9084, %v4868
    %v9099 = vadd.f32 %v9086, %v4869
    %v9100 = vadd.f32 %v9090, %v4870
    %v9101 = vadd.f32 %v9092, %v4871
    %v9102 = vadd.f32 %v9094, %v9096
    %v9103 = vadd.f32 %v9102, %v9098
    %v9104 = vadd.f32 %v9103, %v9100
    %v9105 = vrot.slane %v9104, 4
    %v9106 = vadd.f32 %v9104, %v9105
    %v9107 = vrot.slane %v9106, 2
    %v9108 = vadd.f32 %v9106, %v9107
    %v9109 = vrot.slane %v9108, 1
    %v9110 = vadd.f32 %v9108, %v9109
    %v9111 = vadd.f32 %v9095, %v9097
    %v9112 = vadd.f32 %v9111, %v9099
    %v9113 = vadd.f32 %v9112, %v9101
    %v9114 = vrot.slane %v9113, 4
    %v9115 = vadd.f32 %v9113, %v9114
    %v9116 = vrot.slane %v9115, 2
    %v9117 = vadd.f32 %v9115, %v9116
    %v9118 = vrot.slane %v9117, 1
    %v9119 = vadd.f32 %v9117, %v9118
    %v9120 = vmul.f32 %v9110, %v86
    %v9121 = vmul.f32 %v9119, %v86
    %v9122 = vsub.f32 %v9094, %v9120
    %v9123 = vsub.f32 %v9095, %v9121
    %v9124 = vsub.f32 %v9096, %v9120
    %v9125 = vsub.f32 %v9097, %v9121
    %v9126 = vsub.f32 %v9098, %v9120
    %v9127 = vsub.f32 %v9099, %v9121
    %v9128 = vsub.f32 %v9100, %v9120
    %v9129 = vsub.f32 %v9101, %v9121
    %v9130 = vmul.f32 %v9122, %v9122
    %v9131 = vmul.f32 %v9123, %v9123
    %v9132 = vmul.f32 %v9124, %v9124
    %v9133 = vmul.f32 %v9125, %v9125
    %v9134 = vmul.f32 %v9126, %v9126
    %v9135 = vmul.f32 %v9127, %v9127
    %v9136 = vmul.f32 %v9128, %v9128
    %v9137 = vmul.f32 %v9129, %v9129
    %v9138 = vadd.f32 %v9130, %v9132
    %v9139 = vadd.f32 %v9138, %v9134
    %v9140 = vadd.f32 %v9139, %v9136
    %v9141 = vrot.slane %v9140, 4
    %v9142 = vadd.f32 %v9140, %v9141
    %v9143 = vrot.slane %v9142, 2
    %v9144 = vadd.f32 %v9142, %v9143
    %v9145 = vrot.slane %v9144, 1
    %v9146 = vadd.f32 %v9144, %v9145
    %v9147 = vadd.f32 %v9131, %v9133
    %v9148 = vadd.f32 %v9147, %v9135
    %v9149 = vadd.f32 %v9148, %v9137
    %v9150 = vrot.slane %v9149, 4
    %v9151 = vadd.f32 %v9149, %v9150
    %v9152 = vrot.slane %v9151, 2
    %v9153 = vadd.f32 %v9151, %v9152
    %v9154 = vrot.slane %v9153, 1
    %v9155 = vadd.f32 %v9153, %v9154
    %v9156 = vmul.f32 %v9146, %v86
    %v9157 = vmul.f32 %v9155, %v86
    %v9158 = vadd.f32 %v9156, 1e-05
    %v9159 = vadd.f32 %v9157, 1e-05
    %v9160 = vrsqrt.pop %v9158
    %v9161 = vrsqrt.pop %v9159
    %v9162 = vmul.f32 %v9122, %v9160
    %v9163 = vmul.f32 %v9123, %v9161
    %v9164 = vmul.f32 %v9124, %v9160
    %v9165 = vmul.f32 %v9125, %v9161
    %v9166 = vmul.f32 %v9126, %v9160
    %v9167 = vmul.f32 %v9127, %v9161
    %v9168 = vmul.f32 %v9128, %v9160
    %v9169 = vmul.f32 %v9129, %v9161
    %v9170 = vmul.f32 %v9162, %v4527
    %v9171 = vmul.f32 %v9163, %v4527
    %v9172 = vmul.f32 %v9164, %v4531
    %v9173 = vmul.f32 %v9165, %v4531
    %v9174 = vmul.f32 %v9166, %v4535
    %v9175 = vmul.f32 %v9167, %v4535
    %v9176 = vmul.f32 %v9168, %v4539
    %v9177 = vmul.f32 %v9169, %v4539
    %v9178 = vadd.f32 %v9170, %v4551
    %v9179 = vadd.f32 %v9171, %v4551
    %v9180 = vadd.f32 %v9172, %v4555
    %v9181 = vadd.f32 %v9173, %v4555
    %v9182 = vadd.f32 %v9174, %v4559
    %v9183 = vadd.f32 %v9175, %v4559
    %v9184 = vadd.f32 %v9176, %v4563
    %v9185 = vadd.f32 %v9177, %v4563
    %9186 = vmatprep.subr.mxu0 %v9179
    %9187 = vmatpush1.msra.mxu0 %v9178
    %9188 = vmatprep.subr.mxu0 %v9181
    %9189 = vmatpush1.msra.mxu0 %v9180
    %9190 = vmatprep.subr.mxu0 %v9183
    %9191 = vmatpush1.msra.mxu0 %v9182
    %9192 = vmatprep.subr.mxu0 %v9185
    %9193 = vmatpush1.msra.mxu0 %v9184
    %9194 = vmatprep.subr.mxu0 0.0
    %9195 = vmatpush1.msra.mxu0 0.0
    %9196 = vmatprep.subr.mxu0 0.0
    %9197 = vmatpush1.msra.mxu0 0.0
    %9198 = vmatprep.subr.mxu0 0.0
    %9199 = vmatpush1.msra.mxu0 0.0
    %9200 = vmatprep.subr.mxu0 0.0
    %9201 = vmatpush1.msra.mxu0 0.0
    %9202 = vmatprep.subr.mxu0 0.0
    %9203 = vmatpush1.msra.mxu0 0.0
    %9204 = vmatprep.subr.mxu0 0.0
    %9205 = vmatpush1.msra.mxu0 0.0
    %9206 = vmatprep.subr.mxu0 0.0
    %9207 = vmatpush1.msra.mxu0 0.0
    %9208 = vmatprep.subr.mxu0 0.0
    %9209 = vmatpush1.msra.mxu0 0.0
    %9210 = vmatprep.subr.mxu0 0.0
    %9211 = vmatpush1.msra.mxu0 0.0
    %9212 = vmatprep.subr.mxu0 0.0
    %9213 = vmatpush1.msra.mxu0 0.0
    %9214 = vmatprep.subr.mxu0 0.0
    %9215 = vmatpush1.msra.mxu0 0.0
    %9216 = vmatprep.subr.mxu0 0.0
    %9217 = vmatpush1.msra.mxu0 0.0
    %9218 = vmatprep.subr.mxu0 0.0
    %9219 = vmatpush1.msra.mxu0 0.0
    %9220 = vmatprep.subr.mxu0 0.0
    %9221 = vmatpush1.msra.mxu0 0.0
    %9222 = vmatprep.subr.mxu0 0.0
    %9223 = vmatpush1.msra.mxu0 0.0
    %9224 = vmatprep.subr.mxu0 0.0
    %9225 = vmatpush1.msra.mxu0 0.0
    %9226 = vmatprep.subr.mxu0 0.0
    %9227 = vmatpush1.msra.mxu0 0.0
    %9228 = vmatprep.subr.mxu0 0.0
    %9229 = vmatpush1.msra.mxu0 0.0
    %9230 = vmatprep.subr.mxu0 0.0
    %9231 = vmatpush1.msra.mxu0 0.0
    %9232 = vmatprep.subr.mxu0 0.0
    %9233 = vmatpush1.msra.mxu0 0.0
    %9234 = vmatprep.subr.mxu0 0.0
    %9235 = vmatpush1.msra.mxu0 0.0
    %9236 = vmatprep.subr.mxu0 0.0
    %9237 = vmatpush1.msra.mxu0 0.0
    %9238 = vmatprep.subr.mxu0 0.0
    %9239 = vmatpush1.msra.mxu0 0.0
    %9240 = vmatprep.subr.mxu0 0.0
    %9241 = vmatpush1.msra.mxu0 0.0
    %9242 = vmatprep.subr.mxu0 0.0
    %9243 = vmatpush1.msra.mxu0 0.0
    %9244 = vmatprep.subr.mxu0 0.0
    %9245 = vmatpush1.msra.mxu0 0.0
    %9246 = vmatprep.subr.mxu0 0.0
    %9247 = vmatpush1.msra.mxu0 0.0
    %9248 = vmatprep.subr.mxu0 0.0
    %9249 = vmatpush1.msra.mxu0 0.0
    %9250 = vmatprep.mubr.f32.mxu0 0.0
    %9251 = vmatmul.mubr.f32.gmra.mrb[0].mxu0 %v4590
    %v9252 = vpop.f32.mrb[0].mxu0
    %v9253 = vadd.f32 %v4575, %v9252
    %v9254 = vpop.f32.mrb[0].mxu0
    %v9255 = vadd.f32 %v4575, %v9254
    %9256 = vmatprep.mubr.f32.mxu0 0.0
    %9257 = vmatmul.mubr.f32.gmra.mrb[0].mxu0 %v4593
    %v9258 = vpop.f32.mrb[0].mxu0
    %v9259 = vadd.f32 %v4579, %v9258
    %v9260 = vpop.f32.mrb[0].mxu0
    %v9261 = vadd.f32 %v4579, %v9260
    %9262 = vmatprep.mubr.f32.mxu0 0.0
    %9263 = vmatmul.mubr.f32.gmra.mrb[0].mxu0 %v4596
    %v9264 = vpop.f32.mrb[0].mxu0
    %v9265 = vadd.f32 %v4583, %v9264
    %v9266 = vpop.f32.mrb[0].mxu0
    %v9267 = vadd.f32 %v4583, %v9266
    %9268 = vmatprep.mubr.f32.mxu0 0.0
    %9269 = vmatmul.mubr.f32.gmra.mrb[0].mxu0 %v4599
    %v9270 = vpop.f32.mrb[0].mxu0
    %v9271 = vadd.f32 %v4587, %v9270
    %v9272 = vpop.f32.mrb[0].mxu0
    %v9273 = vadd.f32 %v4587, %v9272
    %9274 = vdwg.mxu0
    %v9275 = vmul.f32 %v9253, 0.5
    %v9276 = vmul.f32 %v9255, 0.5
    %v9277 = vmul.f32 %v9259, 0.5
    %v9278 = vmul.f32 %v9261, 0.5
    %v9279 = vmul.f32 %v9265, 0.5
    %v9280 = vmul.f32 %v9267, 0.5
    %v9281 = vmul.f32 %v9271, 0.5
    %v9282 = vmul.f32 %v9273, 0.5
    %v9283 = vmul.f32 %v9253, 0.70710677
    %v9284 = vmul.f32 %v9255, 0.70710677
    %v9285 = vmul.f32 %v9259, 0.70710677
    %v9286 = vmul.f32 %v9261, 0.70710677
    %v9287 = vmul.f32 %v9265, 0.70710677
    %v9288 = vmul.f32 %v9267, 0.70710677
    %v9289 = vmul.f32 %v9271, 0.70710677
    %v9290 = vmul.f32 %v9273, 0.70710677
    %v9291 = verf.f32.pop %v9283
    %v9292 = verf.f32.pop %v9284
    %v9293 = verf.f32.pop %v9285
    %v9294 = verf.f32.pop %v9286
    %v9295 = verf.f32.pop %v9287
    %v9296 = verf.f32.pop %v9288
    %v9297 = verf.f32.pop %v9289
    %v9298 = verf.f32.pop %v9290
    %v9299 = vadd.f32 %v9291, 1.0
    %v9300 = vadd.f32 %v9292, 1.0
    %v9301 = vadd.f32 %v9293, 1.0
    %v9302 = vadd.f32 %v9294, 1.0
    %v9303 = vadd.f32 %v9295, 1.0
    %v9304 = vadd.f32 %v9296, 1.0
    %v9305 = vadd.f32 %v9297, 1.0
    %v9306 = vadd.f32 %v9298, 1.0
    %v9307 = vmul.f32 %v9275, %v9299
    %v9308 = vmul.f32 %v9276, %v9300
    %v9309 = vmul.f32 %v9277, %v9301
    %v9310 = vmul.f32 %v9278, %v9302
    %v9311 = vmul.f32 %v9279, %v9303
    %v9312 = vmul.f32 %v9280, %v9304
    %v9313 = vmul.f32 %v9281, %v9305
    %v9314 = vmul.f32 %v9282, %v9306
    %9315 = vmatprep.subr.mxu0 %v9308
    %9316 = vmatpush1.msra.mxu0 %v9307
    %9317 = vmatprep.subr.mxu0 %v9310
    %9318 = vmatpush1.msra.mxu0 %v9309
    %9319 = vmatprep.subr.mxu0 %v9312
    %9320 = vmatpush1.msra.mxu0 %v9311
    %9321 = vmatprep.subr.mxu0 %v9314
    %9322 = vmatpush1.msra.mxu0 %v9313
    %9323 = vmatprep.subr.mxu0 0.0
    %9324 = vmatpush1.msra.mxu0 0.0
    %9325 = vmatprep.subr.mxu0 0.0
    %9326 = vmatpush1.msra.mxu0 0.0
    %9327 = vmatprep.subr.mxu0 0.0
    %9328 = vmatpush1.msra.mxu0 0.0
    %9329 = vmatprep.subr.mxu0 0.0
    %9330 = vmatpush1.msra.mxu0 0.0
    %9331 = vmatprep.subr.mxu0 0.0
    %9332 = vmatpush1.msra.mxu0 0.0
    %9333 = vmatprep.subr.mxu0 0.0
    %9334 = vmatpush1.msra.mxu0 0.0
    %9335 = vmatprep.subr.mxu0 0.0
    %9336 = vmatpush1.msra.mxu0 0.0
    %9337 = vmatprep.subr.mxu0 0.0
    %9338 = vmatpush1.msra.mxu0 0.0
    %9339 = vmatprep.subr.mxu0 0.0
    %9340 = vmatpush1.msra.mxu0 0.0
    %9341 = vmatprep.subr.mxu0 0.0
    %9342 = vmatpush1.msra.mxu0 0.0
    %9343 = vmatprep.subr.mxu0 0.0
    %9344 = vmatpush1.msra.mxu0 0.0
    %9345 = vmatprep.subr.mxu0 0.0
    %9346 = vmatpush1.msra.mxu0 0.0
    %9347 = vmatprep.subr.mxu0 0.0
    %9348 = vmatpush1.msra.mxu0 0.0
    %9349 = vmatprep.subr.mxu0 0.0
    %9350 = vmatpush1.msra.mxu0 0.0
    %9351 = vmatprep.subr.mxu0 0.0
    %9352 = vmatpush1.msra.mxu0 0.0
    %9353 = vmatprep.subr.mxu0 0.0
    %9354 = vmatpush1.msra.mxu0 0.0
    %9355 = vmatprep.subr.mxu0 0.0
    %9356 = vmatpush1.msra.mxu0 0.0
    %9357 = vmatprep.subr.mxu0 0.0
    %9358 = vmatpush1.msra.mxu0 0.0
    %9359 = vmatprep.subr.mxu0 0.0
    %9360 = vmatpush1.msra.mxu0 0.0
    %9361 = vmatprep.subr.mxu0 0.0
    %9362 = vmatpush1.msra.mxu0 0.0
    %9363 = vmatprep.subr.mxu0 0.0
    %9364 = vmatpush1.msra.mxu0 0.0
    %9365 = vmatprep.subr.mxu0 0.0
    %9366 = vmatpush1.msra.mxu0 0.0
    %9367 = vmatprep.subr.mxu0 0.0
    %9368 = vmatpush1.msra.mxu0 0.0
    %9369 = vmatprep.subr.mxu0 0.0
    %9370 = vmatpush1.msra.mxu0 0.0
    %9371 = vmatprep.subr.mxu0 0.0
    %9372 = vmatpush1.msra.mxu0 0.0
    %9373 = vmatprep.subr.mxu0 0.0
    %9374 = vmatpush1.msra.mxu0 0.0
    %9375 = vmatprep.subr.mxu0 0.0
    %9376 = vmatpush1.msra.mxu0 0.0
    %9377 = vmatprep.subr.mxu0 0.0
    %9378 = vmatpush1.msra.mxu0 0.0
    %9379 = vmatprep.mubr.f32.mxu0 0.0
    %9380 = vmatmul.mubr.f32.gmra.mrb[0].mxu0 %v4747
    %v9381 = vpop.f32.mrb[0].mxu0
    %v9382 = vadd.f32 %v4732, %v9381
    %v9383 = vpop.f32.mrb[0].mxu0
    %v9384 = vadd.f32 %v4732, %v9383
    %9385 = vmatprep.mubr.f32.mxu0 0.0
    %9386 = vmatmul.mubr.f32.gmra.mrb[0].mxu0 %v4750
    %v9387 = vpop.f32.mrb[0].mxu0
    %v9388 = vadd.f32 %v4736, %v9387
    %v9389 = vpop.f32.mrb[0].mxu0
    %v9390 = vadd.f32 %v4736, %v9389
    %9391 = vmatprep.mubr.f32.mxu0 0.0
    %9392 = vmatmul.mubr.f32.gmra.mrb[0].mxu0 %v4753
    %v9393 = vpop.f32.mrb[0].mxu0
    %v9394 = vadd.f32 %v4740, %v9393
    %v9395 = vpop.f32.mrb[0].mxu0
    %v9396 = vadd.f32 %v4740, %v9395
    %9397 = vmatprep.mubr.f32.mxu0 0.0
    %9398 = vmatmul.mubr.f32.gmra.mrb[0].mxu0 %v4756
    %v9399 = vpop.f32.mrb[0].mxu0
    %v9400 = vadd.f32 %v4744, %v9399
    %v9401 = vpop.f32.mrb[0].mxu0
    %v9402 = vadd.f32 %v4744, %v9401
    %9403 = vdwg.mxu0
    %v9404 = vadd.f32 %v9094, %v9382
    %v9405 = vadd.f32 %v9095, %v9384
    %v9406 = vadd.f32 %v9096, %v9388
    %v9407 = vadd.f32 %v9097, %v9390
    %v9408 = vadd.f32 %v9098, %v9394
    %v9409 = vadd.f32 %v9099, %v9396
    %v9410 = vadd.f32 %v9100, %v9400
    %v9411 = vadd.f32 %v9101, %v9402
    %s9412 = scalar_lea.vmem [#allocation2], 64
    %9413 = vst [vmem:[%s9412] sm:$0xff] %v9404
    %9414 = vst [vmem:[%s9412 + $0x8] sm:$0xff] %v9405
    %9415 = vst [vmem:[%s9412 + $0x10] sm:$0xff] %v9406
    %9416 = vst [vmem:[%s9412 + $0x18] sm:$0xff] %v9407
    %9417 = vst [vmem:[%s9412 + $0x20] sm:$0xff] %v9408
    %9418 = vst [vmem:[%s9412 + $0x28] sm:$0xff] %v9409
    %9419 = vst [vmem:[%s9412 + $0x30] sm:$0xff] %v9410
    %9420 = vst [vmem:[%s9412 + $0x38] sm:$0xff] %v9411
    // Predicated region
    $region26: #{tpu_custom_call.1} parent=1 // pred_check
      _
    $region27: #{tpu_custom_call.1} parent=1 // pred_check_branch
      %9422 = sbr.rel (0) target = $region29
    $region28: #{tpu_custom_call.1} parent=1 // pred_region
      %s9424 = ssub.s32 2048, 2048
      %9425 = vsyncadd [#allocation3], %s9424
      %s9426 = sshll.u32 [#allocation2], 4
      %s9427 = int_to_ptr.vmem [resolvable:$true] %s9426
      %9432 = dma.vmem_to_hbm [thread:$0]  %s9427, 2048, %s6, [#allocation3], 256, 256, 16
    $region29: #{tpu_custom_call.1} parent=1 // pred_fallthru
      _
    // Predicated region
    $region30: #{tpu_custom_call.1} parent=1 // pred_check
      _
    $region31: #{tpu_custom_call.1} parent=1 // pred_check_branch
      %9434 = sbr.rel (0) target = $region33
    $region32: #{tpu_custom_call.1} parent=1 // pred_region
      %9435 = dma.done [#allocation3], 2048
    $region33: #{tpu_custom_call.1} parent=1 // pred_fallthru
      _
    %9436 = vsyncpa [#allocation3], 1

</llo_original>
